<compile_context>
chip_gen: v7x
topology: tpu7x:2x2x1
jax: 0.10.0
libtpu: 0.0.40
codegen_flags: <defaults>
</compile_context>

<pallas_src>
import jax
import jax.numpy as jnp
from jax.experimental import pallas as pl
from jax.experimental.pallas import tpu as pltpu

CH = 64                 # self.filters
NUM_CLASSES = 12
BN_EPS = 1e-5
OH, OW = 25, 5          # conv1 output spatial size
F = OH * OW             # 125 flattened spatial positions
KH1, KW1 = 10, 4        # conv1 kernel
NBLK = 4                # depthwise-separable blocks
POOL_H = 24             # AvgPool2d((24, 5)) window (floor mode drops row 24)


# ---------------------------------------------------------------------------
# Single fused kernel: conv1 -> 4x(dw+pw) -> avg-pool -> fc, BT samples/step.
# ---------------------------------------------------------------------------
def _dscnn_kernel(x_ref, w1_ref, b1_ref, dww_ref, dwb_ref, pww_ref, pwb_ref,
                  fcw_ref, fcb_ref, o_ref):
    f32 = jnp.float32

    w1 = w1_ref[...]                               # [40, 64]  (BN folded)
    b1 = b1_ref[...]                               # [1, 64]
    fcw = fcw_ref[...]                             # [64, 12]
    fcb = fcb_ref[...]                             # [1, 12]

    # Masks over the flat spatial index f = h*5 + w (only w matters): they
    # zero the taps whose W-offset wrapped around a row boundary.
    wpos = jax.lax.broadcasted_iota(jnp.int32, (F, 1), 0) % OW
    m_left = (wpos != 0).astype(f32)               # kills kw=0 taps at w==0
    m_right = (wpos != OW - 1).astype(f32)         # kills kw=2 taps at w==4

    zpad = jnp.zeros((OW + 1, CH), f32)            # 6-row zero halo

    pooled_rows = []
    for n in range(x_ref.shape[0]):                # BT samples, unrolled
        # ---- conv1 (im2col built in wrapper) + folded BN + ReLU ----------
        patches = x_ref[n]                         # [125, 40]
        act = jnp.dot(patches, w1, preferred_element_type=f32) + b1
        act = jnp.maximum(act, 0.0)                # [125, 64]
        # (dropout1: identity in eval mode)

        # ---- 4 x (depthwise 3x3 + BN + ReLU, pointwise 1x1 + BN + ReLU) --
        for blk in range(NBLK):
            wd = dww_ref[blk]                      # [9, 64]
            xh = jnp.concatenate([zpad, act, zpad], axis=0)   # [137, 64]

            # Group taps by kw so each W-boundary mask is applied once.
            cols = []
            for kw in range(3):
                a = jnp.zeros((F, CH), f32)
                for kh in range(3):
                    t = 3 * kh + kw
                    off = OW * kh + kw             # sublane shift in [0, 12]
                    a = a + xh[off:off + F, :] * wd[t:t + 1, :]
                cols.append(a)
            acc = cols[0] * m_left + cols[1] + cols[2] * m_right
            act = jnp.maximum(acc + dwb_ref[blk:blk + 1, :], 0.0)

            # Pointwise 1x1 (+ folded BN) + ReLU: one [125,64]x[64,64] matmul.
            y = (jnp.dot(act, pww_ref[blk], preferred_element_type=f32)
                 + pwb_ref[blk:blk + 1, :])
            act = jnp.maximum(y, 0.0)              # [125, 64]

        # ---- (dropout2: identity) AvgPool2d((24, 5)) --------------------
        pooled = jnp.sum(act[0:POOL_H * OW, :], axis=0, keepdims=True)
        pooled_rows.append(pooled * (1.0 / (POOL_H * OW)))        # [1, 64]

    # ---- Flatten + FC for the whole batch tile in one matmul ------------
    pooled_all = (jnp.concatenate(pooled_rows, axis=0)
                  if len(pooled_rows) > 1 else pooled_rows[0])    # [BT, 64]
    logits = jnp.dot(pooled_all, fcw, preferred_element_type=f32) + fcb
    o_ref[...] = logits.astype(o_ref.dtype)        # [BT, 12]


# ---------------------------------------------------------------------------
# Parameters (deterministic synthetic init, PyTorch shapes, BN folded into W).
# ---------------------------------------------------------------------------
def init_params(key):
    keys = iter(jax.random.split(key, 64))

    def nrm(shape, s):
        return jax.random.normal(next(keys), shape, jnp.float32) * s

    def bn_fold(conv_bias, c):
        gamma = 1.0 + nrm((c,), 0.2)
        beta = nrm((c,), 0.1)
        running_mean = nrm((c,), 0.1)
        running_var = jnp.abs(nrm((c,), 0.2)) + 0.5
        scale = gamma / jnp.sqrt(running_var + BN_EPS)
        bias = (conv_bias - running_mean) * scale + beta
        return scale, bias

    p = {}
    # conv1: torch weight [64, 1, 10, 4], bias [64]  ->  [40, 64], BN folded.
    w1 = nrm((CH, 1, KH1, KW1), 0.1)
    b1 = nrm((CH,), 0.05)
    s1, bb1 = bn_fold(b1, CH)
    p["conv1_w"] = w1.reshape(CH, KH1 * KW1).T * s1[None, :]       # [40, 64]
    p["conv1_b"] = bb1.reshape(1, CH)                              # [1, 64]

    dw_w, dw_b, pw_w, pw_b = [], [], [], []
    for _ in range(NBLK):
        wd = nrm((CH, 1, 3, 3), 0.2)               # depthwise [C, 1, 3, 3]
        bd = nrm((CH,), 0.05)
        sd, bbd = bn_fold(bd, CH)
        dw_w.append(wd.reshape(CH, 9).T * sd[None, :])    # [9, C], row=kh*3+kw
        dw_b.append(bbd)                                  # [64]

        wp = nrm((CH, CH, 1, 1), 0.1)              # pointwise [Cout, Cin, 1, 1]
        bp = nrm((CH,), 0.05)
        sp, bbp = bn_fold(bp, CH)
        pw_w.append(wp.reshape(CH, CH).T * sp[None, :])   # [Cin, Cout]
        pw_b.append(bbp)                                  # [64]

    p["dw_w"] = jnp.stack(dw_w)                    # [4, 9, 64]
    p["dw_b"] = jnp.stack(dw_b)                    # [4, 64]
    p["pw_w"] = jnp.stack(pw_w)                    # [4, 64, 64]
    p["pw_b"] = jnp.stack(pw_b)                    # [4, 64]

    wfc = nrm((NUM_CLASSES, CH), 0.1)              # torch Linear [out, in]
    bfc = nrm((NUM_CLASSES,), 0.05)
    p["fc_w"] = wfc.T                              # [64, 12]
    p["fc_b"] = bfc.reshape(1, NUM_CLASSES)        # [1, 12]
    return p


# ---------------------------------------------------------------------------
# Forward pass: wrapper builds the tiny conv1 im2col (pure slicing, 20 KB per
# sample), then one pallas_call runs the whole network per batch tile.
# ---------------------------------------------------------------------------
def ds_cnn_forward(x, params):
    # x: [N, 1, 49, 10]  (NCHW, matching the PyTorch module)
    N = x.shape[0]
    xi = x[:, 0]                                           # [N, 49, 10]
    # F.pad(x, (1, 1, 4, 5)): W pad (1, 1), H pad (4, 5)   -> [N, 58, 12]
    xp = jnp.pad(xi, ((0, 0), (4, 5), (1, 1)))
    # conv1 im2col: patches[n, h*5+w, kh*4+kw] = xp[n, 2h+kh, 2w+kw]
    slabs = []
    for kh in range(KH1):
        for kw in range(KW1):
            slabs.append(xp[:, kh:kh + 2 * OH:2, kw:kw + 2 * OW:2])  # [N,25,5]
    patches = jnp.stack(slabs, axis=-1).reshape(N, F, KH1 * KW1)     # [N,125,40]

    bt = min(8, N)                                 # samples per grid step
    npad = ((N + bt - 1) // bt) * bt
    if npad != N:
        patches = jnp.pad(patches, ((0, npad - N), (0, 0), (0, 0)))

    out = pl.pallas_call(
        _dscnn_kernel,
        out_shape=jax.ShapeDtypeStruct((npad, NUM_CLASSES), jnp.float32),
        grid=(npad // bt,),
        in_specs=[
            pl.BlockSpec((bt, F, KH1 * KW1), lambda n: (n, 0, 0)),
            pl.BlockSpec((KH1 * KW1, CH), lambda n: (0, 0)),
            pl.BlockSpec((1, CH), lambda n: (0, 0)),
            pl.BlockSpec((NBLK, 9, CH), lambda n: (0, 0, 0)),
            pl.BlockSpec((NBLK, CH), lambda n: (0, 0)),
            pl.BlockSpec((NBLK, CH, CH), lambda n: (0, 0, 0)),
            pl.BlockSpec((NBLK, CH), lambda n: (0, 0)),
            pl.BlockSpec((CH, NUM_CLASSES), lambda n: (0, 0)),
            pl.BlockSpec((1, NUM_CLASSES), lambda n: (0, 0)),
        ],
        out_specs=pl.BlockSpec((bt, NUM_CLASSES), lambda n: (n, 0)),
        compiler_params=pltpu.CompilerParams(
            dimension_semantics=("parallel",)),
    )(patches, params["conv1_w"], params["conv1_b"],
      params["dw_w"], params["dw_b"], params["pw_w"], params["pw_b"],
      params["fc_w"], params["fc_b"])
    return out[:N]                                 # [N, 12]


if __name__ == "__main__":
    key = jax.random.PRNGKey(0)
    kx, kp = jax.random.split(key)
    x = jax.random.normal(kx, (2, 1, 49, 10), jnp.float32)    # NCHW like PyTorch
    params = init_params(kp)

    out = jax.jit(ds_cnn_forward)(x, params)
    out = jax.block_until_ready(out)
    assert out.shape == (2, NUM_CLASSES), out.shape
    assert bool(jnp.all(jnp.isfinite(out)))
    print("KERNEL_OK")
</pallas_src>

<mosaic_0001>
module attributes {stable_mosaic.version = 11 : i64} {
  func.func @_dscnn_kernel(%arg0: i32, %arg1: memref<2x125x40xf32, #tpu.memory_space<vmem>>, %arg2: memref<40x64xf32, #tpu.memory_space<vmem>>, %arg3: memref<1x64xf32, #tpu.memory_space<vmem>>, %arg4: memref<4x9x64xf32, #tpu.memory_space<vmem>>, %arg5: memref<4x64xf32, #tpu.memory_space<vmem>>, %arg6: memref<4x64x64xf32, #tpu.memory_space<vmem>>, %arg7: memref<4x64xf32, #tpu.memory_space<vmem>>, %arg8: memref<64x12xf32, #tpu.memory_space<vmem>>, %arg9: memref<1x12xf32, #tpu.memory_space<vmem>>, %arg10: memref<2x12xf32, #tpu.memory_space<vmem>>) attributes {dimension_semantics = [#tpu.dimension_semantics<parallel>], iteration_bounds = array<i64: 1>, scalar_prefetch = 0 : i64, scratch_operands = 0 : i64, tpu.core_type = #tpu.core_type<tc>, window_params = [{transform_indices = @transform_0, window_bounds = array<i64: 2, 125, 40>}, {pipeline_mode = #tpu.pipeline_mode<synchronous>, transform_indices = @transform_1, window_bounds = array<i64: 40, 64>}, {pipeline_mode = #tpu.pipeline_mode<synchronous>, transform_indices = @transform_2, window_bounds = array<i64: 1, 64>}, {pipeline_mode = #tpu.pipeline_mode<synchronous>, transform_indices = @transform_3, window_bounds = array<i64: 4, 9, 64>}, {pipeline_mode = #tpu.pipeline_mode<synchronous>, transform_indices = @transform_4, window_bounds = array<i64: 4, 64>}, {pipeline_mode = #tpu.pipeline_mode<synchronous>, transform_indices = @transform_5, window_bounds = array<i64: 4, 64, 64>}, {pipeline_mode = #tpu.pipeline_mode<synchronous>, transform_indices = @transform_6, window_bounds = array<i64: 4, 64>}, {pipeline_mode = #tpu.pipeline_mode<synchronous>, transform_indices = @transform_7, window_bounds = array<i64: 64, 12>}, {pipeline_mode = #tpu.pipeline_mode<synchronous>, transform_indices = @transform_8, window_bounds = array<i64: 1, 12>}, {transform_indices = @transform_9, window_bounds = array<i64: 2, 12>}]} {
    %c0 = arith.constant 0 : index
    %c0_0 = arith.constant 0 : index
    %0 = vector.load %arg2[%c0, %c0_0] : memref<40x64xf32, #tpu.memory_space<vmem>>, vector<40x64xf32>
    %c0_1 = arith.constant 0 : index
    %c0_2 = arith.constant 0 : index
    %1 = vector.load %arg3[%c0_1, %c0_2] : memref<1x64xf32, #tpu.memory_space<vmem>>, vector<1x64xf32>
    %c0_3 = arith.constant 0 : index
    %c0_4 = arith.constant 0 : index
    %2 = vector.load %arg8[%c0_3, %c0_4] : memref<64x12xf32, #tpu.memory_space<vmem>>, vector<64x12xf32>
    %c0_5 = arith.constant 0 : index
    %c0_6 = arith.constant 0 : index
    %3 = vector.load %arg9[%c0_5, %c0_6] : memref<1x12xf32, #tpu.memory_space<vmem>>, vector<1x12xf32>
    %4 = tpu.iota {dimensions = array<i32: 0>} : vector<125x1xi32>
    %c5_i32 = arith.constant 5 : i32
    %c0_i32 = arith.constant 0 : i32
    %5 = arith.cmpi eq, %c5_i32, %c0_i32 : i32
    %c1_i32 = arith.constant 1 : i32
    %6 = arith.select %5, %c1_i32, %c5_i32 : i32
    %7 = vector.broadcast %6 : i32 to vector<125x1xi32>
    %8 = arith.remsi %4, %7 : vector<125x1xi32>
    %c0_i32_7 = arith.constant 0 : i32
    %9 = vector.broadcast %c0_i32_7 : i32 to vector<125x1xi32>
    %10 = arith.cmpi ne, %8, %9 : vector<125x1xi32>
    %c0_i32_8 = arith.constant 0 : i32
    %11 = vector.broadcast %c0_i32_8 : i32 to vector<125x1xi32>
    %12 = arith.cmpi slt, %8, %11 : vector<125x1xi32>
    %c0_i32_9 = arith.constant 0 : i32
    %13 = arith.cmpi slt, %6, %c0_i32_9 : i32
    %14 = vector.broadcast %13 : i1 to vector<125x1xi1>
    %15 = vector.broadcast %14 : vector<125x1xi1> to vector<125x1xi1>
    %16 = arith.xori %12, %15 : vector<125x1xi1>
    %17 = arith.andi %16, %10 : vector<125x1xi1>
    %18 = vector.broadcast %6 : i32 to vector<125x1xi32>
    %19 = arith.addi %8, %18 : vector<125x1xi32>
    %20 = arith.select %17, %19, %8 : vector<125x1xi1>, vector<125x1xi32>
    %c0_i32_10 = arith.constant 0 : i32
    %21 = vector.broadcast %c0_i32_10 : i32 to vector<125x1xi32>
    %22 = arith.cmpi ne, %20, %21 : vector<125x1xi32>
    %23 = arith.extui %22 : vector<125x1xi1> to vector<125x1xi32>
    %24 = arith.sitofp %23 : vector<125x1xi32> to vector<125x1xf32>
    %c4_i32 = arith.constant 4 : i32
    %25 = vector.broadcast %c4_i32 : i32 to vector<125x1xi32>
    %26 = arith.cmpi ne, %20, %25 : vector<125x1xi32>
    %27 = arith.extui %26 : vector<125x1xi1> to vector<125x1xi32>
    %28 = arith.sitofp %27 : vector<125x1xi32> to vector<125x1xf32>
    %cst = arith.constant 0.000000e+00 : f32
    %29 = vector.broadcast %cst : f32 to vector<6x64xf32>
    %c0_11 = arith.constant 0 : index
    %c0_12 = arith.constant 0 : index
    %c0_13 = arith.constant 0 : index
    %30 = vector.load %arg1[%c0_11, %c0_12, %c0_13] : memref<2x125x40xf32, #tpu.memory_space<vmem>>, vector<1x125x40xf32>
    %31 = vector.shape_cast %30 : vector<1x125x40xf32> to vector<125x40xf32>
    %cst_14 = arith.constant dense<0.000000e+00> : vector<125x64xf32>
    %32 = tpu.matmul %31, %0, %cst_14 {dimension_numbers = #tpu.dot_dimension_numbers<[1], [0], [0], [1], [0, 0, 1, 1], [], []>} : vector<125x40xf32>, vector<40x64xf32>, vector<125x64xf32> -> vector<125x64xf32>
    %33 = vector.broadcast %1 : vector<1x64xf32> to vector<125x64xf32>
    %34 = arith.addf %32, %33 : vector<125x64xf32>
    %cst_15 = arith.constant 0.000000e+00 : f32
    %35 = vector.broadcast %cst_15 : f32 to vector<125x64xf32>
    %36 = arith.maximumf %34, %35 : vector<125x64xf32>
    %c0_16 = arith.constant 0 : index
    %c0_17 = arith.constant 0 : index
    %c0_18 = arith.constant 0 : index
    %37 = vector.load %arg4[%c0_16, %c0_17, %c0_18] : memref<4x9x64xf32, #tpu.memory_space<vmem>>, vector<1x9x64xf32>
    %38 = vector.shape_cast %37 : vector<1x9x64xf32> to vector<9x64xf32>
    %39 = tpu.concatenate %29, %36, %29 in 0 : vector<6x64xf32>, vector<125x64xf32>, vector<6x64xf32> -> vector<137x64xf32>
    %cst_19 = arith.constant 0.000000e+00 : f32
    %40 = vector.broadcast %cst_19 : f32 to vector<125x64xf32>
    %41 = vector.extract_strided_slice %39 {offsets = [0, 0], sizes = [125, 64], strides = [1, 1]} : vector<137x64xf32> to vector<125x64xf32>
    %42 = vector.extract_strided_slice %38 {offsets = [0, 0], sizes = [1, 64], strides = [1, 1]} : vector<9x64xf32> to vector<1x64xf32>
    %43 = vector.broadcast %42 : vector<1x64xf32> to vector<125x64xf32>
    %44 = arith.mulf %41, %43 : vector<125x64xf32>
    %45 = arith.addf %40, %44 : vector<125x64xf32>
    %46 = vector.extract_strided_slice %39 {offsets = [5, 0], sizes = [125, 64], strides = [1, 1]} : vector<137x64xf32> to vector<125x64xf32>
    %47 = vector.extract_strided_slice %38 {offsets = [3, 0], sizes = [1, 64], strides = [1, 1]} : vector<9x64xf32> to vector<1x64xf32>
    %48 = vector.broadcast %47 : vector<1x64xf32> to vector<125x64xf32>
    %49 = arith.mulf %46, %48 : vector<125x64xf32>
    %50 = arith.addf %45, %49 : vector<125x64xf32>
    %51 = vector.extract_strided_slice %39 {offsets = [10, 0], sizes = [125, 64], strides = [1, 1]} : vector<137x64xf32> to vector<125x64xf32>
    %52 = vector.extract_strided_slice %38 {offsets = [6, 0], sizes = [1, 64], strides = [1, 1]} : vector<9x64xf32> to vector<1x64xf32>
    %53 = vector.broadcast %52 : vector<1x64xf32> to vector<125x64xf32>
    %54 = arith.mulf %51, %53 : vector<125x64xf32>
    %55 = arith.addf %50, %54 : vector<125x64xf32>
    %cst_20 = arith.constant 0.000000e+00 : f32
    %56 = vector.broadcast %cst_20 : f32 to vector<125x64xf32>
    %57 = vector.extract_strided_slice %39 {offsets = [1, 0], sizes = [125, 64], strides = [1, 1]} : vector<137x64xf32> to vector<125x64xf32>
    %58 = vector.extract_strided_slice %38 {offsets = [1, 0], sizes = [1, 64], strides = [1, 1]} : vector<9x64xf32> to vector<1x64xf32>
    %59 = vector.broadcast %58 : vector<1x64xf32> to vector<125x64xf32>
    %60 = arith.mulf %57, %59 : vector<125x64xf32>
    %61 = arith.addf %56, %60 : vector<125x64xf32>
    %62 = vector.extract_strided_slice %39 {offsets = [6, 0], sizes = [125, 64], strides = [1, 1]} : vector<137x64xf32> to vector<125x64xf32>
    %63 = vector.extract_strided_slice %38 {offsets = [4, 0], sizes = [1, 64], strides = [1, 1]} : vector<9x64xf32> to vector<1x64xf32>
    %64 = vector.broadcast %63 : vector<1x64xf32> to vector<125x64xf32>
    %65 = arith.mulf %62, %64 : vector<125x64xf32>
    %66 = arith.addf %61, %65 : vector<125x64xf32>
    %67 = vector.extract_strided_slice %39 {offsets = [11, 0], sizes = [125, 64], strides = [1, 1]} : vector<137x64xf32> to vector<125x64xf32>
    %68 = vector.extract_strided_slice %38 {offsets = [7, 0], sizes = [1, 64], strides = [1, 1]} : vector<9x64xf32> to vector<1x64xf32>
    %69 = vector.broadcast %68 : vector<1x64xf32> to vector<125x64xf32>
    %70 = arith.mulf %67, %69 : vector<125x64xf32>
    %71 = arith.addf %66, %70 : vector<125x64xf32>
    %cst_21 = arith.constant 0.000000e+00 : f32
    %72 = vector.broadcast %cst_21 : f32 to vector<125x64xf32>
    %73 = vector.extract_strided_slice %39 {offsets = [2, 0], sizes = [125, 64], strides = [1, 1]} : vector<137x64xf32> to vector<125x64xf32>
    %74 = vector.extract_strided_slice %38 {offsets = [2, 0], sizes = [1, 64], strides = [1, 1]} : vector<9x64xf32> to vector<1x64xf32>
    %75 = vector.broadcast %74 : vector<1x64xf32> to vector<125x64xf32>
    %76 = arith.mulf %73, %75 : vector<125x64xf32>
    %77 = arith.addf %72, %76 : vector<125x64xf32>
    %78 = vector.extract_strided_slice %39 {offsets = [7, 0], sizes = [125, 64], strides = [1, 1]} : vector<137x64xf32> to vector<125x64xf32>
    %79 = vector.extract_strided_slice %38 {offsets = [5, 0], sizes = [1, 64], strides = [1, 1]} : vector<9x64xf32> to vector<1x64xf32>
    %80 = vector.broadcast %79 : vector<1x64xf32> to vector<125x64xf32>
    %81 = arith.mulf %78, %80 : vector<125x64xf32>
    %82 = arith.addf %77, %81 : vector<125x64xf32>
    %83 = vector.extract_strided_slice %39 {offsets = [12, 0], sizes = [125, 64], strides = [1, 1]} : vector<137x64xf32> to vector<125x64xf32>
    %84 = vector.extract_strided_slice %38 {offsets = [8, 0], sizes = [1, 64], strides = [1, 1]} : vector<9x64xf32> to vector<1x64xf32>
    %85 = vector.broadcast %84 : vector<1x64xf32> to vector<125x64xf32>
    %86 = arith.mulf %83, %85 : vector<125x64xf32>
    %87 = arith.addf %82, %86 : vector<125x64xf32>
    %88 = vector.broadcast %24 : vector<125x1xf32> to vector<125x64xf32>
    %89 = arith.mulf %55, %88 : vector<125x64xf32>
    %90 = arith.addf %89, %71 : vector<125x64xf32>
    %91 = vector.broadcast %28 : vector<125x1xf32> to vector<125x64xf32>
    %92 = arith.mulf %87, %91 : vector<125x64xf32>
    %93 = arith.addf %90, %92 : vector<125x64xf32>
    %c0_22 = arith.constant 0 : index
    %c0_23 = arith.constant 0 : index
    %94 = vector.load %arg5[%c0_22, %c0_23] : memref<4x64xf32, #tpu.memory_space<vmem>>, vector<1x64xf32>
    %95 = vector.broadcast %94 : vector<1x64xf32> to vector<125x64xf32>
    %96 = arith.addf %93, %95 : vector<125x64xf32>
    %cst_24 = arith.constant 0.000000e+00 : f32
    %97 = vector.broadcast %cst_24 : f32 to vector<125x64xf32>
    %98 = arith.maximumf %96, %97 : vector<125x64xf32>
    %c0_25 = arith.constant 0 : index
    %c0_26 = arith.constant 0 : index
    %c0_27 = arith.constant 0 : index
    %99 = vector.load %arg6[%c0_25, %c0_26, %c0_27] : memref<4x64x64xf32, #tpu.memory_space<vmem>>, vector<1x64x64xf32>
    %100 = vector.shape_cast %99 : vector<1x64x64xf32> to vector<64x64xf32>
    %cst_28 = arith.constant dense<0.000000e+00> : vector<125x64xf32>
    %101 = tpu.matmul %98, %100, %cst_28 {dimension_numbers = #tpu.dot_dimension_numbers<[1], [0], [0], [1], [0, 0, 1, 1], [], []>} : vector<125x64xf32>, vector<64x64xf32>, vector<125x64xf32> -> vector<125x64xf32>
    %c0_29 = arith.constant 0 : index
    %c0_30 = arith.constant 0 : index
    %102 = vector.load %arg7[%c0_29, %c0_30] : memref<4x64xf32, #tpu.memory_space<vmem>>, vector<1x64xf32>
    %103 = vector.broadcast %102 : vector<1x64xf32> to vector<125x64xf32>
    %104 = arith.addf %101, %103 : vector<125x64xf32>
    %cst_31 = arith.constant 0.000000e+00 : f32
    %105 = vector.broadcast %cst_31 : f32 to vector<125x64xf32>
    %106 = arith.maximumf %104, %105 : vector<125x64xf32>
    %c1 = arith.constant 1 : index
    %c0_32 = arith.constant 0 : index
    %c0_33 = arith.constant 0 : index
    %107 = vector.load %arg4[%c1, %c0_32, %c0_33] : memref<4x9x64xf32, #tpu.memory_space<vmem>>, vector<1x9x64xf32>
    %108 = vector.shape_cast %107 : vector<1x9x64xf32> to vector<9x64xf32>
    %109 = tpu.concatenate %29, %106, %29 in 0 : vector<6x64xf32>, vector<125x64xf32>, vector<6x64xf32> -> vector<137x64xf32>
    %cst_34 = arith.constant 0.000000e+00 : f32
    %110 = vector.broadcast %cst_34 : f32 to vector<125x64xf32>
    %111 = vector.extract_strided_slice %109 {offsets = [0, 0], sizes = [125, 64], strides = [1, 1]} : vector<137x64xf32> to vector<125x64xf32>
    %112 = vector.extract_strided_slice %108 {offsets = [0, 0], sizes = [1, 64], strides = [1, 1]} : vector<9x64xf32> to vector<1x64xf32>
    %113 = vector.broadcast %112 : vector<1x64xf32> to vector<125x64xf32>
    %114 = arith.mulf %111, %113 : vector<125x64xf32>
    %115 = arith.addf %110, %114 : vector<125x64xf32>
    %116 = vector.extract_strided_slice %109 {offsets = [5, 0], sizes = [125, 64], strides = [1, 1]} : vector<137x64xf32> to vector<125x64xf32>
    %117 = vector.extract_strided_slice %108 {offsets = [3, 0], sizes = [1, 64], strides = [1, 1]} : vector<9x64xf32> to vector<1x64xf32>
    %118 = vector.broadcast %117 : vector<1x64xf32> to vector<125x64xf32>
    %119 = arith.mulf %116, %118 : vector<125x64xf32>
    %120 = arith.addf %115, %119 : vector<125x64xf32>
    %121 = vector.extract_strided_slice %109 {offsets = [10, 0], sizes = [125, 64], strides = [1, 1]} : vector<137x64xf32> to vector<125x64xf32>
    %122 = vector.extract_strided_slice %108 {offsets = [6, 0], sizes = [1, 64], strides = [1, 1]} : vector<9x64xf32> to vector<1x64xf32>
    %123 = vector.broadcast %122 : vector<1x64xf32> to vector<125x64xf32>
    %124 = arith.mulf %121, %123 : vector<125x64xf32>
    %125 = arith.addf %120, %124 : vector<125x64xf32>
    %cst_35 = arith.constant 0.000000e+00 : f32
    %126 = vector.broadcast %cst_35 : f32 to vector<125x64xf32>
    %127 = vector.extract_strided_slice %109 {offsets = [1, 0], sizes = [125, 64], strides = [1, 1]} : vector<137x64xf32> to vector<125x64xf32>
    %128 = vector.extract_strided_slice %108 {offsets = [1, 0], sizes = [1, 64], strides = [1, 1]} : vector<9x64xf32> to vector<1x64xf32>
    %129 = vector.broadcast %128 : vector<1x64xf32> to vector<125x64xf32>
    %130 = arith.mulf %127, %129 : vector<125x64xf32>
    %131 = arith.addf %126, %130 : vector<125x64xf32>
    %132 = vector.extract_strided_slice %109 {offsets = [6, 0], sizes = [125, 64], strides = [1, 1]} : vector<137x64xf32> to vector<125x64xf32>
    %133 = vector.extract_strided_slice %108 {offsets = [4, 0], sizes = [1, 64], strides = [1, 1]} : vector<9x64xf32> to vector<1x64xf32>
    %134 = vector.broadcast %133 : vector<1x64xf32> to vector<125x64xf32>
    %135 = arith.mulf %132, %134 : vector<125x64xf32>
    %136 = arith.addf %131, %135 : vector<125x64xf32>
    %137 = vector.extract_strided_slice %109 {offsets = [11, 0], sizes = [125, 64], strides = [1, 1]} : vector<137x64xf32> to vector<125x64xf32>
    %138 = vector.extract_strided_slice %108 {offsets = [7, 0], sizes = [1, 64], strides = [1, 1]} : vector<9x64xf32> to vector<1x64xf32>
    %139 = vector.broadcast %138 : vector<1x64xf32> to vector<125x64xf32>
    %140 = arith.mulf %137, %139 : vector<125x64xf32>
    %141 = arith.addf %136, %140 : vector<125x64xf32>
    %cst_36 = arith.constant 0.000000e+00 : f32
    %142 = vector.broadcast %cst_36 : f32 to vector<125x64xf32>
    %143 = vector.extract_strided_slice %109 {offsets = [2, 0], sizes = [125, 64], strides = [1, 1]} : vector<137x64xf32> to vector<125x64xf32>
    %144 = vector.extract_strided_slice %108 {offsets = [2, 0], sizes = [1, 64], strides = [1, 1]} : vector<9x64xf32> to vector<1x64xf32>
    %145 = vector.broadcast %144 : vector<1x64xf32> to vector<125x64xf32>
    %146 = arith.mulf %143, %145 : vector<125x64xf32>
    %147 = arith.addf %142, %146 : vector<125x64xf32>
    %148 = vector.extract_strided_slice %109 {offsets = [7, 0], sizes = [125, 64], strides = [1, 1]} : vector<137x64xf32> to vector<125x64xf32>
    %149 = vector.extract_strided_slice %108 {offsets = [5, 0], sizes = [1, 64], strides = [1, 1]} : vector<9x64xf32> to vector<1x64xf32>
    %150 = vector.broadcast %149 : vector<1x64xf32> to vector<125x64xf32>
    %151 = arith.mulf %148, %150 : vector<125x64xf32>
    %152 = arith.addf %147, %151 : vector<125x64xf32>
    %153 = vector.extract_strided_slice %109 {offsets = [12, 0], sizes = [125, 64], strides = [1, 1]} : vector<137x64xf32> to vector<125x64xf32>
    %154 = vector.extract_strided_slice %108 {offsets = [8, 0], sizes = [1, 64], strides = [1, 1]} : vector<9x64xf32> to vector<1x64xf32>
    %155 = vector.broadcast %154 : vector<1x64xf32> to vector<125x64xf32>
    %156 = arith.mulf %153, %155 : vector<125x64xf32>
    %157 = arith.addf %152, %156 : vector<125x64xf32>
    %158 = vector.broadcast %24 : vector<125x1xf32> to vector<125x64xf32>
    %159 = arith.mulf %125, %158 : vector<125x64xf32>
    %160 = arith.addf %159, %141 : vector<125x64xf32>
    %161 = vector.broadcast %28 : vector<125x1xf32> to vector<125x64xf32>
    %162 = arith.mulf %157, %161 : vector<125x64xf32>
    %163 = arith.addf %160, %162 : vector<125x64xf32>
    %c1_37 = arith.constant 1 : index
    %c0_38 = arith.constant 0 : index
    %164 = vector.load %arg5[%c1_37, %c0_38] : memref<4x64xf32, #tpu.memory_space<vmem>>, vector<1x64xf32>
    %165 = vector.broadcast %164 : vector<1x64xf32> to vector<125x64xf32>
    %166 = arith.addf %163, %165 : vector<125x64xf32>
    %cst_39 = arith.constant 0.000000e+00 : f32
    %167 = vector.broadcast %cst_39 : f32 to vector<125x64xf32>
    %168 = arith.maximumf %166, %167 : vector<125x64xf32>
    %c1_40 = arith.constant 1 : index
    %c0_41 = arith.constant 0 : index
    %c0_42 = arith.constant 0 : index
    %169 = vector.load %arg6[%c1_40, %c0_41, %c0_42] : memref<4x64x64xf32, #tpu.memory_space<vmem>>, vector<1x64x64xf32>
    %170 = vector.shape_cast %169 : vector<1x64x64xf32> to vector<64x64xf32>
    %cst_43 = arith.constant dense<0.000000e+00> : vector<125x64xf32>
    %171 = tpu.matmul %168, %170, %cst_43 {dimension_numbers = #tpu.dot_dimension_numbers<[1], [0], [0], [1], [0, 0, 1, 1], [], []>} : vector<125x64xf32>, vector<64x64xf32>, vector<125x64xf32> -> vector<125x64xf32>
    %c1_44 = arith.constant 1 : index
    %c0_45 = arith.constant 0 : index
    %172 = vector.load %arg7[%c1_44, %c0_45] : memref<4x64xf32, #tpu.memory_space<vmem>>, vector<1x64xf32>
    %173 = vector.broadcast %172 : vector<1x64xf32> to vector<125x64xf32>
    %174 = arith.addf %171, %173 : vector<125x64xf32>
    %cst_46 = arith.constant 0.000000e+00 : f32
    %175 = vector.broadcast %cst_46 : f32 to vector<125x64xf32>
    %176 = arith.maximumf %174, %175 : vector<125x64xf32>
    %c2 = arith.constant 2 : index
    %c0_47 = arith.constant 0 : index
    %c0_48 = arith.constant 0 : index
    %177 = vector.load %arg4[%c2, %c0_47, %c0_48] : memref<4x9x64xf32, #tpu.memory_space<vmem>>, vector<1x9x64xf32>
    %178 = vector.shape_cast %177 : vector<1x9x64xf32> to vector<9x64xf32>
    %179 = tpu.concatenate %29, %176, %29 in 0 : vector<6x64xf32>, vector<125x64xf32>, vector<6x64xf32> -> vector<137x64xf32>
    %cst_49 = arith.constant 0.000000e+00 : f32
    %180 = vector.broadcast %cst_49 : f32 to vector<125x64xf32>
    %181 = vector.extract_strided_slice %179 {offsets = [0, 0], sizes = [125, 64], strides = [1, 1]} : vector<137x64xf32> to vector<125x64xf32>
    %182 = vector.extract_strided_slice %178 {offsets = [0, 0], sizes = [1, 64], strides = [1, 1]} : vector<9x64xf32> to vector<1x64xf32>
    %183 = vector.broadcast %182 : vector<1x64xf32> to vector<125x64xf32>
    %184 = arith.mulf %181, %183 : vector<125x64xf32>
    %185 = arith.addf %180, %184 : vector<125x64xf32>
    %186 = vector.extract_strided_slice %179 {offsets = [5, 0], sizes = [125, 64], strides = [1, 1]} : vector<137x64xf32> to vector<125x64xf32>
    %187 = vector.extract_strided_slice %178 {offsets = [3, 0], sizes = [1, 64], strides = [1, 1]} : vector<9x64xf32> to vector<1x64xf32>
    %188 = vector.broadcast %187 : vector<1x64xf32> to vector<125x64xf32>
    %189 = arith.mulf %186, %188 : vector<125x64xf32>
    %190 = arith.addf %185, %189 : vector<125x64xf32>
    %191 = vector.extract_strided_slice %179 {offsets = [10, 0], sizes = [125, 64], strides = [1, 1]} : vector<137x64xf32> to vector<125x64xf32>
    %192 = vector.extract_strided_slice %178 {offsets = [6, 0], sizes = [1, 64], strides = [1, 1]} : vector<9x64xf32> to vector<1x64xf32>
    %193 = vector.broadcast %192 : vector<1x64xf32> to vector<125x64xf32>
    %194 = arith.mulf %191, %193 : vector<125x64xf32>
    %195 = arith.addf %190, %194 : vector<125x64xf32>
    %cst_50 = arith.constant 0.000000e+00 : f32
    %196 = vector.broadcast %cst_50 : f32 to vector<125x64xf32>
    %197 = vector.extract_strided_slice %179 {offsets = [1, 0], sizes = [125, 64], strides = [1, 1]} : vector<137x64xf32> to vector<125x64xf32>
    %198 = vector.extract_strided_slice %178 {offsets = [1, 0], sizes = [1, 64], strides = [1, 1]} : vector<9x64xf32> to vector<1x64xf32>
    %199 = vector.broadcast %198 : vector<1x64xf32> to vector<125x64xf32>
    %200 = arith.mulf %197, %199 : vector<125x64xf32>
    %201 = arith.addf %196, %200 : vector<125x64xf32>
    %202 = vector.extract_strided_slice %179 {offsets = [6, 0], sizes = [125, 64], strides = [1, 1]} : vector<137x64xf32> to vector<125x64xf32>
    %203 = vector.extract_strided_slice %178 {offsets = [4, 0], sizes = [1, 64], strides = [1, 1]} : vector<9x64xf32> to vector<1x64xf32>
    %204 = vector.broadcast %203 : vector<1x64xf32> to vector<125x64xf32>
    %205 = arith.mulf %202, %204 : vector<125x64xf32>
    %206 = arith.addf %201, %205 : vector<125x64xf32>
    %207 = vector.extract_strided_slice %179 {offsets = [11, 0], sizes = [125, 64], strides = [1, 1]} : vector<137x64xf32> to vector<125x64xf32>
    %208 = vector.extract_strided_slice %178 {offsets = [7, 0], sizes = [1, 64], strides = [1, 1]} : vector<9x64xf32> to vector<1x64xf32>
    %209 = vector.broadcast %208 : vector<1x64xf32> to vector<125x64xf32>
    %210 = arith.mulf %207, %209 : vector<125x64xf32>
    %211 = arith.addf %206, %210 : vector<125x64xf32>
    %cst_51 = arith.constant 0.000000e+00 : f32
    %212 = vector.broadcast %cst_51 : f32 to vector<125x64xf32>
    %213 = vector.extract_strided_slice %179 {offsets = [2, 0], sizes = [125, 64], strides = [1, 1]} : vector<137x64xf32> to vector<125x64xf32>
    %214 = vector.extract_strided_slice %178 {offsets = [2, 0], sizes = [1, 64], strides = [1, 1]} : vector<9x64xf32> to vector<1x64xf32>
    %215 = vector.broadcast %214 : vector<1x64xf32> to vector<125x64xf32>
    %216 = arith.mulf %213, %215 : vector<125x64xf32>
    %217 = arith.addf %212, %216 : vector<125x64xf32>
    %218 = vector.extract_strided_slice %179 {offsets = [7, 0], sizes = [125, 64], strides = [1, 1]} : vector<137x64xf32> to vector<125x64xf32>
    %219 = vector.extract_strided_slice %178 {offsets = [5, 0], sizes = [1, 64], strides = [1, 1]} : vector<9x64xf32> to vector<1x64xf32>
    %220 = vector.broadcast %219 : vector<1x64xf32> to vector<125x64xf32>
    %221 = arith.mulf %218, %220 : vector<125x64xf32>
    %222 = arith.addf %217, %221 : vector<125x64xf32>
    %223 = vector.extract_strided_slice %179 {offsets = [12, 0], sizes = [125, 64], strides = [1, 1]} : vector<137x64xf32> to vector<125x64xf32>
    %224 = vector.extract_strided_slice %178 {offsets = [8, 0], sizes = [1, 64], strides = [1, 1]} : vector<9x64xf32> to vector<1x64xf32>
    %225 = vector.broadcast %224 : vector<1x64xf32> to vector<125x64xf32>
    %226 = arith.mulf %223, %225 : vector<125x64xf32>
    %227 = arith.addf %222, %226 : vector<125x64xf32>
    %228 = vector.broadcast %24 : vector<125x1xf32> to vector<125x64xf32>
    %229 = arith.mulf %195, %228 : vector<125x64xf32>
    %230 = arith.addf %229, %211 : vector<125x64xf32>
    %231 = vector.broadcast %28 : vector<125x1xf32> to vector<125x64xf32>
    %232 = arith.mulf %227, %231 : vector<125x64xf32>
    %233 = arith.addf %230, %232 : vector<125x64xf32>
    %c2_52 = arith.constant 2 : index
    %c0_53 = arith.constant 0 : index
    %234 = vector.load %arg5[%c2_52, %c0_53] : memref<4x64xf32, #tpu.memory_space<vmem>>, vector<1x64xf32>
    %235 = vector.broadcast %234 : vector<1x64xf32> to vector<125x64xf32>
    %236 = arith.addf %233, %235 : vector<125x64xf32>
    %cst_54 = arith.constant 0.000000e+00 : f32
    %237 = vector.broadcast %cst_54 : f32 to vector<125x64xf32>
    %238 = arith.maximumf %236, %237 : vector<125x64xf32>
    %c2_55 = arith.constant 2 : index
    %c0_56 = arith.constant 0 : index
    %c0_57 = arith.constant 0 : index
    %239 = vector.load %arg6[%c2_55, %c0_56, %c0_57] : memref<4x64x64xf32, #tpu.memory_space<vmem>>, vector<1x64x64xf32>
    %240 = vector.shape_cast %239 : vector<1x64x64xf32> to vector<64x64xf32>
    %cst_58 = arith.constant dense<0.000000e+00> : vector<125x64xf32>
    %241 = tpu.matmul %238, %240, %cst_58 {dimension_numbers = #tpu.dot_dimension_numbers<[1], [0], [0], [1], [0, 0, 1, 1], [], []>} : vector<125x64xf32>, vector<64x64xf32>, vector<125x64xf32> -> vector<125x64xf32>
    %c2_59 = arith.constant 2 : index
    %c0_60 = arith.constant 0 : index
    %242 = vector.load %arg7[%c2_59, %c0_60] : memref<4x64xf32, #tpu.memory_space<vmem>>, vector<1x64xf32>
    %243 = vector.broadcast %242 : vector<1x64xf32> to vector<125x64xf32>
    %244 = arith.addf %241, %243 : vector<125x64xf32>
    %cst_61 = arith.constant 0.000000e+00 : f32
    %245 = vector.broadcast %cst_61 : f32 to vector<125x64xf32>
    %246 = arith.maximumf %244, %245 : vector<125x64xf32>
    %c3 = arith.constant 3 : index
    %c0_62 = arith.constant 0 : index
    %c0_63 = arith.constant 0 : index
    %247 = vector.load %arg4[%c3, %c0_62, %c0_63] : memref<4x9x64xf32, #tpu.memory_space<vmem>>, vector<1x9x64xf32>
    %248 = vector.shape_cast %247 : vector<1x9x64xf32> to vector<9x64xf32>
    %249 = tpu.concatenate %29, %246, %29 in 0 : vector<6x64xf32>, vector<125x64xf32>, vector<6x64xf32> -> vector<137x64xf32>
    %cst_64 = arith.constant 0.000000e+00 : f32
    %250 = vector.broadcast %cst_64 : f32 to vector<125x64xf32>
    %251 = vector.extract_strided_slice %249 {offsets = [0, 0], sizes = [125, 64], strides = [1, 1]} : vector<137x64xf32> to vector<125x64xf32>
    %252 = vector.extract_strided_slice %248 {offsets = [0, 0], sizes = [1, 64], strides = [1, 1]} : vector<9x64xf32> to vector<1x64xf32>
    %253 = vector.broadcast %252 : vector<1x64xf32> to vector<125x64xf32>
    %254 = arith.mulf %251, %253 : vector<125x64xf32>
    %255 = arith.addf %250, %254 : vector<125x64xf32>
    %256 = vector.extract_strided_slice %249 {offsets = [5, 0], sizes = [125, 64], strides = [1, 1]} : vector<137x64xf32> to vector<125x64xf32>
    %257 = vector.extract_strided_slice %248 {offsets = [3, 0], sizes = [1, 64], strides = [1, 1]} : vector<9x64xf32> to vector<1x64xf32>
    %258 = vector.broadcast %257 : vector<1x64xf32> to vector<125x64xf32>
    %259 = arith.mulf %256, %258 : vector<125x64xf32>
    %260 = arith.addf %255, %259 : vector<125x64xf32>
    %261 = vector.extract_strided_slice %249 {offsets = [10, 0], sizes = [125, 64], strides = [1, 1]} : vector<137x64xf32> to vector<125x64xf32>
    %262 = vector.extract_strided_slice %248 {offsets = [6, 0], sizes = [1, 64], strides = [1, 1]} : vector<9x64xf32> to vector<1x64xf32>
    %263 = vector.broadcast %262 : vector<1x64xf32> to vector<125x64xf32>
    %264 = arith.mulf %261, %263 : vector<125x64xf32>
    %265 = arith.addf %260, %264 : vector<125x64xf32>
    %cst_65 = arith.constant 0.000000e+00 : f32
    %266 = vector.broadcast %cst_65 : f32 to vector<125x64xf32>
    %267 = vector.extract_strided_slice %249 {offsets = [1, 0], sizes = [125, 64], strides = [1, 1]} : vector<137x64xf32> to vector<125x64xf32>
    %268 = vector.extract_strided_slice %248 {offsets = [1, 0], sizes = [1, 64], strides = [1, 1]} : vector<9x64xf32> to vector<1x64xf32>
    %269 = vector.broadcast %268 : vector<1x64xf32> to vector<125x64xf32>
    %270 = arith.mulf %267, %269 : vector<125x64xf32>
    %271 = arith.addf %266, %270 : vector<125x64xf32>
    %272 = vector.extract_strided_slice %249 {offsets = [6, 0], sizes = [125, 64], strides = [1, 1]} : vector<137x64xf32> to vector<125x64xf32>
    %273 = vector.extract_strided_slice %248 {offsets = [4, 0], sizes = [1, 64], strides = [1, 1]} : vector<9x64xf32> to vector<1x64xf32>
    %274 = vector.broadcast %273 : vector<1x64xf32> to vector<125x64xf32>
    %275 = arith.mulf %272, %274 : vector<125x64xf32>
    %276 = arith.addf %271, %275 : vector<125x64xf32>
    %277 = vector.extract_strided_slice %249 {offsets = [11, 0], sizes = [125, 64], strides = [1, 1]} : vector<137x64xf32> to vector<125x64xf32>
    %278 = vector.extract_strided_slice %248 {offsets = [7, 0], sizes = [1, 64], strides = [1, 1]} : vector<9x64xf32> to vector<1x64xf32>
    %279 = vector.broadcast %278 : vector<1x64xf32> to vector<125x64xf32>
    %280 = arith.mulf %277, %279 : vector<125x64xf32>
    %281 = arith.addf %276, %280 : vector<125x64xf32>
    %cst_66 = arith.constant 0.000000e+00 : f32
    %282 = vector.broadcast %cst_66 : f32 to vector<125x64xf32>
    %283 = vector.extract_strided_slice %249 {offsets = [2, 0], sizes = [125, 64], strides = [1, 1]} : vector<137x64xf32> to vector<125x64xf32>
    %284 = vector.extract_strided_slice %248 {offsets = [2, 0], sizes = [1, 64], strides = [1, 1]} : vector<9x64xf32> to vector<1x64xf32>
    %285 = vector.broadcast %284 : vector<1x64xf32> to vector<125x64xf32>
    %286 = arith.mulf %283, %285 : vector<125x64xf32>
    %287 = arith.addf %282, %286 : vector<125x64xf32>
    %288 = vector.extract_strided_slice %249 {offsets = [7, 0], sizes = [125, 64], strides = [1, 1]} : vector<137x64xf32> to vector<125x64xf32>
    %289 = vector.extract_strided_slice %248 {offsets = [5, 0], sizes = [1, 64], strides = [1, 1]} : vector<9x64xf32> to vector<1x64xf32>
    %290 = vector.broadcast %289 : vector<1x64xf32> to vector<125x64xf32>
    %291 = arith.mulf %288, %290 : vector<125x64xf32>
    %292 = arith.addf %287, %291 : vector<125x64xf32>
    %293 = vector.extract_strided_slice %249 {offsets = [12, 0], sizes = [125, 64], strides = [1, 1]} : vector<137x64xf32> to vector<125x64xf32>
    %294 = vector.extract_strided_slice %248 {offsets = [8, 0], sizes = [1, 64], strides = [1, 1]} : vector<9x64xf32> to vector<1x64xf32>
    %295 = vector.broadcast %294 : vector<1x64xf32> to vector<125x64xf32>
    %296 = arith.mulf %293, %295 : vector<125x64xf32>
    %297 = arith.addf %292, %296 : vector<125x64xf32>
    %298 = vector.broadcast %24 : vector<125x1xf32> to vector<125x64xf32>
    %299 = arith.mulf %265, %298 : vector<125x64xf32>
    %300 = arith.addf %299, %281 : vector<125x64xf32>
    %301 = vector.broadcast %28 : vector<125x1xf32> to vector<125x64xf32>
    %302 = arith.mulf %297, %301 : vector<125x64xf32>
    %303 = arith.addf %300, %302 : vector<125x64xf32>
    %c3_67 = arith.constant 3 : index
    %c0_68 = arith.constant 0 : index
    %304 = vector.load %arg5[%c3_67, %c0_68] : memref<4x64xf32, #tpu.memory_space<vmem>>, vector<1x64xf32>
    %305 = vector.broadcast %304 : vector<1x64xf32> to vector<125x64xf32>
    %306 = arith.addf %303, %305 : vector<125x64xf32>
    %cst_69 = arith.constant 0.000000e+00 : f32
    %307 = vector.broadcast %cst_69 : f32 to vector<125x64xf32>
    %308 = arith.maximumf %306, %307 : vector<125x64xf32>
    %c3_70 = arith.constant 3 : index
    %c0_71 = arith.constant 0 : index
    %c0_72 = arith.constant 0 : index
    %309 = vector.load %arg6[%c3_70, %c0_71, %c0_72] : memref<4x64x64xf32, #tpu.memory_space<vmem>>, vector<1x64x64xf32>
    %310 = vector.shape_cast %309 : vector<1x64x64xf32> to vector<64x64xf32>
    %cst_73 = arith.constant dense<0.000000e+00> : vector<125x64xf32>
    %311 = tpu.matmul %308, %310, %cst_73 {dimension_numbers = #tpu.dot_dimension_numbers<[1], [0], [0], [1], [0, 0, 1, 1], [], []>} : vector<125x64xf32>, vector<64x64xf32>, vector<125x64xf32> -> vector<125x64xf32>
    %c3_74 = arith.constant 3 : index
    %c0_75 = arith.constant 0 : index
    %312 = vector.load %arg7[%c3_74, %c0_75] : memref<4x64xf32, #tpu.memory_space<vmem>>, vector<1x64xf32>
    %313 = vector.broadcast %312 : vector<1x64xf32> to vector<125x64xf32>
    %314 = arith.addf %311, %313 : vector<125x64xf32>
    %cst_76 = arith.constant 0.000000e+00 : f32
    %315 = vector.broadcast %cst_76 : f32 to vector<125x64xf32>
    %316 = arith.maximumf %314, %315 : vector<125x64xf32>
    %317 = vector.extract_strided_slice %316 {offsets = [0, 0], sizes = [120, 64], strides = [1, 1]} : vector<125x64xf32> to vector<120x64xf32>
    %cst_77 = arith.constant dense<0.000000e+00> : vector<64xf32>
    %318 = vector.multi_reduction <add>, %317, %cst_77 [0] : vector<120x64xf32> to vector<64xf32>
    %319 = vector.shape_cast %318 : vector<64xf32> to vector<1x64xf32>
    %cst_78 = arith.constant 0.00833333377 : f32
    %320 = vector.broadcast %cst_78 : f32 to vector<1x64xf32>
    %321 = arith.mulf %319, %320 : vector<1x64xf32>
    %c1_79 = arith.constant 1 : index
    %c0_80 = arith.constant 0 : index
    %c0_81 = arith.constant 0 : index
    %322 = vector.load %arg1[%c1_79, %c0_80, %c0_81] : memref<2x125x40xf32, #tpu.memory_space<vmem>>, vector<1x125x40xf32>
    %323 = vector.shape_cast %322 : vector<1x125x40xf32> to vector<125x40xf32>
    %cst_82 = arith.constant dense<0.000000e+00> : vector<125x64xf32>
    %324 = tpu.matmul %323, %0, %cst_82 {dimension_numbers = #tpu.dot_dimension_numbers<[1], [0], [0], [1], [0, 0, 1, 1], [], []>} : vector<125x40xf32>, vector<40x64xf32>, vector<125x64xf32> -> vector<125x64xf32>
    %325 = vector.broadcast %1 : vector<1x64xf32> to vector<125x64xf32>
    %326 = arith.addf %324, %325 : vector<125x64xf32>
    %cst_83 = arith.constant 0.000000e+00 : f32
    %327 = vector.broadcast %cst_83 : f32 to vector<125x64xf32>
    %328 = arith.maximumf %326, %327 : vector<125x64xf32>
    %c0_84 = arith.constant 0 : index
    %c0_85 = arith.constant 0 : index
    %c0_86 = arith.constant 0 : index
    %329 = vector.load %arg4[%c0_84, %c0_85, %c0_86] : memref<4x9x64xf32, #tpu.memory_space<vmem>>, vector<1x9x64xf32>
    %330 = vector.shape_cast %329 : vector<1x9x64xf32> to vector<9x64xf32>
    %331 = tpu.concatenate %29, %328, %29 in 0 : vector<6x64xf32>, vector<125x64xf32>, vector<6x64xf32> -> vector<137x64xf32>
    %cst_87 = arith.constant 0.000000e+00 : f32
    %332 = vector.broadcast %cst_87 : f32 to vector<125x64xf32>
    %333 = vector.extract_strided_slice %331 {offsets = [0, 0], sizes = [125, 64], strides = [1, 1]} : vector<137x64xf32> to vector<125x64xf32>
    %334 = vector.extract_strided_slice %330 {offsets = [0, 0], sizes = [1, 64], strides = [1, 1]} : vector<9x64xf32> to vector<1x64xf32>
    %335 = vector.broadcast %334 : vector<1x64xf32> to vector<125x64xf32>
    %336 = arith.mulf %333, %335 : vector<125x64xf32>
    %337 = arith.addf %332, %336 : vector<125x64xf32>
    %338 = vector.extract_strided_slice %331 {offsets = [5, 0], sizes = [125, 64], strides = [1, 1]} : vector<137x64xf32> to vector<125x64xf32>
    %339 = vector.extract_strided_slice %330 {offsets = [3, 0], sizes = [1, 64], strides = [1, 1]} : vector<9x64xf32> to vector<1x64xf32>
    %340 = vector.broadcast %339 : vector<1x64xf32> to vector<125x64xf32>
    %341 = arith.mulf %338, %340 : vector<125x64xf32>
    %342 = arith.addf %337, %341 : vector<125x64xf32>
    %343 = vector.extract_strided_slice %331 {offsets = [10, 0], sizes = [125, 64], strides = [1, 1]} : vector<137x64xf32> to vector<125x64xf32>
    %344 = vector.extract_strided_slice %330 {offsets = [6, 0], sizes = [1, 64], strides = [1, 1]} : vector<9x64xf32> to vector<1x64xf32>
    %345 = vector.broadcast %344 : vector<1x64xf32> to vector<125x64xf32>
    %346 = arith.mulf %343, %345 : vector<125x64xf32>
    %347 = arith.addf %342, %346 : vector<125x64xf32>
    %cst_88 = arith.constant 0.000000e+00 : f32
    %348 = vector.broadcast %cst_88 : f32 to vector<125x64xf32>
    %349 = vector.extract_strided_slice %331 {offsets = [1, 0], sizes = [125, 64], strides = [1, 1]} : vector<137x64xf32> to vector<125x64xf32>
    %350 = vector.extract_strided_slice %330 {offsets = [1, 0], sizes = [1, 64], strides = [1, 1]} : vector<9x64xf32> to vector<1x64xf32>
    %351 = vector.broadcast %350 : vector<1x64xf32> to vector<125x64xf32>
    %352 = arith.mulf %349, %351 : vector<125x64xf32>
    %353 = arith.addf %348, %352 : vector<125x64xf32>
    %354 = vector.extract_strided_slice %331 {offsets = [6, 0], sizes = [125, 64], strides = [1, 1]} : vector<137x64xf32> to vector<125x64xf32>
    %355 = vector.extract_strided_slice %330 {offsets = [4, 0], sizes = [1, 64], strides = [1, 1]} : vector<9x64xf32> to vector<1x64xf32>
    %356 = vector.broadcast %355 : vector<1x64xf32> to vector<125x64xf32>
    %357 = arith.mulf %354, %356 : vector<125x64xf32>
    %358 = arith.addf %353, %357 : vector<125x64xf32>
    %359 = vector.extract_strided_slice %331 {offsets = [11, 0], sizes = [125, 64], strides = [1, 1]} : vector<137x64xf32> to vector<125x64xf32>
    %360 = vector.extract_strided_slice %330 {offsets = [7, 0], sizes = [1, 64], strides = [1, 1]} : vector<9x64xf32> to vector<1x64xf32>
    %361 = vector.broadcast %360 : vector<1x64xf32> to vector<125x64xf32>
    %362 = arith.mulf %359, %361 : vector<125x64xf32>
    %363 = arith.addf %358, %362 : vector<125x64xf32>
    %cst_89 = arith.constant 0.000000e+00 : f32
    %364 = vector.broadcast %cst_89 : f32 to vector<125x64xf32>
    %365 = vector.extract_strided_slice %331 {offsets = [2, 0], sizes = [125, 64], strides = [1, 1]} : vector<137x64xf32> to vector<125x64xf32>
    %366 = vector.extract_strided_slice %330 {offsets = [2, 0], sizes = [1, 64], strides = [1, 1]} : vector<9x64xf32> to vector<1x64xf32>
    %367 = vector.broadcast %366 : vector<1x64xf32> to vector<125x64xf32>
    %368 = arith.mulf %365, %367 : vector<125x64xf32>
    %369 = arith.addf %364, %368 : vector<125x64xf32>
    %370 = vector.extract_strided_slice %331 {offsets = [7, 0], sizes = [125, 64], strides = [1, 1]} : vector<137x64xf32> to vector<125x64xf32>
    %371 = vector.extract_strided_slice %330 {offsets = [5, 0], sizes = [1, 64], strides = [1, 1]} : vector<9x64xf32> to vector<1x64xf32>
    %372 = vector.broadcast %371 : vector<1x64xf32> to vector<125x64xf32>
    %373 = arith.mulf %370, %372 : vector<125x64xf32>
    %374 = arith.addf %369, %373 : vector<125x64xf32>
    %375 = vector.extract_strided_slice %331 {offsets = [12, 0], sizes = [125, 64], strides = [1, 1]} : vector<137x64xf32> to vector<125x64xf32>
    %376 = vector.extract_strided_slice %330 {offsets = [8, 0], sizes = [1, 64], strides = [1, 1]} : vector<9x64xf32> to vector<1x64xf32>
    %377 = vector.broadcast %376 : vector<1x64xf32> to vector<125x64xf32>
    %378 = arith.mulf %375, %377 : vector<125x64xf32>
    %379 = arith.addf %374, %378 : vector<125x64xf32>
    %380 = vector.broadcast %24 : vector<125x1xf32> to vector<125x64xf32>
    %381 = arith.mulf %347, %380 : vector<125x64xf32>
    %382 = arith.addf %381, %363 : vector<125x64xf32>
    %383 = vector.broadcast %28 : vector<125x1xf32> to vector<125x64xf32>
    %384 = arith.mulf %379, %383 : vector<125x64xf32>
    %385 = arith.addf %382, %384 : vector<125x64xf32>
    %c0_90 = arith.constant 0 : index
    %c0_91 = arith.constant 0 : index
    %386 = vector.load %arg5[%c0_90, %c0_91] : memref<4x64xf32, #tpu.memory_space<vmem>>, vector<1x64xf32>
    %387 = vector.broadcast %386 : vector<1x64xf32> to vector<125x64xf32>
    %388 = arith.addf %385, %387 : vector<125x64xf32>
    %cst_92 = arith.constant 0.000000e+00 : f32
    %389 = vector.broadcast %cst_92 : f32 to vector<125x64xf32>
    %390 = arith.maximumf %388, %389 : vector<125x64xf32>
    %c0_93 = arith.constant 0 : index
    %c0_94 = arith.constant 0 : index
    %c0_95 = arith.constant 0 : index
    %391 = vector.load %arg6[%c0_93, %c0_94, %c0_95] : memref<4x64x64xf32, #tpu.memory_space<vmem>>, vector<1x64x64xf32>
    %392 = vector.shape_cast %391 : vector<1x64x64xf32> to vector<64x64xf32>
    %cst_96 = arith.constant dense<0.000000e+00> : vector<125x64xf32>
    %393 = tpu.matmul %390, %392, %cst_96 {dimension_numbers = #tpu.dot_dimension_numbers<[1], [0], [0], [1], [0, 0, 1, 1], [], []>} : vector<125x64xf32>, vector<64x64xf32>, vector<125x64xf32> -> vector<125x64xf32>
    %c0_97 = arith.constant 0 : index
    %c0_98 = arith.constant 0 : index
    %394 = vector.load %arg7[%c0_97, %c0_98] : memref<4x64xf32, #tpu.memory_space<vmem>>, vector<1x64xf32>
    %395 = vector.broadcast %394 : vector<1x64xf32> to vector<125x64xf32>
    %396 = arith.addf %393, %395 : vector<125x64xf32>
    %cst_99 = arith.constant 0.000000e+00 : f32
    %397 = vector.broadcast %cst_99 : f32 to vector<125x64xf32>
    %398 = arith.maximumf %396, %397 : vector<125x64xf32>
    %c1_100 = arith.constant 1 : index
    %c0_101 = arith.constant 0 : index
    %c0_102 = arith.constant 0 : index
    %399 = vector.load %arg4[%c1_100, %c0_101, %c0_102] : memref<4x9x64xf32, #tpu.memory_space<vmem>>, vector<1x9x64xf32>
    %400 = vector.shape_cast %399 : vector<1x9x64xf32> to vector<9x64xf32>
    %401 = tpu.concatenate %29, %398, %29 in 0 : vector<6x64xf32>, vector<125x64xf32>, vector<6x64xf32> -> vector<137x64xf32>
    %cst_103 = arith.constant 0.000000e+00 : f32
    %402 = vector.broadcast %cst_103 : f32 to vector<125x64xf32>
    %403 = vector.extract_strided_slice %401 {offsets = [0, 0], sizes = [125, 64], strides = [1, 1]} : vector<137x64xf32> to vector<125x64xf32>
    %404 = vector.extract_strided_slice %400 {offsets = [0, 0], sizes = [1, 64], strides = [1, 1]} : vector<9x64xf32> to vector<1x64xf32>
    %405 = vector.broadcast %404 : vector<1x64xf32> to vector<125x64xf32>
    %406 = arith.mulf %403, %405 : vector<125x64xf32>
    %407 = arith.addf %402, %406 : vector<125x64xf32>
    %408 = vector.extract_strided_slice %401 {offsets = [5, 0], sizes = [125, 64], strides = [1, 1]} : vector<137x64xf32> to vector<125x64xf32>
    %409 = vector.extract_strided_slice %400 {offsets = [3, 0], sizes = [1, 64], strides = [1, 1]} : vector<9x64xf32> to vector<1x64xf32>
    %410 = vector.broadcast %409 : vector<1x64xf32> to vector<125x64xf32>
    %411 = arith.mulf %408, %410 : vector<125x64xf32>
    %412 = arith.addf %407, %411 : vector<125x64xf32>
    %413 = vector.extract_strided_slice %401 {offsets = [10, 0], sizes = [125, 64], strides = [1, 1]} : vector<137x64xf32> to vector<125x64xf32>
    %414 = vector.extract_strided_slice %400 {offsets = [6, 0], sizes = [1, 64], strides = [1, 1]} : vector<9x64xf32> to vector<1x64xf32>
    %415 = vector.broadcast %414 : vector<1x64xf32> to vector<125x64xf32>
    %416 = arith.mulf %413, %415 : vector<125x64xf32>
    %417 = arith.addf %412, %416 : vector<125x64xf32>
    %cst_104 = arith.constant 0.000000e+00 : f32
    %418 = vector.broadcast %cst_104 : f32 to vector<125x64xf32>
    %419 = vector.extract_strided_slice %401 {offsets = [1, 0], sizes = [125, 64], strides = [1, 1]} : vector<137x64xf32> to vector<125x64xf32>
    %420 = vector.extract_strided_slice %400 {offsets = [1, 0], sizes = [1, 64], strides = [1, 1]} : vector<9x64xf32> to vector<1x64xf32>
    %421 = vector.broadcast %420 : vector<1x64xf32> to vector<125x64xf32>
    %422 = arith.mulf %419, %421 : vector<125x64xf32>
    %423 = arith.addf %418, %422 : vector<125x64xf32>
    %424 = vector.extract_strided_slice %401 {offsets = [6, 0], sizes = [125, 64], strides = [1, 1]} : vector<137x64xf32> to vector<125x64xf32>
    %425 = vector.extract_strided_slice %400 {offsets = [4, 0], sizes = [1, 64], strides = [1, 1]} : vector<9x64xf32> to vector<1x64xf32>
    %426 = vector.broadcast %425 : vector<1x64xf32> to vector<125x64xf32>
    %427 = arith.mulf %424, %426 : vector<125x64xf32>
    %428 = arith.addf %423, %427 : vector<125x64xf32>
    %429 = vector.extract_strided_slice %401 {offsets = [11, 0], sizes = [125, 64], strides = [1, 1]} : vector<137x64xf32> to vector<125x64xf32>
    %430 = vector.extract_strided_slice %400 {offsets = [7, 0], sizes = [1, 64], strides = [1, 1]} : vector<9x64xf32> to vector<1x64xf32>
    %431 = vector.broadcast %430 : vector<1x64xf32> to vector<125x64xf32>
    %432 = arith.mulf %429, %431 : vector<125x64xf32>
    %433 = arith.addf %428, %432 : vector<125x64xf32>
    %cst_105 = arith.constant 0.000000e+00 : f32
    %434 = vector.broadcast %cst_105 : f32 to vector<125x64xf32>
    %435 = vector.extract_strided_slice %401 {offsets = [2, 0], sizes = [125, 64], strides = [1, 1]} : vector<137x64xf32> to vector<125x64xf32>
    %436 = vector.extract_strided_slice %400 {offsets = [2, 0], sizes = [1, 64], strides = [1, 1]} : vector<9x64xf32> to vector<1x64xf32>
    %437 = vector.broadcast %436 : vector<1x64xf32> to vector<125x64xf32>
    %438 = arith.mulf %435, %437 : vector<125x64xf32>
    %439 = arith.addf %434, %438 : vector<125x64xf32>
    %440 = vector.extract_strided_slice %401 {offsets = [7, 0], sizes = [125, 64], strides = [1, 1]} : vector<137x64xf32> to vector<125x64xf32>
    %441 = vector.extract_strided_slice %400 {offsets = [5, 0], sizes = [1, 64], strides = [1, 1]} : vector<9x64xf32> to vector<1x64xf32>
    %442 = vector.broadcast %441 : vector<1x64xf32> to vector<125x64xf32>
    %443 = arith.mulf %440, %442 : vector<125x64xf32>
    %444 = arith.addf %439, %443 : vector<125x64xf32>
    %445 = vector.extract_strided_slice %401 {offsets = [12, 0], sizes = [125, 64], strides = [1, 1]} : vector<137x64xf32> to vector<125x64xf32>
    %446 = vector.extract_strided_slice %400 {offsets = [8, 0], sizes = [1, 64], strides = [1, 1]} : vector<9x64xf32> to vector<1x64xf32>
    %447 = vector.broadcast %446 : vector<1x64xf32> to vector<125x64xf32>
    %448 = arith.mulf %445, %447 : vector<125x64xf32>
    %449 = arith.addf %444, %448 : vector<125x64xf32>
    %450 = vector.broadcast %24 : vector<125x1xf32> to vector<125x64xf32>
    %451 = arith.mulf %417, %450 : vector<125x64xf32>
    %452 = arith.addf %451, %433 : vector<125x64xf32>
    %453 = vector.broadcast %28 : vector<125x1xf32> to vector<125x64xf32>
    %454 = arith.mulf %449, %453 : vector<125x64xf32>
    %455 = arith.addf %452, %454 : vector<125x64xf32>
    %c1_106 = arith.constant 1 : index
    %c0_107 = arith.constant 0 : index
    %456 = vector.load %arg5[%c1_106, %c0_107] : memref<4x64xf32, #tpu.memory_space<vmem>>, vector<1x64xf32>
    %457 = vector.broadcast %456 : vector<1x64xf32> to vector<125x64xf32>
    %458 = arith.addf %455, %457 : vector<125x64xf32>
    %cst_108 = arith.constant 0.000000e+00 : f32
    %459 = vector.broadcast %cst_108 : f32 to vector<125x64xf32>
    %460 = arith.maximumf %458, %459 : vector<125x64xf32>
    %c1_109 = arith.constant 1 : index
    %c0_110 = arith.constant 0 : index
    %c0_111 = arith.constant 0 : index
    %461 = vector.load %arg6[%c1_109, %c0_110, %c0_111] : memref<4x64x64xf32, #tpu.memory_space<vmem>>, vector<1x64x64xf32>
    %462 = vector.shape_cast %461 : vector<1x64x64xf32> to vector<64x64xf32>
    %cst_112 = arith.constant dense<0.000000e+00> : vector<125x64xf32>
    %463 = tpu.matmul %460, %462, %cst_112 {dimension_numbers = #tpu.dot_dimension_numbers<[1], [0], [0], [1], [0, 0, 1, 1], [], []>} : vector<125x64xf32>, vector<64x64xf32>, vector<125x64xf32> -> vector<125x64xf32>
    %c1_113 = arith.constant 1 : index
    %c0_114 = arith.constant 0 : index
    %464 = vector.load %arg7[%c1_113, %c0_114] : memref<4x64xf32, #tpu.memory_space<vmem>>, vector<1x64xf32>
    %465 = vector.broadcast %464 : vector<1x64xf32> to vector<125x64xf32>
    %466 = arith.addf %463, %465 : vector<125x64xf32>
    %cst_115 = arith.constant 0.000000e+00 : f32
    %467 = vector.broadcast %cst_115 : f32 to vector<125x64xf32>
    %468 = arith.maximumf %466, %467 : vector<125x64xf32>
    %c2_116 = arith.constant 2 : index
    %c0_117 = arith.constant 0 : index
    %c0_118 = arith.constant 0 : index
    %469 = vector.load %arg4[%c2_116, %c0_117, %c0_118] : memref<4x9x64xf32, #tpu.memory_space<vmem>>, vector<1x9x64xf32>
    %470 = vector.shape_cast %469 : vector<1x9x64xf32> to vector<9x64xf32>
    %471 = tpu.concatenate %29, %468, %29 in 0 : vector<6x64xf32>, vector<125x64xf32>, vector<6x64xf32> -> vector<137x64xf32>
    %cst_119 = arith.constant 0.000000e+00 : f32
    %472 = vector.broadcast %cst_119 : f32 to vector<125x64xf32>
    %473 = vector.extract_strided_slice %471 {offsets = [0, 0], sizes = [125, 64], strides = [1, 1]} : vector<137x64xf32> to vector<125x64xf32>
    %474 = vector.extract_strided_slice %470 {offsets = [0, 0], sizes = [1, 64], strides = [1, 1]} : vector<9x64xf32> to vector<1x64xf32>
    %475 = vector.broadcast %474 : vector<1x64xf32> to vector<125x64xf32>
    %476 = arith.mulf %473, %475 : vector<125x64xf32>
    %477 = arith.addf %472, %476 : vector<125x64xf32>
    %478 = vector.extract_strided_slice %471 {offsets = [5, 0], sizes = [125, 64], strides = [1, 1]} : vector<137x64xf32> to vector<125x64xf32>
    %479 = vector.extract_strided_slice %470 {offsets = [3, 0], sizes = [1, 64], strides = [1, 1]} : vector<9x64xf32> to vector<1x64xf32>
    %480 = vector.broadcast %479 : vector<1x64xf32> to vector<125x64xf32>
    %481 = arith.mulf %478, %480 : vector<125x64xf32>
    %482 = arith.addf %477, %481 : vector<125x64xf32>
    %483 = vector.extract_strided_slice %471 {offsets = [10, 0], sizes = [125, 64], strides = [1, 1]} : vector<137x64xf32> to vector<125x64xf32>
    %484 = vector.extract_strided_slice %470 {offsets = [6, 0], sizes = [1, 64], strides = [1, 1]} : vector<9x64xf32> to vector<1x64xf32>
    %485 = vector.broadcast %484 : vector<1x64xf32> to vector<125x64xf32>
    %486 = arith.mulf %483, %485 : vector<125x64xf32>
    %487 = arith.addf %482, %486 : vector<125x64xf32>
    %cst_120 = arith.constant 0.000000e+00 : f32
    %488 = vector.broadcast %cst_120 : f32 to vector<125x64xf32>
    %489 = vector.extract_strided_slice %471 {offsets = [1, 0], sizes = [125, 64], strides = [1, 1]} : vector<137x64xf32> to vector<125x64xf32>
    %490 = vector.extract_strided_slice %470 {offsets = [1, 0], sizes = [1, 64], strides = [1, 1]} : vector<9x64xf32> to vector<1x64xf32>
    %491 = vector.broadcast %490 : vector<1x64xf32> to vector<125x64xf32>
    %492 = arith.mulf %489, %491 : vector<125x64xf32>
    %493 = arith.addf %488, %492 : vector<125x64xf32>
    %494 = vector.extract_strided_slice %471 {offsets = [6, 0], sizes = [125, 64], strides = [1, 1]} : vector<137x64xf32> to vector<125x64xf32>
    %495 = vector.extract_strided_slice %470 {offsets = [4, 0], sizes = [1, 64], strides = [1, 1]} : vector<9x64xf32> to vector<1x64xf32>
    %496 = vector.broadcast %495 : vector<1x64xf32> to vector<125x64xf32>
    %497 = arith.mulf %494, %496 : vector<125x64xf32>
    %498 = arith.addf %493, %497 : vector<125x64xf32>
    %499 = vector.extract_strided_slice %471 {offsets = [11, 0], sizes = [125, 64], strides = [1, 1]} : vector<137x64xf32> to vector<125x64xf32>
    %500 = vector.extract_strided_slice %470 {offsets = [7, 0], sizes = [1, 64], strides = [1, 1]} : vector<9x64xf32> to vector<1x64xf32>
    %501 = vector.broadcast %500 : vector<1x64xf32> to vector<125x64xf32>
    %502 = arith.mulf %499, %501 : vector<125x64xf32>
    %503 = arith.addf %498, %502 : vector<125x64xf32>
    %cst_121 = arith.constant 0.000000e+00 : f32
    %504 = vector.broadcast %cst_121 : f32 to vector<125x64xf32>
    %505 = vector.extract_strided_slice %471 {offsets = [2, 0], sizes = [125, 64], strides = [1, 1]} : vector<137x64xf32> to vector<125x64xf32>
    %506 = vector.extract_strided_slice %470 {offsets = [2, 0], sizes = [1, 64], strides = [1, 1]} : vector<9x64xf32> to vector<1x64xf32>
    %507 = vector.broadcast %506 : vector<1x64xf32> to vector<125x64xf32>
    %508 = arith.mulf %505, %507 : vector<125x64xf32>
    %509 = arith.addf %504, %508 : vector<125x64xf32>
    %510 = vector.extract_strided_slice %471 {offsets = [7, 0], sizes = [125, 64], strides = [1, 1]} : vector<137x64xf32> to vector<125x64xf32>
    %511 = vector.extract_strided_slice %470 {offsets = [5, 0], sizes = [1, 64], strides = [1, 1]} : vector<9x64xf32> to vector<1x64xf32>
    %512 = vector.broadcast %511 : vector<1x64xf32> to vector<125x64xf32>
    %513 = arith.mulf %510, %512 : vector<125x64xf32>
    %514 = arith.addf %509, %513 : vector<125x64xf32>
    %515 = vector.extract_strided_slice %471 {offsets = [12, 0], sizes = [125, 64], strides = [1, 1]} : vector<137x64xf32> to vector<125x64xf32>
    %516 = vector.extract_strided_slice %470 {offsets = [8, 0], sizes = [1, 64], strides = [1, 1]} : vector<9x64xf32> to vector<1x64xf32>
    %517 = vector.broadcast %516 : vector<1x64xf32> to vector<125x64xf32>
    %518 = arith.mulf %515, %517 : vector<125x64xf32>
    %519 = arith.addf %514, %518 : vector<125x64xf32>
    %520 = vector.broadcast %24 : vector<125x1xf32> to vector<125x64xf32>
    %521 = arith.mulf %487, %520 : vector<125x64xf32>
    %522 = arith.addf %521, %503 : vector<125x64xf32>
    %523 = vector.broadcast %28 : vector<125x1xf32> to vector<125x64xf32>
    %524 = arith.mulf %519, %523 : vector<125x64xf32>
    %525 = arith.addf %522, %524 : vector<125x64xf32>
    %c2_122 = arith.constant 2 : index
    %c0_123 = arith.constant 0 : index
    %526 = vector.load %arg5[%c2_122, %c0_123] : memref<4x64xf32, #tpu.memory_space<vmem>>, vector<1x64xf32>
    %527 = vector.broadcast %526 : vector<1x64xf32> to vector<125x64xf32>
    %528 = arith.addf %525, %527 : vector<125x64xf32>
    %cst_124 = arith.constant 0.000000e+00 : f32
    %529 = vector.broadcast %cst_124 : f32 to vector<125x64xf32>
    %530 = arith.maximumf %528, %529 : vector<125x64xf32>
    %c2_125 = arith.constant 2 : index
    %c0_126 = arith.constant 0 : index
    %c0_127 = arith.constant 0 : index
    %531 = vector.load %arg6[%c2_125, %c0_126, %c0_127] : memref<4x64x64xf32, #tpu.memory_space<vmem>>, vector<1x64x64xf32>
    %532 = vector.shape_cast %531 : vector<1x64x64xf32> to vector<64x64xf32>
    %cst_128 = arith.constant dense<0.000000e+00> : vector<125x64xf32>
    %533 = tpu.matmul %530, %532, %cst_128 {dimension_numbers = #tpu.dot_dimension_numbers<[1], [0], [0], [1], [0, 0, 1, 1], [], []>} : vector<125x64xf32>, vector<64x64xf32>, vector<125x64xf32> -> vector<125x64xf32>
    %c2_129 = arith.constant 2 : index
    %c0_130 = arith.constant 0 : index
    %534 = vector.load %arg7[%c2_129, %c0_130] : memref<4x64xf32, #tpu.memory_space<vmem>>, vector<1x64xf32>
    %535 = vector.broadcast %534 : vector<1x64xf32> to vector<125x64xf32>
    %536 = arith.addf %533, %535 : vector<125x64xf32>
    %cst_131 = arith.constant 0.000000e+00 : f32
    %537 = vector.broadcast %cst_131 : f32 to vector<125x64xf32>
    %538 = arith.maximumf %536, %537 : vector<125x64xf32>
    %c3_132 = arith.constant 3 : index
    %c0_133 = arith.constant 0 : index
    %c0_134 = arith.constant 0 : index
    %539 = vector.load %arg4[%c3_132, %c0_133, %c0_134] : memref<4x9x64xf32, #tpu.memory_space<vmem>>, vector<1x9x64xf32>
    %540 = vector.shape_cast %539 : vector<1x9x64xf32> to vector<9x64xf32>
    %541 = tpu.concatenate %29, %538, %29 in 0 : vector<6x64xf32>, vector<125x64xf32>, vector<6x64xf32> -> vector<137x64xf32>
    %cst_135 = arith.constant 0.000000e+00 : f32
    %542 = vector.broadcast %cst_135 : f32 to vector<125x64xf32>
    %543 = vector.extract_strided_slice %541 {offsets = [0, 0], sizes = [125, 64], strides = [1, 1]} : vector<137x64xf32> to vector<125x64xf32>
    %544 = vector.extract_strided_slice %540 {offsets = [0, 0], sizes = [1, 64], strides = [1, 1]} : vector<9x64xf32> to vector<1x64xf32>
    %545 = vector.broadcast %544 : vector<1x64xf32> to vector<125x64xf32>
    %546 = arith.mulf %543, %545 : vector<125x64xf32>
    %547 = arith.addf %542, %546 : vector<125x64xf32>
    %548 = vector.extract_strided_slice %541 {offsets = [5, 0], sizes = [125, 64], strides = [1, 1]} : vector<137x64xf32> to vector<125x64xf32>
    %549 = vector.extract_strided_slice %540 {offsets = [3, 0], sizes = [1, 64], strides = [1, 1]} : vector<9x64xf32> to vector<1x64xf32>
    %550 = vector.broadcast %549 : vector<1x64xf32> to vector<125x64xf32>
    %551 = arith.mulf %548, %550 : vector<125x64xf32>
    %552 = arith.addf %547, %551 : vector<125x64xf32>
    %553 = vector.extract_strided_slice %541 {offsets = [10, 0], sizes = [125, 64], strides = [1, 1]} : vector<137x64xf32> to vector<125x64xf32>
    %554 = vector.extract_strided_slice %540 {offsets = [6, 0], sizes = [1, 64], strides = [1, 1]} : vector<9x64xf32> to vector<1x64xf32>
    %555 = vector.broadcast %554 : vector<1x64xf32> to vector<125x64xf32>
    %556 = arith.mulf %553, %555 : vector<125x64xf32>
    %557 = arith.addf %552, %556 : vector<125x64xf32>
    %cst_136 = arith.constant 0.000000e+00 : f32
    %558 = vector.broadcast %cst_136 : f32 to vector<125x64xf32>
    %559 = vector.extract_strided_slice %541 {offsets = [1, 0], sizes = [125, 64], strides = [1, 1]} : vector<137x64xf32> to vector<125x64xf32>
    %560 = vector.extract_strided_slice %540 {offsets = [1, 0], sizes = [1, 64], strides = [1, 1]} : vector<9x64xf32> to vector<1x64xf32>
    %561 = vector.broadcast %560 : vector<1x64xf32> to vector<125x64xf32>
    %562 = arith.mulf %559, %561 : vector<125x64xf32>
    %563 = arith.addf %558, %562 : vector<125x64xf32>
    %564 = vector.extract_strided_slice %541 {offsets = [6, 0], sizes = [125, 64], strides = [1, 1]} : vector<137x64xf32> to vector<125x64xf32>
    %565 = vector.extract_strided_slice %540 {offsets = [4, 0], sizes = [1, 64], strides = [1, 1]} : vector<9x64xf32> to vector<1x64xf32>
    %566 = vector.broadcast %565 : vector<1x64xf32> to vector<125x64xf32>
    %567 = arith.mulf %564, %566 : vector<125x64xf32>
    %568 = arith.addf %563, %567 : vector<125x64xf32>
    %569 = vector.extract_strided_slice %541 {offsets = [11, 0], sizes = [125, 64], strides = [1, 1]} : vector<137x64xf32> to vector<125x64xf32>
    %570 = vector.extract_strided_slice %540 {offsets = [7, 0], sizes = [1, 64], strides = [1, 1]} : vector<9x64xf32> to vector<1x64xf32>
    %571 = vector.broadcast %570 : vector<1x64xf32> to vector<125x64xf32>
    %572 = arith.mulf %569, %571 : vector<125x64xf32>
    %573 = arith.addf %568, %572 : vector<125x64xf32>
    %cst_137 = arith.constant 0.000000e+00 : f32
    %574 = vector.broadcast %cst_137 : f32 to vector<125x64xf32>
    %575 = vector.extract_strided_slice %541 {offsets = [2, 0], sizes = [125, 64], strides = [1, 1]} : vector<137x64xf32> to vector<125x64xf32>
    %576 = vector.extract_strided_slice %540 {offsets = [2, 0], sizes = [1, 64], strides = [1, 1]} : vector<9x64xf32> to vector<1x64xf32>
    %577 = vector.broadcast %576 : vector<1x64xf32> to vector<125x64xf32>
    %578 = arith.mulf %575, %577 : vector<125x64xf32>
    %579 = arith.addf %574, %578 : vector<125x64xf32>
    %580 = vector.extract_strided_slice %541 {offsets = [7, 0], sizes = [125, 64], strides = [1, 1]} : vector<137x64xf32> to vector<125x64xf32>
    %581 = vector.extract_strided_slice %540 {offsets = [5, 0], sizes = [1, 64], strides = [1, 1]} : vector<9x64xf32> to vector<1x64xf32>
    %582 = vector.broadcast %581 : vector<1x64xf32> to vector<125x64xf32>
    %583 = arith.mulf %580, %582 : vector<125x64xf32>
    %584 = arith.addf %579, %583 : vector<125x64xf32>
    %585 = vector.extract_strided_slice %541 {offsets = [12, 0], sizes = [125, 64], strides = [1, 1]} : vector<137x64xf32> to vector<125x64xf32>
    %586 = vector.extract_strided_slice %540 {offsets = [8, 0], sizes = [1, 64], strides = [1, 1]} : vector<9x64xf32> to vector<1x64xf32>
    %587 = vector.broadcast %586 : vector<1x64xf32> to vector<125x64xf32>
    %588 = arith.mulf %585, %587 : vector<125x64xf32>
    %589 = arith.addf %584, %588 : vector<125x64xf32>
    %590 = vector.broadcast %24 : vector<125x1xf32> to vector<125x64xf32>
    %591 = arith.mulf %557, %590 : vector<125x64xf32>
    %592 = arith.addf %591, %573 : vector<125x64xf32>
    %593 = vector.broadcast %28 : vector<125x1xf32> to vector<125x64xf32>
    %594 = arith.mulf %589, %593 : vector<125x64xf32>
    %595 = arith.addf %592, %594 : vector<125x64xf32>
    %c3_138 = arith.constant 3 : index
    %c0_139 = arith.constant 0 : index
    %596 = vector.load %arg5[%c3_138, %c0_139] : memref<4x64xf32, #tpu.memory_space<vmem>>, vector<1x64xf32>
    %597 = vector.broadcast %596 : vector<1x64xf32> to vector<125x64xf32>
    %598 = arith.addf %595, %597 : vector<125x64xf32>
    %cst_140 = arith.constant 0.000000e+00 : f32
    %599 = vector.broadcast %cst_140 : f32 to vector<125x64xf32>
    %600 = arith.maximumf %598, %599 : vector<125x64xf32>
    %c3_141 = arith.constant 3 : index
    %c0_142 = arith.constant 0 : index
    %c0_143 = arith.constant 0 : index
    %601 = vector.load %arg6[%c3_141, %c0_142, %c0_143] : memref<4x64x64xf32, #tpu.memory_space<vmem>>, vector<1x64x64xf32>
    %602 = vector.shape_cast %601 : vector<1x64x64xf32> to vector<64x64xf32>
    %cst_144 = arith.constant dense<0.000000e+00> : vector<125x64xf32>
    %603 = tpu.matmul %600, %602, %cst_144 {dimension_numbers = #tpu.dot_dimension_numbers<[1], [0], [0], [1], [0, 0, 1, 1], [], []>} : vector<125x64xf32>, vector<64x64xf32>, vector<125x64xf32> -> vector<125x64xf32>
    %c3_145 = arith.constant 3 : index
    %c0_146 = arith.constant 0 : index
    %604 = vector.load %arg7[%c3_145, %c0_146] : memref<4x64xf32, #tpu.memory_space<vmem>>, vector<1x64xf32>
    %605 = vector.broadcast %604 : vector<1x64xf32> to vector<125x64xf32>
    %606 = arith.addf %603, %605 : vector<125x64xf32>
    %cst_147 = arith.constant 0.000000e+00 : f32
    %607 = vector.broadcast %cst_147 : f32 to vector<125x64xf32>
    %608 = arith.maximumf %606, %607 : vector<125x64xf32>
    %609 = vector.extract_strided_slice %608 {offsets = [0, 0], sizes = [120, 64], strides = [1, 1]} : vector<125x64xf32> to vector<120x64xf32>
    %cst_148 = arith.constant dense<0.000000e+00> : vector<64xf32>
    %610 = vector.multi_reduction <add>, %609, %cst_148 [0] : vector<120x64xf32> to vector<64xf32>
    %611 = vector.shape_cast %610 : vector<64xf32> to vector<1x64xf32>
    %cst_149 = arith.constant 0.00833333377 : f32
    %612 = vector.broadcast %cst_149 : f32 to vector<1x64xf32>
    %613 = arith.mulf %611, %612 : vector<1x64xf32>
    %614 = tpu.concatenate %321, %613 in 0 : vector<1x64xf32>, vector<1x64xf32> -> vector<2x64xf32>
    %cst_150 = arith.constant dense<0.000000e+00> : vector<2x12xf32>
    %615 = tpu.matmul %614, %2, %cst_150 {dimension_numbers = #tpu.dot_dimension_numbers<[1], [0], [0], [1], [0, 0, 1, 1], [], []>} : vector<2x64xf32>, vector<64x12xf32>, vector<2x12xf32> -> vector<2x12xf32>
    %616 = vector.broadcast %3 : vector<1x12xf32> to vector<2x12xf32>
    %617 = arith.addf %615, %616 : vector<2x12xf32>
    %c0_151 = arith.constant 0 : index
    %c0_152 = arith.constant 0 : index
    %618 = vector.load %arg10[%c0_151, %c0_152] : memref<2x12xf32, #tpu.memory_space<vmem>>, vector<2x12xf32>
    tpu.vector_store %arg10[%c0_151, %c0_152], %617 {strides = array<i32>} : memref<2x12xf32, #tpu.memory_space<vmem>>, vector<2x12xf32>,
    return
  }
  func.func @transform_0(%arg0: i32) -> (i32, i32, i32) {
    %c0_i32 = arith.constant 0 : i32
    %c0_i32_0 = arith.constant 0 : i32
    %c0_i32_1 = arith.constant 0 : i32
    return %arg0, %c0_i32, %c0_i32_0 : i32, i32, i32
  }
  func.func @transform_1(%arg0: i32) -> (i32, i32) {
    %c0_i32 = arith.constant 0 : i32
    %c0_i32_0 = arith.constant 0 : i32
    %c0_i32_1 = arith.constant 0 : i32
    return %c0_i32, %c0_i32_0 : i32, i32
  }
  func.func @transform_2(%arg0: i32) -> (i32, i32) {
    %c0_i32 = arith.constant 0 : i32
    %c0_i32_0 = arith.constant 0 : i32
    %c0_i32_1 = arith.constant 0 : i32
    return %c0_i32, %c0_i32_0 : i32, i32
  }
  func.func @transform_3(%arg0: i32) -> (i32, i32, i32) {
    %c0_i32 = arith.constant 0 : i32
    %c0_i32_0 = arith.constant 0 : i32
    %c0_i32_1 = arith.constant 0 : i32
    %c0_i32_2 = arith.constant 0 : i32
    return %c0_i32, %c0_i32_0, %c0_i32_1 : i32, i32, i32
  }
  func.func @transform_4(%arg0: i32) -> (i32, i32) {
    %c0_i32 = arith.constant 0 : i32
    %c0_i32_0 = arith.constant 0 : i32
    %c0_i32_1 = arith.constant 0 : i32
    return %c0_i32, %c0_i32_0 : i32, i32
  }
  func.func @transform_5(%arg0: i32) -> (i32, i32, i32) {
    %c0_i32 = arith.constant 0 : i32
    %c0_i32_0 = arith.constant 0 : i32
    %c0_i32_1 = arith.constant 0 : i32
    %c0_i32_2 = arith.constant 0 : i32
    return %c0_i32, %c0_i32_0, %c0_i32_1 : i32, i32, i32
  }
  func.func @transform_6(%arg0: i32) -> (i32, i32) {
    %c0_i32 = arith.constant 0 : i32
    %c0_i32_0 = arith.constant 0 : i32
    %c0_i32_1 = arith.constant 0 : i32
    return %c0_i32, %c0_i32_0 : i32, i32
  }
  func.func @transform_7(%arg0: i32) -> (i32, i32) {
    %c0_i32 = arith.constant 0 : i32
    %c0_i32_0 = arith.constant 0 : i32
    %c0_i32_1 = arith.constant 0 : i32
    return %c0_i32, %c0_i32_0 : i32, i32
  }
  func.func @transform_8(%arg0: i32) -> (i32, i32) {
    %c0_i32 = arith.constant 0 : i32
    %c0_i32_0 = arith.constant 0 : i32
    %c0_i32_1 = arith.constant 0 : i32
    return %c0_i32, %c0_i32_0 : i32, i32
  }
  func.func @transform_9(%arg0: i32) -> (i32, i32) {
    %c0_i32 = arith.constant 0 : i32
    %c0_i32_0 = arith.constant 0 : i32
    return %arg0, %c0_i32 : i32, i32
  }
}

</mosaic_0001>

<llo_original>
// kernel: ds_cnn_forward.1
$region0: #{ds_cnn_forward.1}
  #allocation0 [shape = 'u32[]', space=smem, size = 0x4, offset = 0x4, fixed_abs, tag = 'smem constant byte address 0x4 - core index']
  #allocation1 [shape = 'u32[144,128]{1,0:T(1,128)}', space=vmem, size = 0x12000, scoped, tag = 'internal scratch']
  %s0 = inlined_call_operand.vmem [shape: f32[2,125,40], index: 0, kind: input, shape index: {}]
  %s1 = inlined_call_operand.vmem [shape: f32[40,64], index: 1, kind: input, shape index: {}]
  %s2 = inlined_call_operand.vmem [shape: f32[1,64], index: 2, kind: input, shape index: {}]
  %s3 = inlined_call_operand.vmem [shape: f32[4,9,64], index: 3, kind: input, shape index: {}]
  %s4 = inlined_call_operand.vmem [shape: f32[4,64], index: 4, kind: input, shape index: {}]
  %s5 = inlined_call_operand.vmem [shape: f32[4,64,64], index: 5, kind: input, shape index: {}]
  %s6 = inlined_call_operand.vmem [shape: f32[4,64], index: 6, kind: input, shape index: {}]
  %s7 = inlined_call_operand.vmem [shape: f32[64,12], index: 7, kind: input, shape index: {}]
  %s8 = inlined_call_operand.vmem [shape: f32[1,12], index: 8, kind: input, shape index: {}]
  %s9 = inlined_call_operand.hbm [shape: f32[2,12], index: 9, kind: output, shape index: {}]
  %s10 = sld [smem:[#allocation0]]
  $region46: #{ds_cnn_forward.1} parent=0
    _
  %s12 = ssub.s32 1, %s10
  %s13 = scalar_select 0, %s12, %s10
  $region1: #{ds_cnn_forward.1} parent=0
    #allocation2 [shape = 'u8[1024]{0}', space=vmem, size = 0x400, scoped, tag = 'output window, operand 0, single buffered']
    #allocation3 [shape = 's32[1]{0}', space=sflag, size = 0x4, scoped, tag = 'scoped memory for ds_cnn_forward.1']
    %14 = vsyncpa [#allocation3], 0
    // Predicated region
    $region2: #{ds_cnn_forward.1} parent=1 // pred_check
      _
    $region3: #{ds_cnn_forward.1} parent=1 // pred_check_branch
      %16 = sbr.rel (0) target = $region5
    $region4: #{ds_cnn_forward.1} parent=1 // pred_region
      _
    $region5: #{ds_cnn_forward.1} parent=1 // pred_fallthru
      _
    // Predicated region
    $region6: #{ds_cnn_forward.1} parent=1 // pred_check
      _
    $region7: #{ds_cnn_forward.1} parent=1 // pred_check_branch
      %18 = sbr.rel (0) target = $region9
    $region8: #{ds_cnn_forward.1} parent=1 // pred_region
      _
    $region9: #{ds_cnn_forward.1} parent=1 // pred_fallthru
      _
    // Predicated region
    $region10: #{ds_cnn_forward.1} parent=1 // pred_check
      _
    $region11: #{ds_cnn_forward.1} parent=1 // pred_check_branch
      %20 = sbr.rel (0) target = $region13
    $region12: #{ds_cnn_forward.1} parent=1 // pred_region
      _
    $region13: #{ds_cnn_forward.1} parent=1 // pred_fallthru
      _
    // Predicated region
    $region14: #{ds_cnn_forward.1} parent=1 // pred_check
      _
    $region15: #{ds_cnn_forward.1} parent=1 // pred_check_branch
      %22 = sbr.rel (0) target = $region17
    $region16: #{ds_cnn_forward.1} parent=1 // pred_region
      _
    $region17: #{ds_cnn_forward.1} parent=1 // pred_fallthru
      _
    // Predicated region
    $region18: #{ds_cnn_forward.1} parent=1 // pred_check
      _
    $region19: #{ds_cnn_forward.1} parent=1 // pred_check_branch
      %24 = sbr.rel (0) target = $region21
    $region20: #{ds_cnn_forward.1} parent=1 // pred_region
      _
    $region21: #{ds_cnn_forward.1} parent=1 // pred_fallthru
      _
    // Predicated region
    $region22: #{ds_cnn_forward.1} parent=1 // pred_check
      _
    $region23: #{ds_cnn_forward.1} parent=1 // pred_check_branch
      %26 = sbr.rel (0) target = $region25
    $region24: #{ds_cnn_forward.1} parent=1 // pred_region
      _
    $region25: #{ds_cnn_forward.1} parent=1 // pred_fallthru
      _
    // Predicated region
    $region26: #{ds_cnn_forward.1} parent=1 // pred_check
      _
    $region27: #{ds_cnn_forward.1} parent=1 // pred_check_branch
      %28 = sbr.rel (0) target = $region29
    $region28: #{ds_cnn_forward.1} parent=1 // pred_region
      _
    $region29: #{ds_cnn_forward.1} parent=1 // pred_fallthru
      _
    // Predicated region
    $region30: #{ds_cnn_forward.1} parent=1 // pred_check
      _
    $region31: #{ds_cnn_forward.1} parent=1 // pred_check_branch
      %30 = sbr.rel (0) target = $region33
    $region32: #{ds_cnn_forward.1} parent=1 // pred_region
      _
    $region33: #{ds_cnn_forward.1} parent=1 // pred_fallthru
      _
    // Predicated region
    $region34: #{ds_cnn_forward.1} parent=1 // pred_check
      _
    $region35: #{ds_cnn_forward.1} parent=1 // pred_check_branch
      %32 = sbr.rel (0) target = $region37
    $region36: #{ds_cnn_forward.1} parent=1 // pred_region
      _
    $region37: #{ds_cnn_forward.1} parent=1 // pred_fallthru
      _
    %v33 = vld [vmem:[%s1] sm:$0xff]
    %v34 = vld [vmem:[%s1 + $0x8] sm:$0xff]
    %v35 = vld [vmem:[%s1 + $0x10] sm:$0xff]
    %v36 = vld [vmem:[%s1 + $0x18] sm:$0xff]
    %v37 = vld [vmem:[%s1 + $0x20] sm:$0xff]
    %v38 = vld [vmem:[%s2] sm:$0x1]
    %v39 = vld [vmem:[%s7] sm:$0xff]
    %v40 = vld [vmem:[%s7 + $0x8] sm:$0xff]
    %v41 = vld [vmem:[%s7 + $0x10] sm:$0xff]
    %v42 = vld [vmem:[%s7 + $0x18] sm:$0xff]
    %v43 = vld [vmem:[%s7 + $0x20] sm:$0xff]
    %v44 = vld [vmem:[%s7 + $0x28] sm:$0xff]
    %v45 = vld [vmem:[%s7 + $0x30] sm:$0xff]
    %v46 = vld [vmem:[%s7 + $0x38] sm:$0xff]
    %v47 = vld [vmem:[%s8] sm:$0x1]
    %v48 = vlaneseq
    %v49 = vshrl.u32 %v48, 7
    %v50 = vadd.s32 %v49, 8
    %v51 = vadd.s32 %v49, 16
    %v52 = vadd.s32 %v49, 24
    %v53 = vadd.s32 %v49, 32
    %v54 = vadd.s32 %v49, 40
    %v55 = vadd.s32 %v49, 48
    %v56 = vadd.s32 %v49, 56
    %v57 = vadd.s32 %v49, 64
    %v58 = vadd.s32 %v49, 72
    %v59 = vadd.s32 %v49, 80
    %v60 = vadd.s32 %v49, 88
    %v61 = vadd.s32 %v49, 96
    %v62 = vadd.s32 %v49, 104
    %v63 = vadd.s32 %v49, 112
    %v64 = vadd.s32 %v49, 120
    %vm65 = vcmp.lt.s32.totalorder %v49, 0
    %v66 = vsub.s32 0, %v49
    %v67 = vsel %vm65, %v66, %v49
    %v68 = vmul.u32.u64.compose %v67, 3435973837
    %v69 = vextract.low.u32 %v68
    %v70 = vextract.high.u32 %v68
    %v71 = vshrl.u32 %v70, 2
    %v72 = vmul.u32 %v71, 5
    %v73 = vsub.s32 %v67, %v72
    %v74 = vsub.s32 0, %v73
    %v75 = vsel %vm65, %v74, %v73
    %vm76 = vcmp.lt.s32.totalorder %v50, 0
    %v77 = vsub.s32 0, %v50
    %v78 = vsel %vm76, %v77, %v50
    %v79 = vmul.u32.u64.compose %v78, 3435973837
    %v80 = vextract.low.u32 %v79
    %v81 = vextract.high.u32 %v79
    %v82 = vshrl.u32 %v81, 2
    %v83 = vmul.u32 %v82, 5
    %v84 = vsub.s32 %v78, %v83
    %v85 = vsub.s32 0, %v84
    %v86 = vsel %vm76, %v85, %v84
    %vm87 = vcmp.lt.s32.totalorder %v51, 0
    %v88 = vsub.s32 0, %v51
    %v89 = vsel %vm87, %v88, %v51
    %v90 = vmul.u32.u64.compose %v89, 3435973837
    %v91 = vextract.low.u32 %v90
    %v92 = vextract.high.u32 %v90
    %v93 = vshrl.u32 %v92, 2
    %v94 = vmul.u32 %v93, 5
    %v95 = vsub.s32 %v89, %v94
    %v96 = vsub.s32 0, %v95
    %v97 = vsel %vm87, %v96, %v95
    %vm98 = vcmp.lt.s32.totalorder %v52, 0
    %v99 = vsub.s32 0, %v52
    %v100 = vsel %vm98, %v99, %v52
    %v101 = vmul.u32.u64.compose %v100, 3435973837
    %v102 = vextract.low.u32 %v101
    %v103 = vextract.high.u32 %v101
    %v104 = vshrl.u32 %v103, 2
    %v105 = vmul.u32 %v104, 5
    %v106 = vsub.s32 %v100, %v105
    %v107 = vsub.s32 0, %v106
    %v108 = vsel %vm98, %v107, %v106
    %vm109 = vcmp.lt.s32.totalorder %v53, 0
    %v110 = vsub.s32 0, %v53
    %v111 = vsel %vm109, %v110, %v53
    %v112 = vmul.u32.u64.compose %v111, 3435973837
    %v113 = vextract.low.u32 %v112
    %v114 = vextract.high.u32 %v112
    %v115 = vshrl.u32 %v114, 2
    %v116 = vmul.u32 %v115, 5
    %v117 = vsub.s32 %v111, %v116
    %v118 = vsub.s32 0, %v117
    %v119 = vsel %vm109, %v118, %v117
    %vm120 = vcmp.lt.s32.totalorder %v54, 0
    %v121 = vsub.s32 0, %v54
    %v122 = vsel %vm120, %v121, %v54
    %v123 = vmul.u32.u64.compose %v122, 3435973837
    %v124 = vextract.low.u32 %v123
    %v125 = vextract.high.u32 %v123
    %v126 = vshrl.u32 %v125, 2
    %v127 = vmul.u32 %v126, 5
    %v128 = vsub.s32 %v122, %v127
    %v129 = vsub.s32 0, %v128
    %v130 = vsel %vm120, %v129, %v128
    %vm131 = vcmp.lt.s32.totalorder %v55, 0
    %v132 = vsub.s32 0, %v55
    %v133 = vsel %vm131, %v132, %v55
    %v134 = vmul.u32.u64.compose %v133, 3435973837
    %v135 = vextract.low.u32 %v134
    %v136 = vextract.high.u32 %v134
    %v137 = vshrl.u32 %v136, 2
    %v138 = vmul.u32 %v137, 5
    %v139 = vsub.s32 %v133, %v138
    %v140 = vsub.s32 0, %v139
    %v141 = vsel %vm131, %v140, %v139
    %vm142 = vcmp.lt.s32.totalorder %v56, 0
    %v143 = vsub.s32 0, %v56
    %v144 = vsel %vm142, %v143, %v56
    %v145 = vmul.u32.u64.compose %v144, 3435973837
    %v146 = vextract.low.u32 %v145
    %v147 = vextract.high.u32 %v145
    %v148 = vshrl.u32 %v147, 2
    %v149 = vmul.u32 %v148, 5
    %v150 = vsub.s32 %v144, %v149
    %v151 = vsub.s32 0, %v150
    %v152 = vsel %vm142, %v151, %v150
    %vm153 = vcmp.lt.s32.totalorder %v57, 0
    %v154 = vsub.s32 0, %v57
    %v155 = vsel %vm153, %v154, %v57
    %v156 = vmul.u32.u64.compose %v155, 3435973837
    %v157 = vextract.low.u32 %v156
    %v158 = vextract.high.u32 %v156
    %v159 = vshrl.u32 %v158, 2
    %v160 = vmul.u32 %v159, 5
    %v161 = vsub.s32 %v155, %v160
    %v162 = vsub.s32 0, %v161
    %v163 = vsel %vm153, %v162, %v161
    %vm164 = vcmp.lt.s32.totalorder %v58, 0
    %v165 = vsub.s32 0, %v58
    %v166 = vsel %vm164, %v165, %v58
    %v167 = vmul.u32.u64.compose %v166, 3435973837
    %v168 = vextract.low.u32 %v167
    %v169 = vextract.high.u32 %v167
    %v170 = vshrl.u32 %v169, 2
    %v171 = vmul.u32 %v170, 5
    %v172 = vsub.s32 %v166, %v171
    %v173 = vsub.s32 0, %v172
    %v174 = vsel %vm164, %v173, %v172
    %vm175 = vcmp.lt.s32.totalorder %v59, 0
    %v176 = vsub.s32 0, %v59
    %v177 = vsel %vm175, %v176, %v59
    %v178 = vmul.u32.u64.compose %v177, 3435973837
    %v179 = vextract.low.u32 %v178
    %v180 = vextract.high.u32 %v178
    %v181 = vshrl.u32 %v180, 2
    %v182 = vmul.u32 %v181, 5
    %v183 = vsub.s32 %v177, %v182
    %v184 = vsub.s32 0, %v183
    %v185 = vsel %vm175, %v184, %v183
    %vm186 = vcmp.lt.s32.totalorder %v60, 0
    %v187 = vsub.s32 0, %v60
    %v188 = vsel %vm186, %v187, %v60
    %v189 = vmul.u32.u64.compose %v188, 3435973837
    %v190 = vextract.low.u32 %v189
    %v191 = vextract.high.u32 %v189
    %v192 = vshrl.u32 %v191, 2
    %v193 = vmul.u32 %v192, 5
    %v194 = vsub.s32 %v188, %v193
    %v195 = vsub.s32 0, %v194
    %v196 = vsel %vm186, %v195, %v194
    %vm197 = vcmp.lt.s32.totalorder %v61, 0
    %v198 = vsub.s32 0, %v61
    %v199 = vsel %vm197, %v198, %v61
    %v200 = vmul.u32.u64.compose %v199, 3435973837
    %v201 = vextract.low.u32 %v200
    %v202 = vextract.high.u32 %v200
    %v203 = vshrl.u32 %v202, 2
    %v204 = vmul.u32 %v203, 5
    %v205 = vsub.s32 %v199, %v204
    %v206 = vsub.s32 0, %v205
    %v207 = vsel %vm197, %v206, %v205
    %vm208 = vcmp.lt.s32.totalorder %v62, 0
    %v209 = vsub.s32 0, %v62
    %v210 = vsel %vm208, %v209, %v62
    %v211 = vmul.u32.u64.compose %v210, 3435973837
    %v212 = vextract.low.u32 %v211
    %v213 = vextract.high.u32 %v211
    %v214 = vshrl.u32 %v213, 2
    %v215 = vmul.u32 %v214, 5
    %v216 = vsub.s32 %v210, %v215
    %v217 = vsub.s32 0, %v216
    %v218 = vsel %vm208, %v217, %v216
    %vm219 = vcmp.lt.s32.totalorder %v63, 0
    %v220 = vsub.s32 0, %v63
    %v221 = vsel %vm219, %v220, %v63
    %v222 = vmul.u32.u64.compose %v221, 3435973837
    %v223 = vextract.low.u32 %v222
    %v224 = vextract.high.u32 %v222
    %v225 = vshrl.u32 %v224, 2
    %v226 = vmul.u32 %v225, 5
    %v227 = vsub.s32 %v221, %v226
    %v228 = vsub.s32 0, %v227
    %v229 = vsel %vm219, %v228, %v227
    %vm230 = vcmp.lt.s32.totalorder %v64, 0
    %v231 = vsub.s32 0, %v64
    %v232 = vsel %vm230, %v231, %v64
    %v233 = vmul.u32.u64.compose %v232, 3435973837
    %v234 = vextract.low.u32 %v233
    %v235 = vextract.high.u32 %v233
    %v236 = vshrl.u32 %v235, 2
    %v237 = vmul.u32 %v236, 5
    %v238 = vsub.s32 %v232, %v237
    %v239 = vsub.s32 0, %v238
    %v240 = vsel %vm230, %v239, %v238
    %vm241 = vcmp.ne.s32.totalorder %v75, 0
    %vm242 = vcmp.ne.s32.totalorder %v86, 0
    %vm243 = vcmp.ne.s32.totalorder %v97, 0
    %vm244 = vcmp.ne.s32.totalorder %v108, 0
    %vm245 = vcmp.ne.s32.totalorder %v119, 0
    %vm246 = vcmp.ne.s32.totalorder %v130, 0
    %vm247 = vcmp.ne.s32.totalorder %v141, 0
    %vm248 = vcmp.ne.s32.totalorder %v152, 0
    %vm249 = vcmp.ne.s32.totalorder %v163, 0
    %vm250 = vcmp.ne.s32.totalorder %v174, 0
    %vm251 = vcmp.ne.s32.totalorder %v185, 0
    %vm252 = vcmp.ne.s32.totalorder %v196, 0
    %vm253 = vcmp.ne.s32.totalorder %v207, 0
    %vm254 = vcmp.ne.s32.totalorder %v218, 0
    %vm255 = vcmp.ne.s32.totalorder %v229, 0
    %vm256 = vcmp.ne.s32.totalorder %v240, 0
    %vm257 = vcmp.lt.s32.totalorder %v75, 0
    %vm258 = vcmp.lt.s32.totalorder %v86, 0
    %vm259 = vcmp.lt.s32.totalorder %v97, 0
    %vm260 = vcmp.lt.s32.totalorder %v108, 0
    %vm261 = vcmp.lt.s32.totalorder %v119, 0
    %vm262 = vcmp.lt.s32.totalorder %v130, 0
    %vm263 = vcmp.lt.s32.totalorder %v141, 0
    %vm264 = vcmp.lt.s32.totalorder %v152, 0
    %vm265 = vcmp.lt.s32.totalorder %v163, 0
    %vm266 = vcmp.lt.s32.totalorder %v174, 0
    %vm267 = vcmp.lt.s32.totalorder %v185, 0
    %vm268 = vcmp.lt.s32.totalorder %v196, 0
    %vm269 = vcmp.lt.s32.totalorder %v207, 0
    %vm270 = vcmp.lt.s32.totalorder %v218, 0
    %vm271 = vcmp.lt.s32.totalorder %v229, 0
    %vm272 = vcmp.lt.s32.totalorder %v240, 0
    %vm273 = vmand %vm257, %vm241
    %vm274 = vmand %vm258, %vm242
    %vm275 = vmand %vm259, %vm243
    %vm276 = vmand %vm260, %vm244
    %vm277 = vmand %vm261, %vm245
    %vm278 = vmand %vm262, %vm246
    %vm279 = vmand %vm263, %vm247
    %vm280 = vmand %vm264, %vm248
    %vm281 = vmand %vm265, %vm249
    %vm282 = vmand %vm266, %vm250
    %vm283 = vmand %vm267, %vm251
    %vm284 = vmand %vm268, %vm252
    %vm285 = vmand %vm269, %vm253
    %vm286 = vmand %vm270, %vm254
    %vm287 = vmand %vm271, %vm255
    %vm288 = vmand %vm272, %vm256
    %v289 = vadd.s32 %v75, 5
    %v290 = vadd.s32 %v86, 5
    %v291 = vadd.s32 %v97, 5
    %v292 = vadd.s32 %v108, 5
    %v293 = vadd.s32 %v119, 5
    %v294 = vadd.s32 %v130, 5
    %v295 = vadd.s32 %v141, 5
    %v296 = vadd.s32 %v152, 5
    %v297 = vadd.s32 %v163, 5
    %v298 = vadd.s32 %v174, 5
    %v299 = vadd.s32 %v185, 5
    %v300 = vadd.s32 %v196, 5
    %v301 = vadd.s32 %v207, 5
    %v302 = vadd.s32 %v218, 5
    %v303 = vadd.s32 %v229, 5
    %v304 = vadd.s32 %v240, 5
    %v305 = vsel %vm273, %v289, %v75
    %v306 = vsel %vm274, %v290, %v86
    %v307 = vsel %vm275, %v291, %v97
    %v308 = vsel %vm276, %v292, %v108
    %v309 = vsel %vm277, %v293, %v119
    %v310 = vsel %vm278, %v294, %v130
    %v311 = vsel %vm279, %v295, %v141
    %v312 = vsel %vm280, %v296, %v152
    %v313 = vsel %vm281, %v297, %v163
    %v314 = vsel %vm282, %v298, %v174
    %v315 = vsel %vm283, %v299, %v185
    %v316 = vsel %vm284, %v300, %v196
    %v317 = vsel %vm285, %v301, %v207
    %v318 = vsel %vm286, %v302, %v218
    %v319 = vsel %vm287, %v303, %v229
    %v320 = vsel %vm288, %v304, %v240
    %vm321 = vcmp.ne.s32.totalorder %v305, 0
    %vm322 = vcmp.ne.s32.totalorder %v306, 0
    %vm323 = vcmp.ne.s32.totalorder %v307, 0
    %vm324 = vcmp.ne.s32.totalorder %v308, 0
    %vm325 = vcmp.ne.s32.totalorder %v309, 0
    %vm326 = vcmp.ne.s32.totalorder %v310, 0
    %vm327 = vcmp.ne.s32.totalorder %v311, 0
    %vm328 = vcmp.ne.s32.totalorder %v312, 0
    %vm329 = vcmp.ne.s32.totalorder %v313, 0
    %vm330 = vcmp.ne.s32.totalorder %v314, 0
    %vm331 = vcmp.ne.s32.totalorder %v315, 0
    %vm332 = vcmp.ne.s32.totalorder %v316, 0
    %vm333 = vcmp.ne.s32.totalorder %v317, 0
    %vm334 = vcmp.ne.s32.totalorder %v318, 0
    %vm335 = vcmp.ne.s32.totalorder %v319, 0
    %vm336 = vcmp.ne.s32.totalorder %v320, 0
    %v337 = vsel %vm321, 1, 0
    %v338 = vsel %vm322, 1, 0
    %v339 = vsel %vm323, 1, 0
    %v340 = vsel %vm324, 1, 0
    %v341 = vsel %vm325, 1, 0
    %v342 = vsel %vm326, 1, 0
    %v343 = vsel %vm327, 1, 0
    %v344 = vsel %vm328, 1, 0
    %v345 = vsel %vm329, 1, 0
    %v346 = vsel %vm330, 1, 0
    %v347 = vsel %vm331, 1, 0
    %v348 = vsel %vm332, 1, 0
    %v349 = vsel %vm333, 1, 0
    %v350 = vsel %vm334, 1, 0
    %v351 = vsel %vm335, 1, 0
    %v352 = vsel %vm336, 1, 0
    %v353 = vcvt.s32.f32 %v337
    %v354 = vcvt.s32.f32 %v338
    %v355 = vcvt.s32.f32 %v339
    %v356 = vcvt.s32.f32 %v340
    %v357 = vcvt.s32.f32 %v341
    %v358 = vcvt.s32.f32 %v342
    %v359 = vcvt.s32.f32 %v343
    %v360 = vcvt.s32.f32 %v344
    %v361 = vcvt.s32.f32 %v345
    %v362 = vcvt.s32.f32 %v346
    %v363 = vcvt.s32.f32 %v347
    %v364 = vcvt.s32.f32 %v348
    %v365 = vcvt.s32.f32 %v349
    %v366 = vcvt.s32.f32 %v350
    %v367 = vcvt.s32.f32 %v351
    %v368 = vcvt.s32.f32 %v352
    %vm369 = vcmp.ne.s32.totalorder %v305, 4
    %vm370 = vcmp.ne.s32.totalorder %v306, 4
    %vm371 = vcmp.ne.s32.totalorder %v307, 4
    %vm372 = vcmp.ne.s32.totalorder %v308, 4
    %vm373 = vcmp.ne.s32.totalorder %v309, 4
    %vm374 = vcmp.ne.s32.totalorder %v310, 4
    %vm375 = vcmp.ne.s32.totalorder %v311, 4
    %vm376 = vcmp.ne.s32.totalorder %v312, 4
    %vm377 = vcmp.ne.s32.totalorder %v313, 4
    %vm378 = vcmp.ne.s32.totalorder %v314, 4
    %vm379 = vcmp.ne.s32.totalorder %v315, 4
    %vm380 = vcmp.ne.s32.totalorder %v316, 4
    %vm381 = vcmp.ne.s32.totalorder %v317, 4
    %vm382 = vcmp.ne.s32.totalorder %v318, 4
    %vm383 = vcmp.ne.s32.totalorder %v319, 4
    %vm384 = vcmp.ne.s32.totalorder %v320, 4
    %v385 = vsel %vm369, 1, 0
    %v386 = vsel %vm370, 1, 0
    %v387 = vsel %vm371, 1, 0
    %v388 = vsel %vm372, 1, 0
    %v389 = vsel %vm373, 1, 0
    %v390 = vsel %vm374, 1, 0
    %v391 = vsel %vm375, 1, 0
    %v392 = vsel %vm376, 1, 0
    %v393 = vsel %vm377, 1, 0
    %v394 = vsel %vm378, 1, 0
    %v395 = vsel %vm379, 1, 0
    %v396 = vsel %vm380, 1, 0
    %v397 = vsel %vm381, 1, 0
    %v398 = vsel %vm382, 1, 0
    %v399 = vsel %vm383, 1, 0
    %v400 = vsel %vm384, 1, 0
    %v401 = vcvt.s32.f32 %v385
    %v402 = vcvt.s32.f32 %v386
    %v403 = vcvt.s32.f32 %v387
    %v404 = vcvt.s32.f32 %v388
    %v405 = vcvt.s32.f32 %v389
    %v406 = vcvt.s32.f32 %v390
    %v407 = vcvt.s32.f32 %v391
    %v408 = vcvt.s32.f32 %v392
    %v409 = vcvt.s32.f32 %v393
    %v410 = vcvt.s32.f32 %v394
    %v411 = vcvt.s32.f32 %v395
    %v412 = vcvt.s32.f32 %v396
    %v413 = vcvt.s32.f32 %v397
    %v414 = vcvt.s32.f32 %v398
    %v415 = vcvt.s32.f32 %v399
    %v416 = vcvt.s32.f32 %v400
    %v417 = vld [vmem:[%s0] sm:$0xff]
    %v418 = vld [vmem:[%s0 + $0x8] sm:$0xff]
    %v419 = vld [vmem:[%s0 + $0x10] sm:$0xff]
    %v420 = vld [vmem:[%s0 + $0x18] sm:$0xff]
    %v421 = vld [vmem:[%s0 + $0x20] sm:$0xff]
    %v422 = vld [vmem:[%s0 + $0x28] sm:$0xff]
    %v423 = vld [vmem:[%s0 + $0x30] sm:$0xff]
    %v424 = vld [vmem:[%s0 + $0x38] sm:$0xff]
    %v425 = vld [vmem:[%s0 + $0x40] sm:$0xff]
    %v426 = vld [vmem:[%s0 + $0x48] sm:$0xff]
    %v427 = vld [vmem:[%s0 + $0x50] sm:$0xff]
    %v428 = vld [vmem:[%s0 + $0x58] sm:$0xff]
    %v429 = vld [vmem:[%s0 + $0x60] sm:$0xff]
    %v430 = vld [vmem:[%s0 + $0x68] sm:$0xff]
    %v431 = vld [vmem:[%s0 + $0x70] sm:$0xff]
    %v432 = vld [vmem:[%s0 + $0x78] sm:$0x1f]
    %v434 = vlaneseq
    %v435 = vshrl.u32 %v434, 7
    %v436 = vsub.s32 0, %v435
    %v437 = vrot.slane %v38, %v436
    %vm439 = vcmask 326656
    %v441 = vsel %vm439, %v417, 0
    %v444 = vsel %vm439, %v418, 0
    %v447 = vsel %vm439, %v419, 0
    %v450 = vsel %vm439, %v420, 0
    %v453 = vsel %vm439, %v421, 0
    %v456 = vsel %vm439, %v422, 0
    %v459 = vsel %vm439, %v423, 0
    %v462 = vsel %vm439, %v424, 0
    %v465 = vsel %vm439, %v425, 0
    %v468 = vsel %vm439, %v426, 0
    %v471 = vsel %vm439, %v427, 0
    %v474 = vsel %vm439, %v428, 0
    %v477 = vsel %vm439, %v429, 0
    %v480 = vsel %vm439, %v430, 0
    %v483 = vsel %vm439, %v431, 0
    %v486 = vsel %vm439, %v432, 0
    %488 = vmatprep.subr.mxu0 0.0
    %489 = vmatpush1.msra.mxu0 %v33
    %490 = vmatprep.subr.mxu0 0.0
    %491 = vmatpush1.msra.mxu0 %v34
    %492 = vmatprep.subr.mxu0 0.0
    %493 = vmatpush1.msra.mxu0 %v35
    %494 = vmatprep.subr.mxu0 0.0
    %495 = vmatpush1.msra.mxu0 %v36
    %496 = vmatprep.subr.mxu0 0.0
    %497 = vmatpush1.msra.mxu0 %v37
    %498 = vmatprep.subr.mxu0 0.0
    %499 = vmatpush1.msra.mxu0 0.0
    %500 = vmatprep.subr.mxu0 0.0
    %501 = vmatpush1.msra.mxu0 0.0
    %502 = vmatprep.subr.mxu0 0.0
    %503 = vmatpush1.msra.mxu0 0.0
    %504 = vmatprep.subr.mxu0 0.0
    %505 = vmatpush1.msra.mxu0 0.0
    %506 = vmatprep.subr.mxu0 0.0
    %507 = vmatpush1.msra.mxu0 0.0
    %508 = vmatprep.subr.mxu0 0.0
    %509 = vmatpush1.msra.mxu0 0.0
    %510 = vmatprep.subr.mxu0 0.0
    %511 = vmatpush1.msra.mxu0 0.0
    %512 = vmatprep.subr.mxu0 0.0
    %513 = vmatpush1.msra.mxu0 0.0
    %514 = vmatprep.subr.mxu0 0.0
    %515 = vmatpush1.msra.mxu0 0.0
    %516 = vmatprep.subr.mxu0 0.0
    %517 = vmatpush1.msra.mxu0 0.0
    %518 = vmatprep.subr.mxu0 0.0
    %519 = vmatpush1.msra.mxu0 0.0
    %520 = vmatprep.subr.mxu0 0.0
    %521 = vmatpush1.msra.mxu0 0.0
    %522 = vmatprep.subr.mxu0 0.0
    %523 = vmatpush1.msra.mxu0 0.0
    %524 = vmatprep.subr.mxu0 0.0
    %525 = vmatpush1.msra.mxu0 0.0
    %526 = vmatprep.subr.mxu0 0.0
    %527 = vmatpush1.msra.mxu0 0.0
    %528 = vmatprep.subr.mxu0 0.0
    %529 = vmatpush1.msra.mxu0 0.0
    %530 = vmatprep.subr.mxu0 0.0
    %531 = vmatpush1.msra.mxu0 0.0
    %532 = vmatprep.subr.mxu0 0.0
    %533 = vmatpush1.msra.mxu0 0.0
    %534 = vmatprep.subr.mxu0 0.0
    %535 = vmatpush1.msra.mxu0 0.0
    %536 = vmatprep.subr.mxu0 0.0
    %537 = vmatpush1.msra.mxu0 0.0
    %538 = vmatprep.subr.mxu0 0.0
    %539 = vmatpush1.msra.mxu0 0.0
    %540 = vmatprep.subr.mxu0 0.0
    %541 = vmatpush1.msra.mxu0 0.0
    %542 = vmatprep.subr.mxu0 0.0
    %543 = vmatpush1.msra.mxu0 0.0
    %544 = vmatprep.subr.mxu0 0.0
    %545 = vmatpush1.msra.mxu0 0.0
    %546 = vmatprep.subr.mxu0 0.0
    %547 = vmatpush1.msra.mxu0 0.0
    %548 = vmatprep.subr.mxu0 0.0
    %549 = vmatpush1.msra.mxu0 0.0
    %550 = vmatprep.subr.mxu0 0.0
    %551 = vmatpush1.msra.mxu0 0.0
    %552 = vmatprep.mubr.f32.mxu0 0.0
    %553 = vmatmul.mubr.f32.gmra.mrb[0].mxu0 %v441
    %v554 = vpop.f32.mrb[0].mxu0
    %v555 = vadd.f32 %v437, %v554
    %v556 = vpop.f32.mrb[0].mxu0
    %557 = vmatprep.mubr.f32.mxu0 0.0
    %558 = vmatmul.mubr.f32.gmra.mrb[0].mxu0 %v444
    %v559 = vpop.f32.mrb[0].mxu0
    %v560 = vadd.f32 %v437, %v559
    %v561 = vpop.f32.mrb[0].mxu0
    %562 = vmatprep.mubr.f32.mxu0 0.0
    %563 = vmatmul.mubr.f32.gmra.mrb[0].mxu0 %v447
    %v564 = vpop.f32.mrb[0].mxu0
    %v565 = vadd.f32 %v437, %v564
    %v566 = vpop.f32.mrb[0].mxu0
    %567 = vmatprep.mubr.f32.mxu0 0.0
    %568 = vmatmul.mubr.f32.gmra.mrb[0].mxu0 %v450
    %v569 = vpop.f32.mrb[0].mxu0
    %v570 = vadd.f32 %v437, %v569
    %v571 = vpop.f32.mrb[0].mxu0
    %572 = vmatprep.mubr.f32.mxu0 0.0
    %573 = vmatmul.mubr.f32.gmra.mrb[0].mxu0 %v453
    %v574 = vpop.f32.mrb[0].mxu0
    %v575 = vadd.f32 %v437, %v574
    %v576 = vpop.f32.mrb[0].mxu0
    %577 = vmatprep.mubr.f32.mxu0 0.0
    %578 = vmatmul.mubr.f32.gmra.mrb[0].mxu0 %v456
    %v579 = vpop.f32.mrb[0].mxu0
    %v580 = vadd.f32 %v437, %v579
    %v581 = vpop.f32.mrb[0].mxu0
    %582 = vmatprep.mubr.f32.mxu0 0.0
    %583 = vmatmul.mubr.f32.gmra.mrb[0].mxu0 %v459
    %v584 = vpop.f32.mrb[0].mxu0
    %v585 = vadd.f32 %v437, %v584
    %v586 = vpop.f32.mrb[0].mxu0
    %587 = vmatprep.mubr.f32.mxu0 0.0
    %588 = vmatmul.mubr.f32.gmra.mrb[0].mxu0 %v462
    %v589 = vpop.f32.mrb[0].mxu0
    %v590 = vadd.f32 %v437, %v589
    %v591 = vpop.f32.mrb[0].mxu0
    %592 = vmatprep.mubr.f32.mxu0 0.0
    %593 = vmatmul.mubr.f32.gmra.mrb[0].mxu0 %v465
    %v594 = vpop.f32.mrb[0].mxu0
    %v595 = vadd.f32 %v437, %v594
    %v596 = vpop.f32.mrb[0].mxu0
    %597 = vmatprep.mubr.f32.mxu0 0.0
    %598 = vmatmul.mubr.f32.gmra.mrb[0].mxu0 %v468
    %v599 = vpop.f32.mrb[0].mxu0
    %v600 = vadd.f32 %v437, %v599
    %v601 = vpop.f32.mrb[0].mxu0
    %602 = vmatprep.mubr.f32.mxu0 0.0
    %603 = vmatmul.mubr.f32.gmra.mrb[0].mxu0 %v471
    %v604 = vpop.f32.mrb[0].mxu0
    %v605 = vadd.f32 %v437, %v604
    %v606 = vpop.f32.mrb[0].mxu0
    %607 = vmatprep.mubr.f32.mxu0 0.0
    %608 = vmatmul.mubr.f32.gmra.mrb[0].mxu0 %v474
    %v609 = vpop.f32.mrb[0].mxu0
    %v610 = vadd.f32 %v437, %v609
    %v611 = vpop.f32.mrb[0].mxu0
    %612 = vmatprep.mubr.f32.mxu0 0.0
    %613 = vmatmul.mubr.f32.gmra.mrb[0].mxu0 %v477
    %v614 = vpop.f32.mrb[0].mxu0
    %v615 = vadd.f32 %v437, %v614
    %v616 = vpop.f32.mrb[0].mxu0
    %617 = vmatprep.mubr.f32.mxu0 0.0
    %618 = vmatmul.mubr.f32.gmra.mrb[0].mxu0 %v480
    %v619 = vpop.f32.mrb[0].mxu0
    %v620 = vadd.f32 %v437, %v619
    %v621 = vpop.f32.mrb[0].mxu0
    %622 = vmatprep.mubr.f32.mxu0 0.0
    %623 = vmatmul.mubr.f32.gmra.mrb[0].mxu0 %v483
    %v624 = vpop.f32.mrb[0].mxu0
    %v625 = vadd.f32 %v437, %v624
    %v626 = vpop.f32.mrb[0].mxu0
    %627 = vmatprep.mubr.f32.mxu0 0.0
    %628 = vmatmul.mubr.f32.gmra.mrb[0].mxu0 %v486
    %v629 = vpop.f32.mrb[0].mxu0
    %v630 = vadd.f32 %v437, %v629
    %v631 = vpop.f32.mrb[0].mxu0
    %632 = vdwg.mxu0
    %v633 = vmax.f32 %v555, 0.0
    %v634 = vmax.f32 %v560, 0.0
    %v635 = vmax.f32 %v565, 0.0
    %v636 = vmax.f32 %v570, 0.0
    %v637 = vmax.f32 %v575, 0.0
    %v638 = vmax.f32 %v580, 0.0
    %v639 = vmax.f32 %v585, 0.0
    %v640 = vmax.f32 %v590, 0.0
    %v641 = vmax.f32 %v595, 0.0
    %v642 = vmax.f32 %v600, 0.0
    %v643 = vmax.f32 %v605, 0.0
    %v644 = vmax.f32 %v610, 0.0
    %v645 = vmax.f32 %v615, 0.0
    %v646 = vmax.f32 %v620, 0.0
    %v647 = vmax.f32 %v625, 0.0
    %v648 = vmax.f32 %v630, 0.0
    %v649 = vld [vmem:[%s3] sm:$0xff]
    %v650 = vld [vmem:[%s3 + $0x8] sm:$0x1]
    %vm667 = vcmask 1045504
    %v668 = vrot.slane %v633, 2
    %v669 = vrot.slane %v634, 2
    %v670 = vsel %vm667, %v668, %v669
    %v671 = vrot.slane %v635, 2
    %v672 = vsel %vm667, %v669, %v671
    %v673 = vrot.slane %v636, 2
    %v674 = vsel %vm667, %v671, %v673
    %v675 = vrot.slane %v637, 2
    %v676 = vsel %vm667, %v673, %v675
    %v677 = vrot.slane %v638, 2
    %v678 = vsel %vm667, %v675, %v677
    %v679 = vrot.slane %v639, 2
    %v680 = vsel %vm667, %v677, %v679
    %v681 = vrot.slane %v640, 2
    %v682 = vsel %vm667, %v679, %v681
    %v683 = vrot.slane %v641, 2
    %v684 = vsel %vm667, %v681, %v683
    %v685 = vrot.slane %v642, 2
    %v686 = vsel %vm667, %v683, %v685
    %v687 = vrot.slane %v643, 2
    %v688 = vsel %vm667, %v685, %v687
    %v689 = vrot.slane %v644, 2
    %v690 = vsel %vm667, %v687, %v689
    %v691 = vrot.slane %v645, 2
    %v692 = vsel %vm667, %v689, %v691
    %v693 = vrot.slane %v646, 2
    %v694 = vsel %vm667, %v691, %v693
    %v695 = vrot.slane %v647, 2
    %v696 = vsel %vm667, %v693, %v695
    %v697 = vrot.slane %v648, 2
    %v698 = vsel %vm667, %v695, %v697
    %v716 = vsel %vm667, 0.0, %v668
    %vm717 = vcmask 1042432
    %v718 = vsel %vm717, %v697, 0.0
    %v719 = vlaneseq
    %v720 = vshrl.u32 %v719, 7
    %v721 = vsub.s32 0, %v720
    %v722 = vrot.slane %v649, %v721
    %v723 = vmul.f32 %v716, %v722
    %v724 = vmul.f32 %v670, %v722
    %v725 = vmul.f32 %v672, %v722
    %v726 = vmul.f32 %v674, %v722
    %v727 = vmul.f32 %v676, %v722
    %v728 = vmul.f32 %v678, %v722
    %v729 = vmul.f32 %v680, %v722
    %v730 = vmul.f32 %v682, %v722
    %v731 = vmul.f32 %v684, %v722
    %v732 = vmul.f32 %v686, %v722
    %v733 = vmul.f32 %v688, %v722
    %v734 = vmul.f32 %v690, %v722
    %v735 = vmul.f32 %v692, %v722
    %v736 = vmul.f32 %v694, %v722
    %v737 = vmul.f32 %v696, %v722
    %v738 = vmul.f32 %v698, %v722
    %v739 = vadd.f32 %v723, 0.0
    %v740 = vadd.f32 %v724, 0.0
    %v741 = vadd.f32 %v725, 0.0
    %v742 = vadd.f32 %v726, 0.0
    %v743 = vadd.f32 %v727, 0.0
    %v744 = vadd.f32 %v728, 0.0
    %v745 = vadd.f32 %v729, 0.0
    %v746 = vadd.f32 %v730, 0.0
    %v747 = vadd.f32 %v731, 0.0
    %v748 = vadd.f32 %v732, 0.0
    %v749 = vadd.f32 %v733, 0.0
    %v750 = vadd.f32 %v734, 0.0
    %v751 = vadd.f32 %v735, 0.0
    %v752 = vadd.f32 %v736, 0.0
    %v753 = vadd.f32 %v737, 0.0
    %v754 = vadd.f32 %v738, 0.0
    %v755 = vlaneseq
    %v756 = vshrl.u32 %v755, 7
    %v757 = vsub.s32 3, %v756
    %v758 = vrot.slane %v649, %v757
    %v759 = vmul.f32 %v716, %v758
    %v760 = vmul.f32 %v670, %v758
    %v761 = vmul.f32 %v672, %v758
    %v762 = vmul.f32 %v674, %v758
    %v763 = vmul.f32 %v676, %v758
    %v764 = vmul.f32 %v678, %v758
    %v765 = vmul.f32 %v680, %v758
    %v766 = vmul.f32 %v682, %v758
    %v767 = vmul.f32 %v684, %v758
    %v768 = vmul.f32 %v686, %v758
    %v769 = vmul.f32 %v688, %v758
    %v770 = vmul.f32 %v690, %v758
    %v771 = vmul.f32 %v692, %v758
    %v772 = vmul.f32 %v694, %v758
    %v773 = vmul.f32 %v696, %v758
    %v774 = vmul.f32 %v698, %v758
    %v775 = vmul.f32 %v718, %v758
    %v793 = vrot.slane %v759, 5
    %v794 = vrot.slane %v760, 5
    %v795 = vsel %vm717, %v793, %v794
    %v796 = vrot.slane %v761, 5
    %v797 = vsel %vm717, %v794, %v796
    %v798 = vrot.slane %v762, 5
    %v799 = vsel %vm717, %v796, %v798
    %v800 = vrot.slane %v763, 5
    %v801 = vsel %vm717, %v798, %v800
    %v802 = vrot.slane %v764, 5
    %v803 = vsel %vm717, %v800, %v802
    %v804 = vrot.slane %v765, 5
    %v805 = vsel %vm717, %v802, %v804
    %v806 = vrot.slane %v766, 5
    %v807 = vsel %vm717, %v804, %v806
    %v808 = vrot.slane %v767, 5
    %v809 = vsel %vm717, %v806, %v808
    %v810 = vrot.slane %v768, 5
    %v811 = vsel %vm717, %v808, %v810
    %v812 = vrot.slane %v769, 5
    %v813 = vsel %vm717, %v810, %v812
    %v814 = vrot.slane %v770, 5
    %v815 = vsel %vm717, %v812, %v814
    %v816 = vrot.slane %v771, 5
    %v817 = vsel %vm717, %v814, %v816
    %v818 = vrot.slane %v772, 5
    %v819 = vsel %vm717, %v816, %v818
    %v820 = vrot.slane %v773, 5
    %v821 = vsel %vm717, %v818, %v820
    %v822 = vrot.slane %v774, 5
    %v823 = vsel %vm717, %v820, %v822
    %v824 = vrot.slane %v775, 5
    %v825 = vsel %vm717, %v822, %v824
    %v842 = vadd.f32 %v739, %v795
    %v843 = vadd.f32 %v740, %v797
    %v844 = vadd.f32 %v741, %v799
    %v845 = vadd.f32 %v742, %v801
    %v846 = vadd.f32 %v743, %v803
    %v847 = vadd.f32 %v744, %v805
    %v848 = vadd.f32 %v745, %v807
    %v849 = vadd.f32 %v746, %v809
    %v850 = vadd.f32 %v747, %v811
    %v851 = vadd.f32 %v748, %v813
    %v852 = vadd.f32 %v749, %v815
    %v853 = vadd.f32 %v750, %v817
    %v854 = vadd.f32 %v751, %v819
    %v855 = vadd.f32 %v752, %v821
    %v856 = vadd.f32 %v753, %v823
    %v857 = vadd.f32 %v754, %v825
    %v858 = vlaneseq
    %v859 = vshrl.u32 %v858, 7
    %v860 = vsub.s32 6, %v859
    %v861 = vrot.slane %v649, %v860
    %v862 = vmul.f32 %v670, %v861
    %v863 = vmul.f32 %v672, %v861
    %v864 = vmul.f32 %v674, %v861
    %v865 = vmul.f32 %v676, %v861
    %v866 = vmul.f32 %v678, %v861
    %v867 = vmul.f32 %v680, %v861
    %v868 = vmul.f32 %v682, %v861
    %v869 = vmul.f32 %v684, %v861
    %v870 = vmul.f32 %v686, %v861
    %v871 = vmul.f32 %v688, %v861
    %v872 = vmul.f32 %v690, %v861
    %v873 = vmul.f32 %v692, %v861
    %v874 = vmul.f32 %v694, %v861
    %v875 = vmul.f32 %v696, %v861
    %v876 = vmul.f32 %v698, %v861
    %v877 = vmul.f32 %v718, %v861
    %v894 = vrot.slane %v862, 2
    %v895 = vrot.slane %v863, 2
    %v896 = vsel %vm667, %v894, %v895
    %v897 = vrot.slane %v864, 2
    %v898 = vsel %vm667, %v895, %v897
    %v899 = vrot.slane %v865, 2
    %v900 = vsel %vm667, %v897, %v899
    %v901 = vrot.slane %v866, 2
    %v902 = vsel %vm667, %v899, %v901
    %v903 = vrot.slane %v867, 2
    %v904 = vsel %vm667, %v901, %v903
    %v905 = vrot.slane %v868, 2
    %v906 = vsel %vm667, %v903, %v905
    %v907 = vrot.slane %v869, 2
    %v908 = vsel %vm667, %v905, %v907
    %v909 = vrot.slane %v870, 2
    %v910 = vsel %vm667, %v907, %v909
    %v911 = vrot.slane %v871, 2
    %v912 = vsel %vm667, %v909, %v911
    %v913 = vrot.slane %v872, 2
    %v914 = vsel %vm667, %v911, %v913
    %v915 = vrot.slane %v873, 2
    %v916 = vsel %vm667, %v913, %v915
    %v917 = vrot.slane %v874, 2
    %v918 = vsel %vm667, %v915, %v917
    %v919 = vrot.slane %v875, 2
    %v920 = vsel %vm667, %v917, %v919
    %v921 = vrot.slane %v876, 2
    %v922 = vsel %vm667, %v919, %v921
    %v923 = vrot.slane %v877, 2
    %v924 = vsel %vm667, %v921, %v923
    %v941 = vadd.f32 %v842, %v896
    %v942 = vadd.f32 %v843, %v898
    %v943 = vadd.f32 %v844, %v900
    %v944 = vadd.f32 %v845, %v902
    %v945 = vadd.f32 %v846, %v904
    %v946 = vadd.f32 %v847, %v906
    %v947 = vadd.f32 %v848, %v908
    %v948 = vadd.f32 %v849, %v910
    %v949 = vadd.f32 %v850, %v912
    %v950 = vadd.f32 %v851, %v914
    %v951 = vadd.f32 %v852, %v916
    %v952 = vadd.f32 %v853, %v918
    %v953 = vadd.f32 %v854, %v920
    %v954 = vadd.f32 %v855, %v922
    %v955 = vadd.f32 %v856, %v924
    %v956 = vadd.f32 %v857, %v923
    %v957 = vlaneseq
    %v958 = vshrl.u32 %v957, 7
    %v959 = vsub.s32 1, %v958
    %v960 = vrot.slane %v649, %v959
    %v961 = vmul.f32 %v716, %v960
    %v962 = vmul.f32 %v670, %v960
    %v963 = vmul.f32 %v672, %v960
    %v964 = vmul.f32 %v674, %v960
    %v965 = vmul.f32 %v676, %v960
    %v966 = vmul.f32 %v678, %v960
    %v967 = vmul.f32 %v680, %v960
    %v968 = vmul.f32 %v682, %v960
    %v969 = vmul.f32 %v684, %v960
    %v970 = vmul.f32 %v686, %v960
    %v971 = vmul.f32 %v688, %v960
    %v972 = vmul.f32 %v690, %v960
    %v973 = vmul.f32 %v692, %v960
    %v974 = vmul.f32 %v694, %v960
    %v975 = vmul.f32 %v696, %v960
    %v976 = vmul.f32 %v698, %v960
    %v977 = vadd.f32 %v961, 0.0
    %v978 = vadd.f32 %v962, 0.0
    %v979 = vadd.f32 %v963, 0.0
    %v980 = vadd.f32 %v964, 0.0
    %v981 = vadd.f32 %v965, 0.0
    %v982 = vadd.f32 %v966, 0.0
    %v983 = vadd.f32 %v967, 0.0
    %v984 = vadd.f32 %v968, 0.0
    %v985 = vadd.f32 %v969, 0.0
    %v986 = vadd.f32 %v970, 0.0
    %v987 = vadd.f32 %v971, 0.0
    %v988 = vadd.f32 %v972, 0.0
    %v989 = vadd.f32 %v973, 0.0
    %v990 = vadd.f32 %v974, 0.0
    %v991 = vadd.f32 %v975, 0.0
    %v992 = vadd.f32 %v976, 0.0
    %v993 = vlaneseq
    %v994 = vshrl.u32 %v993, 7
    %v995 = vsub.s32 4, %v994
    %v996 = vrot.slane %v649, %v995
    %v997 = vmul.f32 %v716, %v996
    %v998 = vmul.f32 %v670, %v996
    %v999 = vmul.f32 %v672, %v996
    %v1000 = vmul.f32 %v674, %v996
    %v1001 = vmul.f32 %v676, %v996
    %v1002 = vmul.f32 %v678, %v996
    %v1003 = vmul.f32 %v680, %v996
    %v1004 = vmul.f32 %v682, %v996
    %v1005 = vmul.f32 %v684, %v996
    %v1006 = vmul.f32 %v686, %v996
    %v1007 = vmul.f32 %v688, %v996
    %v1008 = vmul.f32 %v690, %v996
    %v1009 = vmul.f32 %v692, %v996
    %v1010 = vmul.f32 %v694, %v996
    %v1011 = vmul.f32 %v696, %v996
    %v1012 = vmul.f32 %v698, %v996
    %v1013 = vmul.f32 %v718, %v996
    %v1031 = vrot.slane %v997, 5
    %v1032 = vrot.slane %v998, 5
    %v1033 = vsel %vm717, %v1031, %v1032
    %v1034 = vrot.slane %v999, 5
    %v1035 = vsel %vm717, %v1032, %v1034
    %v1036 = vrot.slane %v1000, 5
    %v1037 = vsel %vm717, %v1034, %v1036
    %v1038 = vrot.slane %v1001, 5
    %v1039 = vsel %vm717, %v1036, %v1038
    %v1040 = vrot.slane %v1002, 5
    %v1041 = vsel %vm717, %v1038, %v1040
    %v1042 = vrot.slane %v1003, 5
    %v1043 = vsel %vm717, %v1040, %v1042
    %v1044 = vrot.slane %v1004, 5
    %v1045 = vsel %vm717, %v1042, %v1044
    %v1046 = vrot.slane %v1005, 5
    %v1047 = vsel %vm717, %v1044, %v1046
    %v1048 = vrot.slane %v1006, 5
    %v1049 = vsel %vm717, %v1046, %v1048
    %v1050 = vrot.slane %v1007, 5
    %v1051 = vsel %vm717, %v1048, %v1050
    %v1052 = vrot.slane %v1008, 5
    %v1053 = vsel %vm717, %v1050, %v1052
    %v1054 = vrot.slane %v1009, 5
    %v1055 = vsel %vm717, %v1052, %v1054
    %v1056 = vrot.slane %v1010, 5
    %v1057 = vsel %vm717, %v1054, %v1056
    %v1058 = vrot.slane %v1011, 5
    %v1059 = vsel %vm717, %v1056, %v1058
    %v1060 = vrot.slane %v1012, 5
    %v1061 = vsel %vm717, %v1058, %v1060
    %v1062 = vrot.slane %v1013, 5
    %v1063 = vsel %vm717, %v1060, %v1062
    %v1080 = vadd.f32 %v977, %v1033
    %v1081 = vadd.f32 %v978, %v1035
    %v1082 = vadd.f32 %v979, %v1037
    %v1083 = vadd.f32 %v980, %v1039
    %v1084 = vadd.f32 %v981, %v1041
    %v1085 = vadd.f32 %v982, %v1043
    %v1086 = vadd.f32 %v983, %v1045
    %v1087 = vadd.f32 %v984, %v1047
    %v1088 = vadd.f32 %v985, %v1049
    %v1089 = vadd.f32 %v986, %v1051
    %v1090 = vadd.f32 %v987, %v1053
    %v1091 = vadd.f32 %v988, %v1055
    %v1092 = vadd.f32 %v989, %v1057
    %v1093 = vadd.f32 %v990, %v1059
    %v1094 = vadd.f32 %v991, %v1061
    %v1095 = vadd.f32 %v992, %v1063
    %v1096 = vlaneseq
    %v1097 = vshrl.u32 %v1096, 7
    %v1098 = vsub.s32 7, %v1097
    %v1099 = vrot.slane %v649, %v1098
    %v1100 = vmul.f32 %v670, %v1099
    %v1101 = vmul.f32 %v672, %v1099
    %v1102 = vmul.f32 %v674, %v1099
    %v1103 = vmul.f32 %v676, %v1099
    %v1104 = vmul.f32 %v678, %v1099
    %v1105 = vmul.f32 %v680, %v1099
    %v1106 = vmul.f32 %v682, %v1099
    %v1107 = vmul.f32 %v684, %v1099
    %v1108 = vmul.f32 %v686, %v1099
    %v1109 = vmul.f32 %v688, %v1099
    %v1110 = vmul.f32 %v690, %v1099
    %v1111 = vmul.f32 %v692, %v1099
    %v1112 = vmul.f32 %v694, %v1099
    %v1113 = vmul.f32 %v696, %v1099
    %v1114 = vmul.f32 %v698, %v1099
    %v1115 = vmul.f32 %v718, %v1099
    %v1132 = vrot.slane %v1100, 2
    %v1133 = vrot.slane %v1101, 2
    %v1134 = vsel %vm667, %v1132, %v1133
    %v1135 = vrot.slane %v1102, 2
    %v1136 = vsel %vm667, %v1133, %v1135
    %v1137 = vrot.slane %v1103, 2
    %v1138 = vsel %vm667, %v1135, %v1137
    %v1139 = vrot.slane %v1104, 2
    %v1140 = vsel %vm667, %v1137, %v1139
    %v1141 = vrot.slane %v1105, 2
    %v1142 = vsel %vm667, %v1139, %v1141
    %v1143 = vrot.slane %v1106, 2
    %v1144 = vsel %vm667, %v1141, %v1143
    %v1145 = vrot.slane %v1107, 2
    %v1146 = vsel %vm667, %v1143, %v1145
    %v1147 = vrot.slane %v1108, 2
    %v1148 = vsel %vm667, %v1145, %v1147
    %v1149 = vrot.slane %v1109, 2
    %v1150 = vsel %vm667, %v1147, %v1149
    %v1151 = vrot.slane %v1110, 2
    %v1152 = vsel %vm667, %v1149, %v1151
    %v1153 = vrot.slane %v1111, 2
    %v1154 = vsel %vm667, %v1151, %v1153
    %v1155 = vrot.slane %v1112, 2
    %v1156 = vsel %vm667, %v1153, %v1155
    %v1157 = vrot.slane %v1113, 2
    %v1158 = vsel %vm667, %v1155, %v1157
    %v1159 = vrot.slane %v1114, 2
    %v1160 = vsel %vm667, %v1157, %v1159
    %v1161 = vrot.slane %v1115, 2
    %v1162 = vsel %vm667, %v1159, %v1161
    %v1179 = vadd.f32 %v1080, %v1134
    %v1180 = vadd.f32 %v1081, %v1136
    %v1181 = vadd.f32 %v1082, %v1138
    %v1182 = vadd.f32 %v1083, %v1140
    %v1183 = vadd.f32 %v1084, %v1142
    %v1184 = vadd.f32 %v1085, %v1144
    %v1185 = vadd.f32 %v1086, %v1146
    %v1186 = vadd.f32 %v1087, %v1148
    %v1187 = vadd.f32 %v1088, %v1150
    %v1188 = vadd.f32 %v1089, %v1152
    %v1189 = vadd.f32 %v1090, %v1154
    %v1190 = vadd.f32 %v1091, %v1156
    %v1191 = vadd.f32 %v1092, %v1158
    %v1192 = vadd.f32 %v1093, %v1160
    %v1193 = vadd.f32 %v1094, %v1162
    %v1194 = vadd.f32 %v1095, %v1161
    %v1195 = vlaneseq
    %v1196 = vshrl.u32 %v1195, 7
    %v1197 = vsub.s32 2, %v1196
    %v1198 = vrot.slane %v649, %v1197
    %v1199 = vmul.f32 %v716, %v1198
    %v1200 = vmul.f32 %v670, %v1198
    %v1201 = vmul.f32 %v672, %v1198
    %v1202 = vmul.f32 %v674, %v1198
    %v1203 = vmul.f32 %v676, %v1198
    %v1204 = vmul.f32 %v678, %v1198
    %v1205 = vmul.f32 %v680, %v1198
    %v1206 = vmul.f32 %v682, %v1198
    %v1207 = vmul.f32 %v684, %v1198
    %v1208 = vmul.f32 %v686, %v1198
    %v1209 = vmul.f32 %v688, %v1198
    %v1210 = vmul.f32 %v690, %v1198
    %v1211 = vmul.f32 %v692, %v1198
    %v1212 = vmul.f32 %v694, %v1198
    %v1213 = vmul.f32 %v696, %v1198
    %v1214 = vmul.f32 %v698, %v1198
    %v1215 = vadd.f32 %v1199, 0.0
    %v1216 = vadd.f32 %v1200, 0.0
    %v1217 = vadd.f32 %v1201, 0.0
    %v1218 = vadd.f32 %v1202, 0.0
    %v1219 = vadd.f32 %v1203, 0.0
    %v1220 = vadd.f32 %v1204, 0.0
    %v1221 = vadd.f32 %v1205, 0.0
    %v1222 = vadd.f32 %v1206, 0.0
    %v1223 = vadd.f32 %v1207, 0.0
    %v1224 = vadd.f32 %v1208, 0.0
    %v1225 = vadd.f32 %v1209, 0.0
    %v1226 = vadd.f32 %v1210, 0.0
    %v1227 = vadd.f32 %v1211, 0.0
    %v1228 = vadd.f32 %v1212, 0.0
    %v1229 = vadd.f32 %v1213, 0.0
    %v1230 = vadd.f32 %v1214, 0.0
    %v1231 = vlaneseq
    %v1232 = vshrl.u32 %v1231, 7
    %v1233 = vsub.s32 5, %v1232
    %v1234 = vrot.slane %v649, %v1233
    %v1235 = vmul.f32 %v716, %v1234
    %v1236 = vmul.f32 %v670, %v1234
    %v1237 = vmul.f32 %v672, %v1234
    %v1238 = vmul.f32 %v674, %v1234
    %v1239 = vmul.f32 %v676, %v1234
    %v1240 = vmul.f32 %v678, %v1234
    %v1241 = vmul.f32 %v680, %v1234
    %v1242 = vmul.f32 %v682, %v1234
    %v1243 = vmul.f32 %v684, %v1234
    %v1244 = vmul.f32 %v686, %v1234
    %v1245 = vmul.f32 %v688, %v1234
    %v1246 = vmul.f32 %v690, %v1234
    %v1247 = vmul.f32 %v692, %v1234
    %v1248 = vmul.f32 %v694, %v1234
    %v1249 = vmul.f32 %v696, %v1234
    %v1250 = vmul.f32 %v698, %v1234
    %v1251 = vmul.f32 %v718, %v1234
    %v1269 = vrot.slane %v1235, 5
    %v1270 = vrot.slane %v1236, 5
    %v1271 = vsel %vm717, %v1269, %v1270
    %v1272 = vrot.slane %v1237, 5
    %v1273 = vsel %vm717, %v1270, %v1272
    %v1274 = vrot.slane %v1238, 5
    %v1275 = vsel %vm717, %v1272, %v1274
    %v1276 = vrot.slane %v1239, 5
    %v1277 = vsel %vm717, %v1274, %v1276
    %v1278 = vrot.slane %v1240, 5
    %v1279 = vsel %vm717, %v1276, %v1278
    %v1280 = vrot.slane %v1241, 5
    %v1281 = vsel %vm717, %v1278, %v1280
    %v1282 = vrot.slane %v1242, 5
    %v1283 = vsel %vm717, %v1280, %v1282
    %v1284 = vrot.slane %v1243, 5
    %v1285 = vsel %vm717, %v1282, %v1284
    %v1286 = vrot.slane %v1244, 5
    %v1287 = vsel %vm717, %v1284, %v1286
    %v1288 = vrot.slane %v1245, 5
    %v1289 = vsel %vm717, %v1286, %v1288
    %v1290 = vrot.slane %v1246, 5
    %v1291 = vsel %vm717, %v1288, %v1290
    %v1292 = vrot.slane %v1247, 5
    %v1293 = vsel %vm717, %v1290, %v1292
    %v1294 = vrot.slane %v1248, 5
    %v1295 = vsel %vm717, %v1292, %v1294
    %v1296 = vrot.slane %v1249, 5
    %v1297 = vsel %vm717, %v1294, %v1296
    %v1298 = vrot.slane %v1250, 5
    %v1299 = vsel %vm717, %v1296, %v1298
    %v1300 = vrot.slane %v1251, 5
    %v1301 = vsel %vm717, %v1298, %v1300
    %v1318 = vadd.f32 %v1215, %v1271
    %v1319 = vadd.f32 %v1216, %v1273
    %v1320 = vadd.f32 %v1217, %v1275
    %v1321 = vadd.f32 %v1218, %v1277
    %v1322 = vadd.f32 %v1219, %v1279
    %v1323 = vadd.f32 %v1220, %v1281
    %v1324 = vadd.f32 %v1221, %v1283
    %v1325 = vadd.f32 %v1222, %v1285
    %v1326 = vadd.f32 %v1223, %v1287
    %v1327 = vadd.f32 %v1224, %v1289
    %v1328 = vadd.f32 %v1225, %v1291
    %v1329 = vadd.f32 %v1226, %v1293
    %v1330 = vadd.f32 %v1227, %v1295
    %v1331 = vadd.f32 %v1228, %v1297
    %v1332 = vadd.f32 %v1229, %v1299
    %v1333 = vadd.f32 %v1230, %v1301
    %v1334 = vlaneseq
    %v1335 = vshrl.u32 %v1334, 7
    %v1336 = vsub.s32 0, %v1335
    %v1337 = vrot.slane %v650, %v1336
    %v1338 = vmul.f32 %v670, %v1337
    %v1339 = vmul.f32 %v672, %v1337
    %v1340 = vmul.f32 %v674, %v1337
    %v1341 = vmul.f32 %v676, %v1337
    %v1342 = vmul.f32 %v678, %v1337
    %v1343 = vmul.f32 %v680, %v1337
    %v1344 = vmul.f32 %v682, %v1337
    %v1345 = vmul.f32 %v684, %v1337
    %v1346 = vmul.f32 %v686, %v1337
    %v1347 = vmul.f32 %v688, %v1337
    %v1348 = vmul.f32 %v690, %v1337
    %v1349 = vmul.f32 %v692, %v1337
    %v1350 = vmul.f32 %v694, %v1337
    %v1351 = vmul.f32 %v696, %v1337
    %v1352 = vmul.f32 %v698, %v1337
    %v1353 = vmul.f32 %v718, %v1337
    %v1354 = vmul.f32 %v1337, 0.0
    %v1372 = vrot.slane %v1338, 2
    %v1373 = vrot.slane %v1339, 2
    %v1374 = vsel %vm667, %v1372, %v1373
    %v1375 = vrot.slane %v1340, 2
    %v1376 = vsel %vm667, %v1373, %v1375
    %v1377 = vrot.slane %v1341, 2
    %v1378 = vsel %vm667, %v1375, %v1377
    %v1379 = vrot.slane %v1342, 2
    %v1380 = vsel %vm667, %v1377, %v1379
    %v1381 = vrot.slane %v1343, 2
    %v1382 = vsel %vm667, %v1379, %v1381
    %v1383 = vrot.slane %v1344, 2
    %v1384 = vsel %vm667, %v1381, %v1383
    %v1385 = vrot.slane %v1345, 2
    %v1386 = vsel %vm667, %v1383, %v1385
    %v1387 = vrot.slane %v1346, 2
    %v1388 = vsel %vm667, %v1385, %v1387
    %v1389 = vrot.slane %v1347, 2
    %v1390 = vsel %vm667, %v1387, %v1389
    %v1391 = vrot.slane %v1348, 2
    %v1392 = vsel %vm667, %v1389, %v1391
    %v1393 = vrot.slane %v1349, 2
    %v1394 = vsel %vm667, %v1391, %v1393
    %v1395 = vrot.slane %v1350, 2
    %v1396 = vsel %vm667, %v1393, %v1395
    %v1397 = vrot.slane %v1351, 2
    %v1398 = vsel %vm667, %v1395, %v1397
    %v1399 = vrot.slane %v1352, 2
    %v1400 = vsel %vm667, %v1397, %v1399
    %v1401 = vrot.slane %v1353, 2
    %v1402 = vsel %vm667, %v1399, %v1401
    %v1403 = vrot.slane %v1354, 2
    %v1404 = vsel %vm667, %v1401, %v1403
    %v1421 = vadd.f32 %v1318, %v1374
    %v1422 = vadd.f32 %v1319, %v1376
    %v1423 = vadd.f32 %v1320, %v1378
    %v1424 = vadd.f32 %v1321, %v1380
    %v1425 = vadd.f32 %v1322, %v1382
    %v1426 = vadd.f32 %v1323, %v1384
    %v1427 = vadd.f32 %v1324, %v1386
    %v1428 = vadd.f32 %v1325, %v1388
    %v1429 = vadd.f32 %v1326, %v1390
    %v1430 = vadd.f32 %v1327, %v1392
    %v1431 = vadd.f32 %v1328, %v1394
    %v1432 = vadd.f32 %v1329, %v1396
    %v1433 = vadd.f32 %v1330, %v1398
    %v1434 = vadd.f32 %v1331, %v1400
    %v1435 = vadd.f32 %v1332, %v1402
    %v1436 = vadd.f32 %v1333, %v1404
    %v1437 = vmul.f32 %v941, %v353
    %v1438 = vmul.f32 %v942, %v354
    %v1439 = vmul.f32 %v943, %v355
    %v1440 = vmul.f32 %v944, %v356
    %v1441 = vmul.f32 %v945, %v357
    %v1442 = vmul.f32 %v946, %v358
    %v1443 = vmul.f32 %v947, %v359
    %v1444 = vmul.f32 %v948, %v360
    %v1445 = vmul.f32 %v949, %v361
    %v1446 = vmul.f32 %v950, %v362
    %v1447 = vmul.f32 %v951, %v363
    %v1448 = vmul.f32 %v952, %v364
    %v1449 = vmul.f32 %v953, %v365
    %v1450 = vmul.f32 %v954, %v366
    %v1451 = vmul.f32 %v955, %v367
    %v1452 = vmul.f32 %v956, %v368
    %vm1469 = vcmask 1046528
    %v1470 = vrot.slane %v1179, 1
    %v1471 = vrot.slane %v1180, 1
    %v1472 = vsel %vm1469, %v1470, %v1471
    %v1473 = vrot.slane %v1181, 1
    %v1474 = vsel %vm1469, %v1471, %v1473
    %v1475 = vrot.slane %v1182, 1
    %v1476 = vsel %vm1469, %v1473, %v1475
    %v1477 = vrot.slane %v1183, 1
    %v1478 = vsel %vm1469, %v1475, %v1477
    %v1479 = vrot.slane %v1184, 1
    %v1480 = vsel %vm1469, %v1477, %v1479
    %v1481 = vrot.slane %v1185, 1
    %v1482 = vsel %vm1469, %v1479, %v1481
    %v1483 = vrot.slane %v1186, 1
    %v1484 = vsel %vm1469, %v1481, %v1483
    %v1485 = vrot.slane %v1187, 1
    %v1486 = vsel %vm1469, %v1483, %v1485
    %v1487 = vrot.slane %v1188, 1
    %v1488 = vsel %vm1469, %v1485, %v1487
    %v1489 = vrot.slane %v1189, 1
    %v1490 = vsel %vm1469, %v1487, %v1489
    %v1491 = vrot.slane %v1190, 1
    %v1492 = vsel %vm1469, %v1489, %v1491
    %v1493 = vrot.slane %v1191, 1
    %v1494 = vsel %vm1469, %v1491, %v1493
    %v1495 = vrot.slane %v1192, 1
    %v1496 = vsel %vm1469, %v1493, %v1495
    %v1497 = vrot.slane %v1193, 1
    %v1498 = vsel %vm1469, %v1495, %v1497
    %v1499 = vrot.slane %v1194, 1
    %v1500 = vsel %vm1469, %v1497, %v1499
    %v1517 = vadd.f32 %v1437, %v1472
    %v1518 = vadd.f32 %v1438, %v1474
    %v1519 = vadd.f32 %v1439, %v1476
    %v1520 = vadd.f32 %v1440, %v1478
    %v1521 = vadd.f32 %v1441, %v1480
    %v1522 = vadd.f32 %v1442, %v1482
    %v1523 = vadd.f32 %v1443, %v1484
    %v1524 = vadd.f32 %v1444, %v1486
    %v1525 = vadd.f32 %v1445, %v1488
    %v1526 = vadd.f32 %v1446, %v1490
    %v1527 = vadd.f32 %v1447, %v1492
    %v1528 = vadd.f32 %v1448, %v1494
    %v1529 = vadd.f32 %v1449, %v1496
    %v1530 = vadd.f32 %v1450, %v1498
    %v1531 = vadd.f32 %v1451, %v1500
    %v1532 = vadd.f32 %v1452, %v1499
    %vm1549 = vcmask 1041408
    %v1550 = vrot.slane %v401, 6
    %v1551 = vrot.slane %v402, 6
    %v1552 = vsel %vm1549, %v1550, %v1551
    %v1553 = vrot.slane %v403, 6
    %v1554 = vsel %vm1549, %v1551, %v1553
    %v1555 = vrot.slane %v404, 6
    %v1556 = vsel %vm1549, %v1553, %v1555
    %v1557 = vrot.slane %v405, 6
    %v1558 = vsel %vm1549, %v1555, %v1557
    %v1559 = vrot.slane %v406, 6
    %v1560 = vsel %vm1549, %v1557, %v1559
    %v1561 = vrot.slane %v407, 6
    %v1562 = vsel %vm1549, %v1559, %v1561
    %v1563 = vrot.slane %v408, 6
    %v1564 = vsel %vm1549, %v1561, %v1563
    %v1565 = vrot.slane %v409, 6
    %v1566 = vsel %vm1549, %v1563, %v1565
    %v1567 = vrot.slane %v410, 6
    %v1568 = vsel %vm1549, %v1565, %v1567
    %v1569 = vrot.slane %v411, 6
    %v1570 = vsel %vm1549, %v1567, %v1569
    %v1571 = vrot.slane %v412, 6
    %v1572 = vsel %vm1549, %v1569, %v1571
    %v1573 = vrot.slane %v413, 6
    %v1574 = vsel %vm1549, %v1571, %v1573
    %v1575 = vrot.slane %v414, 6
    %v1576 = vsel %vm1549, %v1573, %v1575
    %v1577 = vrot.slane %v415, 6
    %v1578 = vsel %vm1549, %v1575, %v1577
    %v1579 = vrot.slane %v416, 6
    %v1580 = vsel %vm1549, %v1577, %v1579
    %v1597 = vmul.f32 %v1421, %v1550
    %v1598 = vmul.f32 %v1422, %v1552
    %v1599 = vmul.f32 %v1423, %v1554
    %v1600 = vmul.f32 %v1424, %v1556
    %v1601 = vmul.f32 %v1425, %v1558
    %v1602 = vmul.f32 %v1426, %v1560
    %v1603 = vmul.f32 %v1427, %v1562
    %v1604 = vmul.f32 %v1428, %v1564
    %v1605 = vmul.f32 %v1429, %v1566
    %v1606 = vmul.f32 %v1430, %v1568
    %v1607 = vmul.f32 %v1431, %v1570
    %v1608 = vmul.f32 %v1432, %v1572
    %v1609 = vmul.f32 %v1433, %v1574
    %v1610 = vmul.f32 %v1434, %v1576
    %v1611 = vmul.f32 %v1435, %v1578
    %v1612 = vmul.f32 %v1436, %v1580
    %v1629 = vrot.slane %v1597, 2
    %v1630 = vrot.slane %v1598, 2
    %v1631 = vsel %vm667, %v1629, %v1630
    %v1632 = vrot.slane %v1599, 2
    %v1633 = vsel %vm667, %v1630, %v1632
    %v1634 = vrot.slane %v1600, 2
    %v1635 = vsel %vm667, %v1632, %v1634
    %v1636 = vrot.slane %v1601, 2
    %v1637 = vsel %vm667, %v1634, %v1636
    %v1638 = vrot.slane %v1602, 2
    %v1639 = vsel %vm667, %v1636, %v1638
    %v1640 = vrot.slane %v1603, 2
    %v1641 = vsel %vm667, %v1638, %v1640
    %v1642 = vrot.slane %v1604, 2
    %v1643 = vsel %vm667, %v1640, %v1642
    %v1644 = vrot.slane %v1605, 2
    %v1645 = vsel %vm667, %v1642, %v1644
    %v1646 = vrot.slane %v1606, 2
    %v1647 = vsel %vm667, %v1644, %v1646
    %v1648 = vrot.slane %v1607, 2
    %v1649 = vsel %vm667, %v1646, %v1648
    %v1650 = vrot.slane %v1608, 2
    %v1651 = vsel %vm667, %v1648, %v1650
    %v1652 = vrot.slane %v1609, 2
    %v1653 = vsel %vm667, %v1650, %v1652
    %v1654 = vrot.slane %v1610, 2
    %v1655 = vsel %vm667, %v1652, %v1654
    %v1656 = vrot.slane %v1611, 2
    %v1657 = vsel %vm667, %v1654, %v1656
    %v1658 = vrot.slane %v1612, 2
    %v1659 = vsel %vm667, %v1656, %v1658
    %v1676 = vadd.f32 %v1517, %v1631
    %v1677 = vadd.f32 %v1518, %v1633
    %v1678 = vadd.f32 %v1519, %v1635
    %v1679 = vadd.f32 %v1520, %v1637
    %v1680 = vadd.f32 %v1521, %v1639
    %v1681 = vadd.f32 %v1522, %v1641
    %v1682 = vadd.f32 %v1523, %v1643
    %v1683 = vadd.f32 %v1524, %v1645
    %v1684 = vadd.f32 %v1525, %v1647
    %v1685 = vadd.f32 %v1526, %v1649
    %v1686 = vadd.f32 %v1527, %v1651
    %v1687 = vadd.f32 %v1528, %v1653
    %v1688 = vadd.f32 %v1529, %v1655
    %v1689 = vadd.f32 %v1530, %v1657
    %v1690 = vadd.f32 %v1531, %v1659
    %v1691 = vadd.f32 %v1532, %v1658
    %v1692 = vld [vmem:[%s4] sm:$0x1]
    %v1693 = vlaneseq
    %v1694 = vshrl.u32 %v1693, 7
    %v1695 = vsub.s32 0, %v1694
    %v1696 = vrot.slane %v1692, %v1695
    %v1697 = vadd.f32 %v1676, %v1696
    %v1698 = vadd.f32 %v1677, %v1696
    %v1699 = vadd.f32 %v1678, %v1696
    %v1700 = vadd.f32 %v1679, %v1696
    %v1701 = vadd.f32 %v1680, %v1696
    %v1702 = vadd.f32 %v1681, %v1696
    %v1703 = vadd.f32 %v1682, %v1696
    %v1704 = vadd.f32 %v1683, %v1696
    %v1705 = vadd.f32 %v1684, %v1696
    %v1706 = vadd.f32 %v1685, %v1696
    %v1707 = vadd.f32 %v1686, %v1696
    %v1708 = vadd.f32 %v1687, %v1696
    %v1709 = vadd.f32 %v1688, %v1696
    %v1710 = vadd.f32 %v1689, %v1696
    %v1711 = vadd.f32 %v1690, %v1696
    %v1712 = vadd.f32 %v1691, %v1696
    %v1713 = vmax.f32 %v1697, 0.0
    %v1714 = vmax.f32 %v1698, 0.0
    %v1715 = vmax.f32 %v1699, 0.0
    %v1716 = vmax.f32 %v1700, 0.0
    %v1717 = vmax.f32 %v1701, 0.0
    %v1718 = vmax.f32 %v1702, 0.0
    %v1719 = vmax.f32 %v1703, 0.0
    %v1720 = vmax.f32 %v1704, 0.0
    %v1721 = vmax.f32 %v1705, 0.0
    %v1722 = vmax.f32 %v1706, 0.0
    %v1723 = vmax.f32 %v1707, 0.0
    %v1724 = vmax.f32 %v1708, 0.0
    %v1725 = vmax.f32 %v1709, 0.0
    %v1726 = vmax.f32 %v1710, 0.0
    %v1727 = vmax.f32 %v1711, 0.0
    %v1728 = vmax.f32 %v1712, 0.0
    %v1729 = vld [vmem:[%s5] sm:$0xff]
    %v1730 = vld [vmem:[%s5 + $0x8] sm:$0xff]
    %v1731 = vld [vmem:[%s5 + $0x10] sm:$0xff]
    %v1732 = vld [vmem:[%s5 + $0x18] sm:$0xff]
    %v1733 = vld [vmem:[%s5 + $0x20] sm:$0xff]
    %v1734 = vld [vmem:[%s5 + $0x28] sm:$0xff]
    %v1735 = vld [vmem:[%s5 + $0x30] sm:$0xff]
    %v1736 = vld [vmem:[%s5 + $0x38] sm:$0xff]
    %v1737 = vld [vmem:[%s6] sm:$0x1]
    %v1738 = vlaneseq
    %v1739 = vshrl.u32 %v1738, 7
    %v1740 = vsub.s32 0, %v1739
    %v1741 = vrot.slane %v1737, %v1740
    %vm1742 = vcmask 523264
    %v1744 = vsel %vm1742, %v1713, 0
    %v1747 = vsel %vm1742, %v1714, 0
    %v1750 = vsel %vm1742, %v1715, 0
    %v1753 = vsel %vm1742, %v1716, 0
    %v1756 = vsel %vm1742, %v1717, 0
    %v1759 = vsel %vm1742, %v1718, 0
    %v1762 = vsel %vm1742, %v1719, 0
    %v1765 = vsel %vm1742, %v1720, 0
    %v1768 = vsel %vm1742, %v1721, 0
    %v1771 = vsel %vm1742, %v1722, 0
    %v1774 = vsel %vm1742, %v1723, 0
    %v1777 = vsel %vm1742, %v1724, 0
    %v1780 = vsel %vm1742, %v1725, 0
    %v1783 = vsel %vm1742, %v1726, 0
    %v1786 = vsel %vm1742, %v1727, 0
    %v1789 = vsel %vm1742, %v1728, 0
    %1791 = vmatprep.subr.mxu0 0.0
    %1792 = vmatpush1.msra.mxu0 %v1729
    %1793 = vmatprep.subr.mxu0 0.0
    %1794 = vmatpush1.msra.mxu0 %v1730
    %1795 = vmatprep.subr.mxu0 0.0
    %1796 = vmatpush1.msra.mxu0 %v1731
    %1797 = vmatprep.subr.mxu0 0.0
    %1798 = vmatpush1.msra.mxu0 %v1732
    %1799 = vmatprep.subr.mxu0 0.0
    %1800 = vmatpush1.msra.mxu0 %v1733
    %1801 = vmatprep.subr.mxu0 0.0
    %1802 = vmatpush1.msra.mxu0 %v1734
    %1803 = vmatprep.subr.mxu0 0.0
    %1804 = vmatpush1.msra.mxu0 %v1735
    %1805 = vmatprep.subr.mxu0 0.0
    %1806 = vmatpush1.msra.mxu0 %v1736
    %1807 = vmatprep.subr.mxu0 0.0
    %1808 = vmatpush1.msra.mxu0 0.0
    %1809 = vmatprep.subr.mxu0 0.0
    %1810 = vmatpush1.msra.mxu0 0.0
    %1811 = vmatprep.subr.mxu0 0.0
    %1812 = vmatpush1.msra.mxu0 0.0
    %1813 = vmatprep.subr.mxu0 0.0
    %1814 = vmatpush1.msra.mxu0 0.0
    %1815 = vmatprep.subr.mxu0 0.0
    %1816 = vmatpush1.msra.mxu0 0.0
    %1817 = vmatprep.subr.mxu0 0.0
    %1818 = vmatpush1.msra.mxu0 0.0
    %1819 = vmatprep.subr.mxu0 0.0
    %1820 = vmatpush1.msra.mxu0 0.0
    %1821 = vmatprep.subr.mxu0 0.0
    %1822 = vmatpush1.msra.mxu0 0.0
    %1823 = vmatprep.subr.mxu0 0.0
    %1824 = vmatpush1.msra.mxu0 0.0
    %1825 = vmatprep.subr.mxu0 0.0
    %1826 = vmatpush1.msra.mxu0 0.0
    %1827 = vmatprep.subr.mxu0 0.0
    %1828 = vmatpush1.msra.mxu0 0.0
    %1829 = vmatprep.subr.mxu0 0.0
    %1830 = vmatpush1.msra.mxu0 0.0
    %1831 = vmatprep.subr.mxu0 0.0
    %1832 = vmatpush1.msra.mxu0 0.0
    %1833 = vmatprep.subr.mxu0 0.0
    %1834 = vmatpush1.msra.mxu0 0.0
    %1835 = vmatprep.subr.mxu0 0.0
    %1836 = vmatpush1.msra.mxu0 0.0
    %1837 = vmatprep.subr.mxu0 0.0
    %1838 = vmatpush1.msra.mxu0 0.0
    %1839 = vmatprep.subr.mxu0 0.0
    %1840 = vmatpush1.msra.mxu0 0.0
    %1841 = vmatprep.subr.mxu0 0.0
    %1842 = vmatpush1.msra.mxu0 0.0
    %1843 = vmatprep.subr.mxu0 0.0
    %1844 = vmatpush1.msra.mxu0 0.0
    %1845 = vmatprep.subr.mxu0 0.0
    %1846 = vmatpush1.msra.mxu0 0.0
    %1847 = vmatprep.subr.mxu0 0.0
    %1848 = vmatpush1.msra.mxu0 0.0
    %1849 = vmatprep.subr.mxu0 0.0
    %1850 = vmatpush1.msra.mxu0 0.0
    %1851 = vmatprep.subr.mxu0 0.0
    %1852 = vmatpush1.msra.mxu0 0.0
    %1853 = vmatprep.subr.mxu0 0.0
    %1854 = vmatpush1.msra.mxu0 0.0
    %1855 = vmatprep.mubr.f32.mxu0 0.0
    %1856 = vmatmul.mubr.f32.gmra.mrb[0].mxu0 %v1744
    %v1857 = vpop.f32.mrb[0].mxu0
    %v1858 = vadd.f32 %v1741, %v1857
    %v1859 = vpop.f32.mrb[0].mxu0
    %1860 = vmatprep.mubr.f32.mxu0 0.0
    %1861 = vmatmul.mubr.f32.gmra.mrb[0].mxu0 %v1747
    %v1862 = vpop.f32.mrb[0].mxu0
    %v1863 = vadd.f32 %v1741, %v1862
    %v1864 = vpop.f32.mrb[0].mxu0
    %1865 = vmatprep.mubr.f32.mxu0 0.0
    %1866 = vmatmul.mubr.f32.gmra.mrb[0].mxu0 %v1750
    %v1867 = vpop.f32.mrb[0].mxu0
    %v1868 = vadd.f32 %v1741, %v1867
    %v1869 = vpop.f32.mrb[0].mxu0
    %1870 = vmatprep.mubr.f32.mxu0 0.0
    %1871 = vmatmul.mubr.f32.gmra.mrb[0].mxu0 %v1753
    %v1872 = vpop.f32.mrb[0].mxu0
    %v1873 = vadd.f32 %v1741, %v1872
    %v1874 = vpop.f32.mrb[0].mxu0
    %1875 = vmatprep.mubr.f32.mxu0 0.0
    %1876 = vmatmul.mubr.f32.gmra.mrb[0].mxu0 %v1756
    %v1877 = vpop.f32.mrb[0].mxu0
    %v1878 = vadd.f32 %v1741, %v1877
    %v1879 = vpop.f32.mrb[0].mxu0
    %1880 = vmatprep.mubr.f32.mxu0 0.0
    %1881 = vmatmul.mubr.f32.gmra.mrb[0].mxu0 %v1759
    %v1882 = vpop.f32.mrb[0].mxu0
    %v1883 = vadd.f32 %v1741, %v1882
    %v1884 = vpop.f32.mrb[0].mxu0
    %1885 = vmatprep.mubr.f32.mxu0 0.0
    %1886 = vmatmul.mubr.f32.gmra.mrb[0].mxu0 %v1762
    %v1887 = vpop.f32.mrb[0].mxu0
    %v1888 = vadd.f32 %v1741, %v1887
    %v1889 = vpop.f32.mrb[0].mxu0
    %1890 = vmatprep.mubr.f32.mxu0 0.0
    %1891 = vmatmul.mubr.f32.gmra.mrb[0].mxu0 %v1765
    %v1892 = vpop.f32.mrb[0].mxu0
    %v1893 = vadd.f32 %v1741, %v1892
    %v1894 = vpop.f32.mrb[0].mxu0
    %1895 = vmatprep.mubr.f32.mxu0 0.0
    %1896 = vmatmul.mubr.f32.gmra.mrb[0].mxu0 %v1768
    %v1897 = vpop.f32.mrb[0].mxu0
    %v1898 = vadd.f32 %v1741, %v1897
    %v1899 = vpop.f32.mrb[0].mxu0
    %1900 = vmatprep.mubr.f32.mxu0 0.0
    %1901 = vmatmul.mubr.f32.gmra.mrb[0].mxu0 %v1771
    %v1902 = vpop.f32.mrb[0].mxu0
    %v1903 = vadd.f32 %v1741, %v1902
    %v1904 = vpop.f32.mrb[0].mxu0
    %1905 = vmatprep.mubr.f32.mxu0 0.0
    %1906 = vmatmul.mubr.f32.gmra.mrb[0].mxu0 %v1774
    %v1907 = vpop.f32.mrb[0].mxu0
    %v1908 = vadd.f32 %v1741, %v1907
    %v1909 = vpop.f32.mrb[0].mxu0
    %1910 = vmatprep.mubr.f32.mxu0 0.0
    %1911 = vmatmul.mubr.f32.gmra.mrb[0].mxu0 %v1777
    %v1912 = vpop.f32.mrb[0].mxu0
    %v1913 = vadd.f32 %v1741, %v1912
    %v1914 = vpop.f32.mrb[0].mxu0
    %1915 = vmatprep.mubr.f32.mxu0 0.0
    %1916 = vmatmul.mubr.f32.gmra.mrb[0].mxu0 %v1780
    %v1917 = vpop.f32.mrb[0].mxu0
    %v1918 = vadd.f32 %v1741, %v1917
    %v1919 = vpop.f32.mrb[0].mxu0
    %1920 = vmatprep.mubr.f32.mxu0 0.0
    %1921 = vmatmul.mubr.f32.gmra.mrb[0].mxu0 %v1783
    %v1922 = vpop.f32.mrb[0].mxu0
    %v1923 = vadd.f32 %v1741, %v1922
    %v1924 = vpop.f32.mrb[0].mxu0
    %1925 = vmatprep.mubr.f32.mxu0 0.0
    %1926 = vmatmul.mubr.f32.gmra.mrb[0].mxu0 %v1786
    %v1927 = vpop.f32.mrb[0].mxu0
    %v1928 = vadd.f32 %v1741, %v1927
    %v1929 = vpop.f32.mrb[0].mxu0
    %1930 = vmatprep.mubr.f32.mxu0 0.0
    %1931 = vmatmul.mubr.f32.gmra.mrb[0].mxu0 %v1789
    %v1932 = vpop.f32.mrb[0].mxu0
    %v1933 = vadd.f32 %v1741, %v1932
    %v1934 = vpop.f32.mrb[0].mxu0
    %1935 = vdwg.mxu0
    %v1936 = vmax.f32 %v1858, 0.0
    %v1937 = vmax.f32 %v1863, 0.0
    %v1938 = vmax.f32 %v1868, 0.0
    %v1939 = vmax.f32 %v1873, 0.0
    %v1940 = vmax.f32 %v1878, 0.0
    %v1941 = vmax.f32 %v1883, 0.0
    %v1942 = vmax.f32 %v1888, 0.0
    %v1943 = vmax.f32 %v1893, 0.0
    %v1944 = vmax.f32 %v1898, 0.0
    %v1945 = vmax.f32 %v1903, 0.0
    %v1946 = vmax.f32 %v1908, 0.0
    %v1947 = vmax.f32 %v1913, 0.0
    %v1948 = vmax.f32 %v1918, 0.0
    %v1949 = vmax.f32 %v1923, 0.0
    %v1950 = vmax.f32 %v1928, 0.0
    %v1951 = vmax.f32 %v1933, 0.0
    %s1952 = scalar_lea.vmem %s3, 16
    %v1953 = vld [vmem:[%s1952] sm:$0xff]
    %v1954 = vld [vmem:[%s1952 + $0x8] sm:$0x1]
    %v1971 = vrot.slane %v1936, 2
    %v1972 = vrot.slane %v1937, 2
    %v1973 = vsel %vm667, %v1971, %v1972
    %v1974 = vrot.slane %v1938, 2
    %v1975 = vsel %vm667, %v1972, %v1974
    %v1976 = vrot.slane %v1939, 2
    %v1977 = vsel %vm667, %v1974, %v1976
    %v1978 = vrot.slane %v1940, 2
    %v1979 = vsel %vm667, %v1976, %v1978
    %v1980 = vrot.slane %v1941, 2
    %v1981 = vsel %vm667, %v1978, %v1980
    %v1982 = vrot.slane %v1942, 2
    %v1983 = vsel %vm667, %v1980, %v1982
    %v1984 = vrot.slane %v1943, 2
    %v1985 = vsel %vm667, %v1982, %v1984
    %v1986 = vrot.slane %v1944, 2
    %v1987 = vsel %vm667, %v1984, %v1986
    %v1988 = vrot.slane %v1945, 2
    %v1989 = vsel %vm667, %v1986, %v1988
    %v1990 = vrot.slane %v1946, 2
    %v1991 = vsel %vm667, %v1988, %v1990
    %v1992 = vrot.slane %v1947, 2
    %v1993 = vsel %vm667, %v1990, %v1992
    %v1994 = vrot.slane %v1948, 2
    %v1995 = vsel %vm667, %v1992, %v1994
    %v1996 = vrot.slane %v1949, 2
    %v1997 = vsel %vm667, %v1994, %v1996
    %v1998 = vrot.slane %v1950, 2
    %v1999 = vsel %vm667, %v1996, %v1998
    %v2000 = vrot.slane %v1951, 2
    %v2001 = vsel %vm667, %v1998, %v2000
    %v2019 = vsel %vm667, 0.0, %v1971
    %v2020 = vsel %vm717, %v2000, 0.0
    %v2021 = vlaneseq
    %v2022 = vshrl.u32 %v2021, 7
    %v2023 = vsub.s32 0, %v2022
    %v2024 = vrot.slane %v1953, %v2023
    %v2025 = vmul.f32 %v2019, %v2024
    %v2026 = vmul.f32 %v1973, %v2024
    %v2027 = vmul.f32 %v1975, %v2024
    %v2028 = vmul.f32 %v1977, %v2024
    %v2029 = vmul.f32 %v1979, %v2024
    %v2030 = vmul.f32 %v1981, %v2024
    %v2031 = vmul.f32 %v1983, %v2024
    %v2032 = vmul.f32 %v1985, %v2024
    %v2033 = vmul.f32 %v1987, %v2024
    %v2034 = vmul.f32 %v1989, %v2024
    %v2035 = vmul.f32 %v1991, %v2024
    %v2036 = vmul.f32 %v1993, %v2024
    %v2037 = vmul.f32 %v1995, %v2024
    %v2038 = vmul.f32 %v1997, %v2024
    %v2039 = vmul.f32 %v1999, %v2024
    %v2040 = vmul.f32 %v2001, %v2024
    %v2041 = vadd.f32 %v2025, 0.0
    %v2042 = vadd.f32 %v2026, 0.0
    %v2043 = vadd.f32 %v2027, 0.0
    %v2044 = vadd.f32 %v2028, 0.0
    %v2045 = vadd.f32 %v2029, 0.0
    %v2046 = vadd.f32 %v2030, 0.0
    %v2047 = vadd.f32 %v2031, 0.0
    %v2048 = vadd.f32 %v2032, 0.0
    %v2049 = vadd.f32 %v2033, 0.0
    %v2050 = vadd.f32 %v2034, 0.0
    %v2051 = vadd.f32 %v2035, 0.0
    %v2052 = vadd.f32 %v2036, 0.0
    %v2053 = vadd.f32 %v2037, 0.0
    %v2054 = vadd.f32 %v2038, 0.0
    %v2055 = vadd.f32 %v2039, 0.0
    %v2056 = vadd.f32 %v2040, 0.0
    %v2057 = vlaneseq
    %v2058 = vshrl.u32 %v2057, 7
    %v2059 = vsub.s32 3, %v2058
    %v2060 = vrot.slane %v1953, %v2059
    %v2061 = vmul.f32 %v2019, %v2060
    %v2062 = vmul.f32 %v1973, %v2060
    %v2063 = vmul.f32 %v1975, %v2060
    %v2064 = vmul.f32 %v1977, %v2060
    %v2065 = vmul.f32 %v1979, %v2060
    %v2066 = vmul.f32 %v1981, %v2060
    %v2067 = vmul.f32 %v1983, %v2060
    %v2068 = vmul.f32 %v1985, %v2060
    %v2069 = vmul.f32 %v1987, %v2060
    %v2070 = vmul.f32 %v1989, %v2060
    %v2071 = vmul.f32 %v1991, %v2060
    %v2072 = vmul.f32 %v1993, %v2060
    %v2073 = vmul.f32 %v1995, %v2060
    %v2074 = vmul.f32 %v1997, %v2060
    %v2075 = vmul.f32 %v1999, %v2060
    %v2076 = vmul.f32 %v2001, %v2060
    %v2077 = vmul.f32 %v2020, %v2060
    %v2095 = vrot.slane %v2061, 5
    %v2096 = vrot.slane %v2062, 5
    %v2097 = vsel %vm717, %v2095, %v2096
    %v2098 = vrot.slane %v2063, 5
    %v2099 = vsel %vm717, %v2096, %v2098
    %v2100 = vrot.slane %v2064, 5
    %v2101 = vsel %vm717, %v2098, %v2100
    %v2102 = vrot.slane %v2065, 5
    %v2103 = vsel %vm717, %v2100, %v2102
    %v2104 = vrot.slane %v2066, 5
    %v2105 = vsel %vm717, %v2102, %v2104
    %v2106 = vrot.slane %v2067, 5
    %v2107 = vsel %vm717, %v2104, %v2106
    %v2108 = vrot.slane %v2068, 5
    %v2109 = vsel %vm717, %v2106, %v2108
    %v2110 = vrot.slane %v2069, 5
    %v2111 = vsel %vm717, %v2108, %v2110
    %v2112 = vrot.slane %v2070, 5
    %v2113 = vsel %vm717, %v2110, %v2112
    %v2114 = vrot.slane %v2071, 5
    %v2115 = vsel %vm717, %v2112, %v2114
    %v2116 = vrot.slane %v2072, 5
    %v2117 = vsel %vm717, %v2114, %v2116
    %v2118 = vrot.slane %v2073, 5
    %v2119 = vsel %vm717, %v2116, %v2118
    %v2120 = vrot.slane %v2074, 5
    %v2121 = vsel %vm717, %v2118, %v2120
    %v2122 = vrot.slane %v2075, 5
    %v2123 = vsel %vm717, %v2120, %v2122
    %v2124 = vrot.slane %v2076, 5
    %v2125 = vsel %vm717, %v2122, %v2124
    %v2126 = vrot.slane %v2077, 5
    %v2127 = vsel %vm717, %v2124, %v2126
    %v2144 = vadd.f32 %v2041, %v2097
    %v2145 = vadd.f32 %v2042, %v2099
    %v2146 = vadd.f32 %v2043, %v2101
    %v2147 = vadd.f32 %v2044, %v2103
    %v2148 = vadd.f32 %v2045, %v2105
    %v2149 = vadd.f32 %v2046, %v2107
    %v2150 = vadd.f32 %v2047, %v2109
    %v2151 = vadd.f32 %v2048, %v2111
    %v2152 = vadd.f32 %v2049, %v2113
    %v2153 = vadd.f32 %v2050, %v2115
    %v2154 = vadd.f32 %v2051, %v2117
    %v2155 = vadd.f32 %v2052, %v2119
    %v2156 = vadd.f32 %v2053, %v2121
    %v2157 = vadd.f32 %v2054, %v2123
    %v2158 = vadd.f32 %v2055, %v2125
    %v2159 = vadd.f32 %v2056, %v2127
    %v2160 = vlaneseq
    %v2161 = vshrl.u32 %v2160, 7
    %v2162 = vsub.s32 6, %v2161
    %v2163 = vrot.slane %v1953, %v2162
    %v2164 = vmul.f32 %v1973, %v2163
    %v2165 = vmul.f32 %v1975, %v2163
    %v2166 = vmul.f32 %v1977, %v2163
    %v2167 = vmul.f32 %v1979, %v2163
    %v2168 = vmul.f32 %v1981, %v2163
    %v2169 = vmul.f32 %v1983, %v2163
    %v2170 = vmul.f32 %v1985, %v2163
    %v2171 = vmul.f32 %v1987, %v2163
    %v2172 = vmul.f32 %v1989, %v2163
    %v2173 = vmul.f32 %v1991, %v2163
    %v2174 = vmul.f32 %v1993, %v2163
    %v2175 = vmul.f32 %v1995, %v2163
    %v2176 = vmul.f32 %v1997, %v2163
    %v2177 = vmul.f32 %v1999, %v2163
    %v2178 = vmul.f32 %v2001, %v2163
    %v2179 = vmul.f32 %v2020, %v2163
    %v2196 = vrot.slane %v2164, 2
    %v2197 = vrot.slane %v2165, 2
    %v2198 = vsel %vm667, %v2196, %v2197
    %v2199 = vrot.slane %v2166, 2
    %v2200 = vsel %vm667, %v2197, %v2199
    %v2201 = vrot.slane %v2167, 2
    %v2202 = vsel %vm667, %v2199, %v2201
    %v2203 = vrot.slane %v2168, 2
    %v2204 = vsel %vm667, %v2201, %v2203
    %v2205 = vrot.slane %v2169, 2
    %v2206 = vsel %vm667, %v2203, %v2205
    %v2207 = vrot.slane %v2170, 2
    %v2208 = vsel %vm667, %v2205, %v2207
    %v2209 = vrot.slane %v2171, 2
    %v2210 = vsel %vm667, %v2207, %v2209
    %v2211 = vrot.slane %v2172, 2
    %v2212 = vsel %vm667, %v2209, %v2211
    %v2213 = vrot.slane %v2173, 2
    %v2214 = vsel %vm667, %v2211, %v2213
    %v2215 = vrot.slane %v2174, 2
    %v2216 = vsel %vm667, %v2213, %v2215
    %v2217 = vrot.slane %v2175, 2
    %v2218 = vsel %vm667, %v2215, %v2217
    %v2219 = vrot.slane %v2176, 2
    %v2220 = vsel %vm667, %v2217, %v2219
    %v2221 = vrot.slane %v2177, 2
    %v2222 = vsel %vm667, %v2219, %v2221
    %v2223 = vrot.slane %v2178, 2
    %v2224 = vsel %vm667, %v2221, %v2223
    %v2225 = vrot.slane %v2179, 2
    %v2226 = vsel %vm667, %v2223, %v2225
    %v2243 = vadd.f32 %v2144, %v2198
    %v2244 = vadd.f32 %v2145, %v2200
    %v2245 = vadd.f32 %v2146, %v2202
    %v2246 = vadd.f32 %v2147, %v2204
    %v2247 = vadd.f32 %v2148, %v2206
    %v2248 = vadd.f32 %v2149, %v2208
    %v2249 = vadd.f32 %v2150, %v2210
    %v2250 = vadd.f32 %v2151, %v2212
    %v2251 = vadd.f32 %v2152, %v2214
    %v2252 = vadd.f32 %v2153, %v2216
    %v2253 = vadd.f32 %v2154, %v2218
    %v2254 = vadd.f32 %v2155, %v2220
    %v2255 = vadd.f32 %v2156, %v2222
    %v2256 = vadd.f32 %v2157, %v2224
    %v2257 = vadd.f32 %v2158, %v2226
    %v2258 = vadd.f32 %v2159, %v2225
    %v2259 = vlaneseq
    %v2260 = vshrl.u32 %v2259, 7
    %v2261 = vsub.s32 1, %v2260
    %v2262 = vrot.slane %v1953, %v2261
    %v2263 = vmul.f32 %v2019, %v2262
    %v2264 = vmul.f32 %v1973, %v2262
    %v2265 = vmul.f32 %v1975, %v2262
    %v2266 = vmul.f32 %v1977, %v2262
    %v2267 = vmul.f32 %v1979, %v2262
    %v2268 = vmul.f32 %v1981, %v2262
    %v2269 = vmul.f32 %v1983, %v2262
    %v2270 = vmul.f32 %v1985, %v2262
    %v2271 = vmul.f32 %v1987, %v2262
    %v2272 = vmul.f32 %v1989, %v2262
    %v2273 = vmul.f32 %v1991, %v2262
    %v2274 = vmul.f32 %v1993, %v2262
    %v2275 = vmul.f32 %v1995, %v2262
    %v2276 = vmul.f32 %v1997, %v2262
    %v2277 = vmul.f32 %v1999, %v2262
    %v2278 = vmul.f32 %v2001, %v2262
    %v2279 = vadd.f32 %v2263, 0.0
    %v2280 = vadd.f32 %v2264, 0.0
    %v2281 = vadd.f32 %v2265, 0.0
    %v2282 = vadd.f32 %v2266, 0.0
    %v2283 = vadd.f32 %v2267, 0.0
    %v2284 = vadd.f32 %v2268, 0.0
    %v2285 = vadd.f32 %v2269, 0.0
    %v2286 = vadd.f32 %v2270, 0.0
    %v2287 = vadd.f32 %v2271, 0.0
    %v2288 = vadd.f32 %v2272, 0.0
    %v2289 = vadd.f32 %v2273, 0.0
    %v2290 = vadd.f32 %v2274, 0.0
    %v2291 = vadd.f32 %v2275, 0.0
    %v2292 = vadd.f32 %v2276, 0.0
    %v2293 = vadd.f32 %v2277, 0.0
    %v2294 = vadd.f32 %v2278, 0.0
    %v2295 = vlaneseq
    %v2296 = vshrl.u32 %v2295, 7
    %v2297 = vsub.s32 4, %v2296
    %v2298 = vrot.slane %v1953, %v2297
    %v2299 = vmul.f32 %v2019, %v2298
    %v2300 = vmul.f32 %v1973, %v2298
    %v2301 = vmul.f32 %v1975, %v2298
    %v2302 = vmul.f32 %v1977, %v2298
    %v2303 = vmul.f32 %v1979, %v2298
    %v2304 = vmul.f32 %v1981, %v2298
    %v2305 = vmul.f32 %v1983, %v2298
    %v2306 = vmul.f32 %v1985, %v2298
    %v2307 = vmul.f32 %v1987, %v2298
    %v2308 = vmul.f32 %v1989, %v2298
    %v2309 = vmul.f32 %v1991, %v2298
    %v2310 = vmul.f32 %v1993, %v2298
    %v2311 = vmul.f32 %v1995, %v2298
    %v2312 = vmul.f32 %v1997, %v2298
    %v2313 = vmul.f32 %v1999, %v2298
    %v2314 = vmul.f32 %v2001, %v2298
    %v2315 = vmul.f32 %v2020, %v2298
    %v2333 = vrot.slane %v2299, 5
    %v2334 = vrot.slane %v2300, 5
    %v2335 = vsel %vm717, %v2333, %v2334
    %v2336 = vrot.slane %v2301, 5
    %v2337 = vsel %vm717, %v2334, %v2336
    %v2338 = vrot.slane %v2302, 5
    %v2339 = vsel %vm717, %v2336, %v2338
    %v2340 = vrot.slane %v2303, 5
    %v2341 = vsel %vm717, %v2338, %v2340
    %v2342 = vrot.slane %v2304, 5
    %v2343 = vsel %vm717, %v2340, %v2342
    %v2344 = vrot.slane %v2305, 5
    %v2345 = vsel %vm717, %v2342, %v2344
    %v2346 = vrot.slane %v2306, 5
    %v2347 = vsel %vm717, %v2344, %v2346
    %v2348 = vrot.slane %v2307, 5
    %v2349 = vsel %vm717, %v2346, %v2348
    %v2350 = vrot.slane %v2308, 5
    %v2351 = vsel %vm717, %v2348, %v2350
    %v2352 = vrot.slane %v2309, 5
    %v2353 = vsel %vm717, %v2350, %v2352
    %v2354 = vrot.slane %v2310, 5
    %v2355 = vsel %vm717, %v2352, %v2354
    %v2356 = vrot.slane %v2311, 5
    %v2357 = vsel %vm717, %v2354, %v2356
    %v2358 = vrot.slane %v2312, 5
    %v2359 = vsel %vm717, %v2356, %v2358
    %v2360 = vrot.slane %v2313, 5
    %v2361 = vsel %vm717, %v2358, %v2360
    %v2362 = vrot.slane %v2314, 5
    %v2363 = vsel %vm717, %v2360, %v2362
    %v2364 = vrot.slane %v2315, 5
    %v2365 = vsel %vm717, %v2362, %v2364
    %v2382 = vadd.f32 %v2279, %v2335
    %v2383 = vadd.f32 %v2280, %v2337
    %v2384 = vadd.f32 %v2281, %v2339
    %v2385 = vadd.f32 %v2282, %v2341
    %v2386 = vadd.f32 %v2283, %v2343
    %v2387 = vadd.f32 %v2284, %v2345
    %v2388 = vadd.f32 %v2285, %v2347
    %v2389 = vadd.f32 %v2286, %v2349
    %v2390 = vadd.f32 %v2287, %v2351
    %v2391 = vadd.f32 %v2288, %v2353
    %v2392 = vadd.f32 %v2289, %v2355
    %v2393 = vadd.f32 %v2290, %v2357
    %v2394 = vadd.f32 %v2291, %v2359
    %v2395 = vadd.f32 %v2292, %v2361
    %v2396 = vadd.f32 %v2293, %v2363
    %v2397 = vadd.f32 %v2294, %v2365
    %v2398 = vlaneseq
    %v2399 = vshrl.u32 %v2398, 7
    %v2400 = vsub.s32 7, %v2399
    %v2401 = vrot.slane %v1953, %v2400
    %v2402 = vmul.f32 %v1973, %v2401
    %v2403 = vmul.f32 %v1975, %v2401
    %v2404 = vmul.f32 %v1977, %v2401
    %v2405 = vmul.f32 %v1979, %v2401
    %v2406 = vmul.f32 %v1981, %v2401
    %v2407 = vmul.f32 %v1983, %v2401
    %v2408 = vmul.f32 %v1985, %v2401
    %v2409 = vmul.f32 %v1987, %v2401
    %v2410 = vmul.f32 %v1989, %v2401
    %v2411 = vmul.f32 %v1991, %v2401
    %v2412 = vmul.f32 %v1993, %v2401
    %v2413 = vmul.f32 %v1995, %v2401
    %v2414 = vmul.f32 %v1997, %v2401
    %v2415 = vmul.f32 %v1999, %v2401
    %v2416 = vmul.f32 %v2001, %v2401
    %v2417 = vmul.f32 %v2020, %v2401
    %v2434 = vrot.slane %v2402, 2
    %v2435 = vrot.slane %v2403, 2
    %v2436 = vsel %vm667, %v2434, %v2435
    %v2437 = vrot.slane %v2404, 2
    %v2438 = vsel %vm667, %v2435, %v2437
    %v2439 = vrot.slane %v2405, 2
    %v2440 = vsel %vm667, %v2437, %v2439
    %v2441 = vrot.slane %v2406, 2
    %v2442 = vsel %vm667, %v2439, %v2441
    %v2443 = vrot.slane %v2407, 2
    %v2444 = vsel %vm667, %v2441, %v2443
    %v2445 = vrot.slane %v2408, 2
    %v2446 = vsel %vm667, %v2443, %v2445
    %v2447 = vrot.slane %v2409, 2
    %v2448 = vsel %vm667, %v2445, %v2447
    %v2449 = vrot.slane %v2410, 2
    %v2450 = vsel %vm667, %v2447, %v2449
    %v2451 = vrot.slane %v2411, 2
    %v2452 = vsel %vm667, %v2449, %v2451
    %v2453 = vrot.slane %v2412, 2
    %v2454 = vsel %vm667, %v2451, %v2453
    %v2455 = vrot.slane %v2413, 2
    %v2456 = vsel %vm667, %v2453, %v2455
    %v2457 = vrot.slane %v2414, 2
    %v2458 = vsel %vm667, %v2455, %v2457
    %v2459 = vrot.slane %v2415, 2
    %v2460 = vsel %vm667, %v2457, %v2459
    %v2461 = vrot.slane %v2416, 2
    %v2462 = vsel %vm667, %v2459, %v2461
    %v2463 = vrot.slane %v2417, 2
    %v2464 = vsel %vm667, %v2461, %v2463
    %v2481 = vadd.f32 %v2382, %v2436
    %v2482 = vadd.f32 %v2383, %v2438
    %v2483 = vadd.f32 %v2384, %v2440
    %v2484 = vadd.f32 %v2385, %v2442
    %v2485 = vadd.f32 %v2386, %v2444
    %v2486 = vadd.f32 %v2387, %v2446
    %v2487 = vadd.f32 %v2388, %v2448
    %v2488 = vadd.f32 %v2389, %v2450
    %v2489 = vadd.f32 %v2390, %v2452
    %v2490 = vadd.f32 %v2391, %v2454
    %v2491 = vadd.f32 %v2392, %v2456
    %v2492 = vadd.f32 %v2393, %v2458
    %v2493 = vadd.f32 %v2394, %v2460
    %v2494 = vadd.f32 %v2395, %v2462
    %v2495 = vadd.f32 %v2396, %v2464
    %v2496 = vadd.f32 %v2397, %v2463
    %v2497 = vlaneseq
    %v2498 = vshrl.u32 %v2497, 7
    %v2499 = vsub.s32 2, %v2498
    %v2500 = vrot.slane %v1953, %v2499
    %v2501 = vmul.f32 %v2019, %v2500
    %v2502 = vmul.f32 %v1973, %v2500
    %v2503 = vmul.f32 %v1975, %v2500
    %v2504 = vmul.f32 %v1977, %v2500
    %v2505 = vmul.f32 %v1979, %v2500
    %v2506 = vmul.f32 %v1981, %v2500
    %v2507 = vmul.f32 %v1983, %v2500
    %v2508 = vmul.f32 %v1985, %v2500
    %v2509 = vmul.f32 %v1987, %v2500
    %v2510 = vmul.f32 %v1989, %v2500
    %v2511 = vmul.f32 %v1991, %v2500
    %v2512 = vmul.f32 %v1993, %v2500
    %v2513 = vmul.f32 %v1995, %v2500
    %v2514 = vmul.f32 %v1997, %v2500
    %v2515 = vmul.f32 %v1999, %v2500
    %v2516 = vmul.f32 %v2001, %v2500
    %v2517 = vadd.f32 %v2501, 0.0
    %v2518 = vadd.f32 %v2502, 0.0
    %v2519 = vadd.f32 %v2503, 0.0
    %v2520 = vadd.f32 %v2504, 0.0
    %v2521 = vadd.f32 %v2505, 0.0
    %v2522 = vadd.f32 %v2506, 0.0
    %v2523 = vadd.f32 %v2507, 0.0
    %v2524 = vadd.f32 %v2508, 0.0
    %v2525 = vadd.f32 %v2509, 0.0
    %v2526 = vadd.f32 %v2510, 0.0
    %v2527 = vadd.f32 %v2511, 0.0
    %v2528 = vadd.f32 %v2512, 0.0
    %v2529 = vadd.f32 %v2513, 0.0
    %v2530 = vadd.f32 %v2514, 0.0
    %v2531 = vadd.f32 %v2515, 0.0
    %v2532 = vadd.f32 %v2516, 0.0
    %v2533 = vlaneseq
    %v2534 = vshrl.u32 %v2533, 7
    %v2535 = vsub.s32 5, %v2534
    %v2536 = vrot.slane %v1953, %v2535
    %v2537 = vmul.f32 %v2019, %v2536
    %v2538 = vmul.f32 %v1973, %v2536
    %v2539 = vmul.f32 %v1975, %v2536
    %v2540 = vmul.f32 %v1977, %v2536
    %v2541 = vmul.f32 %v1979, %v2536
    %v2542 = vmul.f32 %v1981, %v2536
    %v2543 = vmul.f32 %v1983, %v2536
    %v2544 = vmul.f32 %v1985, %v2536
    %v2545 = vmul.f32 %v1987, %v2536
    %v2546 = vmul.f32 %v1989, %v2536
    %v2547 = vmul.f32 %v1991, %v2536
    %v2548 = vmul.f32 %v1993, %v2536
    %v2549 = vmul.f32 %v1995, %v2536
    %v2550 = vmul.f32 %v1997, %v2536
    %v2551 = vmul.f32 %v1999, %v2536
    %v2552 = vmul.f32 %v2001, %v2536
    %v2553 = vmul.f32 %v2020, %v2536
    %v2571 = vrot.slane %v2537, 5
    %v2572 = vrot.slane %v2538, 5
    %v2573 = vsel %vm717, %v2571, %v2572
    %v2574 = vrot.slane %v2539, 5
    %v2575 = vsel %vm717, %v2572, %v2574
    %v2576 = vrot.slane %v2540, 5
    %v2577 = vsel %vm717, %v2574, %v2576
    %v2578 = vrot.slane %v2541, 5
    %v2579 = vsel %vm717, %v2576, %v2578
    %v2580 = vrot.slane %v2542, 5
    %v2581 = vsel %vm717, %v2578, %v2580
    %v2582 = vrot.slane %v2543, 5
    %v2583 = vsel %vm717, %v2580, %v2582
    %v2584 = vrot.slane %v2544, 5
    %v2585 = vsel %vm717, %v2582, %v2584
    %v2586 = vrot.slane %v2545, 5
    %v2587 = vsel %vm717, %v2584, %v2586
    %v2588 = vrot.slane %v2546, 5
    %v2589 = vsel %vm717, %v2586, %v2588
    %v2590 = vrot.slane %v2547, 5
    %v2591 = vsel %vm717, %v2588, %v2590
    %v2592 = vrot.slane %v2548, 5
    %v2593 = vsel %vm717, %v2590, %v2592
    %v2594 = vrot.slane %v2549, 5
    %v2595 = vsel %vm717, %v2592, %v2594
    %v2596 = vrot.slane %v2550, 5
    %v2597 = vsel %vm717, %v2594, %v2596
    %v2598 = vrot.slane %v2551, 5
    %v2599 = vsel %vm717, %v2596, %v2598
    %v2600 = vrot.slane %v2552, 5
    %v2601 = vsel %vm717, %v2598, %v2600
    %v2602 = vrot.slane %v2553, 5
    %v2603 = vsel %vm717, %v2600, %v2602
    %v2620 = vadd.f32 %v2517, %v2573
    %v2621 = vadd.f32 %v2518, %v2575
    %v2622 = vadd.f32 %v2519, %v2577
    %v2623 = vadd.f32 %v2520, %v2579
    %v2624 = vadd.f32 %v2521, %v2581
    %v2625 = vadd.f32 %v2522, %v2583
    %v2626 = vadd.f32 %v2523, %v2585
    %v2627 = vadd.f32 %v2524, %v2587
    %v2628 = vadd.f32 %v2525, %v2589
    %v2629 = vadd.f32 %v2526, %v2591
    %v2630 = vadd.f32 %v2527, %v2593
    %v2631 = vadd.f32 %v2528, %v2595
    %v2632 = vadd.f32 %v2529, %v2597
    %v2633 = vadd.f32 %v2530, %v2599
    %v2634 = vadd.f32 %v2531, %v2601
    %v2635 = vadd.f32 %v2532, %v2603
    %v2636 = vlaneseq
    %v2637 = vshrl.u32 %v2636, 7
    %v2638 = vsub.s32 0, %v2637
    %v2639 = vrot.slane %v1954, %v2638
    %v2640 = vmul.f32 %v1973, %v2639
    %v2641 = vmul.f32 %v1975, %v2639
    %v2642 = vmul.f32 %v1977, %v2639
    %v2643 = vmul.f32 %v1979, %v2639
    %v2644 = vmul.f32 %v1981, %v2639
    %v2645 = vmul.f32 %v1983, %v2639
    %v2646 = vmul.f32 %v1985, %v2639
    %v2647 = vmul.f32 %v1987, %v2639
    %v2648 = vmul.f32 %v1989, %v2639
    %v2649 = vmul.f32 %v1991, %v2639
    %v2650 = vmul.f32 %v1993, %v2639
    %v2651 = vmul.f32 %v1995, %v2639
    %v2652 = vmul.f32 %v1997, %v2639
    %v2653 = vmul.f32 %v1999, %v2639
    %v2654 = vmul.f32 %v2001, %v2639
    %v2655 = vmul.f32 %v2020, %v2639
    %v2656 = vmul.f32 %v2639, 0.0
    %v2674 = vrot.slane %v2640, 2
    %v2675 = vrot.slane %v2641, 2
    %v2676 = vsel %vm667, %v2674, %v2675
    %v2677 = vrot.slane %v2642, 2
    %v2678 = vsel %vm667, %v2675, %v2677
    %v2679 = vrot.slane %v2643, 2
    %v2680 = vsel %vm667, %v2677, %v2679
    %v2681 = vrot.slane %v2644, 2
    %v2682 = vsel %vm667, %v2679, %v2681
    %v2683 = vrot.slane %v2645, 2
    %v2684 = vsel %vm667, %v2681, %v2683
    %v2685 = vrot.slane %v2646, 2
    %v2686 = vsel %vm667, %v2683, %v2685
    %v2687 = vrot.slane %v2647, 2
    %v2688 = vsel %vm667, %v2685, %v2687
    %v2689 = vrot.slane %v2648, 2
    %v2690 = vsel %vm667, %v2687, %v2689
    %v2691 = vrot.slane %v2649, 2
    %v2692 = vsel %vm667, %v2689, %v2691
    %v2693 = vrot.slane %v2650, 2
    %v2694 = vsel %vm667, %v2691, %v2693
    %v2695 = vrot.slane %v2651, 2
    %v2696 = vsel %vm667, %v2693, %v2695
    %v2697 = vrot.slane %v2652, 2
    %v2698 = vsel %vm667, %v2695, %v2697
    %v2699 = vrot.slane %v2653, 2
    %v2700 = vsel %vm667, %v2697, %v2699
    %v2701 = vrot.slane %v2654, 2
    %v2702 = vsel %vm667, %v2699, %v2701
    %v2703 = vrot.slane %v2655, 2
    %v2704 = vsel %vm667, %v2701, %v2703
    %v2705 = vrot.slane %v2656, 2
    %v2706 = vsel %vm667, %v2703, %v2705
    %v2723 = vadd.f32 %v2620, %v2676
    %v2724 = vadd.f32 %v2621, %v2678
    %v2725 = vadd.f32 %v2622, %v2680
    %v2726 = vadd.f32 %v2623, %v2682
    %v2727 = vadd.f32 %v2624, %v2684
    %v2728 = vadd.f32 %v2625, %v2686
    %v2729 = vadd.f32 %v2626, %v2688
    %v2730 = vadd.f32 %v2627, %v2690
    %v2731 = vadd.f32 %v2628, %v2692
    %v2732 = vadd.f32 %v2629, %v2694
    %v2733 = vadd.f32 %v2630, %v2696
    %v2734 = vadd.f32 %v2631, %v2698
    %v2735 = vadd.f32 %v2632, %v2700
    %v2736 = vadd.f32 %v2633, %v2702
    %v2737 = vadd.f32 %v2634, %v2704
    %v2738 = vadd.f32 %v2635, %v2706
    %v2739 = vmul.f32 %v2243, %v353
    %v2740 = vmul.f32 %v2244, %v354
    %v2741 = vmul.f32 %v2245, %v355
    %v2742 = vmul.f32 %v2246, %v356
    %v2743 = vmul.f32 %v2247, %v357
    %v2744 = vmul.f32 %v2248, %v358
    %v2745 = vmul.f32 %v2249, %v359
    %v2746 = vmul.f32 %v2250, %v360
    %v2747 = vmul.f32 %v2251, %v361
    %v2748 = vmul.f32 %v2252, %v362
    %v2749 = vmul.f32 %v2253, %v363
    %v2750 = vmul.f32 %v2254, %v364
    %v2751 = vmul.f32 %v2255, %v365
    %v2752 = vmul.f32 %v2256, %v366
    %v2753 = vmul.f32 %v2257, %v367
    %v2754 = vmul.f32 %v2258, %v368
    %v2771 = vrot.slane %v2481, 1
    %v2772 = vrot.slane %v2482, 1
    %v2773 = vsel %vm1469, %v2771, %v2772
    %v2774 = vrot.slane %v2483, 1
    %v2775 = vsel %vm1469, %v2772, %v2774
    %v2776 = vrot.slane %v2484, 1
    %v2777 = vsel %vm1469, %v2774, %v2776
    %v2778 = vrot.slane %v2485, 1
    %v2779 = vsel %vm1469, %v2776, %v2778
    %v2780 = vrot.slane %v2486, 1
    %v2781 = vsel %vm1469, %v2778, %v2780
    %v2782 = vrot.slane %v2487, 1
    %v2783 = vsel %vm1469, %v2780, %v2782
    %v2784 = vrot.slane %v2488, 1
    %v2785 = vsel %vm1469, %v2782, %v2784
    %v2786 = vrot.slane %v2489, 1
    %v2787 = vsel %vm1469, %v2784, %v2786
    %v2788 = vrot.slane %v2490, 1
    %v2789 = vsel %vm1469, %v2786, %v2788
    %v2790 = vrot.slane %v2491, 1
    %v2791 = vsel %vm1469, %v2788, %v2790
    %v2792 = vrot.slane %v2492, 1
    %v2793 = vsel %vm1469, %v2790, %v2792
    %v2794 = vrot.slane %v2493, 1
    %v2795 = vsel %vm1469, %v2792, %v2794
    %v2796 = vrot.slane %v2494, 1
    %v2797 = vsel %vm1469, %v2794, %v2796
    %v2798 = vrot.slane %v2495, 1
    %v2799 = vsel %vm1469, %v2796, %v2798
    %v2800 = vrot.slane %v2496, 1
    %v2801 = vsel %vm1469, %v2798, %v2800
    %v2818 = vadd.f32 %v2739, %v2773
    %v2819 = vadd.f32 %v2740, %v2775
    %v2820 = vadd.f32 %v2741, %v2777
    %v2821 = vadd.f32 %v2742, %v2779
    %v2822 = vadd.f32 %v2743, %v2781
    %v2823 = vadd.f32 %v2744, %v2783
    %v2824 = vadd.f32 %v2745, %v2785
    %v2825 = vadd.f32 %v2746, %v2787
    %v2826 = vadd.f32 %v2747, %v2789
    %v2827 = vadd.f32 %v2748, %v2791
    %v2828 = vadd.f32 %v2749, %v2793
    %v2829 = vadd.f32 %v2750, %v2795
    %v2830 = vadd.f32 %v2751, %v2797
    %v2831 = vadd.f32 %v2752, %v2799
    %v2832 = vadd.f32 %v2753, %v2801
    %v2833 = vadd.f32 %v2754, %v2800
    %v2834 = vmul.f32 %v2723, %v1550
    %v2835 = vmul.f32 %v2724, %v1552
    %v2836 = vmul.f32 %v2725, %v1554
    %v2837 = vmul.f32 %v2726, %v1556
    %v2838 = vmul.f32 %v2727, %v1558
    %v2839 = vmul.f32 %v2728, %v1560
    %v2840 = vmul.f32 %v2729, %v1562
    %v2841 = vmul.f32 %v2730, %v1564
    %v2842 = vmul.f32 %v2731, %v1566
    %v2843 = vmul.f32 %v2732, %v1568
    %v2844 = vmul.f32 %v2733, %v1570
    %v2845 = vmul.f32 %v2734, %v1572
    %v2846 = vmul.f32 %v2735, %v1574
    %v2847 = vmul.f32 %v2736, %v1576
    %v2848 = vmul.f32 %v2737, %v1578
    %v2849 = vmul.f32 %v2738, %v1580
    %v2866 = vrot.slane %v2834, 2
    %v2867 = vrot.slane %v2835, 2
    %v2868 = vsel %vm667, %v2866, %v2867
    %v2869 = vrot.slane %v2836, 2
    %v2870 = vsel %vm667, %v2867, %v2869
    %v2871 = vrot.slane %v2837, 2
    %v2872 = vsel %vm667, %v2869, %v2871
    %v2873 = vrot.slane %v2838, 2
    %v2874 = vsel %vm667, %v2871, %v2873
    %v2875 = vrot.slane %v2839, 2
    %v2876 = vsel %vm667, %v2873, %v2875
    %v2877 = vrot.slane %v2840, 2
    %v2878 = vsel %vm667, %v2875, %v2877
    %v2879 = vrot.slane %v2841, 2
    %v2880 = vsel %vm667, %v2877, %v2879
    %v2881 = vrot.slane %v2842, 2
    %v2882 = vsel %vm667, %v2879, %v2881
    %v2883 = vrot.slane %v2843, 2
    %v2884 = vsel %vm667, %v2881, %v2883
    %v2885 = vrot.slane %v2844, 2
    %v2886 = vsel %vm667, %v2883, %v2885
    %v2887 = vrot.slane %v2845, 2
    %v2888 = vsel %vm667, %v2885, %v2887
    %v2889 = vrot.slane %v2846, 2
    %v2890 = vsel %vm667, %v2887, %v2889
    %v2891 = vrot.slane %v2847, 2
    %v2892 = vsel %vm667, %v2889, %v2891
    %v2893 = vrot.slane %v2848, 2
    %v2894 = vsel %vm667, %v2891, %v2893
    %v2895 = vrot.slane %v2849, 2
    %v2896 = vsel %vm667, %v2893, %v2895
    %v2913 = vadd.f32 %v2818, %v2868
    %v2914 = vadd.f32 %v2819, %v2870
    %v2915 = vadd.f32 %v2820, %v2872
    %v2916 = vadd.f32 %v2821, %v2874
    %v2917 = vadd.f32 %v2822, %v2876
    %v2918 = vadd.f32 %v2823, %v2878
    %v2919 = vadd.f32 %v2824, %v2880
    %v2920 = vadd.f32 %v2825, %v2882
    %v2921 = vadd.f32 %v2826, %v2884
    %v2922 = vadd.f32 %v2827, %v2886
    %v2923 = vadd.f32 %v2828, %v2888
    %v2924 = vadd.f32 %v2829, %v2890
    %v2925 = vadd.f32 %v2830, %v2892
    %v2926 = vadd.f32 %v2831, %v2894
    %v2927 = vadd.f32 %v2832, %v2896
    %v2928 = vadd.f32 %v2833, %v2895
    %v2929 = vld [vmem:[%s4 + $0x1] sm:$0x1]
    %v2930 = vlaneseq
    %v2931 = vshrl.u32 %v2930, 7
    %v2932 = vsub.s32 0, %v2931
    %v2933 = vrot.slane %v2929, %v2932
    %v2934 = vadd.f32 %v2913, %v2933
    %v2935 = vadd.f32 %v2914, %v2933
    %v2936 = vadd.f32 %v2915, %v2933
    %v2937 = vadd.f32 %v2916, %v2933
    %v2938 = vadd.f32 %v2917, %v2933
    %v2939 = vadd.f32 %v2918, %v2933
    %v2940 = vadd.f32 %v2919, %v2933
    %v2941 = vadd.f32 %v2920, %v2933
    %v2942 = vadd.f32 %v2921, %v2933
    %v2943 = vadd.f32 %v2922, %v2933
    %v2944 = vadd.f32 %v2923, %v2933
    %v2945 = vadd.f32 %v2924, %v2933
    %v2946 = vadd.f32 %v2925, %v2933
    %v2947 = vadd.f32 %v2926, %v2933
    %v2948 = vadd.f32 %v2927, %v2933
    %v2949 = vadd.f32 %v2928, %v2933
    %v2950 = vmax.f32 %v2934, 0.0
    %v2951 = vmax.f32 %v2935, 0.0
    %v2952 = vmax.f32 %v2936, 0.0
    %v2953 = vmax.f32 %v2937, 0.0
    %v2954 = vmax.f32 %v2938, 0.0
    %v2955 = vmax.f32 %v2939, 0.0
    %v2956 = vmax.f32 %v2940, 0.0
    %v2957 = vmax.f32 %v2941, 0.0
    %v2958 = vmax.f32 %v2942, 0.0
    %v2959 = vmax.f32 %v2943, 0.0
    %v2960 = vmax.f32 %v2944, 0.0
    %v2961 = vmax.f32 %v2945, 0.0
    %v2962 = vmax.f32 %v2946, 0.0
    %v2963 = vmax.f32 %v2947, 0.0
    %v2964 = vmax.f32 %v2948, 0.0
    %v2965 = vmax.f32 %v2949, 0.0
    %s2966 = scalar_lea.vmem %s5, 64
    %v2967 = vld [vmem:[%s2966] sm:$0xff]
    %v2968 = vld [vmem:[%s2966 + $0x8] sm:$0xff]
    %v2969 = vld [vmem:[%s2966 + $0x10] sm:$0xff]
    %v2970 = vld [vmem:[%s2966 + $0x18] sm:$0xff]
    %v2971 = vld [vmem:[%s2966 + $0x20] sm:$0xff]
    %v2972 = vld [vmem:[%s2966 + $0x28] sm:$0xff]
    %v2973 = vld [vmem:[%s2966 + $0x30] sm:$0xff]
    %v2974 = vld [vmem:[%s2966 + $0x38] sm:$0xff]
    %v2975 = vld [vmem:[%s6 + $0x1] sm:$0x1]
    %v2976 = vlaneseq
    %v2977 = vshrl.u32 %v2976, 7
    %v2978 = vsub.s32 0, %v2977
    %v2979 = vrot.slane %v2975, %v2978
    %v2981 = vsel %vm1742, %v2950, 0
    %v2984 = vsel %vm1742, %v2951, 0
    %v2987 = vsel %vm1742, %v2952, 0
    %v2990 = vsel %vm1742, %v2953, 0
    %v2993 = vsel %vm1742, %v2954, 0
    %v2996 = vsel %vm1742, %v2955, 0
    %v2999 = vsel %vm1742, %v2956, 0
    %v3002 = vsel %vm1742, %v2957, 0
    %v3005 = vsel %vm1742, %v2958, 0
    %v3008 = vsel %vm1742, %v2959, 0
    %v3011 = vsel %vm1742, %v2960, 0
    %v3014 = vsel %vm1742, %v2961, 0
    %v3017 = vsel %vm1742, %v2962, 0
    %v3020 = vsel %vm1742, %v2963, 0
    %v3023 = vsel %vm1742, %v2964, 0
    %v3026 = vsel %vm1742, %v2965, 0
    %3028 = vmatprep.subr.mxu0 0.0
    %3029 = vmatpush1.msra.mxu0 %v2967
    %3030 = vmatprep.subr.mxu0 0.0
    %3031 = vmatpush1.msra.mxu0 %v2968
    %3032 = vmatprep.subr.mxu0 0.0
    %3033 = vmatpush1.msra.mxu0 %v2969
    %3034 = vmatprep.subr.mxu0 0.0
    %3035 = vmatpush1.msra.mxu0 %v2970
    %3036 = vmatprep.subr.mxu0 0.0
    %3037 = vmatpush1.msra.mxu0 %v2971
    %3038 = vmatprep.subr.mxu0 0.0
    %3039 = vmatpush1.msra.mxu0 %v2972
    %3040 = vmatprep.subr.mxu0 0.0
    %3041 = vmatpush1.msra.mxu0 %v2973
    %3042 = vmatprep.subr.mxu0 0.0
    %3043 = vmatpush1.msra.mxu0 %v2974
    %3044 = vmatprep.subr.mxu0 0.0
    %3045 = vmatpush1.msra.mxu0 0.0
    %3046 = vmatprep.subr.mxu0 0.0
    %3047 = vmatpush1.msra.mxu0 0.0
    %3048 = vmatprep.subr.mxu0 0.0
    %3049 = vmatpush1.msra.mxu0 0.0
    %3050 = vmatprep.subr.mxu0 0.0
    %3051 = vmatpush1.msra.mxu0 0.0
    %3052 = vmatprep.subr.mxu0 0.0
    %3053 = vmatpush1.msra.mxu0 0.0
    %3054 = vmatprep.subr.mxu0 0.0
    %3055 = vmatpush1.msra.mxu0 0.0
    %3056 = vmatprep.subr.mxu0 0.0
    %3057 = vmatpush1.msra.mxu0 0.0
    %3058 = vmatprep.subr.mxu0 0.0
    %3059 = vmatpush1.msra.mxu0 0.0
    %3060 = vmatprep.subr.mxu0 0.0
    %3061 = vmatpush1.msra.mxu0 0.0
    %3062 = vmatprep.subr.mxu0 0.0
    %3063 = vmatpush1.msra.mxu0 0.0
    %3064 = vmatprep.subr.mxu0 0.0
    %3065 = vmatpush1.msra.mxu0 0.0
    %3066 = vmatprep.subr.mxu0 0.0
    %3067 = vmatpush1.msra.mxu0 0.0
    %3068 = vmatprep.subr.mxu0 0.0
    %3069 = vmatpush1.msra.mxu0 0.0
    %3070 = vmatprep.subr.mxu0 0.0
    %3071 = vmatpush1.msra.mxu0 0.0
    %3072 = vmatprep.subr.mxu0 0.0
    %3073 = vmatpush1.msra.mxu0 0.0
    %3074 = vmatprep.subr.mxu0 0.0
    %3075 = vmatpush1.msra.mxu0 0.0
    %3076 = vmatprep.subr.mxu0 0.0
    %3077 = vmatpush1.msra.mxu0 0.0
    %3078 = vmatprep.subr.mxu0 0.0
    %3079 = vmatpush1.msra.mxu0 0.0
    %3080 = vmatprep.subr.mxu0 0.0
    %3081 = vmatpush1.msra.mxu0 0.0
    %3082 = vmatprep.subr.mxu0 0.0
    %3083 = vmatpush1.msra.mxu0 0.0
    %3084 = vmatprep.subr.mxu0 0.0
    %3085 = vmatpush1.msra.mxu0 0.0
    %3086 = vmatprep.subr.mxu0 0.0
    %3087 = vmatpush1.msra.mxu0 0.0
    %3088 = vmatprep.subr.mxu0 0.0
    %3089 = vmatpush1.msra.mxu0 0.0
    %3090 = vmatprep.subr.mxu0 0.0
    %3091 = vmatpush1.msra.mxu0 0.0
    %3092 = vmatprep.mubr.f32.mxu0 0.0
    %3093 = vmatmul.mubr.f32.gmra.mrb[0].mxu0 %v2981
    %v3094 = vpop.f32.mrb[0].mxu0
    %v3095 = vadd.f32 %v2979, %v3094
    %v3096 = vpop.f32.mrb[0].mxu0
    %3097 = vmatprep.mubr.f32.mxu0 0.0
    %3098 = vmatmul.mubr.f32.gmra.mrb[0].mxu0 %v2984
    %v3099 = vpop.f32.mrb[0].mxu0
    %v3100 = vadd.f32 %v2979, %v3099
    %v3101 = vpop.f32.mrb[0].mxu0
    %3102 = vmatprep.mubr.f32.mxu0 0.0
    %3103 = vmatmul.mubr.f32.gmra.mrb[0].mxu0 %v2987
    %v3104 = vpop.f32.mrb[0].mxu0
    %v3105 = vadd.f32 %v2979, %v3104
    %v3106 = vpop.f32.mrb[0].mxu0
    %3107 = vmatprep.mubr.f32.mxu0 0.0
    %3108 = vmatmul.mubr.f32.gmra.mrb[0].mxu0 %v2990
    %v3109 = vpop.f32.mrb[0].mxu0
    %v3110 = vadd.f32 %v2979, %v3109
    %v3111 = vpop.f32.mrb[0].mxu0
    %3112 = vmatprep.mubr.f32.mxu0 0.0
    %3113 = vmatmul.mubr.f32.gmra.mrb[0].mxu0 %v2993
    %v3114 = vpop.f32.mrb[0].mxu0
    %v3115 = vadd.f32 %v2979, %v3114
    %v3116 = vpop.f32.mrb[0].mxu0
    %3117 = vmatprep.mubr.f32.mxu0 0.0
    %3118 = vmatmul.mubr.f32.gmra.mrb[0].mxu0 %v2996
    %v3119 = vpop.f32.mrb[0].mxu0
    %v3120 = vadd.f32 %v2979, %v3119
    %v3121 = vpop.f32.mrb[0].mxu0
    %3122 = vmatprep.mubr.f32.mxu0 0.0
    %3123 = vmatmul.mubr.f32.gmra.mrb[0].mxu0 %v2999
    %v3124 = vpop.f32.mrb[0].mxu0
    %v3125 = vadd.f32 %v2979, %v3124
    %v3126 = vpop.f32.mrb[0].mxu0
    %3127 = vmatprep.mubr.f32.mxu0 0.0
    %3128 = vmatmul.mubr.f32.gmra.mrb[0].mxu0 %v3002
    %v3129 = vpop.f32.mrb[0].mxu0
    %v3130 = vadd.f32 %v2979, %v3129
    %v3131 = vpop.f32.mrb[0].mxu0
    %3132 = vmatprep.mubr.f32.mxu0 0.0
    %3133 = vmatmul.mubr.f32.gmra.mrb[0].mxu0 %v3005
    %v3134 = vpop.f32.mrb[0].mxu0
    %v3135 = vadd.f32 %v2979, %v3134
    %v3136 = vpop.f32.mrb[0].mxu0
    %3137 = vmatprep.mubr.f32.mxu0 0.0
    %3138 = vmatmul.mubr.f32.gmra.mrb[0].mxu0 %v3008
    %v3139 = vpop.f32.mrb[0].mxu0
    %v3140 = vadd.f32 %v2979, %v3139
    %v3141 = vpop.f32.mrb[0].mxu0
    %3142 = vmatprep.mubr.f32.mxu0 0.0
    %3143 = vmatmul.mubr.f32.gmra.mrb[0].mxu0 %v3011
    %v3144 = vpop.f32.mrb[0].mxu0
    %v3145 = vadd.f32 %v2979, %v3144
    %v3146 = vpop.f32.mrb[0].mxu0
    %3147 = vmatprep.mubr.f32.mxu0 0.0
    %3148 = vmatmul.mubr.f32.gmra.mrb[0].mxu0 %v3014
    %v3149 = vpop.f32.mrb[0].mxu0
    %v3150 = vadd.f32 %v2979, %v3149
    %v3151 = vpop.f32.mrb[0].mxu0
    %3152 = vmatprep.mubr.f32.mxu0 0.0
    %3153 = vmatmul.mubr.f32.gmra.mrb[0].mxu0 %v3017
    %v3154 = vpop.f32.mrb[0].mxu0
    %v3155 = vadd.f32 %v2979, %v3154
    %v3156 = vpop.f32.mrb[0].mxu0
    %3157 = vmatprep.mubr.f32.mxu0 0.0
    %3158 = vmatmul.mubr.f32.gmra.mrb[0].mxu0 %v3020
    %v3159 = vpop.f32.mrb[0].mxu0
    %v3160 = vadd.f32 %v2979, %v3159
    %v3161 = vpop.f32.mrb[0].mxu0
    %3162 = vmatprep.mubr.f32.mxu0 0.0
    %3163 = vmatmul.mubr.f32.gmra.mrb[0].mxu0 %v3023
    %v3164 = vpop.f32.mrb[0].mxu0
    %v3165 = vadd.f32 %v2979, %v3164
    %v3166 = vpop.f32.mrb[0].mxu0
    %3167 = vmatprep.mubr.f32.mxu0 0.0
    %3168 = vmatmul.mubr.f32.gmra.mrb[0].mxu0 %v3026
    %v3169 = vpop.f32.mrb[0].mxu0
    %v3170 = vadd.f32 %v2979, %v3169
    %v3171 = vpop.f32.mrb[0].mxu0
    %3172 = vdwg.mxu0
    %v3173 = vmax.f32 %v3095, 0.0
    %v3174 = vmax.f32 %v3100, 0.0
    %v3175 = vmax.f32 %v3105, 0.0
    %v3176 = vmax.f32 %v3110, 0.0
    %v3177 = vmax.f32 %v3115, 0.0
    %v3178 = vmax.f32 %v3120, 0.0
    %v3179 = vmax.f32 %v3125, 0.0
    %v3180 = vmax.f32 %v3130, 0.0
    %v3181 = vmax.f32 %v3135, 0.0
    %v3182 = vmax.f32 %v3140, 0.0
    %v3183 = vmax.f32 %v3145, 0.0
    %v3184 = vmax.f32 %v3150, 0.0
    %v3185 = vmax.f32 %v3155, 0.0
    %v3186 = vmax.f32 %v3160, 0.0
    %v3187 = vmax.f32 %v3165, 0.0
    %v3188 = vmax.f32 %v3170, 0.0
    %s3189 = scalar_lea.vmem %s3, 32
    %v3190 = vld [vmem:[%s3189] sm:$0xff]
    %v3191 = vld [vmem:[%s3189 + $0x8] sm:$0x1]
    %v3208 = vrot.slane %v3173, 2
    %v3209 = vrot.slane %v3174, 2
    %v3210 = vsel %vm667, %v3208, %v3209
    %v3211 = vrot.slane %v3175, 2
    %v3212 = vsel %vm667, %v3209, %v3211
    %v3213 = vrot.slane %v3176, 2
    %v3214 = vsel %vm667, %v3211, %v3213
    %v3215 = vrot.slane %v3177, 2
    %v3216 = vsel %vm667, %v3213, %v3215
    %v3217 = vrot.slane %v3178, 2
    %v3218 = vsel %vm667, %v3215, %v3217
    %v3219 = vrot.slane %v3179, 2
    %v3220 = vsel %vm667, %v3217, %v3219
    %v3221 = vrot.slane %v3180, 2
    %v3222 = vsel %vm667, %v3219, %v3221
    %v3223 = vrot.slane %v3181, 2
    %v3224 = vsel %vm667, %v3221, %v3223
    %v3225 = vrot.slane %v3182, 2
    %v3226 = vsel %vm667, %v3223, %v3225
    %v3227 = vrot.slane %v3183, 2
    %v3228 = vsel %vm667, %v3225, %v3227
    %v3229 = vrot.slane %v3184, 2
    %v3230 = vsel %vm667, %v3227, %v3229
    %v3231 = vrot.slane %v3185, 2
    %v3232 = vsel %vm667, %v3229, %v3231
    %v3233 = vrot.slane %v3186, 2
    %v3234 = vsel %vm667, %v3231, %v3233
    %v3235 = vrot.slane %v3187, 2
    %v3236 = vsel %vm667, %v3233, %v3235
    %v3237 = vrot.slane %v3188, 2
    %v3238 = vsel %vm667, %v3235, %v3237
    %v3256 = vsel %vm667, 0.0, %v3208
    %v3257 = vsel %vm717, %v3237, 0.0
    %v3258 = vlaneseq
    %v3259 = vshrl.u32 %v3258, 7
    %v3260 = vsub.s32 0, %v3259
    %v3261 = vrot.slane %v3190, %v3260
    %v3262 = vmul.f32 %v3256, %v3261
    %v3263 = vmul.f32 %v3210, %v3261
    %v3264 = vmul.f32 %v3212, %v3261
    %v3265 = vmul.f32 %v3214, %v3261
    %v3266 = vmul.f32 %v3216, %v3261
    %v3267 = vmul.f32 %v3218, %v3261
    %v3268 = vmul.f32 %v3220, %v3261
    %v3269 = vmul.f32 %v3222, %v3261
    %v3270 = vmul.f32 %v3224, %v3261
    %v3271 = vmul.f32 %v3226, %v3261
    %v3272 = vmul.f32 %v3228, %v3261
    %v3273 = vmul.f32 %v3230, %v3261
    %v3274 = vmul.f32 %v3232, %v3261
    %v3275 = vmul.f32 %v3234, %v3261
    %v3276 = vmul.f32 %v3236, %v3261
    %v3277 = vmul.f32 %v3238, %v3261
    %v3278 = vadd.f32 %v3262, 0.0
    %v3279 = vadd.f32 %v3263, 0.0
    %v3280 = vadd.f32 %v3264, 0.0
    %v3281 = vadd.f32 %v3265, 0.0
    %v3282 = vadd.f32 %v3266, 0.0
    %v3283 = vadd.f32 %v3267, 0.0
    %v3284 = vadd.f32 %v3268, 0.0
    %v3285 = vadd.f32 %v3269, 0.0
    %v3286 = vadd.f32 %v3270, 0.0
    %v3287 = vadd.f32 %v3271, 0.0
    %v3288 = vadd.f32 %v3272, 0.0
    %v3289 = vadd.f32 %v3273, 0.0
    %v3290 = vadd.f32 %v3274, 0.0
    %v3291 = vadd.f32 %v3275, 0.0
    %v3292 = vadd.f32 %v3276, 0.0
    %v3293 = vadd.f32 %v3277, 0.0
    %v3294 = vlaneseq
    %v3295 = vshrl.u32 %v3294, 7
    %v3296 = vsub.s32 3, %v3295
    %v3297 = vrot.slane %v3190, %v3296
    %v3298 = vmul.f32 %v3256, %v3297
    %v3299 = vmul.f32 %v3210, %v3297
    %v3300 = vmul.f32 %v3212, %v3297
    %v3301 = vmul.f32 %v3214, %v3297
    %v3302 = vmul.f32 %v3216, %v3297
    %v3303 = vmul.f32 %v3218, %v3297
    %v3304 = vmul.f32 %v3220, %v3297
    %v3305 = vmul.f32 %v3222, %v3297
    %v3306 = vmul.f32 %v3224, %v3297
    %v3307 = vmul.f32 %v3226, %v3297
    %v3308 = vmul.f32 %v3228, %v3297
    %v3309 = vmul.f32 %v3230, %v3297
    %v3310 = vmul.f32 %v3232, %v3297
    %v3311 = vmul.f32 %v3234, %v3297
    %v3312 = vmul.f32 %v3236, %v3297
    %v3313 = vmul.f32 %v3238, %v3297
    %v3314 = vmul.f32 %v3257, %v3297
    %v3332 = vrot.slane %v3298, 5
    %v3333 = vrot.slane %v3299, 5
    %v3334 = vsel %vm717, %v3332, %v3333
    %v3335 = vrot.slane %v3300, 5
    %v3336 = vsel %vm717, %v3333, %v3335
    %v3337 = vrot.slane %v3301, 5
    %v3338 = vsel %vm717, %v3335, %v3337
    %v3339 = vrot.slane %v3302, 5
    %v3340 = vsel %vm717, %v3337, %v3339
    %v3341 = vrot.slane %v3303, 5
    %v3342 = vsel %vm717, %v3339, %v3341
    %v3343 = vrot.slane %v3304, 5
    %v3344 = vsel %vm717, %v3341, %v3343
    %v3345 = vrot.slane %v3305, 5
    %v3346 = vsel %vm717, %v3343, %v3345
    %v3347 = vrot.slane %v3306, 5
    %v3348 = vsel %vm717, %v3345, %v3347
    %v3349 = vrot.slane %v3307, 5
    %v3350 = vsel %vm717, %v3347, %v3349
    %v3351 = vrot.slane %v3308, 5
    %v3352 = vsel %vm717, %v3349, %v3351
    %v3353 = vrot.slane %v3309, 5
    %v3354 = vsel %vm717, %v3351, %v3353
    %v3355 = vrot.slane %v3310, 5
    %v3356 = vsel %vm717, %v3353, %v3355
    %v3357 = vrot.slane %v3311, 5
    %v3358 = vsel %vm717, %v3355, %v3357
    %v3359 = vrot.slane %v3312, 5
    %v3360 = vsel %vm717, %v3357, %v3359
    %v3361 = vrot.slane %v3313, 5
    %v3362 = vsel %vm717, %v3359, %v3361
    %v3363 = vrot.slane %v3314, 5
    %v3364 = vsel %vm717, %v3361, %v3363
    %v3381 = vadd.f32 %v3278, %v3334
    %v3382 = vadd.f32 %v3279, %v3336
    %v3383 = vadd.f32 %v3280, %v3338
    %v3384 = vadd.f32 %v3281, %v3340
    %v3385 = vadd.f32 %v3282, %v3342
    %v3386 = vadd.f32 %v3283, %v3344
    %v3387 = vadd.f32 %v3284, %v3346
    %v3388 = vadd.f32 %v3285, %v3348
    %v3389 = vadd.f32 %v3286, %v3350
    %v3390 = vadd.f32 %v3287, %v3352
    %v3391 = vadd.f32 %v3288, %v3354
    %v3392 = vadd.f32 %v3289, %v3356
    %v3393 = vadd.f32 %v3290, %v3358
    %v3394 = vadd.f32 %v3291, %v3360
    %v3395 = vadd.f32 %v3292, %v3362
    %v3396 = vadd.f32 %v3293, %v3364
    %v3397 = vlaneseq
    %v3398 = vshrl.u32 %v3397, 7
    %v3399 = vsub.s32 6, %v3398
    %v3400 = vrot.slane %v3190, %v3399
    %v3401 = vmul.f32 %v3210, %v3400
    %v3402 = vmul.f32 %v3212, %v3400
    %v3403 = vmul.f32 %v3214, %v3400
    %v3404 = vmul.f32 %v3216, %v3400
    %v3405 = vmul.f32 %v3218, %v3400
    %v3406 = vmul.f32 %v3220, %v3400
    %v3407 = vmul.f32 %v3222, %v3400
    %v3408 = vmul.f32 %v3224, %v3400
    %v3409 = vmul.f32 %v3226, %v3400
    %v3410 = vmul.f32 %v3228, %v3400
    %v3411 = vmul.f32 %v3230, %v3400
    %v3412 = vmul.f32 %v3232, %v3400
    %v3413 = vmul.f32 %v3234, %v3400
    %v3414 = vmul.f32 %v3236, %v3400
    %v3415 = vmul.f32 %v3238, %v3400
    %v3416 = vmul.f32 %v3257, %v3400
    %v3433 = vrot.slane %v3401, 2
    %v3434 = vrot.slane %v3402, 2
    %v3435 = vsel %vm667, %v3433, %v3434
    %v3436 = vrot.slane %v3403, 2
    %v3437 = vsel %vm667, %v3434, %v3436
    %v3438 = vrot.slane %v3404, 2
    %v3439 = vsel %vm667, %v3436, %v3438
    %v3440 = vrot.slane %v3405, 2
    %v3441 = vsel %vm667, %v3438, %v3440
    %v3442 = vrot.slane %v3406, 2
    %v3443 = vsel %vm667, %v3440, %v3442
    %v3444 = vrot.slane %v3407, 2
    %v3445 = vsel %vm667, %v3442, %v3444
    %v3446 = vrot.slane %v3408, 2
    %v3447 = vsel %vm667, %v3444, %v3446
    %v3448 = vrot.slane %v3409, 2
    %v3449 = vsel %vm667, %v3446, %v3448
    %v3450 = vrot.slane %v3410, 2
    %v3451 = vsel %vm667, %v3448, %v3450
    %v3452 = vrot.slane %v3411, 2
    %v3453 = vsel %vm667, %v3450, %v3452
    %v3454 = vrot.slane %v3412, 2
    %v3455 = vsel %vm667, %v3452, %v3454
    %v3456 = vrot.slane %v3413, 2
    %v3457 = vsel %vm667, %v3454, %v3456
    %v3458 = vrot.slane %v3414, 2
    %v3459 = vsel %vm667, %v3456, %v3458
    %v3460 = vrot.slane %v3415, 2
    %v3461 = vsel %vm667, %v3458, %v3460
    %v3462 = vrot.slane %v3416, 2
    %v3463 = vsel %vm667, %v3460, %v3462
    %v3480 = vadd.f32 %v3381, %v3435
    %v3481 = vadd.f32 %v3382, %v3437
    %v3482 = vadd.f32 %v3383, %v3439
    %v3483 = vadd.f32 %v3384, %v3441
    %v3484 = vadd.f32 %v3385, %v3443
    %v3485 = vadd.f32 %v3386, %v3445
    %v3486 = vadd.f32 %v3387, %v3447
    %v3487 = vadd.f32 %v3388, %v3449
    %v3488 = vadd.f32 %v3389, %v3451
    %v3489 = vadd.f32 %v3390, %v3453
    %v3490 = vadd.f32 %v3391, %v3455
    %v3491 = vadd.f32 %v3392, %v3457
    %v3492 = vadd.f32 %v3393, %v3459
    %v3493 = vadd.f32 %v3394, %v3461
    %v3494 = vadd.f32 %v3395, %v3463
    %v3495 = vadd.f32 %v3396, %v3462
    %v3496 = vlaneseq
    %v3497 = vshrl.u32 %v3496, 7
    %v3498 = vsub.s32 1, %v3497
    %v3499 = vrot.slane %v3190, %v3498
    %v3500 = vmul.f32 %v3256, %v3499
    %v3501 = vmul.f32 %v3210, %v3499
    %v3502 = vmul.f32 %v3212, %v3499
    %v3503 = vmul.f32 %v3214, %v3499
    %v3504 = vmul.f32 %v3216, %v3499
    %v3505 = vmul.f32 %v3218, %v3499
    %v3506 = vmul.f32 %v3220, %v3499
    %v3507 = vmul.f32 %v3222, %v3499
    %v3508 = vmul.f32 %v3224, %v3499
    %v3509 = vmul.f32 %v3226, %v3499
    %v3510 = vmul.f32 %v3228, %v3499
    %v3511 = vmul.f32 %v3230, %v3499
    %v3512 = vmul.f32 %v3232, %v3499
    %v3513 = vmul.f32 %v3234, %v3499
    %v3514 = vmul.f32 %v3236, %v3499
    %v3515 = vmul.f32 %v3238, %v3499
    %v3516 = vadd.f32 %v3500, 0.0
    %v3517 = vadd.f32 %v3501, 0.0
    %v3518 = vadd.f32 %v3502, 0.0
    %v3519 = vadd.f32 %v3503, 0.0
    %v3520 = vadd.f32 %v3504, 0.0
    %v3521 = vadd.f32 %v3505, 0.0
    %v3522 = vadd.f32 %v3506, 0.0
    %v3523 = vadd.f32 %v3507, 0.0
    %v3524 = vadd.f32 %v3508, 0.0
    %v3525 = vadd.f32 %v3509, 0.0
    %v3526 = vadd.f32 %v3510, 0.0
    %v3527 = vadd.f32 %v3511, 0.0
    %v3528 = vadd.f32 %v3512, 0.0
    %v3529 = vadd.f32 %v3513, 0.0
    %v3530 = vadd.f32 %v3514, 0.0
    %v3531 = vadd.f32 %v3515, 0.0
    %v3532 = vlaneseq
    %v3533 = vshrl.u32 %v3532, 7
    %v3534 = vsub.s32 4, %v3533
    %v3535 = vrot.slane %v3190, %v3534
    %v3536 = vmul.f32 %v3256, %v3535
    %v3537 = vmul.f32 %v3210, %v3535
    %v3538 = vmul.f32 %v3212, %v3535
    %v3539 = vmul.f32 %v3214, %v3535
    %v3540 = vmul.f32 %v3216, %v3535
    %v3541 = vmul.f32 %v3218, %v3535
    %v3542 = vmul.f32 %v3220, %v3535
    %v3543 = vmul.f32 %v3222, %v3535
    %v3544 = vmul.f32 %v3224, %v3535
    %v3545 = vmul.f32 %v3226, %v3535
    %v3546 = vmul.f32 %v3228, %v3535
    %v3547 = vmul.f32 %v3230, %v3535
    %v3548 = vmul.f32 %v3232, %v3535
    %v3549 = vmul.f32 %v3234, %v3535
    %v3550 = vmul.f32 %v3236, %v3535
    %v3551 = vmul.f32 %v3238, %v3535
    %v3552 = vmul.f32 %v3257, %v3535
    %v3570 = vrot.slane %v3536, 5
    %v3571 = vrot.slane %v3537, 5
    %v3572 = vsel %vm717, %v3570, %v3571
    %v3573 = vrot.slane %v3538, 5
    %v3574 = vsel %vm717, %v3571, %v3573
    %v3575 = vrot.slane %v3539, 5
    %v3576 = vsel %vm717, %v3573, %v3575
    %v3577 = vrot.slane %v3540, 5
    %v3578 = vsel %vm717, %v3575, %v3577
    %v3579 = vrot.slane %v3541, 5
    %v3580 = vsel %vm717, %v3577, %v3579
    %v3581 = vrot.slane %v3542, 5
    %v3582 = vsel %vm717, %v3579, %v3581
    %v3583 = vrot.slane %v3543, 5
    %v3584 = vsel %vm717, %v3581, %v3583
    %v3585 = vrot.slane %v3544, 5
    %v3586 = vsel %vm717, %v3583, %v3585
    %v3587 = vrot.slane %v3545, 5
    %v3588 = vsel %vm717, %v3585, %v3587
    %v3589 = vrot.slane %v3546, 5
    %v3590 = vsel %vm717, %v3587, %v3589
    %v3591 = vrot.slane %v3547, 5
    %v3592 = vsel %vm717, %v3589, %v3591
    %v3593 = vrot.slane %v3548, 5
    %v3594 = vsel %vm717, %v3591, %v3593
    %v3595 = vrot.slane %v3549, 5
    %v3596 = vsel %vm717, %v3593, %v3595
    %v3597 = vrot.slane %v3550, 5
    %v3598 = vsel %vm717, %v3595, %v3597
    %v3599 = vrot.slane %v3551, 5
    %v3600 = vsel %vm717, %v3597, %v3599
    %v3601 = vrot.slane %v3552, 5
    %v3602 = vsel %vm717, %v3599, %v3601
    %v3619 = vadd.f32 %v3516, %v3572
    %v3620 = vadd.f32 %v3517, %v3574
    %v3621 = vadd.f32 %v3518, %v3576
    %v3622 = vadd.f32 %v3519, %v3578
    %v3623 = vadd.f32 %v3520, %v3580
    %v3624 = vadd.f32 %v3521, %v3582
    %v3625 = vadd.f32 %v3522, %v3584
    %v3626 = vadd.f32 %v3523, %v3586
    %v3627 = vadd.f32 %v3524, %v3588
    %v3628 = vadd.f32 %v3525, %v3590
    %v3629 = vadd.f32 %v3526, %v3592
    %v3630 = vadd.f32 %v3527, %v3594
    %v3631 = vadd.f32 %v3528, %v3596
    %v3632 = vadd.f32 %v3529, %v3598
    %v3633 = vadd.f32 %v3530, %v3600
    %v3634 = vadd.f32 %v3531, %v3602
    %v3635 = vlaneseq
    %v3636 = vshrl.u32 %v3635, 7
    %v3637 = vsub.s32 7, %v3636
    %v3638 = vrot.slane %v3190, %v3637
    %v3639 = vmul.f32 %v3210, %v3638
    %v3640 = vmul.f32 %v3212, %v3638
    %v3641 = vmul.f32 %v3214, %v3638
    %v3642 = vmul.f32 %v3216, %v3638
    %v3643 = vmul.f32 %v3218, %v3638
    %v3644 = vmul.f32 %v3220, %v3638
    %v3645 = vmul.f32 %v3222, %v3638
    %v3646 = vmul.f32 %v3224, %v3638
    %v3647 = vmul.f32 %v3226, %v3638
    %v3648 = vmul.f32 %v3228, %v3638
    %v3649 = vmul.f32 %v3230, %v3638
    %v3650 = vmul.f32 %v3232, %v3638
    %v3651 = vmul.f32 %v3234, %v3638
    %v3652 = vmul.f32 %v3236, %v3638
    %v3653 = vmul.f32 %v3238, %v3638
    %v3654 = vmul.f32 %v3257, %v3638
    %v3671 = vrot.slane %v3639, 2
    %v3672 = vrot.slane %v3640, 2
    %v3673 = vsel %vm667, %v3671, %v3672
    %v3674 = vrot.slane %v3641, 2
    %v3675 = vsel %vm667, %v3672, %v3674
    %v3676 = vrot.slane %v3642, 2
    %v3677 = vsel %vm667, %v3674, %v3676
    %v3678 = vrot.slane %v3643, 2
    %v3679 = vsel %vm667, %v3676, %v3678
    %v3680 = vrot.slane %v3644, 2
    %v3681 = vsel %vm667, %v3678, %v3680
    %v3682 = vrot.slane %v3645, 2
    %v3683 = vsel %vm667, %v3680, %v3682
    %v3684 = vrot.slane %v3646, 2
    %v3685 = vsel %vm667, %v3682, %v3684
    %v3686 = vrot.slane %v3647, 2
    %v3687 = vsel %vm667, %v3684, %v3686
    %v3688 = vrot.slane %v3648, 2
    %v3689 = vsel %vm667, %v3686, %v3688
    %v3690 = vrot.slane %v3649, 2
    %v3691 = vsel %vm667, %v3688, %v3690
    %v3692 = vrot.slane %v3650, 2
    %v3693 = vsel %vm667, %v3690, %v3692
    %v3694 = vrot.slane %v3651, 2
    %v3695 = vsel %vm667, %v3692, %v3694
    %v3696 = vrot.slane %v3652, 2
    %v3697 = vsel %vm667, %v3694, %v3696
    %v3698 = vrot.slane %v3653, 2
    %v3699 = vsel %vm667, %v3696, %v3698
    %v3700 = vrot.slane %v3654, 2
    %v3701 = vsel %vm667, %v3698, %v3700
    %v3718 = vadd.f32 %v3619, %v3673
    %v3719 = vadd.f32 %v3620, %v3675
    %v3720 = vadd.f32 %v3621, %v3677
    %v3721 = vadd.f32 %v3622, %v3679
    %v3722 = vadd.f32 %v3623, %v3681
    %v3723 = vadd.f32 %v3624, %v3683
    %v3724 = vadd.f32 %v3625, %v3685
    %v3725 = vadd.f32 %v3626, %v3687
    %v3726 = vadd.f32 %v3627, %v3689
    %v3727 = vadd.f32 %v3628, %v3691
    %v3728 = vadd.f32 %v3629, %v3693
    %v3729 = vadd.f32 %v3630, %v3695
    %v3730 = vadd.f32 %v3631, %v3697
    %v3731 = vadd.f32 %v3632, %v3699
    %v3732 = vadd.f32 %v3633, %v3701
    %v3733 = vadd.f32 %v3634, %v3700
    %v3734 = vlaneseq
    %v3735 = vshrl.u32 %v3734, 7
    %v3736 = vsub.s32 2, %v3735
    %v3737 = vrot.slane %v3190, %v3736
    %v3738 = vmul.f32 %v3256, %v3737
    %v3739 = vmul.f32 %v3210, %v3737
    %v3740 = vmul.f32 %v3212, %v3737
    %v3741 = vmul.f32 %v3214, %v3737
    %v3742 = vmul.f32 %v3216, %v3737
    %v3743 = vmul.f32 %v3218, %v3737
    %v3744 = vmul.f32 %v3220, %v3737
    %v3745 = vmul.f32 %v3222, %v3737
    %v3746 = vmul.f32 %v3224, %v3737
    %v3747 = vmul.f32 %v3226, %v3737
    %v3748 = vmul.f32 %v3228, %v3737
    %v3749 = vmul.f32 %v3230, %v3737
    %v3750 = vmul.f32 %v3232, %v3737
    %v3751 = vmul.f32 %v3234, %v3737
    %v3752 = vmul.f32 %v3236, %v3737
    %v3753 = vmul.f32 %v3238, %v3737
    %v3754 = vadd.f32 %v3738, 0.0
    %v3755 = vadd.f32 %v3739, 0.0
    %v3756 = vadd.f32 %v3740, 0.0
    %v3757 = vadd.f32 %v3741, 0.0
    %v3758 = vadd.f32 %v3742, 0.0
    %v3759 = vadd.f32 %v3743, 0.0
    %v3760 = vadd.f32 %v3744, 0.0
    %v3761 = vadd.f32 %v3745, 0.0
    %v3762 = vadd.f32 %v3746, 0.0
    %v3763 = vadd.f32 %v3747, 0.0
    %v3764 = vadd.f32 %v3748, 0.0
    %v3765 = vadd.f32 %v3749, 0.0
    %v3766 = vadd.f32 %v3750, 0.0
    %v3767 = vadd.f32 %v3751, 0.0
    %v3768 = vadd.f32 %v3752, 0.0
    %v3769 = vadd.f32 %v3753, 0.0
    %v3770 = vlaneseq
    %v3771 = vshrl.u32 %v3770, 7
    %v3772 = vsub.s32 5, %v3771
    %v3773 = vrot.slane %v3190, %v3772
    %v3774 = vmul.f32 %v3256, %v3773
    %v3775 = vmul.f32 %v3210, %v3773
    %v3776 = vmul.f32 %v3212, %v3773
    %v3777 = vmul.f32 %v3214, %v3773
    %v3778 = vmul.f32 %v3216, %v3773
    %v3779 = vmul.f32 %v3218, %v3773
    %v3780 = vmul.f32 %v3220, %v3773
    %v3781 = vmul.f32 %v3222, %v3773
    %v3782 = vmul.f32 %v3224, %v3773
    %v3783 = vmul.f32 %v3226, %v3773
    %v3784 = vmul.f32 %v3228, %v3773
    %v3785 = vmul.f32 %v3230, %v3773
    %v3786 = vmul.f32 %v3232, %v3773
    %v3787 = vmul.f32 %v3234, %v3773
    %v3788 = vmul.f32 %v3236, %v3773
    %v3789 = vmul.f32 %v3238, %v3773
    %v3790 = vmul.f32 %v3257, %v3773
    %v3808 = vrot.slane %v3774, 5
    %v3809 = vrot.slane %v3775, 5
    %v3810 = vsel %vm717, %v3808, %v3809
    %v3811 = vrot.slane %v3776, 5
    %v3812 = vsel %vm717, %v3809, %v3811
    %v3813 = vrot.slane %v3777, 5
    %v3814 = vsel %vm717, %v3811, %v3813
    %v3815 = vrot.slane %v3778, 5
    %v3816 = vsel %vm717, %v3813, %v3815
    %v3817 = vrot.slane %v3779, 5
    %v3818 = vsel %vm717, %v3815, %v3817
    %v3819 = vrot.slane %v3780, 5
    %v3820 = vsel %vm717, %v3817, %v3819
    %v3821 = vrot.slane %v3781, 5
    %v3822 = vsel %vm717, %v3819, %v3821
    %v3823 = vrot.slane %v3782, 5
    %v3824 = vsel %vm717, %v3821, %v3823
    %v3825 = vrot.slane %v3783, 5
    %v3826 = vsel %vm717, %v3823, %v3825
    %v3827 = vrot.slane %v3784, 5
    %v3828 = vsel %vm717, %v3825, %v3827
    %v3829 = vrot.slane %v3785, 5
    %v3830 = vsel %vm717, %v3827, %v3829
    %v3831 = vrot.slane %v3786, 5
    %v3832 = vsel %vm717, %v3829, %v3831
    %v3833 = vrot.slane %v3787, 5
    %v3834 = vsel %vm717, %v3831, %v3833
    %v3835 = vrot.slane %v3788, 5
    %v3836 = vsel %vm717, %v3833, %v3835
    %v3837 = vrot.slane %v3789, 5
    %v3838 = vsel %vm717, %v3835, %v3837
    %v3839 = vrot.slane %v3790, 5
    %v3840 = vsel %vm717, %v3837, %v3839
    %v3857 = vadd.f32 %v3754, %v3810
    %v3858 = vadd.f32 %v3755, %v3812
    %v3859 = vadd.f32 %v3756, %v3814
    %v3860 = vadd.f32 %v3757, %v3816
    %v3861 = vadd.f32 %v3758, %v3818
    %v3862 = vadd.f32 %v3759, %v3820
    %v3863 = vadd.f32 %v3760, %v3822
    %v3864 = vadd.f32 %v3761, %v3824
    %v3865 = vadd.f32 %v3762, %v3826
    %v3866 = vadd.f32 %v3763, %v3828
    %v3867 = vadd.f32 %v3764, %v3830
    %v3868 = vadd.f32 %v3765, %v3832
    %v3869 = vadd.f32 %v3766, %v3834
    %v3870 = vadd.f32 %v3767, %v3836
    %v3871 = vadd.f32 %v3768, %v3838
    %v3872 = vadd.f32 %v3769, %v3840
    %v3873 = vlaneseq
    %v3874 = vshrl.u32 %v3873, 7
    %v3875 = vsub.s32 0, %v3874
    %v3876 = vrot.slane %v3191, %v3875
    %v3877 = vmul.f32 %v3210, %v3876
    %v3878 = vmul.f32 %v3212, %v3876
    %v3879 = vmul.f32 %v3214, %v3876
    %v3880 = vmul.f32 %v3216, %v3876
    %v3881 = vmul.f32 %v3218, %v3876
    %v3882 = vmul.f32 %v3220, %v3876
    %v3883 = vmul.f32 %v3222, %v3876
    %v3884 = vmul.f32 %v3224, %v3876
    %v3885 = vmul.f32 %v3226, %v3876
    %v3886 = vmul.f32 %v3228, %v3876
    %v3887 = vmul.f32 %v3230, %v3876
    %v3888 = vmul.f32 %v3232, %v3876
    %v3889 = vmul.f32 %v3234, %v3876
    %v3890 = vmul.f32 %v3236, %v3876
    %v3891 = vmul.f32 %v3238, %v3876
    %v3892 = vmul.f32 %v3257, %v3876
    %v3893 = vmul.f32 %v3876, 0.0
    %v3911 = vrot.slane %v3877, 2
    %v3912 = vrot.slane %v3878, 2
    %v3913 = vsel %vm667, %v3911, %v3912
    %v3914 = vrot.slane %v3879, 2
    %v3915 = vsel %vm667, %v3912, %v3914
    %v3916 = vrot.slane %v3880, 2
    %v3917 = vsel %vm667, %v3914, %v3916
    %v3918 = vrot.slane %v3881, 2
    %v3919 = vsel %vm667, %v3916, %v3918
    %v3920 = vrot.slane %v3882, 2
    %v3921 = vsel %vm667, %v3918, %v3920
    %v3922 = vrot.slane %v3883, 2
    %v3923 = vsel %vm667, %v3920, %v3922
    %v3924 = vrot.slane %v3884, 2
    %v3925 = vsel %vm667, %v3922, %v3924
    %v3926 = vrot.slane %v3885, 2
    %v3927 = vsel %vm667, %v3924, %v3926
    %v3928 = vrot.slane %v3886, 2
    %v3929 = vsel %vm667, %v3926, %v3928
    %v3930 = vrot.slane %v3887, 2
    %v3931 = vsel %vm667, %v3928, %v3930
    %v3932 = vrot.slane %v3888, 2
    %v3933 = vsel %vm667, %v3930, %v3932
    %v3934 = vrot.slane %v3889, 2
    %v3935 = vsel %vm667, %v3932, %v3934
    %v3936 = vrot.slane %v3890, 2
    %v3937 = vsel %vm667, %v3934, %v3936
    %v3938 = vrot.slane %v3891, 2
    %v3939 = vsel %vm667, %v3936, %v3938
    %v3940 = vrot.slane %v3892, 2
    %v3941 = vsel %vm667, %v3938, %v3940
    %v3942 = vrot.slane %v3893, 2
    %v3943 = vsel %vm667, %v3940, %v3942
    %v3960 = vadd.f32 %v3857, %v3913
    %v3961 = vadd.f32 %v3858, %v3915
    %v3962 = vadd.f32 %v3859, %v3917
    %v3963 = vadd.f32 %v3860, %v3919
    %v3964 = vadd.f32 %v3861, %v3921
    %v3965 = vadd.f32 %v3862, %v3923
    %v3966 = vadd.f32 %v3863, %v3925
    %v3967 = vadd.f32 %v3864, %v3927
    %v3968 = vadd.f32 %v3865, %v3929
    %v3969 = vadd.f32 %v3866, %v3931
    %v3970 = vadd.f32 %v3867, %v3933
    %v3971 = vadd.f32 %v3868, %v3935
    %v3972 = vadd.f32 %v3869, %v3937
    %v3973 = vadd.f32 %v3870, %v3939
    %v3974 = vadd.f32 %v3871, %v3941
    %v3975 = vadd.f32 %v3872, %v3943
    %v3976 = vmul.f32 %v3480, %v353
    %v3977 = vmul.f32 %v3481, %v354
    %v3978 = vmul.f32 %v3482, %v355
    %v3979 = vmul.f32 %v3483, %v356
    %v3980 = vmul.f32 %v3484, %v357
    %v3981 = vmul.f32 %v3485, %v358
    %v3982 = vmul.f32 %v3486, %v359
    %v3983 = vmul.f32 %v3487, %v360
    %v3984 = vmul.f32 %v3488, %v361
    %v3985 = vmul.f32 %v3489, %v362
    %v3986 = vmul.f32 %v3490, %v363
    %v3987 = vmul.f32 %v3491, %v364
    %v3988 = vmul.f32 %v3492, %v365
    %v3989 = vmul.f32 %v3493, %v366
    %v3990 = vmul.f32 %v3494, %v367
    %v3991 = vmul.f32 %v3495, %v368
    %v4008 = vrot.slane %v3718, 1
    %v4009 = vrot.slane %v3719, 1
    %v4010 = vsel %vm1469, %v4008, %v4009
    %v4011 = vrot.slane %v3720, 1
    %v4012 = vsel %vm1469, %v4009, %v4011
    %v4013 = vrot.slane %v3721, 1
    %v4014 = vsel %vm1469, %v4011, %v4013
    %v4015 = vrot.slane %v3722, 1
    %v4016 = vsel %vm1469, %v4013, %v4015
    %v4017 = vrot.slane %v3723, 1
    %v4018 = vsel %vm1469, %v4015, %v4017
    %v4019 = vrot.slane %v3724, 1
    %v4020 = vsel %vm1469, %v4017, %v4019
    %v4021 = vrot.slane %v3725, 1
    %v4022 = vsel %vm1469, %v4019, %v4021
    %v4023 = vrot.slane %v3726, 1
    %v4024 = vsel %vm1469, %v4021, %v4023
    %v4025 = vrot.slane %v3727, 1
    %v4026 = vsel %vm1469, %v4023, %v4025
    %v4027 = vrot.slane %v3728, 1
    %v4028 = vsel %vm1469, %v4025, %v4027
    %v4029 = vrot.slane %v3729, 1
    %v4030 = vsel %vm1469, %v4027, %v4029
    %v4031 = vrot.slane %v3730, 1
    %v4032 = vsel %vm1469, %v4029, %v4031
    %v4033 = vrot.slane %v3731, 1
    %v4034 = vsel %vm1469, %v4031, %v4033
    %v4035 = vrot.slane %v3732, 1
    %v4036 = vsel %vm1469, %v4033, %v4035
    %v4037 = vrot.slane %v3733, 1
    %v4038 = vsel %vm1469, %v4035, %v4037
    %v4055 = vadd.f32 %v3976, %v4010
    %v4056 = vadd.f32 %v3977, %v4012
    %v4057 = vadd.f32 %v3978, %v4014
    %v4058 = vadd.f32 %v3979, %v4016
    %v4059 = vadd.f32 %v3980, %v4018
    %v4060 = vadd.f32 %v3981, %v4020
    %v4061 = vadd.f32 %v3982, %v4022
    %v4062 = vadd.f32 %v3983, %v4024
    %v4063 = vadd.f32 %v3984, %v4026
    %v4064 = vadd.f32 %v3985, %v4028
    %v4065 = vadd.f32 %v3986, %v4030
    %v4066 = vadd.f32 %v3987, %v4032
    %v4067 = vadd.f32 %v3988, %v4034
    %v4068 = vadd.f32 %v3989, %v4036
    %v4069 = vadd.f32 %v3990, %v4038
    %v4070 = vadd.f32 %v3991, %v4037
    %v4071 = vmul.f32 %v3960, %v1550
    %v4072 = vmul.f32 %v3961, %v1552
    %v4073 = vmul.f32 %v3962, %v1554
    %v4074 = vmul.f32 %v3963, %v1556
    %v4075 = vmul.f32 %v3964, %v1558
    %v4076 = vmul.f32 %v3965, %v1560
    %v4077 = vmul.f32 %v3966, %v1562
    %v4078 = vmul.f32 %v3967, %v1564
    %v4079 = vmul.f32 %v3968, %v1566
    %v4080 = vmul.f32 %v3969, %v1568
    %v4081 = vmul.f32 %v3970, %v1570
    %v4082 = vmul.f32 %v3971, %v1572
    %v4083 = vmul.f32 %v3972, %v1574
    %v4084 = vmul.f32 %v3973, %v1576
    %v4085 = vmul.f32 %v3974, %v1578
    %v4086 = vmul.f32 %v3975, %v1580
    %v4103 = vrot.slane %v4071, 2
    %v4104 = vrot.slane %v4072, 2
    %v4105 = vsel %vm667, %v4103, %v4104
    %v4106 = vrot.slane %v4073, 2
    %v4107 = vsel %vm667, %v4104, %v4106
    %v4108 = vrot.slane %v4074, 2
    %v4109 = vsel %vm667, %v4106, %v4108
    %v4110 = vrot.slane %v4075, 2
    %v4111 = vsel %vm667, %v4108, %v4110
    %v4112 = vrot.slane %v4076, 2
    %v4113 = vsel %vm667, %v4110, %v4112
    %v4114 = vrot.slane %v4077, 2
    %v4115 = vsel %vm667, %v4112, %v4114
    %v4116 = vrot.slane %v4078, 2
    %v4117 = vsel %vm667, %v4114, %v4116
    %v4118 = vrot.slane %v4079, 2
    %v4119 = vsel %vm667, %v4116, %v4118
    %v4120 = vrot.slane %v4080, 2
    %v4121 = vsel %vm667, %v4118, %v4120
    %v4122 = vrot.slane %v4081, 2
    %v4123 = vsel %vm667, %v4120, %v4122
    %v4124 = vrot.slane %v4082, 2
    %v4125 = vsel %vm667, %v4122, %v4124
    %v4126 = vrot.slane %v4083, 2
    %v4127 = vsel %vm667, %v4124, %v4126
    %v4128 = vrot.slane %v4084, 2
    %v4129 = vsel %vm667, %v4126, %v4128
    %v4130 = vrot.slane %v4085, 2
    %v4131 = vsel %vm667, %v4128, %v4130
    %v4132 = vrot.slane %v4086, 2
    %v4133 = vsel %vm667, %v4130, %v4132
    %v4150 = vadd.f32 %v4055, %v4105
    %v4151 = vadd.f32 %v4056, %v4107
    %v4152 = vadd.f32 %v4057, %v4109
    %v4153 = vadd.f32 %v4058, %v4111
    %v4154 = vadd.f32 %v4059, %v4113
    %v4155 = vadd.f32 %v4060, %v4115
    %v4156 = vadd.f32 %v4061, %v4117
    %v4157 = vadd.f32 %v4062, %v4119
    %v4158 = vadd.f32 %v4063, %v4121
    %v4159 = vadd.f32 %v4064, %v4123
    %v4160 = vadd.f32 %v4065, %v4125
    %v4161 = vadd.f32 %v4066, %v4127
    %v4162 = vadd.f32 %v4067, %v4129
    %v4163 = vadd.f32 %v4068, %v4131
    %v4164 = vadd.f32 %v4069, %v4133
    %v4165 = vadd.f32 %v4070, %v4132
    %v4166 = vld [vmem:[%s4 + $0x2] sm:$0x1]
    %v4167 = vlaneseq
    %v4168 = vshrl.u32 %v4167, 7
    %v4169 = vsub.s32 0, %v4168
    %v4170 = vrot.slane %v4166, %v4169
    %v4171 = vadd.f32 %v4150, %v4170
    %v4172 = vadd.f32 %v4151, %v4170
    %v4173 = vadd.f32 %v4152, %v4170
    %v4174 = vadd.f32 %v4153, %v4170
    %v4175 = vadd.f32 %v4154, %v4170
    %v4176 = vadd.f32 %v4155, %v4170
    %v4177 = vadd.f32 %v4156, %v4170
    %v4178 = vadd.f32 %v4157, %v4170
    %v4179 = vadd.f32 %v4158, %v4170
    %v4180 = vadd.f32 %v4159, %v4170
    %v4181 = vadd.f32 %v4160, %v4170
    %v4182 = vadd.f32 %v4161, %v4170
    %v4183 = vadd.f32 %v4162, %v4170
    %v4184 = vadd.f32 %v4163, %v4170
    %v4185 = vadd.f32 %v4164, %v4170
    %v4186 = vadd.f32 %v4165, %v4170
    %v4187 = vmax.f32 %v4171, 0.0
    %v4188 = vmax.f32 %v4172, 0.0
    %v4189 = vmax.f32 %v4173, 0.0
    %v4190 = vmax.f32 %v4174, 0.0
    %v4191 = vmax.f32 %v4175, 0.0
    %v4192 = vmax.f32 %v4176, 0.0
    %v4193 = vmax.f32 %v4177, 0.0
    %v4194 = vmax.f32 %v4178, 0.0
    %v4195 = vmax.f32 %v4179, 0.0
    %v4196 = vmax.f32 %v4180, 0.0
    %v4197 = vmax.f32 %v4181, 0.0
    %v4198 = vmax.f32 %v4182, 0.0
    %v4199 = vmax.f32 %v4183, 0.0
    %v4200 = vmax.f32 %v4184, 0.0
    %v4201 = vmax.f32 %v4185, 0.0
    %v4202 = vmax.f32 %v4186, 0.0
    %s4203 = scalar_lea.vmem %s5, 128
    %v4204 = vld [vmem:[%s4203] sm:$0xff]
    %v4205 = vld [vmem:[%s4203 + $0x8] sm:$0xff]
    %v4206 = vld [vmem:[%s4203 + $0x10] sm:$0xff]
    %v4207 = vld [vmem:[%s4203 + $0x18] sm:$0xff]
    %v4208 = vld [vmem:[%s4203 + $0x20] sm:$0xff]
    %v4209 = vld [vmem:[%s4203 + $0x28] sm:$0xff]
    %v4210 = vld [vmem:[%s4203 + $0x30] sm:$0xff]
    %v4211 = vld [vmem:[%s4203 + $0x38] sm:$0xff]
    %v4212 = vld [vmem:[%s6 + $0x2] sm:$0x1]
    %v4213 = vlaneseq
    %v4214 = vshrl.u32 %v4213, 7
    %v4215 = vsub.s32 0, %v4214
    %v4216 = vrot.slane %v4212, %v4215
    %v4218 = vsel %vm1742, %v4187, 0
    %v4221 = vsel %vm1742, %v4188, 0
    %v4224 = vsel %vm1742, %v4189, 0
    %v4227 = vsel %vm1742, %v4190, 0
    %v4230 = vsel %vm1742, %v4191, 0
    %v4233 = vsel %vm1742, %v4192, 0
    %v4236 = vsel %vm1742, %v4193, 0
    %v4239 = vsel %vm1742, %v4194, 0
    %v4242 = vsel %vm1742, %v4195, 0
    %v4245 = vsel %vm1742, %v4196, 0
    %v4248 = vsel %vm1742, %v4197, 0
    %v4251 = vsel %vm1742, %v4198, 0
    %v4254 = vsel %vm1742, %v4199, 0
    %v4257 = vsel %vm1742, %v4200, 0
    %v4260 = vsel %vm1742, %v4201, 0
    %v4263 = vsel %vm1742, %v4202, 0
    %4265 = vmatprep.subr.mxu0 0.0
    %4266 = vmatpush1.msra.mxu0 %v4204
    %4267 = vmatprep.subr.mxu0 0.0
    %4268 = vmatpush1.msra.mxu0 %v4205
    %4269 = vmatprep.subr.mxu0 0.0
    %4270 = vmatpush1.msra.mxu0 %v4206
    %4271 = vmatprep.subr.mxu0 0.0
    %4272 = vmatpush1.msra.mxu0 %v4207
    %4273 = vmatprep.subr.mxu0 0.0
    %4274 = vmatpush1.msra.mxu0 %v4208
    %4275 = vmatprep.subr.mxu0 0.0
    %4276 = vmatpush1.msra.mxu0 %v4209
    %4277 = vmatprep.subr.mxu0 0.0
    %4278 = vmatpush1.msra.mxu0 %v4210
    %4279 = vmatprep.subr.mxu0 0.0
    %4280 = vmatpush1.msra.mxu0 %v4211
    %4281 = vmatprep.subr.mxu0 0.0
    %4282 = vmatpush1.msra.mxu0 0.0
    %4283 = vmatprep.subr.mxu0 0.0
    %4284 = vmatpush1.msra.mxu0 0.0
    %4285 = vmatprep.subr.mxu0 0.0
    %4286 = vmatpush1.msra.mxu0 0.0
    %4287 = vmatprep.subr.mxu0 0.0
    %4288 = vmatpush1.msra.mxu0 0.0
    %4289 = vmatprep.subr.mxu0 0.0
    %4290 = vmatpush1.msra.mxu0 0.0
    %4291 = vmatprep.subr.mxu0 0.0
    %4292 = vmatpush1.msra.mxu0 0.0
    %4293 = vmatprep.subr.mxu0 0.0
    %4294 = vmatpush1.msra.mxu0 0.0
    %4295 = vmatprep.subr.mxu0 0.0
    %4296 = vmatpush1.msra.mxu0 0.0
    %4297 = vmatprep.subr.mxu0 0.0
    %4298 = vmatpush1.msra.mxu0 0.0
    %4299 = vmatprep.subr.mxu0 0.0
    %4300 = vmatpush1.msra.mxu0 0.0
    %4301 = vmatprep.subr.mxu0 0.0
    %4302 = vmatpush1.msra.mxu0 0.0
    %4303 = vmatprep.subr.mxu0 0.0
    %4304 = vmatpush1.msra.mxu0 0.0
    %4305 = vmatprep.subr.mxu0 0.0
    %4306 = vmatpush1.msra.mxu0 0.0
    %4307 = vmatprep.subr.mxu0 0.0
    %4308 = vmatpush1.msra.mxu0 0.0
    %4309 = vmatprep.subr.mxu0 0.0
    %4310 = vmatpush1.msra.mxu0 0.0
    %4311 = vmatprep.subr.mxu0 0.0
    %4312 = vmatpush1.msra.mxu0 0.0
    %4313 = vmatprep.subr.mxu0 0.0
    %4314 = vmatpush1.msra.mxu0 0.0
    %4315 = vmatprep.subr.mxu0 0.0
    %4316 = vmatpush1.msra.mxu0 0.0
    %4317 = vmatprep.subr.mxu0 0.0
    %4318 = vmatpush1.msra.mxu0 0.0
    %4319 = vmatprep.subr.mxu0 0.0
    %4320 = vmatpush1.msra.mxu0 0.0
    %4321 = vmatprep.subr.mxu0 0.0
    %4322 = vmatpush1.msra.mxu0 0.0
    %4323 = vmatprep.subr.mxu0 0.0
    %4324 = vmatpush1.msra.mxu0 0.0
    %4325 = vmatprep.subr.mxu0 0.0
    %4326 = vmatpush1.msra.mxu0 0.0
    %4327 = vmatprep.subr.mxu0 0.0
    %4328 = vmatpush1.msra.mxu0 0.0
    %4329 = vmatprep.mubr.f32.mxu0 0.0
    %4330 = vmatmul.mubr.f32.gmra.mrb[0].mxu0 %v4218
    %v4331 = vpop.f32.mrb[0].mxu0
    %v4332 = vadd.f32 %v4216, %v4331
    %v4333 = vpop.f32.mrb[0].mxu0
    %4334 = vmatprep.mubr.f32.mxu0 0.0
    %4335 = vmatmul.mubr.f32.gmra.mrb[0].mxu0 %v4221
    %v4336 = vpop.f32.mrb[0].mxu0
    %v4337 = vadd.f32 %v4216, %v4336
    %v4338 = vpop.f32.mrb[0].mxu0
    %4339 = vmatprep.mubr.f32.mxu0 0.0
    %4340 = vmatmul.mubr.f32.gmra.mrb[0].mxu0 %v4224
    %v4341 = vpop.f32.mrb[0].mxu0
    %v4342 = vadd.f32 %v4216, %v4341
    %v4343 = vpop.f32.mrb[0].mxu0
    %4344 = vmatprep.mubr.f32.mxu0 0.0
    %4345 = vmatmul.mubr.f32.gmra.mrb[0].mxu0 %v4227
    %v4346 = vpop.f32.mrb[0].mxu0
    %v4347 = vadd.f32 %v4216, %v4346
    %v4348 = vpop.f32.mrb[0].mxu0
    %4349 = vmatprep.mubr.f32.mxu0 0.0
    %4350 = vmatmul.mubr.f32.gmra.mrb[0].mxu0 %v4230
    %v4351 = vpop.f32.mrb[0].mxu0
    %v4352 = vadd.f32 %v4216, %v4351
    %v4353 = vpop.f32.mrb[0].mxu0
    %4354 = vmatprep.mubr.f32.mxu0 0.0
    %4355 = vmatmul.mubr.f32.gmra.mrb[0].mxu0 %v4233
    %v4356 = vpop.f32.mrb[0].mxu0
    %v4357 = vadd.f32 %v4216, %v4356
    %v4358 = vpop.f32.mrb[0].mxu0
    %4359 = vmatprep.mubr.f32.mxu0 0.0
    %4360 = vmatmul.mubr.f32.gmra.mrb[0].mxu0 %v4236
    %v4361 = vpop.f32.mrb[0].mxu0
    %v4362 = vadd.f32 %v4216, %v4361
    %v4363 = vpop.f32.mrb[0].mxu0
    %4364 = vmatprep.mubr.f32.mxu0 0.0
    %4365 = vmatmul.mubr.f32.gmra.mrb[0].mxu0 %v4239
    %v4366 = vpop.f32.mrb[0].mxu0
    %v4367 = vadd.f32 %v4216, %v4366
    %v4368 = vpop.f32.mrb[0].mxu0
    %4369 = vmatprep.mubr.f32.mxu0 0.0
    %4370 = vmatmul.mubr.f32.gmra.mrb[0].mxu0 %v4242
    %v4371 = vpop.f32.mrb[0].mxu0
    %v4372 = vadd.f32 %v4216, %v4371
    %v4373 = vpop.f32.mrb[0].mxu0
    %4374 = vmatprep.mubr.f32.mxu0 0.0
    %4375 = vmatmul.mubr.f32.gmra.mrb[0].mxu0 %v4245
    %v4376 = vpop.f32.mrb[0].mxu0
    %v4377 = vadd.f32 %v4216, %v4376
    %v4378 = vpop.f32.mrb[0].mxu0
    %4379 = vmatprep.mubr.f32.mxu0 0.0
    %4380 = vmatmul.mubr.f32.gmra.mrb[0].mxu0 %v4248
    %v4381 = vpop.f32.mrb[0].mxu0
    %v4382 = vadd.f32 %v4216, %v4381
    %v4383 = vpop.f32.mrb[0].mxu0
    %4384 = vmatprep.mubr.f32.mxu0 0.0
    %4385 = vmatmul.mubr.f32.gmra.mrb[0].mxu0 %v4251
    %v4386 = vpop.f32.mrb[0].mxu0
    %v4387 = vadd.f32 %v4216, %v4386
    %v4388 = vpop.f32.mrb[0].mxu0
    %4389 = vmatprep.mubr.f32.mxu0 0.0
    %4390 = vmatmul.mubr.f32.gmra.mrb[0].mxu0 %v4254
    %v4391 = vpop.f32.mrb[0].mxu0
    %v4392 = vadd.f32 %v4216, %v4391
    %v4393 = vpop.f32.mrb[0].mxu0
    %4394 = vmatprep.mubr.f32.mxu0 0.0
    %4395 = vmatmul.mubr.f32.gmra.mrb[0].mxu0 %v4257
    %v4396 = vpop.f32.mrb[0].mxu0
    %v4397 = vadd.f32 %v4216, %v4396
    %v4398 = vpop.f32.mrb[0].mxu0
    %4399 = vmatprep.mubr.f32.mxu0 0.0
    %4400 = vmatmul.mubr.f32.gmra.mrb[0].mxu0 %v4260
    %v4401 = vpop.f32.mrb[0].mxu0
    %v4402 = vadd.f32 %v4216, %v4401
    %v4403 = vpop.f32.mrb[0].mxu0
    %4404 = vmatprep.mubr.f32.mxu0 0.0
    %4405 = vmatmul.mubr.f32.gmra.mrb[0].mxu0 %v4263
    %v4406 = vpop.f32.mrb[0].mxu0
    %v4407 = vadd.f32 %v4216, %v4406
    %v4408 = vpop.f32.mrb[0].mxu0
    %4409 = vdwg.mxu0
    %v4410 = vmax.f32 %v4332, 0.0
    %v4411 = vmax.f32 %v4337, 0.0
    %v4412 = vmax.f32 %v4342, 0.0
    %v4413 = vmax.f32 %v4347, 0.0
    %v4414 = vmax.f32 %v4352, 0.0
    %v4415 = vmax.f32 %v4357, 0.0
    %v4416 = vmax.f32 %v4362, 0.0
    %v4417 = vmax.f32 %v4367, 0.0
    %v4418 = vmax.f32 %v4372, 0.0
    %v4419 = vmax.f32 %v4377, 0.0
    %v4420 = vmax.f32 %v4382, 0.0
    %v4421 = vmax.f32 %v4387, 0.0
    %v4422 = vmax.f32 %v4392, 0.0
    %v4423 = vmax.f32 %v4397, 0.0
    %v4424 = vmax.f32 %v4402, 0.0
    %v4425 = vmax.f32 %v4407, 0.0
    %s4426 = scalar_lea.vmem %s3, 48
    %v4427 = vld [vmem:[%s4426] sm:$0xff]
    %v4428 = vld [vmem:[%s4426 + $0x8] sm:$0x1]
    %v4445 = vrot.slane %v4410, 2
    %v4446 = vrot.slane %v4411, 2
    %v4447 = vsel %vm667, %v4445, %v4446
    %v4448 = vrot.slane %v4412, 2
    %v4449 = vsel %vm667, %v4446, %v4448
    %v4450 = vrot.slane %v4413, 2
    %v4451 = vsel %vm667, %v4448, %v4450
    %v4452 = vrot.slane %v4414, 2
    %v4453 = vsel %vm667, %v4450, %v4452
    %v4454 = vrot.slane %v4415, 2
    %v4455 = vsel %vm667, %v4452, %v4454
    %v4456 = vrot.slane %v4416, 2
    %v4457 = vsel %vm667, %v4454, %v4456
    %v4458 = vrot.slane %v4417, 2
    %v4459 = vsel %vm667, %v4456, %v4458
    %v4460 = vrot.slane %v4418, 2
    %v4461 = vsel %vm667, %v4458, %v4460
    %v4462 = vrot.slane %v4419, 2
    %v4463 = vsel %vm667, %v4460, %v4462
    %v4464 = vrot.slane %v4420, 2
    %v4465 = vsel %vm667, %v4462, %v4464
    %v4466 = vrot.slane %v4421, 2
    %v4467 = vsel %vm667, %v4464, %v4466
    %v4468 = vrot.slane %v4422, 2
    %v4469 = vsel %vm667, %v4466, %v4468
    %v4470 = vrot.slane %v4423, 2
    %v4471 = vsel %vm667, %v4468, %v4470
    %v4472 = vrot.slane %v4424, 2
    %v4473 = vsel %vm667, %v4470, %v4472
    %v4474 = vrot.slane %v4425, 2
    %v4475 = vsel %vm667, %v4472, %v4474
    %v4493 = vsel %vm667, 0.0, %v4445
    %v4494 = vsel %vm717, %v4474, 0.0
    %v4495 = vlaneseq
    %v4496 = vshrl.u32 %v4495, 7
    %v4497 = vsub.s32 0, %v4496
    %v4498 = vrot.slane %v4427, %v4497
    %v4499 = vmul.f32 %v4493, %v4498
    %v4500 = vmul.f32 %v4447, %v4498
    %v4501 = vmul.f32 %v4449, %v4498
    %v4502 = vmul.f32 %v4451, %v4498
    %v4503 = vmul.f32 %v4453, %v4498
    %v4504 = vmul.f32 %v4455, %v4498
    %v4505 = vmul.f32 %v4457, %v4498
    %v4506 = vmul.f32 %v4459, %v4498
    %v4507 = vmul.f32 %v4461, %v4498
    %v4508 = vmul.f32 %v4463, %v4498
    %v4509 = vmul.f32 %v4465, %v4498
    %v4510 = vmul.f32 %v4467, %v4498
    %v4511 = vmul.f32 %v4469, %v4498
    %v4512 = vmul.f32 %v4471, %v4498
    %v4513 = vmul.f32 %v4473, %v4498
    %v4514 = vmul.f32 %v4475, %v4498
    %v4515 = vadd.f32 %v4499, 0.0
    %v4516 = vadd.f32 %v4500, 0.0
    %v4517 = vadd.f32 %v4501, 0.0
    %v4518 = vadd.f32 %v4502, 0.0
    %v4519 = vadd.f32 %v4503, 0.0
    %v4520 = vadd.f32 %v4504, 0.0
    %v4521 = vadd.f32 %v4505, 0.0
    %v4522 = vadd.f32 %v4506, 0.0
    %v4523 = vadd.f32 %v4507, 0.0
    %v4524 = vadd.f32 %v4508, 0.0
    %v4525 = vadd.f32 %v4509, 0.0
    %v4526 = vadd.f32 %v4510, 0.0
    %v4527 = vadd.f32 %v4511, 0.0
    %v4528 = vadd.f32 %v4512, 0.0
    %v4529 = vadd.f32 %v4513, 0.0
    %v4530 = vadd.f32 %v4514, 0.0
    %v4531 = vlaneseq
    %v4532 = vshrl.u32 %v4531, 7
    %v4533 = vsub.s32 3, %v4532
    %v4534 = vrot.slane %v4427, %v4533
    %v4535 = vmul.f32 %v4493, %v4534
    %v4536 = vmul.f32 %v4447, %v4534
    %v4537 = vmul.f32 %v4449, %v4534
    %v4538 = vmul.f32 %v4451, %v4534
    %v4539 = vmul.f32 %v4453, %v4534
    %v4540 = vmul.f32 %v4455, %v4534
    %v4541 = vmul.f32 %v4457, %v4534
    %v4542 = vmul.f32 %v4459, %v4534
    %v4543 = vmul.f32 %v4461, %v4534
    %v4544 = vmul.f32 %v4463, %v4534
    %v4545 = vmul.f32 %v4465, %v4534
    %v4546 = vmul.f32 %v4467, %v4534
    %v4547 = vmul.f32 %v4469, %v4534
    %v4548 = vmul.f32 %v4471, %v4534
    %v4549 = vmul.f32 %v4473, %v4534
    %v4550 = vmul.f32 %v4475, %v4534
    %v4551 = vmul.f32 %v4494, %v4534
    %v4569 = vrot.slane %v4535, 5
    %v4570 = vrot.slane %v4536, 5
    %v4571 = vsel %vm717, %v4569, %v4570
    %v4572 = vrot.slane %v4537, 5
    %v4573 = vsel %vm717, %v4570, %v4572
    %v4574 = vrot.slane %v4538, 5
    %v4575 = vsel %vm717, %v4572, %v4574
    %v4576 = vrot.slane %v4539, 5
    %v4577 = vsel %vm717, %v4574, %v4576
    %v4578 = vrot.slane %v4540, 5
    %v4579 = vsel %vm717, %v4576, %v4578
    %v4580 = vrot.slane %v4541, 5
    %v4581 = vsel %vm717, %v4578, %v4580
    %v4582 = vrot.slane %v4542, 5
    %v4583 = vsel %vm717, %v4580, %v4582
    %v4584 = vrot.slane %v4543, 5
    %v4585 = vsel %vm717, %v4582, %v4584
    %v4586 = vrot.slane %v4544, 5
    %v4587 = vsel %vm717, %v4584, %v4586
    %v4588 = vrot.slane %v4545, 5
    %v4589 = vsel %vm717, %v4586, %v4588
    %v4590 = vrot.slane %v4546, 5
    %v4591 = vsel %vm717, %v4588, %v4590
    %v4592 = vrot.slane %v4547, 5
    %v4593 = vsel %vm717, %v4590, %v4592
    %v4594 = vrot.slane %v4548, 5
    %v4595 = vsel %vm717, %v4592, %v4594
    %v4596 = vrot.slane %v4549, 5
    %v4597 = vsel %vm717, %v4594, %v4596
    %v4598 = vrot.slane %v4550, 5
    %v4599 = vsel %vm717, %v4596, %v4598
    %v4600 = vrot.slane %v4551, 5
    %v4601 = vsel %vm717, %v4598, %v4600
    %v4618 = vadd.f32 %v4515, %v4571
    %v4619 = vadd.f32 %v4516, %v4573
    %v4620 = vadd.f32 %v4517, %v4575
    %v4621 = vadd.f32 %v4518, %v4577
    %v4622 = vadd.f32 %v4519, %v4579
    %v4623 = vadd.f32 %v4520, %v4581
    %v4624 = vadd.f32 %v4521, %v4583
    %v4625 = vadd.f32 %v4522, %v4585
    %v4626 = vadd.f32 %v4523, %v4587
    %v4627 = vadd.f32 %v4524, %v4589
    %v4628 = vadd.f32 %v4525, %v4591
    %v4629 = vadd.f32 %v4526, %v4593
    %v4630 = vadd.f32 %v4527, %v4595
    %v4631 = vadd.f32 %v4528, %v4597
    %v4632 = vadd.f32 %v4529, %v4599
    %v4633 = vadd.f32 %v4530, %v4601
    %v4634 = vlaneseq
    %v4635 = vshrl.u32 %v4634, 7
    %v4636 = vsub.s32 6, %v4635
    %v4637 = vrot.slane %v4427, %v4636
    %v4638 = vmul.f32 %v4447, %v4637
    %v4639 = vmul.f32 %v4449, %v4637
    %v4640 = vmul.f32 %v4451, %v4637
    %v4641 = vmul.f32 %v4453, %v4637
    %v4642 = vmul.f32 %v4455, %v4637
    %v4643 = vmul.f32 %v4457, %v4637
    %v4644 = vmul.f32 %v4459, %v4637
    %v4645 = vmul.f32 %v4461, %v4637
    %v4646 = vmul.f32 %v4463, %v4637
    %v4647 = vmul.f32 %v4465, %v4637
    %v4648 = vmul.f32 %v4467, %v4637
    %v4649 = vmul.f32 %v4469, %v4637
    %v4650 = vmul.f32 %v4471, %v4637
    %v4651 = vmul.f32 %v4473, %v4637
    %v4652 = vmul.f32 %v4475, %v4637
    %v4653 = vmul.f32 %v4494, %v4637
    %v4670 = vrot.slane %v4638, 2
    %v4671 = vrot.slane %v4639, 2
    %v4672 = vsel %vm667, %v4670, %v4671
    %v4673 = vrot.slane %v4640, 2
    %v4674 = vsel %vm667, %v4671, %v4673
    %v4675 = vrot.slane %v4641, 2
    %v4676 = vsel %vm667, %v4673, %v4675
    %v4677 = vrot.slane %v4642, 2
    %v4678 = vsel %vm667, %v4675, %v4677
    %v4679 = vrot.slane %v4643, 2
    %v4680 = vsel %vm667, %v4677, %v4679
    %v4681 = vrot.slane %v4644, 2
    %v4682 = vsel %vm667, %v4679, %v4681
    %v4683 = vrot.slane %v4645, 2
    %v4684 = vsel %vm667, %v4681, %v4683
    %v4685 = vrot.slane %v4646, 2
    %v4686 = vsel %vm667, %v4683, %v4685
    %v4687 = vrot.slane %v4647, 2
    %v4688 = vsel %vm667, %v4685, %v4687
    %v4689 = vrot.slane %v4648, 2
    %v4690 = vsel %vm667, %v4687, %v4689
    %v4691 = vrot.slane %v4649, 2
    %v4692 = vsel %vm667, %v4689, %v4691
    %v4693 = vrot.slane %v4650, 2
    %v4694 = vsel %vm667, %v4691, %v4693
    %v4695 = vrot.slane %v4651, 2
    %v4696 = vsel %vm667, %v4693, %v4695
    %v4697 = vrot.slane %v4652, 2
    %v4698 = vsel %vm667, %v4695, %v4697
    %v4699 = vrot.slane %v4653, 2
    %v4700 = vsel %vm667, %v4697, %v4699
    %v4717 = vadd.f32 %v4618, %v4672
    %v4718 = vadd.f32 %v4619, %v4674
    %v4719 = vadd.f32 %v4620, %v4676
    %v4720 = vadd.f32 %v4621, %v4678
    %v4721 = vadd.f32 %v4622, %v4680
    %v4722 = vadd.f32 %v4623, %v4682
    %v4723 = vadd.f32 %v4624, %v4684
    %v4724 = vadd.f32 %v4625, %v4686
    %v4725 = vadd.f32 %v4626, %v4688
    %v4726 = vadd.f32 %v4627, %v4690
    %v4727 = vadd.f32 %v4628, %v4692
    %v4728 = vadd.f32 %v4629, %v4694
    %v4729 = vadd.f32 %v4630, %v4696
    %v4730 = vadd.f32 %v4631, %v4698
    %v4731 = vadd.f32 %v4632, %v4700
    %v4732 = vadd.f32 %v4633, %v4699
    %v4733 = vlaneseq
    %v4734 = vshrl.u32 %v4733, 7
    %v4735 = vsub.s32 1, %v4734
    %v4736 = vrot.slane %v4427, %v4735
    %v4737 = vmul.f32 %v4493, %v4736
    %v4738 = vmul.f32 %v4447, %v4736
    %v4739 = vmul.f32 %v4449, %v4736
    %v4740 = vmul.f32 %v4451, %v4736
    %v4741 = vmul.f32 %v4453, %v4736
    %v4742 = vmul.f32 %v4455, %v4736
    %v4743 = vmul.f32 %v4457, %v4736
    %v4744 = vmul.f32 %v4459, %v4736
    %v4745 = vmul.f32 %v4461, %v4736
    %v4746 = vmul.f32 %v4463, %v4736
    %v4747 = vmul.f32 %v4465, %v4736
    %v4748 = vmul.f32 %v4467, %v4736
    %v4749 = vmul.f32 %v4469, %v4736
    %v4750 = vmul.f32 %v4471, %v4736
    %v4751 = vmul.f32 %v4473, %v4736
    %v4752 = vmul.f32 %v4475, %v4736
    %v4753 = vadd.f32 %v4737, 0.0
    %v4754 = vadd.f32 %v4738, 0.0
    %v4755 = vadd.f32 %v4739, 0.0
    %v4756 = vadd.f32 %v4740, 0.0
    %v4757 = vadd.f32 %v4741, 0.0
    %v4758 = vadd.f32 %v4742, 0.0
    %v4759 = vadd.f32 %v4743, 0.0
    %v4760 = vadd.f32 %v4744, 0.0
    %v4761 = vadd.f32 %v4745, 0.0
    %v4762 = vadd.f32 %v4746, 0.0
    %v4763 = vadd.f32 %v4747, 0.0
    %v4764 = vadd.f32 %v4748, 0.0
    %v4765 = vadd.f32 %v4749, 0.0
    %v4766 = vadd.f32 %v4750, 0.0
    %v4767 = vadd.f32 %v4751, 0.0
    %v4768 = vadd.f32 %v4752, 0.0
    %v4769 = vlaneseq
    %v4770 = vshrl.u32 %v4769, 7
    %v4771 = vsub.s32 4, %v4770
    %v4772 = vrot.slane %v4427, %v4771
    %v4773 = vmul.f32 %v4493, %v4772
    %v4774 = vmul.f32 %v4447, %v4772
    %v4775 = vmul.f32 %v4449, %v4772
    %v4776 = vmul.f32 %v4451, %v4772
    %v4777 = vmul.f32 %v4453, %v4772
    %v4778 = vmul.f32 %v4455, %v4772
    %v4779 = vmul.f32 %v4457, %v4772
    %v4780 = vmul.f32 %v4459, %v4772
    %v4781 = vmul.f32 %v4461, %v4772
    %v4782 = vmul.f32 %v4463, %v4772
    %v4783 = vmul.f32 %v4465, %v4772
    %v4784 = vmul.f32 %v4467, %v4772
    %v4785 = vmul.f32 %v4469, %v4772
    %v4786 = vmul.f32 %v4471, %v4772
    %v4787 = vmul.f32 %v4473, %v4772
    %v4788 = vmul.f32 %v4475, %v4772
    %v4789 = vmul.f32 %v4494, %v4772
    %v4807 = vrot.slane %v4773, 5
    %v4808 = vrot.slane %v4774, 5
    %v4809 = vsel %vm717, %v4807, %v4808
    %v4810 = vrot.slane %v4775, 5
    %v4811 = vsel %vm717, %v4808, %v4810
    %v4812 = vrot.slane %v4776, 5
    %v4813 = vsel %vm717, %v4810, %v4812
    %v4814 = vrot.slane %v4777, 5
    %v4815 = vsel %vm717, %v4812, %v4814
    %v4816 = vrot.slane %v4778, 5
    %v4817 = vsel %vm717, %v4814, %v4816
    %v4818 = vrot.slane %v4779, 5
    %v4819 = vsel %vm717, %v4816, %v4818
    %v4820 = vrot.slane %v4780, 5
    %v4821 = vsel %vm717, %v4818, %v4820
    %v4822 = vrot.slane %v4781, 5
    %v4823 = vsel %vm717, %v4820, %v4822
    %v4824 = vrot.slane %v4782, 5
    %v4825 = vsel %vm717, %v4822, %v4824
    %v4826 = vrot.slane %v4783, 5
    %v4827 = vsel %vm717, %v4824, %v4826
    %v4828 = vrot.slane %v4784, 5
    %v4829 = vsel %vm717, %v4826, %v4828
    %v4830 = vrot.slane %v4785, 5
    %v4831 = vsel %vm717, %v4828, %v4830
    %v4832 = vrot.slane %v4786, 5
    %v4833 = vsel %vm717, %v4830, %v4832
    %v4834 = vrot.slane %v4787, 5
    %v4835 = vsel %vm717, %v4832, %v4834
    %v4836 = vrot.slane %v4788, 5
    %v4837 = vsel %vm717, %v4834, %v4836
    %v4838 = vrot.slane %v4789, 5
    %v4839 = vsel %vm717, %v4836, %v4838
    %v4856 = vadd.f32 %v4753, %v4809
    %v4857 = vadd.f32 %v4754, %v4811
    %v4858 = vadd.f32 %v4755, %v4813
    %v4859 = vadd.f32 %v4756, %v4815
    %v4860 = vadd.f32 %v4757, %v4817
    %v4861 = vadd.f32 %v4758, %v4819
    %v4862 = vadd.f32 %v4759, %v4821
    %v4863 = vadd.f32 %v4760, %v4823
    %v4864 = vadd.f32 %v4761, %v4825
    %v4865 = vadd.f32 %v4762, %v4827
    %v4866 = vadd.f32 %v4763, %v4829
    %v4867 = vadd.f32 %v4764, %v4831
    %v4868 = vadd.f32 %v4765, %v4833
    %v4869 = vadd.f32 %v4766, %v4835
    %v4870 = vadd.f32 %v4767, %v4837
    %v4871 = vadd.f32 %v4768, %v4839
    %v4872 = vlaneseq
    %v4873 = vshrl.u32 %v4872, 7
    %v4874 = vsub.s32 7, %v4873
    %v4875 = vrot.slane %v4427, %v4874
    %v4876 = vmul.f32 %v4447, %v4875
    %v4877 = vmul.f32 %v4449, %v4875
    %v4878 = vmul.f32 %v4451, %v4875
    %v4879 = vmul.f32 %v4453, %v4875
    %v4880 = vmul.f32 %v4455, %v4875
    %v4881 = vmul.f32 %v4457, %v4875
    %v4882 = vmul.f32 %v4459, %v4875
    %v4883 = vmul.f32 %v4461, %v4875
    %v4884 = vmul.f32 %v4463, %v4875
    %v4885 = vmul.f32 %v4465, %v4875
    %v4886 = vmul.f32 %v4467, %v4875
    %v4887 = vmul.f32 %v4469, %v4875
    %v4888 = vmul.f32 %v4471, %v4875
    %v4889 = vmul.f32 %v4473, %v4875
    %v4890 = vmul.f32 %v4475, %v4875
    %v4891 = vmul.f32 %v4494, %v4875
    %v4908 = vrot.slane %v4876, 2
    %v4909 = vrot.slane %v4877, 2
    %v4910 = vsel %vm667, %v4908, %v4909
    %v4911 = vrot.slane %v4878, 2
    %v4912 = vsel %vm667, %v4909, %v4911
    %v4913 = vrot.slane %v4879, 2
    %v4914 = vsel %vm667, %v4911, %v4913
    %v4915 = vrot.slane %v4880, 2
    %v4916 = vsel %vm667, %v4913, %v4915
    %v4917 = vrot.slane %v4881, 2
    %v4918 = vsel %vm667, %v4915, %v4917
    %v4919 = vrot.slane %v4882, 2
    %v4920 = vsel %vm667, %v4917, %v4919
    %v4921 = vrot.slane %v4883, 2
    %v4922 = vsel %vm667, %v4919, %v4921
    %v4923 = vrot.slane %v4884, 2
    %v4924 = vsel %vm667, %v4921, %v4923
    %v4925 = vrot.slane %v4885, 2
    %v4926 = vsel %vm667, %v4923, %v4925
    %v4927 = vrot.slane %v4886, 2
    %v4928 = vsel %vm667, %v4925, %v4927
    %v4929 = vrot.slane %v4887, 2
    %v4930 = vsel %vm667, %v4927, %v4929
    %v4931 = vrot.slane %v4888, 2
    %v4932 = vsel %vm667, %v4929, %v4931
    %v4933 = vrot.slane %v4889, 2
    %v4934 = vsel %vm667, %v4931, %v4933
    %v4935 = vrot.slane %v4890, 2
    %v4936 = vsel %vm667, %v4933, %v4935
    %v4937 = vrot.slane %v4891, 2
    %v4938 = vsel %vm667, %v4935, %v4937
    %v4955 = vadd.f32 %v4856, %v4910
    %v4956 = vadd.f32 %v4857, %v4912
    %v4957 = vadd.f32 %v4858, %v4914
    %v4958 = vadd.f32 %v4859, %v4916
    %v4959 = vadd.f32 %v4860, %v4918
    %v4960 = vadd.f32 %v4861, %v4920
    %v4961 = vadd.f32 %v4862, %v4922
    %v4962 = vadd.f32 %v4863, %v4924
    %v4963 = vadd.f32 %v4864, %v4926
    %v4964 = vadd.f32 %v4865, %v4928
    %v4965 = vadd.f32 %v4866, %v4930
    %v4966 = vadd.f32 %v4867, %v4932
    %v4967 = vadd.f32 %v4868, %v4934
    %v4968 = vadd.f32 %v4869, %v4936
    %v4969 = vadd.f32 %v4870, %v4938
    %v4970 = vadd.f32 %v4871, %v4937
    %v4971 = vlaneseq
    %v4972 = vshrl.u32 %v4971, 7
    %v4973 = vsub.s32 2, %v4972
    %v4974 = vrot.slane %v4427, %v4973
    %v4975 = vmul.f32 %v4493, %v4974
    %v4976 = vmul.f32 %v4447, %v4974
    %v4977 = vmul.f32 %v4449, %v4974
    %v4978 = vmul.f32 %v4451, %v4974
    %v4979 = vmul.f32 %v4453, %v4974
    %v4980 = vmul.f32 %v4455, %v4974
    %v4981 = vmul.f32 %v4457, %v4974
    %v4982 = vmul.f32 %v4459, %v4974
    %v4983 = vmul.f32 %v4461, %v4974
    %v4984 = vmul.f32 %v4463, %v4974
    %v4985 = vmul.f32 %v4465, %v4974
    %v4986 = vmul.f32 %v4467, %v4974
    %v4987 = vmul.f32 %v4469, %v4974
    %v4988 = vmul.f32 %v4471, %v4974
    %v4989 = vmul.f32 %v4473, %v4974
    %v4990 = vmul.f32 %v4475, %v4974
    %v4991 = vadd.f32 %v4975, 0.0
    %v4992 = vadd.f32 %v4976, 0.0
    %v4993 = vadd.f32 %v4977, 0.0
    %v4994 = vadd.f32 %v4978, 0.0
    %v4995 = vadd.f32 %v4979, 0.0
    %v4996 = vadd.f32 %v4980, 0.0
    %v4997 = vadd.f32 %v4981, 0.0
    %v4998 = vadd.f32 %v4982, 0.0
    %v4999 = vadd.f32 %v4983, 0.0
    %v5000 = vadd.f32 %v4984, 0.0
    %v5001 = vadd.f32 %v4985, 0.0
    %v5002 = vadd.f32 %v4986, 0.0
    %v5003 = vadd.f32 %v4987, 0.0
    %v5004 = vadd.f32 %v4988, 0.0
    %v5005 = vadd.f32 %v4989, 0.0
    %v5006 = vadd.f32 %v4990, 0.0
    %v5007 = vlaneseq
    %v5008 = vshrl.u32 %v5007, 7
    %v5009 = vsub.s32 5, %v5008
    %v5010 = vrot.slane %v4427, %v5009
    %v5011 = vmul.f32 %v4493, %v5010
    %v5012 = vmul.f32 %v4447, %v5010
    %v5013 = vmul.f32 %v4449, %v5010
    %v5014 = vmul.f32 %v4451, %v5010
    %v5015 = vmul.f32 %v4453, %v5010
    %v5016 = vmul.f32 %v4455, %v5010
    %v5017 = vmul.f32 %v4457, %v5010
    %v5018 = vmul.f32 %v4459, %v5010
    %v5019 = vmul.f32 %v4461, %v5010
    %v5020 = vmul.f32 %v4463, %v5010
    %v5021 = vmul.f32 %v4465, %v5010
    %v5022 = vmul.f32 %v4467, %v5010
    %v5023 = vmul.f32 %v4469, %v5010
    %v5024 = vmul.f32 %v4471, %v5010
    %v5025 = vmul.f32 %v4473, %v5010
    %v5026 = vmul.f32 %v4475, %v5010
    %v5027 = vmul.f32 %v4494, %v5010
    %v5045 = vrot.slane %v5011, 5
    %v5046 = vrot.slane %v5012, 5
    %v5047 = vsel %vm717, %v5045, %v5046
    %v5048 = vrot.slane %v5013, 5
    %v5049 = vsel %vm717, %v5046, %v5048
    %v5050 = vrot.slane %v5014, 5
    %v5051 = vsel %vm717, %v5048, %v5050
    %v5052 = vrot.slane %v5015, 5
    %v5053 = vsel %vm717, %v5050, %v5052
    %v5054 = vrot.slane %v5016, 5
    %v5055 = vsel %vm717, %v5052, %v5054
    %v5056 = vrot.slane %v5017, 5
    %v5057 = vsel %vm717, %v5054, %v5056
    %v5058 = vrot.slane %v5018, 5
    %v5059 = vsel %vm717, %v5056, %v5058
    %v5060 = vrot.slane %v5019, 5
    %v5061 = vsel %vm717, %v5058, %v5060
    %v5062 = vrot.slane %v5020, 5
    %v5063 = vsel %vm717, %v5060, %v5062
    %v5064 = vrot.slane %v5021, 5
    %v5065 = vsel %vm717, %v5062, %v5064
    %v5066 = vrot.slane %v5022, 5
    %v5067 = vsel %vm717, %v5064, %v5066
    %v5068 = vrot.slane %v5023, 5
    %v5069 = vsel %vm717, %v5066, %v5068
    %v5070 = vrot.slane %v5024, 5
    %v5071 = vsel %vm717, %v5068, %v5070
    %v5072 = vrot.slane %v5025, 5
    %v5073 = vsel %vm717, %v5070, %v5072
    %v5074 = vrot.slane %v5026, 5
    %v5075 = vsel %vm717, %v5072, %v5074
    %v5076 = vrot.slane %v5027, 5
    %v5077 = vsel %vm717, %v5074, %v5076
    %v5094 = vadd.f32 %v4991, %v5047
    %v5095 = vadd.f32 %v4992, %v5049
    %v5096 = vadd.f32 %v4993, %v5051
    %v5097 = vadd.f32 %v4994, %v5053
    %v5098 = vadd.f32 %v4995, %v5055
    %v5099 = vadd.f32 %v4996, %v5057
    %v5100 = vadd.f32 %v4997, %v5059
    %v5101 = vadd.f32 %v4998, %v5061
    %v5102 = vadd.f32 %v4999, %v5063
    %v5103 = vadd.f32 %v5000, %v5065
    %v5104 = vadd.f32 %v5001, %v5067
    %v5105 = vadd.f32 %v5002, %v5069
    %v5106 = vadd.f32 %v5003, %v5071
    %v5107 = vadd.f32 %v5004, %v5073
    %v5108 = vadd.f32 %v5005, %v5075
    %v5109 = vadd.f32 %v5006, %v5077
    %v5110 = vlaneseq
    %v5111 = vshrl.u32 %v5110, 7
    %v5112 = vsub.s32 0, %v5111
    %v5113 = vrot.slane %v4428, %v5112
    %v5114 = vmul.f32 %v4447, %v5113
    %v5115 = vmul.f32 %v4449, %v5113
    %v5116 = vmul.f32 %v4451, %v5113
    %v5117 = vmul.f32 %v4453, %v5113
    %v5118 = vmul.f32 %v4455, %v5113
    %v5119 = vmul.f32 %v4457, %v5113
    %v5120 = vmul.f32 %v4459, %v5113
    %v5121 = vmul.f32 %v4461, %v5113
    %v5122 = vmul.f32 %v4463, %v5113
    %v5123 = vmul.f32 %v4465, %v5113
    %v5124 = vmul.f32 %v4467, %v5113
    %v5125 = vmul.f32 %v4469, %v5113
    %v5126 = vmul.f32 %v4471, %v5113
    %v5127 = vmul.f32 %v4473, %v5113
    %v5128 = vmul.f32 %v4475, %v5113
    %v5129 = vmul.f32 %v4494, %v5113
    %v5130 = vmul.f32 %v5113, 0.0
    %v5148 = vrot.slane %v5114, 2
    %v5149 = vrot.slane %v5115, 2
    %v5150 = vsel %vm667, %v5148, %v5149
    %v5151 = vrot.slane %v5116, 2
    %v5152 = vsel %vm667, %v5149, %v5151
    %v5153 = vrot.slane %v5117, 2
    %v5154 = vsel %vm667, %v5151, %v5153
    %v5155 = vrot.slane %v5118, 2
    %v5156 = vsel %vm667, %v5153, %v5155
    %v5157 = vrot.slane %v5119, 2
    %v5158 = vsel %vm667, %v5155, %v5157
    %v5159 = vrot.slane %v5120, 2
    %v5160 = vsel %vm667, %v5157, %v5159
    %v5161 = vrot.slane %v5121, 2
    %v5162 = vsel %vm667, %v5159, %v5161
    %v5163 = vrot.slane %v5122, 2
    %v5164 = vsel %vm667, %v5161, %v5163
    %v5165 = vrot.slane %v5123, 2
    %v5166 = vsel %vm667, %v5163, %v5165
    %v5167 = vrot.slane %v5124, 2
    %v5168 = vsel %vm667, %v5165, %v5167
    %v5169 = vrot.slane %v5125, 2
    %v5170 = vsel %vm667, %v5167, %v5169
    %v5171 = vrot.slane %v5126, 2
    %v5172 = vsel %vm667, %v5169, %v5171
    %v5173 = vrot.slane %v5127, 2
    %v5174 = vsel %vm667, %v5171, %v5173
    %v5175 = vrot.slane %v5128, 2
    %v5176 = vsel %vm667, %v5173, %v5175
    %v5177 = vrot.slane %v5129, 2
    %v5178 = vsel %vm667, %v5175, %v5177
    %v5179 = vrot.slane %v5130, 2
    %v5180 = vsel %vm667, %v5177, %v5179
    %v5197 = vadd.f32 %v5094, %v5150
    %v5198 = vadd.f32 %v5095, %v5152
    %v5199 = vadd.f32 %v5096, %v5154
    %v5200 = vadd.f32 %v5097, %v5156
    %v5201 = vadd.f32 %v5098, %v5158
    %v5202 = vadd.f32 %v5099, %v5160
    %v5203 = vadd.f32 %v5100, %v5162
    %v5204 = vadd.f32 %v5101, %v5164
    %v5205 = vadd.f32 %v5102, %v5166
    %v5206 = vadd.f32 %v5103, %v5168
    %v5207 = vadd.f32 %v5104, %v5170
    %v5208 = vadd.f32 %v5105, %v5172
    %v5209 = vadd.f32 %v5106, %v5174
    %v5210 = vadd.f32 %v5107, %v5176
    %v5211 = vadd.f32 %v5108, %v5178
    %v5212 = vadd.f32 %v5109, %v5180
    %v5213 = vmul.f32 %v4717, %v353
    %v5214 = vmul.f32 %v4718, %v354
    %v5215 = vmul.f32 %v4719, %v355
    %v5216 = vmul.f32 %v4720, %v356
    %v5217 = vmul.f32 %v4721, %v357
    %v5218 = vmul.f32 %v4722, %v358
    %v5219 = vmul.f32 %v4723, %v359
    %v5220 = vmul.f32 %v4724, %v360
    %v5221 = vmul.f32 %v4725, %v361
    %v5222 = vmul.f32 %v4726, %v362
    %v5223 = vmul.f32 %v4727, %v363
    %v5224 = vmul.f32 %v4728, %v364
    %v5225 = vmul.f32 %v4729, %v365
    %v5226 = vmul.f32 %v4730, %v366
    %v5227 = vmul.f32 %v4731, %v367
    %v5228 = vmul.f32 %v4732, %v368
    %v5245 = vrot.slane %v4955, 1
    %v5246 = vrot.slane %v4956, 1
    %v5247 = vsel %vm1469, %v5245, %v5246
    %v5248 = vrot.slane %v4957, 1
    %v5249 = vsel %vm1469, %v5246, %v5248
    %v5250 = vrot.slane %v4958, 1
    %v5251 = vsel %vm1469, %v5248, %v5250
    %v5252 = vrot.slane %v4959, 1
    %v5253 = vsel %vm1469, %v5250, %v5252
    %v5254 = vrot.slane %v4960, 1
    %v5255 = vsel %vm1469, %v5252, %v5254
    %v5256 = vrot.slane %v4961, 1
    %v5257 = vsel %vm1469, %v5254, %v5256
    %v5258 = vrot.slane %v4962, 1
    %v5259 = vsel %vm1469, %v5256, %v5258
    %v5260 = vrot.slane %v4963, 1
    %v5261 = vsel %vm1469, %v5258, %v5260
    %v5262 = vrot.slane %v4964, 1
    %v5263 = vsel %vm1469, %v5260, %v5262
    %v5264 = vrot.slane %v4965, 1
    %v5265 = vsel %vm1469, %v5262, %v5264
    %v5266 = vrot.slane %v4966, 1
    %v5267 = vsel %vm1469, %v5264, %v5266
    %v5268 = vrot.slane %v4967, 1
    %v5269 = vsel %vm1469, %v5266, %v5268
    %v5270 = vrot.slane %v4968, 1
    %v5271 = vsel %vm1469, %v5268, %v5270
    %v5272 = vrot.slane %v4969, 1
    %v5273 = vsel %vm1469, %v5270, %v5272
    %v5274 = vrot.slane %v4970, 1
    %v5275 = vsel %vm1469, %v5272, %v5274
    %v5292 = vadd.f32 %v5213, %v5247
    %v5293 = vadd.f32 %v5214, %v5249
    %v5294 = vadd.f32 %v5215, %v5251
    %v5295 = vadd.f32 %v5216, %v5253
    %v5296 = vadd.f32 %v5217, %v5255
    %v5297 = vadd.f32 %v5218, %v5257
    %v5298 = vadd.f32 %v5219, %v5259
    %v5299 = vadd.f32 %v5220, %v5261
    %v5300 = vadd.f32 %v5221, %v5263
    %v5301 = vadd.f32 %v5222, %v5265
    %v5302 = vadd.f32 %v5223, %v5267
    %v5303 = vadd.f32 %v5224, %v5269
    %v5304 = vadd.f32 %v5225, %v5271
    %v5305 = vadd.f32 %v5226, %v5273
    %v5306 = vadd.f32 %v5227, %v5275
    %v5307 = vadd.f32 %v5228, %v5274
    %v5308 = vmul.f32 %v5197, %v1550
    %v5309 = vmul.f32 %v5198, %v1552
    %v5310 = vmul.f32 %v5199, %v1554
    %v5311 = vmul.f32 %v5200, %v1556
    %v5312 = vmul.f32 %v5201, %v1558
    %v5313 = vmul.f32 %v5202, %v1560
    %v5314 = vmul.f32 %v5203, %v1562
    %v5315 = vmul.f32 %v5204, %v1564
    %v5316 = vmul.f32 %v5205, %v1566
    %v5317 = vmul.f32 %v5206, %v1568
    %v5318 = vmul.f32 %v5207, %v1570
    %v5319 = vmul.f32 %v5208, %v1572
    %v5320 = vmul.f32 %v5209, %v1574
    %v5321 = vmul.f32 %v5210, %v1576
    %v5322 = vmul.f32 %v5211, %v1578
    %v5323 = vmul.f32 %v5212, %v1580
    %v5340 = vrot.slane %v5308, 2
    %v5341 = vrot.slane %v5309, 2
    %v5342 = vsel %vm667, %v5340, %v5341
    %v5343 = vrot.slane %v5310, 2
    %v5344 = vsel %vm667, %v5341, %v5343
    %v5345 = vrot.slane %v5311, 2
    %v5346 = vsel %vm667, %v5343, %v5345
    %v5347 = vrot.slane %v5312, 2
    %v5348 = vsel %vm667, %v5345, %v5347
    %v5349 = vrot.slane %v5313, 2
    %v5350 = vsel %vm667, %v5347, %v5349
    %v5351 = vrot.slane %v5314, 2
    %v5352 = vsel %vm667, %v5349, %v5351
    %v5353 = vrot.slane %v5315, 2
    %v5354 = vsel %vm667, %v5351, %v5353
    %v5355 = vrot.slane %v5316, 2
    %v5356 = vsel %vm667, %v5353, %v5355
    %v5357 = vrot.slane %v5317, 2
    %v5358 = vsel %vm667, %v5355, %v5357
    %v5359 = vrot.slane %v5318, 2
    %v5360 = vsel %vm667, %v5357, %v5359
    %v5361 = vrot.slane %v5319, 2
    %v5362 = vsel %vm667, %v5359, %v5361
    %v5363 = vrot.slane %v5320, 2
    %v5364 = vsel %vm667, %v5361, %v5363
    %v5365 = vrot.slane %v5321, 2
    %v5366 = vsel %vm667, %v5363, %v5365
    %v5367 = vrot.slane %v5322, 2
    %v5368 = vsel %vm667, %v5365, %v5367
    %v5369 = vrot.slane %v5323, 2
    %v5370 = vsel %vm667, %v5367, %v5369
    %v5387 = vadd.f32 %v5292, %v5342
    %v5388 = vadd.f32 %v5293, %v5344
    %v5389 = vadd.f32 %v5294, %v5346
    %v5390 = vadd.f32 %v5295, %v5348
    %v5391 = vadd.f32 %v5296, %v5350
    %v5392 = vadd.f32 %v5297, %v5352
    %v5393 = vadd.f32 %v5298, %v5354
    %v5394 = vadd.f32 %v5299, %v5356
    %v5395 = vadd.f32 %v5300, %v5358
    %v5396 = vadd.f32 %v5301, %v5360
    %v5397 = vadd.f32 %v5302, %v5362
    %v5398 = vadd.f32 %v5303, %v5364
    %v5399 = vadd.f32 %v5304, %v5366
    %v5400 = vadd.f32 %v5305, %v5368
    %v5401 = vadd.f32 %v5306, %v5370
    %v5402 = vadd.f32 %v5307, %v5369
    %v5403 = vld [vmem:[%s4 + $0x3] sm:$0x1]
    %v5404 = vlaneseq
    %v5405 = vshrl.u32 %v5404, 7
    %v5406 = vsub.s32 0, %v5405
    %v5407 = vrot.slane %v5403, %v5406
    %v5408 = vadd.f32 %v5387, %v5407
    %v5409 = vadd.f32 %v5388, %v5407
    %v5410 = vadd.f32 %v5389, %v5407
    %v5411 = vadd.f32 %v5390, %v5407
    %v5412 = vadd.f32 %v5391, %v5407
    %v5413 = vadd.f32 %v5392, %v5407
    %v5414 = vadd.f32 %v5393, %v5407
    %v5415 = vadd.f32 %v5394, %v5407
    %v5416 = vadd.f32 %v5395, %v5407
    %v5417 = vadd.f32 %v5396, %v5407
    %v5418 = vadd.f32 %v5397, %v5407
    %v5419 = vadd.f32 %v5398, %v5407
    %v5420 = vadd.f32 %v5399, %v5407
    %v5421 = vadd.f32 %v5400, %v5407
    %v5422 = vadd.f32 %v5401, %v5407
    %v5423 = vadd.f32 %v5402, %v5407
    %v5424 = vmax.f32 %v5408, 0.0
    %v5425 = vmax.f32 %v5409, 0.0
    %v5426 = vmax.f32 %v5410, 0.0
    %v5427 = vmax.f32 %v5411, 0.0
    %v5428 = vmax.f32 %v5412, 0.0
    %v5429 = vmax.f32 %v5413, 0.0
    %v5430 = vmax.f32 %v5414, 0.0
    %v5431 = vmax.f32 %v5415, 0.0
    %v5432 = vmax.f32 %v5416, 0.0
    %v5433 = vmax.f32 %v5417, 0.0
    %v5434 = vmax.f32 %v5418, 0.0
    %v5435 = vmax.f32 %v5419, 0.0
    %v5436 = vmax.f32 %v5420, 0.0
    %v5437 = vmax.f32 %v5421, 0.0
    %v5438 = vmax.f32 %v5422, 0.0
    %v5439 = vmax.f32 %v5423, 0.0
    %s5440 = scalar_lea.vmem %s5, 192
    %v5441 = vld [vmem:[%s5440] sm:$0xff]
    %v5442 = vld [vmem:[%s5440 + $0x8] sm:$0xff]
    %v5443 = vld [vmem:[%s5440 + $0x10] sm:$0xff]
    %v5444 = vld [vmem:[%s5440 + $0x18] sm:$0xff]
    %v5445 = vld [vmem:[%s5440 + $0x20] sm:$0xff]
    %v5446 = vld [vmem:[%s5440 + $0x28] sm:$0xff]
    %v5447 = vld [vmem:[%s5440 + $0x30] sm:$0xff]
    %v5448 = vld [vmem:[%s5440 + $0x38] sm:$0xff]
    %v5449 = vld [vmem:[%s6 + $0x3] sm:$0x1]
    %v5450 = vlaneseq
    %v5451 = vshrl.u32 %v5450, 7
    %v5452 = vsub.s32 0, %v5451
    %v5453 = vrot.slane %v5449, %v5452
    %v5455 = vsel %vm1742, %v5424, 0
    %v5458 = vsel %vm1742, %v5425, 0
    %v5461 = vsel %vm1742, %v5426, 0
    %v5464 = vsel %vm1742, %v5427, 0
    %v5467 = vsel %vm1742, %v5428, 0
    %v5470 = vsel %vm1742, %v5429, 0
    %v5473 = vsel %vm1742, %v5430, 0
    %v5476 = vsel %vm1742, %v5431, 0
    %v5479 = vsel %vm1742, %v5432, 0
    %v5482 = vsel %vm1742, %v5433, 0
    %v5485 = vsel %vm1742, %v5434, 0
    %v5488 = vsel %vm1742, %v5435, 0
    %v5491 = vsel %vm1742, %v5436, 0
    %v5494 = vsel %vm1742, %v5437, 0
    %v5497 = vsel %vm1742, %v5438, 0
    %v5500 = vsel %vm1742, %v5439, 0
    %5502 = vmatprep.subr.mxu0 0.0
    %5503 = vmatpush1.msra.mxu0 %v5441
    %5504 = vmatprep.subr.mxu0 0.0
    %5505 = vmatpush1.msra.mxu0 %v5442
    %5506 = vmatprep.subr.mxu0 0.0
    %5507 = vmatpush1.msra.mxu0 %v5443
    %5508 = vmatprep.subr.mxu0 0.0
    %5509 = vmatpush1.msra.mxu0 %v5444
    %5510 = vmatprep.subr.mxu0 0.0
    %5511 = vmatpush1.msra.mxu0 %v5445
    %5512 = vmatprep.subr.mxu0 0.0
    %5513 = vmatpush1.msra.mxu0 %v5446
    %5514 = vmatprep.subr.mxu0 0.0
    %5515 = vmatpush1.msra.mxu0 %v5447
    %5516 = vmatprep.subr.mxu0 0.0
    %5517 = vmatpush1.msra.mxu0 %v5448
    %5518 = vmatprep.subr.mxu0 0.0
    %5519 = vmatpush1.msra.mxu0 0.0
    %5520 = vmatprep.subr.mxu0 0.0
    %5521 = vmatpush1.msra.mxu0 0.0
    %5522 = vmatprep.subr.mxu0 0.0
    %5523 = vmatpush1.msra.mxu0 0.0
    %5524 = vmatprep.subr.mxu0 0.0
    %5525 = vmatpush1.msra.mxu0 0.0
    %5526 = vmatprep.subr.mxu0 0.0
    %5527 = vmatpush1.msra.mxu0 0.0
    %5528 = vmatprep.subr.mxu0 0.0
    %5529 = vmatpush1.msra.mxu0 0.0
    %5530 = vmatprep.subr.mxu0 0.0
    %5531 = vmatpush1.msra.mxu0 0.0
    %5532 = vmatprep.subr.mxu0 0.0
    %5533 = vmatpush1.msra.mxu0 0.0
    %5534 = vmatprep.subr.mxu0 0.0
    %5535 = vmatpush1.msra.mxu0 0.0
    %5536 = vmatprep.subr.mxu0 0.0
    %5537 = vmatpush1.msra.mxu0 0.0
    %5538 = vmatprep.subr.mxu0 0.0
    %5539 = vmatpush1.msra.mxu0 0.0
    %5540 = vmatprep.subr.mxu0 0.0
    %5541 = vmatpush1.msra.mxu0 0.0
    %5542 = vmatprep.subr.mxu0 0.0
    %5543 = vmatpush1.msra.mxu0 0.0
    %5544 = vmatprep.subr.mxu0 0.0
    %5545 = vmatpush1.msra.mxu0 0.0
    %5546 = vmatprep.subr.mxu0 0.0
    %5547 = vmatpush1.msra.mxu0 0.0
    %5548 = vmatprep.subr.mxu0 0.0
    %5549 = vmatpush1.msra.mxu0 0.0
    %5550 = vmatprep.subr.mxu0 0.0
    %5551 = vmatpush1.msra.mxu0 0.0
    %5552 = vmatprep.subr.mxu0 0.0
    %5553 = vmatpush1.msra.mxu0 0.0
    %5554 = vmatprep.subr.mxu0 0.0
    %5555 = vmatpush1.msra.mxu0 0.0
    %5556 = vmatprep.subr.mxu0 0.0
    %5557 = vmatpush1.msra.mxu0 0.0
    %5558 = vmatprep.subr.mxu0 0.0
    %5559 = vmatpush1.msra.mxu0 0.0
    %5560 = vmatprep.subr.mxu0 0.0
    %5561 = vmatpush1.msra.mxu0 0.0
    %5562 = vmatprep.subr.mxu0 0.0
    %5563 = vmatpush1.msra.mxu0 0.0
    %5564 = vmatprep.subr.mxu0 0.0
    %5565 = vmatpush1.msra.mxu0 0.0
    %5566 = vmatprep.mubr.f32.mxu0 0.0
    %5567 = vmatmul.mubr.f32.gmra.mrb[0].mxu0 %v5455
    %v5568 = vpop.f32.mrb[0].mxu0
    %v5569 = vadd.f32 %v5453, %v5568
    %v5570 = vpop.f32.mrb[0].mxu0
    %5571 = vmatprep.mubr.f32.mxu0 0.0
    %5572 = vmatmul.mubr.f32.gmra.mrb[0].mxu0 %v5458
    %v5573 = vpop.f32.mrb[0].mxu0
    %v5574 = vadd.f32 %v5453, %v5573
    %v5575 = vpop.f32.mrb[0].mxu0
    %5576 = vmatprep.mubr.f32.mxu0 0.0
    %5577 = vmatmul.mubr.f32.gmra.mrb[0].mxu0 %v5461
    %v5578 = vpop.f32.mrb[0].mxu0
    %v5579 = vadd.f32 %v5453, %v5578
    %v5580 = vpop.f32.mrb[0].mxu0
    %5581 = vmatprep.mubr.f32.mxu0 0.0
    %5582 = vmatmul.mubr.f32.gmra.mrb[0].mxu0 %v5464
    %v5583 = vpop.f32.mrb[0].mxu0
    %v5584 = vadd.f32 %v5453, %v5583
    %v5585 = vpop.f32.mrb[0].mxu0
    %5586 = vmatprep.mubr.f32.mxu0 0.0
    %5587 = vmatmul.mubr.f32.gmra.mrb[0].mxu0 %v5467
    %v5588 = vpop.f32.mrb[0].mxu0
    %v5589 = vadd.f32 %v5453, %v5588
    %v5590 = vpop.f32.mrb[0].mxu0
    %5591 = vmatprep.mubr.f32.mxu0 0.0
    %5592 = vmatmul.mubr.f32.gmra.mrb[0].mxu0 %v5470
    %v5593 = vpop.f32.mrb[0].mxu0
    %v5594 = vadd.f32 %v5453, %v5593
    %v5595 = vpop.f32.mrb[0].mxu0
    %5596 = vmatprep.mubr.f32.mxu0 0.0
    %5597 = vmatmul.mubr.f32.gmra.mrb[0].mxu0 %v5473
    %v5598 = vpop.f32.mrb[0].mxu0
    %v5599 = vadd.f32 %v5453, %v5598
    %v5600 = vpop.f32.mrb[0].mxu0
    %5601 = vmatprep.mubr.f32.mxu0 0.0
    %5602 = vmatmul.mubr.f32.gmra.mrb[0].mxu0 %v5476
    %v5603 = vpop.f32.mrb[0].mxu0
    %v5604 = vadd.f32 %v5453, %v5603
    %v5605 = vpop.f32.mrb[0].mxu0
    %5606 = vmatprep.mubr.f32.mxu0 0.0
    %5607 = vmatmul.mubr.f32.gmra.mrb[0].mxu0 %v5479
    %v5608 = vpop.f32.mrb[0].mxu0
    %v5609 = vadd.f32 %v5453, %v5608
    %v5610 = vpop.f32.mrb[0].mxu0
    %5611 = vmatprep.mubr.f32.mxu0 0.0
    %5612 = vmatmul.mubr.f32.gmra.mrb[0].mxu0 %v5482
    %v5613 = vpop.f32.mrb[0].mxu0
    %v5614 = vadd.f32 %v5453, %v5613
    %v5615 = vpop.f32.mrb[0].mxu0
    %5616 = vmatprep.mubr.f32.mxu0 0.0
    %5617 = vmatmul.mubr.f32.gmra.mrb[0].mxu0 %v5485
    %v5618 = vpop.f32.mrb[0].mxu0
    %v5619 = vadd.f32 %v5453, %v5618
    %v5620 = vpop.f32.mrb[0].mxu0
    %5621 = vmatprep.mubr.f32.mxu0 0.0
    %5622 = vmatmul.mubr.f32.gmra.mrb[0].mxu0 %v5488
    %v5623 = vpop.f32.mrb[0].mxu0
    %v5624 = vadd.f32 %v5453, %v5623
    %v5625 = vpop.f32.mrb[0].mxu0
    %5626 = vmatprep.mubr.f32.mxu0 0.0
    %5627 = vmatmul.mubr.f32.gmra.mrb[0].mxu0 %v5491
    %v5628 = vpop.f32.mrb[0].mxu0
    %v5629 = vadd.f32 %v5453, %v5628
    %v5630 = vpop.f32.mrb[0].mxu0
    %5631 = vmatprep.mubr.f32.mxu0 0.0
    %5632 = vmatmul.mubr.f32.gmra.mrb[0].mxu0 %v5494
    %v5633 = vpop.f32.mrb[0].mxu0
    %v5634 = vadd.f32 %v5453, %v5633
    %v5635 = vpop.f32.mrb[0].mxu0
    %5636 = vmatprep.mubr.f32.mxu0 0.0
    %5637 = vmatmul.mubr.f32.gmra.mrb[0].mxu0 %v5497
    %v5638 = vpop.f32.mrb[0].mxu0
    %v5639 = vadd.f32 %v5453, %v5638
    %v5640 = vpop.f32.mrb[0].mxu0
    %5641 = vmatprep.mubr.f32.mxu0 0.0
    %5642 = vmatmul.mubr.f32.gmra.mrb[0].mxu0 %v5500
    %v5643 = vpop.f32.mrb[0].mxu0
    %v5644 = vpop.f32.mrb[0].mxu0
    %5645 = vdwg.mxu0
    %v5646 = vmax.f32 %v5569, 0.0
    %v5647 = vmax.f32 %v5574, 0.0
    %v5648 = vmax.f32 %v5579, 0.0
    %v5649 = vmax.f32 %v5584, 0.0
    %v5650 = vmax.f32 %v5589, 0.0
    %v5651 = vmax.f32 %v5594, 0.0
    %v5652 = vmax.f32 %v5599, 0.0
    %v5653 = vmax.f32 %v5604, 0.0
    %v5654 = vmax.f32 %v5609, 0.0
    %v5655 = vmax.f32 %v5614, 0.0
    %v5656 = vmax.f32 %v5619, 0.0
    %v5657 = vmax.f32 %v5624, 0.0
    %v5658 = vmax.f32 %v5629, 0.0
    %v5659 = vmax.f32 %v5634, 0.0
    %v5660 = vmax.f32 %v5639, 0.0
    %v5661 = vsel %vm1742, %v5646, 0.0
    %v5662 = vsel %vm1742, %v5647, 0.0
    %v5663 = vadd.f32 %v5661, %v5662
    %v5664 = vsel %vm1742, %v5648, 0.0
    %v5665 = vadd.f32 %v5663, %v5664
    %v5666 = vsel %vm1742, %v5649, 0.0
    %v5667 = vadd.f32 %v5665, %v5666
    %v5668 = vsel %vm1742, %v5650, 0.0
    %v5669 = vadd.f32 %v5667, %v5668
    %v5670 = vsel %vm1742, %v5651, 0.0
    %v5671 = vadd.f32 %v5669, %v5670
    %v5672 = vsel %vm1742, %v5652, 0.0
    %v5673 = vadd.f32 %v5671, %v5672
    %v5674 = vsel %vm1742, %v5653, 0.0
    %v5675 = vadd.f32 %v5673, %v5674
    %v5676 = vsel %vm1742, %v5654, 0.0
    %v5677 = vadd.f32 %v5675, %v5676
    %v5678 = vsel %vm1742, %v5655, 0.0
    %v5679 = vadd.f32 %v5677, %v5678
    %v5680 = vsel %vm1742, %v5656, 0.0
    %v5681 = vadd.f32 %v5679, %v5680
    %v5682 = vsel %vm1742, %v5657, 0.0
    %v5683 = vadd.f32 %v5681, %v5682
    %v5684 = vsel %vm1742, %v5658, 0.0
    %v5685 = vadd.f32 %v5683, %v5684
    %v5686 = vsel %vm1742, %v5659, 0.0
    %v5687 = vadd.f32 %v5685, %v5686
    %v5688 = vsel %vm1742, %v5660, 0.0
    %v5689 = vadd.f32 %v5687, %v5688
    %v5690 = vrot.slane %v5689, 4
    %v5691 = vadd.f32 %v5689, %v5690
    %v5692 = vrot.slane %v5691, 2
    %v5693 = vadd.f32 %v5691, %v5692
    %v5694 = vrot.slane %v5693, 1
    %v5695 = vadd.f32 %v5693, %v5694
    %v5696 = vmul.f32 %v5695, 0.008333334
    %s5697 = scalar_lea.vmem %s0, 128
    %v5698 = vld [vmem:[%s5697] sm:$0xff]
    %v5699 = vld [vmem:[%s5697 + $0x8] sm:$0xff]
    %v5700 = vld [vmem:[%s5697 + $0x10] sm:$0xff]
    %v5701 = vld [vmem:[%s5697 + $0x18] sm:$0xff]
    %v5702 = vld [vmem:[%s5697 + $0x20] sm:$0xff]
    %v5703 = vld [vmem:[%s5697 + $0x28] sm:$0xff]
    %v5704 = vld [vmem:[%s5697 + $0x30] sm:$0xff]
    %v5705 = vld [vmem:[%s5697 + $0x38] sm:$0xff]
    %v5706 = vld [vmem:[%s5697 + $0x40] sm:$0xff]
    %v5707 = vld [vmem:[%s5697 + $0x48] sm:$0xff]
    %v5708 = vld [vmem:[%s5697 + $0x50] sm:$0xff]
    %v5709 = vld [vmem:[%s5697 + $0x58] sm:$0xff]
    %v5710 = vld [vmem:[%s5697 + $0x60] sm:$0xff]
    %v5711 = vld [vmem:[%s5697 + $0x68] sm:$0xff]
    %v5712 = vld [vmem:[%s5697 + $0x70] sm:$0xff]
    %v5713 = vld [vmem:[%s5697 + $0x78] sm:$0x1f]
    %v5715 = vsel %vm439, %v5698, 0
    %v5718 = vsel %vm439, %v5699, 0
    %v5721 = vsel %vm439, %v5700, 0
    %v5724 = vsel %vm439, %v5701, 0
    %v5727 = vsel %vm439, %v5702, 0
    %v5730 = vsel %vm439, %v5703, 0
    %v5733 = vsel %vm439, %v5704, 0
    %v5736 = vsel %vm439, %v5705, 0
    %v5739 = vsel %vm439, %v5706, 0
    %v5742 = vsel %vm439, %v5707, 0
    %v5745 = vsel %vm439, %v5708, 0
    %v5748 = vsel %vm439, %v5709, 0
    %v5751 = vsel %vm439, %v5710, 0
    %v5754 = vsel %vm439, %v5711, 0
    %v5757 = vsel %vm439, %v5712, 0
    %v5760 = vsel %vm439, %v5713, 0
    %5762 = vmatprep.subr.mxu0 0.0
    %5763 = vmatpush1.msra.mxu0 %v33
    %5764 = vmatprep.subr.mxu0 0.0
    %5765 = vmatpush1.msra.mxu0 %v34
    %5766 = vmatprep.subr.mxu0 0.0
    %5767 = vmatpush1.msra.mxu0 %v35
    %5768 = vmatprep.subr.mxu0 0.0
    %5769 = vmatpush1.msra.mxu0 %v36
    %5770 = vmatprep.subr.mxu0 0.0
    %5771 = vmatpush1.msra.mxu0 %v37
    %5772 = vmatprep.subr.mxu0 0.0
    %5773 = vmatpush1.msra.mxu0 0.0
    %5774 = vmatprep.subr.mxu0 0.0
    %5775 = vmatpush1.msra.mxu0 0.0
    %5776 = vmatprep.subr.mxu0 0.0
    %5777 = vmatpush1.msra.mxu0 0.0
    %5778 = vmatprep.subr.mxu0 0.0
    %5779 = vmatpush1.msra.mxu0 0.0
    %5780 = vmatprep.subr.mxu0 0.0
    %5781 = vmatpush1.msra.mxu0 0.0
    %5782 = vmatprep.subr.mxu0 0.0
    %5783 = vmatpush1.msra.mxu0 0.0
    %5784 = vmatprep.subr.mxu0 0.0
    %5785 = vmatpush1.msra.mxu0 0.0
    %5786 = vmatprep.subr.mxu0 0.0
    %5787 = vmatpush1.msra.mxu0 0.0
    %5788 = vmatprep.subr.mxu0 0.0
    %5789 = vmatpush1.msra.mxu0 0.0
    %5790 = vmatprep.subr.mxu0 0.0
    %5791 = vmatpush1.msra.mxu0 0.0
    %5792 = vmatprep.subr.mxu0 0.0
    %5793 = vmatpush1.msra.mxu0 0.0
    %5794 = vmatprep.subr.mxu0 0.0
    %5795 = vmatpush1.msra.mxu0 0.0
    %5796 = vmatprep.subr.mxu0 0.0
    %5797 = vmatpush1.msra.mxu0 0.0
    %5798 = vmatprep.subr.mxu0 0.0
    %5799 = vmatpush1.msra.mxu0 0.0
    %5800 = vmatprep.subr.mxu0 0.0
    %5801 = vmatpush1.msra.mxu0 0.0
    %5802 = vmatprep.subr.mxu0 0.0
    %5803 = vmatpush1.msra.mxu0 0.0
    %5804 = vmatprep.subr.mxu0 0.0
    %5805 = vmatpush1.msra.mxu0 0.0
    %5806 = vmatprep.subr.mxu0 0.0
    %5807 = vmatpush1.msra.mxu0 0.0
    %5808 = vmatprep.subr.mxu0 0.0
    %5809 = vmatpush1.msra.mxu0 0.0
    %5810 = vmatprep.subr.mxu0 0.0
    %5811 = vmatpush1.msra.mxu0 0.0
    %5812 = vmatprep.subr.mxu0 0.0
    %5813 = vmatpush1.msra.mxu0 0.0
    %5814 = vmatprep.subr.mxu0 0.0
    %5815 = vmatpush1.msra.mxu0 0.0
    %5816 = vmatprep.subr.mxu0 0.0
    %5817 = vmatpush1.msra.mxu0 0.0
    %5818 = vmatprep.subr.mxu0 0.0
    %5819 = vmatpush1.msra.mxu0 0.0
    %5820 = vmatprep.subr.mxu0 0.0
    %5821 = vmatpush1.msra.mxu0 0.0
    %5822 = vmatprep.subr.mxu0 0.0
    %5823 = vmatpush1.msra.mxu0 0.0
    %5824 = vmatprep.subr.mxu0 0.0
    %5825 = vmatpush1.msra.mxu0 0.0
    %5826 = vmatprep.mubr.f32.mxu0 0.0
    %5827 = vmatmul.mubr.f32.gmra.mrb[0].mxu0 %v5715
    %v5828 = vpop.f32.mrb[0].mxu0
    %v5829 = vadd.f32 %v437, %v5828
    %v5830 = vpop.f32.mrb[0].mxu0
    %5831 = vmatprep.mubr.f32.mxu0 0.0
    %5832 = vmatmul.mubr.f32.gmra.mrb[0].mxu0 %v5718
    %v5833 = vpop.f32.mrb[0].mxu0
    %v5834 = vadd.f32 %v437, %v5833
    %v5835 = vpop.f32.mrb[0].mxu0
    %5836 = vmatprep.mubr.f32.mxu0 0.0
    %5837 = vmatmul.mubr.f32.gmra.mrb[0].mxu0 %v5721
    %v5838 = vpop.f32.mrb[0].mxu0
    %v5839 = vadd.f32 %v437, %v5838
    %v5840 = vpop.f32.mrb[0].mxu0
    %5841 = vmatprep.mubr.f32.mxu0 0.0
    %5842 = vmatmul.mubr.f32.gmra.mrb[0].mxu0 %v5724
    %v5843 = vpop.f32.mrb[0].mxu0
    %v5844 = vadd.f32 %v437, %v5843
    %v5845 = vpop.f32.mrb[0].mxu0
    %5846 = vmatprep.mubr.f32.mxu0 0.0
    %5847 = vmatmul.mubr.f32.gmra.mrb[0].mxu0 %v5727
    %v5848 = vpop.f32.mrb[0].mxu0
    %v5849 = vadd.f32 %v437, %v5848
    %v5850 = vpop.f32.mrb[0].mxu0
    %5851 = vmatprep.mubr.f32.mxu0 0.0
    %5852 = vmatmul.mubr.f32.gmra.mrb[0].mxu0 %v5730
    %v5853 = vpop.f32.mrb[0].mxu0
    %v5854 = vadd.f32 %v437, %v5853
    %v5855 = vpop.f32.mrb[0].mxu0
    %5856 = vmatprep.mubr.f32.mxu0 0.0
    %5857 = vmatmul.mubr.f32.gmra.mrb[0].mxu0 %v5733
    %v5858 = vpop.f32.mrb[0].mxu0
    %v5859 = vadd.f32 %v437, %v5858
    %v5860 = vpop.f32.mrb[0].mxu0
    %5861 = vmatprep.mubr.f32.mxu0 0.0
    %5862 = vmatmul.mubr.f32.gmra.mrb[0].mxu0 %v5736
    %v5863 = vpop.f32.mrb[0].mxu0
    %v5864 = vadd.f32 %v437, %v5863
    %v5865 = vpop.f32.mrb[0].mxu0
    %5866 = vmatprep.mubr.f32.mxu0 0.0
    %5867 = vmatmul.mubr.f32.gmra.mrb[0].mxu0 %v5739
    %v5868 = vpop.f32.mrb[0].mxu0
    %v5869 = vadd.f32 %v437, %v5868
    %v5870 = vpop.f32.mrb[0].mxu0
    %5871 = vmatprep.mubr.f32.mxu0 0.0
    %5872 = vmatmul.mubr.f32.gmra.mrb[0].mxu0 %v5742
    %v5873 = vpop.f32.mrb[0].mxu0
    %v5874 = vadd.f32 %v437, %v5873
    %v5875 = vpop.f32.mrb[0].mxu0
    %5876 = vmatprep.mubr.f32.mxu0 0.0
    %5877 = vmatmul.mubr.f32.gmra.mrb[0].mxu0 %v5745
    %v5878 = vpop.f32.mrb[0].mxu0
    %v5879 = vadd.f32 %v437, %v5878
    %v5880 = vpop.f32.mrb[0].mxu0
    %5881 = vmatprep.mubr.f32.mxu0 0.0
    %5882 = vmatmul.mubr.f32.gmra.mrb[0].mxu0 %v5748
    %v5883 = vpop.f32.mrb[0].mxu0
    %v5884 = vadd.f32 %v437, %v5883
    %v5885 = vpop.f32.mrb[0].mxu0
    %5886 = vmatprep.mubr.f32.mxu0 0.0
    %5887 = vmatmul.mubr.f32.gmra.mrb[0].mxu0 %v5751
    %v5888 = vpop.f32.mrb[0].mxu0
    %v5889 = vadd.f32 %v437, %v5888
    %v5890 = vpop.f32.mrb[0].mxu0
    %5891 = vmatprep.mubr.f32.mxu0 0.0
    %5892 = vmatmul.mubr.f32.gmra.mrb[0].mxu0 %v5754
    %v5893 = vpop.f32.mrb[0].mxu0
    %v5894 = vadd.f32 %v437, %v5893
    %v5895 = vpop.f32.mrb[0].mxu0
    %5896 = vmatprep.mubr.f32.mxu0 0.0
    %5897 = vmatmul.mubr.f32.gmra.mrb[0].mxu0 %v5757
    %v5898 = vpop.f32.mrb[0].mxu0
    %v5899 = vadd.f32 %v437, %v5898
    %v5900 = vpop.f32.mrb[0].mxu0
    %5901 = vmatprep.mubr.f32.mxu0 0.0
    %5902 = vmatmul.mubr.f32.gmra.mrb[0].mxu0 %v5760
    %v5903 = vpop.f32.mrb[0].mxu0
    %v5904 = vadd.f32 %v437, %v5903
    %v5905 = vpop.f32.mrb[0].mxu0
    %5906 = vdwg.mxu0
    %v5907 = vmax.f32 %v5829, 0.0
    %v5908 = vmax.f32 %v5834, 0.0
    %v5909 = vmax.f32 %v5839, 0.0
    %v5910 = vmax.f32 %v5844, 0.0
    %v5911 = vmax.f32 %v5849, 0.0
    %v5912 = vmax.f32 %v5854, 0.0
    %v5913 = vmax.f32 %v5859, 0.0
    %v5914 = vmax.f32 %v5864, 0.0
    %v5915 = vmax.f32 %v5869, 0.0
    %v5916 = vmax.f32 %v5874, 0.0
    %v5917 = vmax.f32 %v5879, 0.0
    %v5918 = vmax.f32 %v5884, 0.0
    %v5919 = vmax.f32 %v5889, 0.0
    %v5920 = vmax.f32 %v5894, 0.0
    %v5921 = vmax.f32 %v5899, 0.0
    %v5922 = vmax.f32 %v5904, 0.0
    %v5939 = vrot.slane %v5907, 2
    %v5940 = vrot.slane %v5908, 2
    %v5941 = vsel %vm667, %v5939, %v5940
    %v5942 = vrot.slane %v5909, 2
    %v5943 = vsel %vm667, %v5940, %v5942
    %v5944 = vrot.slane %v5910, 2
    %v5945 = vsel %vm667, %v5942, %v5944
    %v5946 = vrot.slane %v5911, 2
    %v5947 = vsel %vm667, %v5944, %v5946
    %v5948 = vrot.slane %v5912, 2
    %v5949 = vsel %vm667, %v5946, %v5948
    %v5950 = vrot.slane %v5913, 2
    %v5951 = vsel %vm667, %v5948, %v5950
    %v5952 = vrot.slane %v5914, 2
    %v5953 = vsel %vm667, %v5950, %v5952
    %v5954 = vrot.slane %v5915, 2
    %v5955 = vsel %vm667, %v5952, %v5954
    %v5956 = vrot.slane %v5916, 2
    %v5957 = vsel %vm667, %v5954, %v5956
    %v5958 = vrot.slane %v5917, 2
    %v5959 = vsel %vm667, %v5956, %v5958
    %v5960 = vrot.slane %v5918, 2
    %v5961 = vsel %vm667, %v5958, %v5960
    %v5962 = vrot.slane %v5919, 2
    %v5963 = vsel %vm667, %v5960, %v5962
    %v5964 = vrot.slane %v5920, 2
    %v5965 = vsel %vm667, %v5962, %v5964
    %v5966 = vrot.slane %v5921, 2
    %v5967 = vsel %vm667, %v5964, %v5966
    %v5968 = vrot.slane %v5922, 2
    %v5969 = vsel %vm667, %v5966, %v5968
    %v5987 = vsel %vm667, 0.0, %v5939
    %v5988 = vsel %vm717, %v5968, 0.0
    %v5989 = vmul.f32 %v5987, %v722
    %v5990 = vmul.f32 %v5941, %v722
    %v5991 = vmul.f32 %v5943, %v722
    %v5992 = vmul.f32 %v5945, %v722
    %v5993 = vmul.f32 %v5947, %v722
    %v5994 = vmul.f32 %v5949, %v722
    %v5995 = vmul.f32 %v5951, %v722
    %v5996 = vmul.f32 %v5953, %v722
    %v5997 = vmul.f32 %v5955, %v722
    %v5998 = vmul.f32 %v5957, %v722
    %v5999 = vmul.f32 %v5959, %v722
    %v6000 = vmul.f32 %v5961, %v722
    %v6001 = vmul.f32 %v5963, %v722
    %v6002 = vmul.f32 %v5965, %v722
    %v6003 = vmul.f32 %v5967, %v722
    %v6004 = vmul.f32 %v5969, %v722
    %v6005 = vadd.f32 %v5989, 0.0
    %v6006 = vadd.f32 %v5990, 0.0
    %v6007 = vadd.f32 %v5991, 0.0
    %v6008 = vadd.f32 %v5992, 0.0
    %v6009 = vadd.f32 %v5993, 0.0
    %v6010 = vadd.f32 %v5994, 0.0
    %v6011 = vadd.f32 %v5995, 0.0
    %v6012 = vadd.f32 %v5996, 0.0
    %v6013 = vadd.f32 %v5997, 0.0
    %v6014 = vadd.f32 %v5998, 0.0
    %v6015 = vadd.f32 %v5999, 0.0
    %v6016 = vadd.f32 %v6000, 0.0
    %v6017 = vadd.f32 %v6001, 0.0
    %v6018 = vadd.f32 %v6002, 0.0
    %v6019 = vadd.f32 %v6003, 0.0
    %v6020 = vadd.f32 %v6004, 0.0
    %v6021 = vmul.f32 %v5987, %v758
    %v6022 = vmul.f32 %v5941, %v758
    %v6023 = vmul.f32 %v5943, %v758
    %v6024 = vmul.f32 %v5945, %v758
    %v6025 = vmul.f32 %v5947, %v758
    %v6026 = vmul.f32 %v5949, %v758
    %v6027 = vmul.f32 %v5951, %v758
    %v6028 = vmul.f32 %v5953, %v758
    %v6029 = vmul.f32 %v5955, %v758
    %v6030 = vmul.f32 %v5957, %v758
    %v6031 = vmul.f32 %v5959, %v758
    %v6032 = vmul.f32 %v5961, %v758
    %v6033 = vmul.f32 %v5963, %v758
    %v6034 = vmul.f32 %v5965, %v758
    %v6035 = vmul.f32 %v5967, %v758
    %v6036 = vmul.f32 %v5969, %v758
    %v6037 = vmul.f32 %v5988, %v758
    %v6055 = vrot.slane %v6021, 5
    %v6056 = vrot.slane %v6022, 5
    %v6057 = vsel %vm717, %v6055, %v6056
    %v6058 = vrot.slane %v6023, 5
    %v6059 = vsel %vm717, %v6056, %v6058
    %v6060 = vrot.slane %v6024, 5
    %v6061 = vsel %vm717, %v6058, %v6060
    %v6062 = vrot.slane %v6025, 5
    %v6063 = vsel %vm717, %v6060, %v6062
    %v6064 = vrot.slane %v6026, 5
    %v6065 = vsel %vm717, %v6062, %v6064
    %v6066 = vrot.slane %v6027, 5
    %v6067 = vsel %vm717, %v6064, %v6066
    %v6068 = vrot.slane %v6028, 5
    %v6069 = vsel %vm717, %v6066, %v6068
    %v6070 = vrot.slane %v6029, 5
    %v6071 = vsel %vm717, %v6068, %v6070
    %v6072 = vrot.slane %v6030, 5
    %v6073 = vsel %vm717, %v6070, %v6072
    %v6074 = vrot.slane %v6031, 5
    %v6075 = vsel %vm717, %v6072, %v6074
    %v6076 = vrot.slane %v6032, 5
    %v6077 = vsel %vm717, %v6074, %v6076
    %v6078 = vrot.slane %v6033, 5
    %v6079 = vsel %vm717, %v6076, %v6078
    %v6080 = vrot.slane %v6034, 5
    %v6081 = vsel %vm717, %v6078, %v6080
    %v6082 = vrot.slane %v6035, 5
    %v6083 = vsel %vm717, %v6080, %v6082
    %v6084 = vrot.slane %v6036, 5
    %v6085 = vsel %vm717, %v6082, %v6084
    %v6086 = vrot.slane %v6037, 5
    %v6087 = vsel %vm717, %v6084, %v6086
    %v6104 = vadd.f32 %v6005, %v6057
    %v6105 = vadd.f32 %v6006, %v6059
    %v6106 = vadd.f32 %v6007, %v6061
    %v6107 = vadd.f32 %v6008, %v6063
    %v6108 = vadd.f32 %v6009, %v6065
    %v6109 = vadd.f32 %v6010, %v6067
    %v6110 = vadd.f32 %v6011, %v6069
    %v6111 = vadd.f32 %v6012, %v6071
    %v6112 = vadd.f32 %v6013, %v6073
    %v6113 = vadd.f32 %v6014, %v6075
    %v6114 = vadd.f32 %v6015, %v6077
    %v6115 = vadd.f32 %v6016, %v6079
    %v6116 = vadd.f32 %v6017, %v6081
    %v6117 = vadd.f32 %v6018, %v6083
    %v6118 = vadd.f32 %v6019, %v6085
    %v6119 = vadd.f32 %v6020, %v6087
    %v6120 = vmul.f32 %v5941, %v861
    %v6121 = vmul.f32 %v5943, %v861
    %v6122 = vmul.f32 %v5945, %v861
    %v6123 = vmul.f32 %v5947, %v861
    %v6124 = vmul.f32 %v5949, %v861
    %v6125 = vmul.f32 %v5951, %v861
    %v6126 = vmul.f32 %v5953, %v861
    %v6127 = vmul.f32 %v5955, %v861
    %v6128 = vmul.f32 %v5957, %v861
    %v6129 = vmul.f32 %v5959, %v861
    %v6130 = vmul.f32 %v5961, %v861
    %v6131 = vmul.f32 %v5963, %v861
    %v6132 = vmul.f32 %v5965, %v861
    %v6133 = vmul.f32 %v5967, %v861
    %v6134 = vmul.f32 %v5969, %v861
    %v6135 = vmul.f32 %v5988, %v861
    %v6152 = vrot.slane %v6120, 2
    %v6153 = vrot.slane %v6121, 2
    %v6154 = vsel %vm667, %v6152, %v6153
    %v6155 = vrot.slane %v6122, 2
    %v6156 = vsel %vm667, %v6153, %v6155
    %v6157 = vrot.slane %v6123, 2
    %v6158 = vsel %vm667, %v6155, %v6157
    %v6159 = vrot.slane %v6124, 2
    %v6160 = vsel %vm667, %v6157, %v6159
    %v6161 = vrot.slane %v6125, 2
    %v6162 = vsel %vm667, %v6159, %v6161
    %v6163 = vrot.slane %v6126, 2
    %v6164 = vsel %vm667, %v6161, %v6163
    %v6165 = vrot.slane %v6127, 2
    %v6166 = vsel %vm667, %v6163, %v6165
    %v6167 = vrot.slane %v6128, 2
    %v6168 = vsel %vm667, %v6165, %v6167
    %v6169 = vrot.slane %v6129, 2
    %v6170 = vsel %vm667, %v6167, %v6169
    %v6171 = vrot.slane %v6130, 2
    %v6172 = vsel %vm667, %v6169, %v6171
    %v6173 = vrot.slane %v6131, 2
    %v6174 = vsel %vm667, %v6171, %v6173
    %v6175 = vrot.slane %v6132, 2
    %v6176 = vsel %vm667, %v6173, %v6175
    %v6177 = vrot.slane %v6133, 2
    %v6178 = vsel %vm667, %v6175, %v6177
    %v6179 = vrot.slane %v6134, 2
    %v6180 = vsel %vm667, %v6177, %v6179
    %v6181 = vrot.slane %v6135, 2
    %v6182 = vsel %vm667, %v6179, %v6181
    %v6199 = vadd.f32 %v6104, %v6154
    %v6200 = vadd.f32 %v6105, %v6156
    %v6201 = vadd.f32 %v6106, %v6158
    %v6202 = vadd.f32 %v6107, %v6160
    %v6203 = vadd.f32 %v6108, %v6162
    %v6204 = vadd.f32 %v6109, %v6164
    %v6205 = vadd.f32 %v6110, %v6166
    %v6206 = vadd.f32 %v6111, %v6168
    %v6207 = vadd.f32 %v6112, %v6170
    %v6208 = vadd.f32 %v6113, %v6172
    %v6209 = vadd.f32 %v6114, %v6174
    %v6210 = vadd.f32 %v6115, %v6176
    %v6211 = vadd.f32 %v6116, %v6178
    %v6212 = vadd.f32 %v6117, %v6180
    %v6213 = vadd.f32 %v6118, %v6182
    %v6214 = vadd.f32 %v6119, %v6181
    %v6215 = vmul.f32 %v5987, %v960
    %v6216 = vmul.f32 %v5941, %v960
    %v6217 = vmul.f32 %v5943, %v960
    %v6218 = vmul.f32 %v5945, %v960
    %v6219 = vmul.f32 %v5947, %v960
    %v6220 = vmul.f32 %v5949, %v960
    %v6221 = vmul.f32 %v5951, %v960
    %v6222 = vmul.f32 %v5953, %v960
    %v6223 = vmul.f32 %v5955, %v960
    %v6224 = vmul.f32 %v5957, %v960
    %v6225 = vmul.f32 %v5959, %v960
    %v6226 = vmul.f32 %v5961, %v960
    %v6227 = vmul.f32 %v5963, %v960
    %v6228 = vmul.f32 %v5965, %v960
    %v6229 = vmul.f32 %v5967, %v960
    %v6230 = vmul.f32 %v5969, %v960
    %v6231 = vadd.f32 %v6215, 0.0
    %v6232 = vadd.f32 %v6216, 0.0
    %v6233 = vadd.f32 %v6217, 0.0
    %v6234 = vadd.f32 %v6218, 0.0
    %v6235 = vadd.f32 %v6219, 0.0
    %v6236 = vadd.f32 %v6220, 0.0
    %v6237 = vadd.f32 %v6221, 0.0
    %v6238 = vadd.f32 %v6222, 0.0
    %v6239 = vadd.f32 %v6223, 0.0
    %v6240 = vadd.f32 %v6224, 0.0
    %v6241 = vadd.f32 %v6225, 0.0
    %v6242 = vadd.f32 %v6226, 0.0
    %v6243 = vadd.f32 %v6227, 0.0
    %v6244 = vadd.f32 %v6228, 0.0
    %v6245 = vadd.f32 %v6229, 0.0
    %v6246 = vadd.f32 %v6230, 0.0
    %v6247 = vmul.f32 %v5987, %v996
    %v6248 = vmul.f32 %v5941, %v996
    %v6249 = vmul.f32 %v5943, %v996
    %v6250 = vmul.f32 %v5945, %v996
    %v6251 = vmul.f32 %v5947, %v996
    %v6252 = vmul.f32 %v5949, %v996
    %v6253 = vmul.f32 %v5951, %v996
    %v6254 = vmul.f32 %v5953, %v996
    %v6255 = vmul.f32 %v5955, %v996
    %v6256 = vmul.f32 %v5957, %v996
    %v6257 = vmul.f32 %v5959, %v996
    %v6258 = vmul.f32 %v5961, %v996
    %v6259 = vmul.f32 %v5963, %v996
    %v6260 = vmul.f32 %v5965, %v996
    %v6261 = vmul.f32 %v5967, %v996
    %v6262 = vmul.f32 %v5969, %v996
    %v6263 = vmul.f32 %v5988, %v996
    %v6281 = vrot.slane %v6247, 5
    %v6282 = vrot.slane %v6248, 5
    %v6283 = vsel %vm717, %v6281, %v6282
    %v6284 = vrot.slane %v6249, 5
    %v6285 = vsel %vm717, %v6282, %v6284
    %v6286 = vrot.slane %v6250, 5
    %v6287 = vsel %vm717, %v6284, %v6286
    %v6288 = vrot.slane %v6251, 5
    %v6289 = vsel %vm717, %v6286, %v6288
    %v6290 = vrot.slane %v6252, 5
    %v6291 = vsel %vm717, %v6288, %v6290
    %v6292 = vrot.slane %v6253, 5
    %v6293 = vsel %vm717, %v6290, %v6292
    %v6294 = vrot.slane %v6254, 5
    %v6295 = vsel %vm717, %v6292, %v6294
    %v6296 = vrot.slane %v6255, 5
    %v6297 = vsel %vm717, %v6294, %v6296
    %v6298 = vrot.slane %v6256, 5
    %v6299 = vsel %vm717, %v6296, %v6298
    %v6300 = vrot.slane %v6257, 5
    %v6301 = vsel %vm717, %v6298, %v6300
    %v6302 = vrot.slane %v6258, 5
    %v6303 = vsel %vm717, %v6300, %v6302
    %v6304 = vrot.slane %v6259, 5
    %v6305 = vsel %vm717, %v6302, %v6304
    %v6306 = vrot.slane %v6260, 5
    %v6307 = vsel %vm717, %v6304, %v6306
    %v6308 = vrot.slane %v6261, 5
    %v6309 = vsel %vm717, %v6306, %v6308
    %v6310 = vrot.slane %v6262, 5
    %v6311 = vsel %vm717, %v6308, %v6310
    %v6312 = vrot.slane %v6263, 5
    %v6313 = vsel %vm717, %v6310, %v6312
    %v6330 = vadd.f32 %v6231, %v6283
    %v6331 = vadd.f32 %v6232, %v6285
    %v6332 = vadd.f32 %v6233, %v6287
    %v6333 = vadd.f32 %v6234, %v6289
    %v6334 = vadd.f32 %v6235, %v6291
    %v6335 = vadd.f32 %v6236, %v6293
    %v6336 = vadd.f32 %v6237, %v6295
    %v6337 = vadd.f32 %v6238, %v6297
    %v6338 = vadd.f32 %v6239, %v6299
    %v6339 = vadd.f32 %v6240, %v6301
    %v6340 = vadd.f32 %v6241, %v6303
    %v6341 = vadd.f32 %v6242, %v6305
    %v6342 = vadd.f32 %v6243, %v6307
    %v6343 = vadd.f32 %v6244, %v6309
    %v6344 = vadd.f32 %v6245, %v6311
    %v6345 = vadd.f32 %v6246, %v6313
    %v6346 = vmul.f32 %v5941, %v1099
    %v6347 = vmul.f32 %v5943, %v1099
    %v6348 = vmul.f32 %v5945, %v1099
    %v6349 = vmul.f32 %v5947, %v1099
    %v6350 = vmul.f32 %v5949, %v1099
    %v6351 = vmul.f32 %v5951, %v1099
    %v6352 = vmul.f32 %v5953, %v1099
    %v6353 = vmul.f32 %v5955, %v1099
    %v6354 = vmul.f32 %v5957, %v1099
    %v6355 = vmul.f32 %v5959, %v1099
    %v6356 = vmul.f32 %v5961, %v1099
    %v6357 = vmul.f32 %v5963, %v1099
    %v6358 = vmul.f32 %v5965, %v1099
    %v6359 = vmul.f32 %v5967, %v1099
    %v6360 = vmul.f32 %v5969, %v1099
    %v6361 = vmul.f32 %v5988, %v1099
    %v6378 = vrot.slane %v6346, 2
    %v6379 = vrot.slane %v6347, 2
    %v6380 = vsel %vm667, %v6378, %v6379
    %v6381 = vrot.slane %v6348, 2
    %v6382 = vsel %vm667, %v6379, %v6381
    %v6383 = vrot.slane %v6349, 2
    %v6384 = vsel %vm667, %v6381, %v6383
    %v6385 = vrot.slane %v6350, 2
    %v6386 = vsel %vm667, %v6383, %v6385
    %v6387 = vrot.slane %v6351, 2
    %v6388 = vsel %vm667, %v6385, %v6387
    %v6389 = vrot.slane %v6352, 2
    %v6390 = vsel %vm667, %v6387, %v6389
    %v6391 = vrot.slane %v6353, 2
    %v6392 = vsel %vm667, %v6389, %v6391
    %v6393 = vrot.slane %v6354, 2
    %v6394 = vsel %vm667, %v6391, %v6393
    %v6395 = vrot.slane %v6355, 2
    %v6396 = vsel %vm667, %v6393, %v6395
    %v6397 = vrot.slane %v6356, 2
    %v6398 = vsel %vm667, %v6395, %v6397
    %v6399 = vrot.slane %v6357, 2
    %v6400 = vsel %vm667, %v6397, %v6399
    %v6401 = vrot.slane %v6358, 2
    %v6402 = vsel %vm667, %v6399, %v6401
    %v6403 = vrot.slane %v6359, 2
    %v6404 = vsel %vm667, %v6401, %v6403
    %v6405 = vrot.slane %v6360, 2
    %v6406 = vsel %vm667, %v6403, %v6405
    %v6407 = vrot.slane %v6361, 2
    %v6408 = vsel %vm667, %v6405, %v6407
    %v6425 = vadd.f32 %v6330, %v6380
    %v6426 = vadd.f32 %v6331, %v6382
    %v6427 = vadd.f32 %v6332, %v6384
    %v6428 = vadd.f32 %v6333, %v6386
    %v6429 = vadd.f32 %v6334, %v6388
    %v6430 = vadd.f32 %v6335, %v6390
    %v6431 = vadd.f32 %v6336, %v6392
    %v6432 = vadd.f32 %v6337, %v6394
    %v6433 = vadd.f32 %v6338, %v6396
    %v6434 = vadd.f32 %v6339, %v6398
    %v6435 = vadd.f32 %v6340, %v6400
    %v6436 = vadd.f32 %v6341, %v6402
    %v6437 = vadd.f32 %v6342, %v6404
    %v6438 = vadd.f32 %v6343, %v6406
    %v6439 = vadd.f32 %v6344, %v6408
    %v6440 = vadd.f32 %v6345, %v6407
    %v6441 = vmul.f32 %v5987, %v1198
    %v6442 = vmul.f32 %v5941, %v1198
    %v6443 = vmul.f32 %v5943, %v1198
    %v6444 = vmul.f32 %v5945, %v1198
    %v6445 = vmul.f32 %v5947, %v1198
    %v6446 = vmul.f32 %v5949, %v1198
    %v6447 = vmul.f32 %v5951, %v1198
    %v6448 = vmul.f32 %v5953, %v1198
    %v6449 = vmul.f32 %v5955, %v1198
    %v6450 = vmul.f32 %v5957, %v1198
    %v6451 = vmul.f32 %v5959, %v1198
    %v6452 = vmul.f32 %v5961, %v1198
    %v6453 = vmul.f32 %v5963, %v1198
    %v6454 = vmul.f32 %v5965, %v1198
    %v6455 = vmul.f32 %v5967, %v1198
    %v6456 = vmul.f32 %v5969, %v1198
    %v6457 = vadd.f32 %v6441, 0.0
    %v6458 = vadd.f32 %v6442, 0.0
    %v6459 = vadd.f32 %v6443, 0.0
    %v6460 = vadd.f32 %v6444, 0.0
    %v6461 = vadd.f32 %v6445, 0.0
    %v6462 = vadd.f32 %v6446, 0.0
    %v6463 = vadd.f32 %v6447, 0.0
    %v6464 = vadd.f32 %v6448, 0.0
    %v6465 = vadd.f32 %v6449, 0.0
    %v6466 = vadd.f32 %v6450, 0.0
    %v6467 = vadd.f32 %v6451, 0.0
    %v6468 = vadd.f32 %v6452, 0.0
    %v6469 = vadd.f32 %v6453, 0.0
    %v6470 = vadd.f32 %v6454, 0.0
    %v6471 = vadd.f32 %v6455, 0.0
    %v6472 = vadd.f32 %v6456, 0.0
    %v6473 = vmul.f32 %v5987, %v1234
    %v6474 = vmul.f32 %v5941, %v1234
    %v6475 = vmul.f32 %v5943, %v1234
    %v6476 = vmul.f32 %v5945, %v1234
    %v6477 = vmul.f32 %v5947, %v1234
    %v6478 = vmul.f32 %v5949, %v1234
    %v6479 = vmul.f32 %v5951, %v1234
    %v6480 = vmul.f32 %v5953, %v1234
    %v6481 = vmul.f32 %v5955, %v1234
    %v6482 = vmul.f32 %v5957, %v1234
    %v6483 = vmul.f32 %v5959, %v1234
    %v6484 = vmul.f32 %v5961, %v1234
    %v6485 = vmul.f32 %v5963, %v1234
    %v6486 = vmul.f32 %v5965, %v1234
    %v6487 = vmul.f32 %v5967, %v1234
    %v6488 = vmul.f32 %v5969, %v1234
    %v6489 = vmul.f32 %v5988, %v1234
    %v6507 = vrot.slane %v6473, 5
    %v6508 = vrot.slane %v6474, 5
    %v6509 = vsel %vm717, %v6507, %v6508
    %v6510 = vrot.slane %v6475, 5
    %v6511 = vsel %vm717, %v6508, %v6510
    %v6512 = vrot.slane %v6476, 5
    %v6513 = vsel %vm717, %v6510, %v6512
    %v6514 = vrot.slane %v6477, 5
    %v6515 = vsel %vm717, %v6512, %v6514
    %v6516 = vrot.slane %v6478, 5
    %v6517 = vsel %vm717, %v6514, %v6516
    %v6518 = vrot.slane %v6479, 5
    %v6519 = vsel %vm717, %v6516, %v6518
    %v6520 = vrot.slane %v6480, 5
    %v6521 = vsel %vm717, %v6518, %v6520
    %v6522 = vrot.slane %v6481, 5
    %v6523 = vsel %vm717, %v6520, %v6522
    %v6524 = vrot.slane %v6482, 5
    %v6525 = vsel %vm717, %v6522, %v6524
    %v6526 = vrot.slane %v6483, 5
    %v6527 = vsel %vm717, %v6524, %v6526
    %v6528 = vrot.slane %v6484, 5
    %v6529 = vsel %vm717, %v6526, %v6528
    %v6530 = vrot.slane %v6485, 5
    %v6531 = vsel %vm717, %v6528, %v6530
    %v6532 = vrot.slane %v6486, 5
    %v6533 = vsel %vm717, %v6530, %v6532
    %v6534 = vrot.slane %v6487, 5
    %v6535 = vsel %vm717, %v6532, %v6534
    %v6536 = vrot.slane %v6488, 5
    %v6537 = vsel %vm717, %v6534, %v6536
    %v6538 = vrot.slane %v6489, 5
    %v6539 = vsel %vm717, %v6536, %v6538
    %v6556 = vadd.f32 %v6457, %v6509
    %v6557 = vadd.f32 %v6458, %v6511
    %v6558 = vadd.f32 %v6459, %v6513
    %v6559 = vadd.f32 %v6460, %v6515
    %v6560 = vadd.f32 %v6461, %v6517
    %v6561 = vadd.f32 %v6462, %v6519
    %v6562 = vadd.f32 %v6463, %v6521
    %v6563 = vadd.f32 %v6464, %v6523
    %v6564 = vadd.f32 %v6465, %v6525
    %v6565 = vadd.f32 %v6466, %v6527
    %v6566 = vadd.f32 %v6467, %v6529
    %v6567 = vadd.f32 %v6468, %v6531
    %v6568 = vadd.f32 %v6469, %v6533
    %v6569 = vadd.f32 %v6470, %v6535
    %v6570 = vadd.f32 %v6471, %v6537
    %v6571 = vadd.f32 %v6472, %v6539
    %v6572 = vmul.f32 %v5941, %v1337
    %v6573 = vmul.f32 %v5943, %v1337
    %v6574 = vmul.f32 %v5945, %v1337
    %v6575 = vmul.f32 %v5947, %v1337
    %v6576 = vmul.f32 %v5949, %v1337
    %v6577 = vmul.f32 %v5951, %v1337
    %v6578 = vmul.f32 %v5953, %v1337
    %v6579 = vmul.f32 %v5955, %v1337
    %v6580 = vmul.f32 %v5957, %v1337
    %v6581 = vmul.f32 %v5959, %v1337
    %v6582 = vmul.f32 %v5961, %v1337
    %v6583 = vmul.f32 %v5963, %v1337
    %v6584 = vmul.f32 %v5965, %v1337
    %v6585 = vmul.f32 %v5967, %v1337
    %v6586 = vmul.f32 %v5969, %v1337
    %v6587 = vmul.f32 %v5988, %v1337
    %v6604 = vrot.slane %v6572, 2
    %v6605 = vrot.slane %v6573, 2
    %v6606 = vsel %vm667, %v6604, %v6605
    %v6607 = vrot.slane %v6574, 2
    %v6608 = vsel %vm667, %v6605, %v6607
    %v6609 = vrot.slane %v6575, 2
    %v6610 = vsel %vm667, %v6607, %v6609
    %v6611 = vrot.slane %v6576, 2
    %v6612 = vsel %vm667, %v6609, %v6611
    %v6613 = vrot.slane %v6577, 2
    %v6614 = vsel %vm667, %v6611, %v6613
    %v6615 = vrot.slane %v6578, 2
    %v6616 = vsel %vm667, %v6613, %v6615
    %v6617 = vrot.slane %v6579, 2
    %v6618 = vsel %vm667, %v6615, %v6617
    %v6619 = vrot.slane %v6580, 2
    %v6620 = vsel %vm667, %v6617, %v6619
    %v6621 = vrot.slane %v6581, 2
    %v6622 = vsel %vm667, %v6619, %v6621
    %v6623 = vrot.slane %v6582, 2
    %v6624 = vsel %vm667, %v6621, %v6623
    %v6625 = vrot.slane %v6583, 2
    %v6626 = vsel %vm667, %v6623, %v6625
    %v6627 = vrot.slane %v6584, 2
    %v6628 = vsel %vm667, %v6625, %v6627
    %v6629 = vrot.slane %v6585, 2
    %v6630 = vsel %vm667, %v6627, %v6629
    %v6631 = vrot.slane %v6586, 2
    %v6632 = vsel %vm667, %v6629, %v6631
    %v6633 = vrot.slane %v6587, 2
    %v6634 = vsel %vm667, %v6631, %v6633
    %v6635 = vsel %vm667, %v6633, %v1403
    %v6652 = vadd.f32 %v6556, %v6606
    %v6653 = vadd.f32 %v6557, %v6608
    %v6654 = vadd.f32 %v6558, %v6610
    %v6655 = vadd.f32 %v6559, %v6612
    %v6656 = vadd.f32 %v6560, %v6614
    %v6657 = vadd.f32 %v6561, %v6616
    %v6658 = vadd.f32 %v6562, %v6618
    %v6659 = vadd.f32 %v6563, %v6620
    %v6660 = vadd.f32 %v6564, %v6622
    %v6661 = vadd.f32 %v6565, %v6624
    %v6662 = vadd.f32 %v6566, %v6626
    %v6663 = vadd.f32 %v6567, %v6628
    %v6664 = vadd.f32 %v6568, %v6630
    %v6665 = vadd.f32 %v6569, %v6632
    %v6666 = vadd.f32 %v6570, %v6634
    %v6667 = vadd.f32 %v6571, %v6635
    %v6668 = vmul.f32 %v6199, %v353
    %v6669 = vmul.f32 %v6200, %v354
    %v6670 = vmul.f32 %v6201, %v355
    %v6671 = vmul.f32 %v6202, %v356
    %v6672 = vmul.f32 %v6203, %v357
    %v6673 = vmul.f32 %v6204, %v358
    %v6674 = vmul.f32 %v6205, %v359
    %v6675 = vmul.f32 %v6206, %v360
    %v6676 = vmul.f32 %v6207, %v361
    %v6677 = vmul.f32 %v6208, %v362
    %v6678 = vmul.f32 %v6209, %v363
    %v6679 = vmul.f32 %v6210, %v364
    %v6680 = vmul.f32 %v6211, %v365
    %v6681 = vmul.f32 %v6212, %v366
    %v6682 = vmul.f32 %v6213, %v367
    %v6683 = vmul.f32 %v6214, %v368
    %v6700 = vrot.slane %v6425, 1
    %v6701 = vrot.slane %v6426, 1
    %v6702 = vsel %vm1469, %v6700, %v6701
    %v6703 = vrot.slane %v6427, 1
    %v6704 = vsel %vm1469, %v6701, %v6703
    %v6705 = vrot.slane %v6428, 1
    %v6706 = vsel %vm1469, %v6703, %v6705
    %v6707 = vrot.slane %v6429, 1
    %v6708 = vsel %vm1469, %v6705, %v6707
    %v6709 = vrot.slane %v6430, 1
    %v6710 = vsel %vm1469, %v6707, %v6709
    %v6711 = vrot.slane %v6431, 1
    %v6712 = vsel %vm1469, %v6709, %v6711
    %v6713 = vrot.slane %v6432, 1
    %v6714 = vsel %vm1469, %v6711, %v6713
    %v6715 = vrot.slane %v6433, 1
    %v6716 = vsel %vm1469, %v6713, %v6715
    %v6717 = vrot.slane %v6434, 1
    %v6718 = vsel %vm1469, %v6715, %v6717
    %v6719 = vrot.slane %v6435, 1
    %v6720 = vsel %vm1469, %v6717, %v6719
    %v6721 = vrot.slane %v6436, 1
    %v6722 = vsel %vm1469, %v6719, %v6721
    %v6723 = vrot.slane %v6437, 1
    %v6724 = vsel %vm1469, %v6721, %v6723
    %v6725 = vrot.slane %v6438, 1
    %v6726 = vsel %vm1469, %v6723, %v6725
    %v6727 = vrot.slane %v6439, 1
    %v6728 = vsel %vm1469, %v6725, %v6727
    %v6729 = vrot.slane %v6440, 1
    %v6730 = vsel %vm1469, %v6727, %v6729
    %v6747 = vadd.f32 %v6668, %v6702
    %v6748 = vadd.f32 %v6669, %v6704
    %v6749 = vadd.f32 %v6670, %v6706
    %v6750 = vadd.f32 %v6671, %v6708
    %v6751 = vadd.f32 %v6672, %v6710
    %v6752 = vadd.f32 %v6673, %v6712
    %v6753 = vadd.f32 %v6674, %v6714
    %v6754 = vadd.f32 %v6675, %v6716
    %v6755 = vadd.f32 %v6676, %v6718
    %v6756 = vadd.f32 %v6677, %v6720
    %v6757 = vadd.f32 %v6678, %v6722
    %v6758 = vadd.f32 %v6679, %v6724
    %v6759 = vadd.f32 %v6680, %v6726
    %v6760 = vadd.f32 %v6681, %v6728
    %v6761 = vadd.f32 %v6682, %v6730
    %v6762 = vadd.f32 %v6683, %v6729
    %v6763 = vmul.f32 %v6652, %v1550
    %v6764 = vmul.f32 %v6653, %v1552
    %v6765 = vmul.f32 %v6654, %v1554
    %v6766 = vmul.f32 %v6655, %v1556
    %v6767 = vmul.f32 %v6656, %v1558
    %v6768 = vmul.f32 %v6657, %v1560
    %v6769 = vmul.f32 %v6658, %v1562
    %v6770 = vmul.f32 %v6659, %v1564
    %v6771 = vmul.f32 %v6660, %v1566
    %v6772 = vmul.f32 %v6661, %v1568
    %v6773 = vmul.f32 %v6662, %v1570
    %v6774 = vmul.f32 %v6663, %v1572
    %v6775 = vmul.f32 %v6664, %v1574
    %v6776 = vmul.f32 %v6665, %v1576
    %v6777 = vmul.f32 %v6666, %v1578
    %v6778 = vmul.f32 %v6667, %v1580
    %v6795 = vrot.slane %v6763, 2
    %v6796 = vrot.slane %v6764, 2
    %v6797 = vsel %vm667, %v6795, %v6796
    %v6798 = vrot.slane %v6765, 2
    %v6799 = vsel %vm667, %v6796, %v6798
    %v6800 = vrot.slane %v6766, 2
    %v6801 = vsel %vm667, %v6798, %v6800
    %v6802 = vrot.slane %v6767, 2
    %v6803 = vsel %vm667, %v6800, %v6802
    %v6804 = vrot.slane %v6768, 2
    %v6805 = vsel %vm667, %v6802, %v6804
    %v6806 = vrot.slane %v6769, 2
    %v6807 = vsel %vm667, %v6804, %v6806
    %v6808 = vrot.slane %v6770, 2
    %v6809 = vsel %vm667, %v6806, %v6808
    %v6810 = vrot.slane %v6771, 2
    %v6811 = vsel %vm667, %v6808, %v6810
    %v6812 = vrot.slane %v6772, 2
    %v6813 = vsel %vm667, %v6810, %v6812
    %v6814 = vrot.slane %v6773, 2
    %v6815 = vsel %vm667, %v6812, %v6814
    %v6816 = vrot.slane %v6774, 2
    %v6817 = vsel %vm667, %v6814, %v6816
    %v6818 = vrot.slane %v6775, 2
    %v6819 = vsel %vm667, %v6816, %v6818
    %v6820 = vrot.slane %v6776, 2
    %v6821 = vsel %vm667, %v6818, %v6820
    %v6822 = vrot.slane %v6777, 2
    %v6823 = vsel %vm667, %v6820, %v6822
    %v6824 = vrot.slane %v6778, 2
    %v6825 = vsel %vm667, %v6822, %v6824
    %v6842 = vadd.f32 %v6747, %v6797
    %v6843 = vadd.f32 %v6748, %v6799
    %v6844 = vadd.f32 %v6749, %v6801
    %v6845 = vadd.f32 %v6750, %v6803
    %v6846 = vadd.f32 %v6751, %v6805
    %v6847 = vadd.f32 %v6752, %v6807
    %v6848 = vadd.f32 %v6753, %v6809
    %v6849 = vadd.f32 %v6754, %v6811
    %v6850 = vadd.f32 %v6755, %v6813
    %v6851 = vadd.f32 %v6756, %v6815
    %v6852 = vadd.f32 %v6757, %v6817
    %v6853 = vadd.f32 %v6758, %v6819
    %v6854 = vadd.f32 %v6759, %v6821
    %v6855 = vadd.f32 %v6760, %v6823
    %v6856 = vadd.f32 %v6761, %v6825
    %v6857 = vadd.f32 %v6762, %v6824
    %v6858 = vadd.f32 %v6842, %v1696
    %v6859 = vadd.f32 %v6843, %v1696
    %v6860 = vadd.f32 %v6844, %v1696
    %v6861 = vadd.f32 %v6845, %v1696
    %v6862 = vadd.f32 %v6846, %v1696
    %v6863 = vadd.f32 %v6847, %v1696
    %v6864 = vadd.f32 %v6848, %v1696
    %v6865 = vadd.f32 %v6849, %v1696
    %v6866 = vadd.f32 %v6850, %v1696
    %v6867 = vadd.f32 %v6851, %v1696
    %v6868 = vadd.f32 %v6852, %v1696
    %v6869 = vadd.f32 %v6853, %v1696
    %v6870 = vadd.f32 %v6854, %v1696
    %v6871 = vadd.f32 %v6855, %v1696
    %v6872 = vadd.f32 %v6856, %v1696
    %v6873 = vadd.f32 %v6857, %v1696
    %v6874 = vmax.f32 %v6858, 0.0
    %v6875 = vmax.f32 %v6859, 0.0
    %v6876 = vmax.f32 %v6860, 0.0
    %v6877 = vmax.f32 %v6861, 0.0
    %v6878 = vmax.f32 %v6862, 0.0
    %v6879 = vmax.f32 %v6863, 0.0
    %v6880 = vmax.f32 %v6864, 0.0
    %v6881 = vmax.f32 %v6865, 0.0
    %v6882 = vmax.f32 %v6866, 0.0
    %v6883 = vmax.f32 %v6867, 0.0
    %v6884 = vmax.f32 %v6868, 0.0
    %v6885 = vmax.f32 %v6869, 0.0
    %v6886 = vmax.f32 %v6870, 0.0
    %v6887 = vmax.f32 %v6871, 0.0
    %v6888 = vmax.f32 %v6872, 0.0
    %v6889 = vmax.f32 %v6873, 0.0
    %v6891 = vsel %vm1742, %v6874, 0
    %v6894 = vsel %vm1742, %v6875, 0
    %v6897 = vsel %vm1742, %v6876, 0
    %v6900 = vsel %vm1742, %v6877, 0
    %v6903 = vsel %vm1742, %v6878, 0
    %v6906 = vsel %vm1742, %v6879, 0
    %v6909 = vsel %vm1742, %v6880, 0
    %v6912 = vsel %vm1742, %v6881, 0
    %v6915 = vsel %vm1742, %v6882, 0
    %v6918 = vsel %vm1742, %v6883, 0
    %v6921 = vsel %vm1742, %v6884, 0
    %v6924 = vsel %vm1742, %v6885, 0
    %v6927 = vsel %vm1742, %v6886, 0
    %v6930 = vsel %vm1742, %v6887, 0
    %v6933 = vsel %vm1742, %v6888, 0
    %v6936 = vsel %vm1742, %v6889, 0
    %6938 = vmatprep.subr.mxu0 0.0
    %6939 = vmatpush1.msra.mxu0 %v1729
    %6940 = vmatprep.subr.mxu0 0.0
    %6941 = vmatpush1.msra.mxu0 %v1730
    %6942 = vmatprep.subr.mxu0 0.0
    %6943 = vmatpush1.msra.mxu0 %v1731
    %6944 = vmatprep.subr.mxu0 0.0
    %6945 = vmatpush1.msra.mxu0 %v1732
    %6946 = vmatprep.subr.mxu0 0.0
    %6947 = vmatpush1.msra.mxu0 %v1733
    %6948 = vmatprep.subr.mxu0 0.0
    %6949 = vmatpush1.msra.mxu0 %v1734
    %6950 = vmatprep.subr.mxu0 0.0
    %6951 = vmatpush1.msra.mxu0 %v1735
    %6952 = vmatprep.subr.mxu0 0.0
    %6953 = vmatpush1.msra.mxu0 %v1736
    %6954 = vmatprep.subr.mxu0 0.0
    %6955 = vmatpush1.msra.mxu0 0.0
    %6956 = vmatprep.subr.mxu0 0.0
    %6957 = vmatpush1.msra.mxu0 0.0
    %6958 = vmatprep.subr.mxu0 0.0
    %6959 = vmatpush1.msra.mxu0 0.0
    %6960 = vmatprep.subr.mxu0 0.0
    %6961 = vmatpush1.msra.mxu0 0.0
    %6962 = vmatprep.subr.mxu0 0.0
    %6963 = vmatpush1.msra.mxu0 0.0
    %6964 = vmatprep.subr.mxu0 0.0
    %6965 = vmatpush1.msra.mxu0 0.0
    %6966 = vmatprep.subr.mxu0 0.0
    %6967 = vmatpush1.msra.mxu0 0.0
    %6968 = vmatprep.subr.mxu0 0.0
    %6969 = vmatpush1.msra.mxu0 0.0
    %6970 = vmatprep.subr.mxu0 0.0
    %6971 = vmatpush1.msra.mxu0 0.0
    %6972 = vmatprep.subr.mxu0 0.0
    %6973 = vmatpush1.msra.mxu0 0.0
    %6974 = vmatprep.subr.mxu0 0.0
    %6975 = vmatpush1.msra.mxu0 0.0
    %6976 = vmatprep.subr.mxu0 0.0
    %6977 = vmatpush1.msra.mxu0 0.0
    %6978 = vmatprep.subr.mxu0 0.0
    %6979 = vmatpush1.msra.mxu0 0.0
    %6980 = vmatprep.subr.mxu0 0.0
    %6981 = vmatpush1.msra.mxu0 0.0
    %6982 = vmatprep.subr.mxu0 0.0
    %6983 = vmatpush1.msra.mxu0 0.0
    %6984 = vmatprep.subr.mxu0 0.0
    %6985 = vmatpush1.msra.mxu0 0.0
    %6986 = vmatprep.subr.mxu0 0.0
    %6987 = vmatpush1.msra.mxu0 0.0
    %6988 = vmatprep.subr.mxu0 0.0
    %6989 = vmatpush1.msra.mxu0 0.0
    %6990 = vmatprep.subr.mxu0 0.0
    %6991 = vmatpush1.msra.mxu0 0.0
    %6992 = vmatprep.subr.mxu0 0.0
    %6993 = vmatpush1.msra.mxu0 0.0
    %6994 = vmatprep.subr.mxu0 0.0
    %6995 = vmatpush1.msra.mxu0 0.0
    %6996 = vmatprep.subr.mxu0 0.0
    %6997 = vmatpush1.msra.mxu0 0.0
    %6998 = vmatprep.subr.mxu0 0.0
    %6999 = vmatpush1.msra.mxu0 0.0
    %7000 = vmatprep.subr.mxu0 0.0
    %7001 = vmatpush1.msra.mxu0 0.0
    %7002 = vmatprep.mubr.f32.mxu0 0.0
    %7003 = vmatmul.mubr.f32.gmra.mrb[0].mxu0 %v6891
    %v7004 = vpop.f32.mrb[0].mxu0
    %v7005 = vadd.f32 %v1741, %v7004
    %v7006 = vpop.f32.mrb[0].mxu0
    %7007 = vmatprep.mubr.f32.mxu0 0.0
    %7008 = vmatmul.mubr.f32.gmra.mrb[0].mxu0 %v6894
    %v7009 = vpop.f32.mrb[0].mxu0
    %v7010 = vadd.f32 %v1741, %v7009
    %v7011 = vpop.f32.mrb[0].mxu0
    %7012 = vmatprep.mubr.f32.mxu0 0.0
    %7013 = vmatmul.mubr.f32.gmra.mrb[0].mxu0 %v6897
    %v7014 = vpop.f32.mrb[0].mxu0
    %v7015 = vadd.f32 %v1741, %v7014
    %v7016 = vpop.f32.mrb[0].mxu0
    %7017 = vmatprep.mubr.f32.mxu0 0.0
    %7018 = vmatmul.mubr.f32.gmra.mrb[0].mxu0 %v6900
    %v7019 = vpop.f32.mrb[0].mxu0
    %v7020 = vadd.f32 %v1741, %v7019
    %v7021 = vpop.f32.mrb[0].mxu0
    %7022 = vmatprep.mubr.f32.mxu0 0.0
    %7023 = vmatmul.mubr.f32.gmra.mrb[0].mxu0 %v6903
    %v7024 = vpop.f32.mrb[0].mxu0
    %v7025 = vadd.f32 %v1741, %v7024
    %v7026 = vpop.f32.mrb[0].mxu0
    %7027 = vmatprep.mubr.f32.mxu0 0.0
    %7028 = vmatmul.mubr.f32.gmra.mrb[0].mxu0 %v6906
    %v7029 = vpop.f32.mrb[0].mxu0
    %v7030 = vadd.f32 %v1741, %v7029
    %v7031 = vpop.f32.mrb[0].mxu0
    %7032 = vmatprep.mubr.f32.mxu0 0.0
    %7033 = vmatmul.mubr.f32.gmra.mrb[0].mxu0 %v6909
    %v7034 = vpop.f32.mrb[0].mxu0
    %v7035 = vadd.f32 %v1741, %v7034
    %v7036 = vpop.f32.mrb[0].mxu0
    %7037 = vmatprep.mubr.f32.mxu0 0.0
    %7038 = vmatmul.mubr.f32.gmra.mrb[0].mxu0 %v6912
    %v7039 = vpop.f32.mrb[0].mxu0
    %v7040 = vadd.f32 %v1741, %v7039
    %v7041 = vpop.f32.mrb[0].mxu0
    %7042 = vmatprep.mubr.f32.mxu0 0.0
    %7043 = vmatmul.mubr.f32.gmra.mrb[0].mxu0 %v6915
    %v7044 = vpop.f32.mrb[0].mxu0
    %v7045 = vadd.f32 %v1741, %v7044
    %v7046 = vpop.f32.mrb[0].mxu0
    %7047 = vmatprep.mubr.f32.mxu0 0.0
    %7048 = vmatmul.mubr.f32.gmra.mrb[0].mxu0 %v6918
    %v7049 = vpop.f32.mrb[0].mxu0
    %v7050 = vadd.f32 %v1741, %v7049
    %v7051 = vpop.f32.mrb[0].mxu0
    %7052 = vmatprep.mubr.f32.mxu0 0.0
    %7053 = vmatmul.mubr.f32.gmra.mrb[0].mxu0 %v6921
    %v7054 = vpop.f32.mrb[0].mxu0
    %v7055 = vadd.f32 %v1741, %v7054
    %v7056 = vpop.f32.mrb[0].mxu0
    %7057 = vmatprep.mubr.f32.mxu0 0.0
    %7058 = vmatmul.mubr.f32.gmra.mrb[0].mxu0 %v6924
    %v7059 = vpop.f32.mrb[0].mxu0
    %v7060 = vadd.f32 %v1741, %v7059
    %v7061 = vpop.f32.mrb[0].mxu0
    %7062 = vmatprep.mubr.f32.mxu0 0.0
    %7063 = vmatmul.mubr.f32.gmra.mrb[0].mxu0 %v6927
    %v7064 = vpop.f32.mrb[0].mxu0
    %v7065 = vadd.f32 %v1741, %v7064
    %v7066 = vpop.f32.mrb[0].mxu0
    %7067 = vmatprep.mubr.f32.mxu0 0.0
    %7068 = vmatmul.mubr.f32.gmra.mrb[0].mxu0 %v6930
    %v7069 = vpop.f32.mrb[0].mxu0
    %v7070 = vadd.f32 %v1741, %v7069
    %v7071 = vpop.f32.mrb[0].mxu0
    %7072 = vmatprep.mubr.f32.mxu0 0.0
    %7073 = vmatmul.mubr.f32.gmra.mrb[0].mxu0 %v6933
    %v7074 = vpop.f32.mrb[0].mxu0
    %v7075 = vadd.f32 %v1741, %v7074
    %v7076 = vpop.f32.mrb[0].mxu0
    %7077 = vmatprep.mubr.f32.mxu0 0.0
    %7078 = vmatmul.mubr.f32.gmra.mrb[0].mxu0 %v6936
    %v7079 = vpop.f32.mrb[0].mxu0
    %v7080 = vadd.f32 %v1741, %v7079
    %v7081 = vpop.f32.mrb[0].mxu0
    %7082 = vdwg.mxu0
    %v7083 = vmax.f32 %v7005, 0.0
    %v7084 = vmax.f32 %v7010, 0.0
    %v7085 = vmax.f32 %v7015, 0.0
    %v7086 = vmax.f32 %v7020, 0.0
    %v7087 = vmax.f32 %v7025, 0.0
    %v7088 = vmax.f32 %v7030, 0.0
    %v7089 = vmax.f32 %v7035, 0.0
    %v7090 = vmax.f32 %v7040, 0.0
    %v7091 = vmax.f32 %v7045, 0.0
    %v7092 = vmax.f32 %v7050, 0.0
    %v7093 = vmax.f32 %v7055, 0.0
    %v7094 = vmax.f32 %v7060, 0.0
    %v7095 = vmax.f32 %v7065, 0.0
    %v7096 = vmax.f32 %v7070, 0.0
    %v7097 = vmax.f32 %v7075, 0.0
    %v7098 = vmax.f32 %v7080, 0.0
    %v7115 = vrot.slane %v7083, 2
    %v7116 = vrot.slane %v7084, 2
    %v7117 = vsel %vm667, %v7115, %v7116
    %v7118 = vrot.slane %v7085, 2
    %v7119 = vsel %vm667, %v7116, %v7118
    %v7120 = vrot.slane %v7086, 2
    %v7121 = vsel %vm667, %v7118, %v7120
    %v7122 = vrot.slane %v7087, 2
    %v7123 = vsel %vm667, %v7120, %v7122
    %v7124 = vrot.slane %v7088, 2
    %v7125 = vsel %vm667, %v7122, %v7124
    %v7126 = vrot.slane %v7089, 2
    %v7127 = vsel %vm667, %v7124, %v7126
    %v7128 = vrot.slane %v7090, 2
    %v7129 = vsel %vm667, %v7126, %v7128
    %v7130 = vrot.slane %v7091, 2
    %v7131 = vsel %vm667, %v7128, %v7130
    %v7132 = vrot.slane %v7092, 2
    %v7133 = vsel %vm667, %v7130, %v7132
    %v7134 = vrot.slane %v7093, 2
    %v7135 = vsel %vm667, %v7132, %v7134
    %v7136 = vrot.slane %v7094, 2
    %v7137 = vsel %vm667, %v7134, %v7136
    %v7138 = vrot.slane %v7095, 2
    %v7139 = vsel %vm667, %v7136, %v7138
    %v7140 = vrot.slane %v7096, 2
    %v7141 = vsel %vm667, %v7138, %v7140
    %v7142 = vrot.slane %v7097, 2
    %v7143 = vsel %vm667, %v7140, %v7142
    %v7144 = vrot.slane %v7098, 2
    %v7145 = vsel %vm667, %v7142, %v7144
    %v7163 = vsel %vm667, 0.0, %v7115
    %v7164 = vsel %vm717, %v7144, 0.0
    %v7165 = vmul.f32 %v7163, %v2024
    %v7166 = vmul.f32 %v7117, %v2024
    %v7167 = vmul.f32 %v7119, %v2024
    %v7168 = vmul.f32 %v7121, %v2024
    %v7169 = vmul.f32 %v7123, %v2024
    %v7170 = vmul.f32 %v7125, %v2024
    %v7171 = vmul.f32 %v7127, %v2024
    %v7172 = vmul.f32 %v7129, %v2024
    %v7173 = vmul.f32 %v7131, %v2024
    %v7174 = vmul.f32 %v7133, %v2024
    %v7175 = vmul.f32 %v7135, %v2024
    %v7176 = vmul.f32 %v7137, %v2024
    %v7177 = vmul.f32 %v7139, %v2024
    %v7178 = vmul.f32 %v7141, %v2024
    %v7179 = vmul.f32 %v7143, %v2024
    %v7180 = vmul.f32 %v7145, %v2024
    %v7181 = vadd.f32 %v7165, 0.0
    %v7182 = vadd.f32 %v7166, 0.0
    %v7183 = vadd.f32 %v7167, 0.0
    %v7184 = vadd.f32 %v7168, 0.0
    %v7185 = vadd.f32 %v7169, 0.0
    %v7186 = vadd.f32 %v7170, 0.0
    %v7187 = vadd.f32 %v7171, 0.0
    %v7188 = vadd.f32 %v7172, 0.0
    %v7189 = vadd.f32 %v7173, 0.0
    %v7190 = vadd.f32 %v7174, 0.0
    %v7191 = vadd.f32 %v7175, 0.0
    %v7192 = vadd.f32 %v7176, 0.0
    %v7193 = vadd.f32 %v7177, 0.0
    %v7194 = vadd.f32 %v7178, 0.0
    %v7195 = vadd.f32 %v7179, 0.0
    %v7196 = vadd.f32 %v7180, 0.0
    %v7197 = vmul.f32 %v7163, %v2060
    %v7198 = vmul.f32 %v7117, %v2060
    %v7199 = vmul.f32 %v7119, %v2060
    %v7200 = vmul.f32 %v7121, %v2060
    %v7201 = vmul.f32 %v7123, %v2060
    %v7202 = vmul.f32 %v7125, %v2060
    %v7203 = vmul.f32 %v7127, %v2060
    %v7204 = vmul.f32 %v7129, %v2060
    %v7205 = vmul.f32 %v7131, %v2060
    %v7206 = vmul.f32 %v7133, %v2060
    %v7207 = vmul.f32 %v7135, %v2060
    %v7208 = vmul.f32 %v7137, %v2060
    %v7209 = vmul.f32 %v7139, %v2060
    %v7210 = vmul.f32 %v7141, %v2060
    %v7211 = vmul.f32 %v7143, %v2060
    %v7212 = vmul.f32 %v7145, %v2060
    %v7213 = vmul.f32 %v7164, %v2060
    %v7231 = vrot.slane %v7197, 5
    %v7232 = vrot.slane %v7198, 5
    %v7233 = vsel %vm717, %v7231, %v7232
    %v7234 = vrot.slane %v7199, 5
    %v7235 = vsel %vm717, %v7232, %v7234
    %v7236 = vrot.slane %v7200, 5
    %v7237 = vsel %vm717, %v7234, %v7236
    %v7238 = vrot.slane %v7201, 5
    %v7239 = vsel %vm717, %v7236, %v7238
    %v7240 = vrot.slane %v7202, 5
    %v7241 = vsel %vm717, %v7238, %v7240
    %v7242 = vrot.slane %v7203, 5
    %v7243 = vsel %vm717, %v7240, %v7242
    %v7244 = vrot.slane %v7204, 5
    %v7245 = vsel %vm717, %v7242, %v7244
    %v7246 = vrot.slane %v7205, 5
    %v7247 = vsel %vm717, %v7244, %v7246
    %v7248 = vrot.slane %v7206, 5
    %v7249 = vsel %vm717, %v7246, %v7248
    %v7250 = vrot.slane %v7207, 5
    %v7251 = vsel %vm717, %v7248, %v7250
    %v7252 = vrot.slane %v7208, 5
    %v7253 = vsel %vm717, %v7250, %v7252
    %v7254 = vrot.slane %v7209, 5
    %v7255 = vsel %vm717, %v7252, %v7254
    %v7256 = vrot.slane %v7210, 5
    %v7257 = vsel %vm717, %v7254, %v7256
    %v7258 = vrot.slane %v7211, 5
    %v7259 = vsel %vm717, %v7256, %v7258
    %v7260 = vrot.slane %v7212, 5
    %v7261 = vsel %vm717, %v7258, %v7260
    %v7262 = vrot.slane %v7213, 5
    %v7263 = vsel %vm717, %v7260, %v7262
    %v7280 = vadd.f32 %v7181, %v7233
    %v7281 = vadd.f32 %v7182, %v7235
    %v7282 = vadd.f32 %v7183, %v7237
    %v7283 = vadd.f32 %v7184, %v7239
    %v7284 = vadd.f32 %v7185, %v7241
    %v7285 = vadd.f32 %v7186, %v7243
    %v7286 = vadd.f32 %v7187, %v7245
    %v7287 = vadd.f32 %v7188, %v7247
    %v7288 = vadd.f32 %v7189, %v7249
    %v7289 = vadd.f32 %v7190, %v7251
    %v7290 = vadd.f32 %v7191, %v7253
    %v7291 = vadd.f32 %v7192, %v7255
    %v7292 = vadd.f32 %v7193, %v7257
    %v7293 = vadd.f32 %v7194, %v7259
    %v7294 = vadd.f32 %v7195, %v7261
    %v7295 = vadd.f32 %v7196, %v7263
    %v7296 = vmul.f32 %v7117, %v2163
    %v7297 = vmul.f32 %v7119, %v2163
    %v7298 = vmul.f32 %v7121, %v2163
    %v7299 = vmul.f32 %v7123, %v2163
    %v7300 = vmul.f32 %v7125, %v2163
    %v7301 = vmul.f32 %v7127, %v2163
    %v7302 = vmul.f32 %v7129, %v2163
    %v7303 = vmul.f32 %v7131, %v2163
    %v7304 = vmul.f32 %v7133, %v2163
    %v7305 = vmul.f32 %v7135, %v2163
    %v7306 = vmul.f32 %v7137, %v2163
    %v7307 = vmul.f32 %v7139, %v2163
    %v7308 = vmul.f32 %v7141, %v2163
    %v7309 = vmul.f32 %v7143, %v2163
    %v7310 = vmul.f32 %v7145, %v2163
    %v7311 = vmul.f32 %v7164, %v2163
    %v7328 = vrot.slane %v7296, 2
    %v7329 = vrot.slane %v7297, 2
    %v7330 = vsel %vm667, %v7328, %v7329
    %v7331 = vrot.slane %v7298, 2
    %v7332 = vsel %vm667, %v7329, %v7331
    %v7333 = vrot.slane %v7299, 2
    %v7334 = vsel %vm667, %v7331, %v7333
    %v7335 = vrot.slane %v7300, 2
    %v7336 = vsel %vm667, %v7333, %v7335
    %v7337 = vrot.slane %v7301, 2
    %v7338 = vsel %vm667, %v7335, %v7337
    %v7339 = vrot.slane %v7302, 2
    %v7340 = vsel %vm667, %v7337, %v7339
    %v7341 = vrot.slane %v7303, 2
    %v7342 = vsel %vm667, %v7339, %v7341
    %v7343 = vrot.slane %v7304, 2
    %v7344 = vsel %vm667, %v7341, %v7343
    %v7345 = vrot.slane %v7305, 2
    %v7346 = vsel %vm667, %v7343, %v7345
    %v7347 = vrot.slane %v7306, 2
    %v7348 = vsel %vm667, %v7345, %v7347
    %v7349 = vrot.slane %v7307, 2
    %v7350 = vsel %vm667, %v7347, %v7349
    %v7351 = vrot.slane %v7308, 2
    %v7352 = vsel %vm667, %v7349, %v7351
    %v7353 = vrot.slane %v7309, 2
    %v7354 = vsel %vm667, %v7351, %v7353
    %v7355 = vrot.slane %v7310, 2
    %v7356 = vsel %vm667, %v7353, %v7355
    %v7357 = vrot.slane %v7311, 2
    %v7358 = vsel %vm667, %v7355, %v7357
    %v7375 = vadd.f32 %v7280, %v7330
    %v7376 = vadd.f32 %v7281, %v7332
    %v7377 = vadd.f32 %v7282, %v7334
    %v7378 = vadd.f32 %v7283, %v7336
    %v7379 = vadd.f32 %v7284, %v7338
    %v7380 = vadd.f32 %v7285, %v7340
    %v7381 = vadd.f32 %v7286, %v7342
    %v7382 = vadd.f32 %v7287, %v7344
    %v7383 = vadd.f32 %v7288, %v7346
    %v7384 = vadd.f32 %v7289, %v7348
    %v7385 = vadd.f32 %v7290, %v7350
    %v7386 = vadd.f32 %v7291, %v7352
    %v7387 = vadd.f32 %v7292, %v7354
    %v7388 = vadd.f32 %v7293, %v7356
    %v7389 = vadd.f32 %v7294, %v7358
    %v7390 = vadd.f32 %v7295, %v7357
    %v7391 = vmul.f32 %v7163, %v2262
    %v7392 = vmul.f32 %v7117, %v2262
    %v7393 = vmul.f32 %v7119, %v2262
    %v7394 = vmul.f32 %v7121, %v2262
    %v7395 = vmul.f32 %v7123, %v2262
    %v7396 = vmul.f32 %v7125, %v2262
    %v7397 = vmul.f32 %v7127, %v2262
    %v7398 = vmul.f32 %v7129, %v2262
    %v7399 = vmul.f32 %v7131, %v2262
    %v7400 = vmul.f32 %v7133, %v2262
    %v7401 = vmul.f32 %v7135, %v2262
    %v7402 = vmul.f32 %v7137, %v2262
    %v7403 = vmul.f32 %v7139, %v2262
    %v7404 = vmul.f32 %v7141, %v2262
    %v7405 = vmul.f32 %v7143, %v2262
    %v7406 = vmul.f32 %v7145, %v2262
    %v7407 = vadd.f32 %v7391, 0.0
    %v7408 = vadd.f32 %v7392, 0.0
    %v7409 = vadd.f32 %v7393, 0.0
    %v7410 = vadd.f32 %v7394, 0.0
    %v7411 = vadd.f32 %v7395, 0.0
    %v7412 = vadd.f32 %v7396, 0.0
    %v7413 = vadd.f32 %v7397, 0.0
    %v7414 = vadd.f32 %v7398, 0.0
    %v7415 = vadd.f32 %v7399, 0.0
    %v7416 = vadd.f32 %v7400, 0.0
    %v7417 = vadd.f32 %v7401, 0.0
    %v7418 = vadd.f32 %v7402, 0.0
    %v7419 = vadd.f32 %v7403, 0.0
    %v7420 = vadd.f32 %v7404, 0.0
    %v7421 = vadd.f32 %v7405, 0.0
    %v7422 = vadd.f32 %v7406, 0.0
    %v7423 = vmul.f32 %v7163, %v2298
    %v7424 = vmul.f32 %v7117, %v2298
    %v7425 = vmul.f32 %v7119, %v2298
    %v7426 = vmul.f32 %v7121, %v2298
    %v7427 = vmul.f32 %v7123, %v2298
    %v7428 = vmul.f32 %v7125, %v2298
    %v7429 = vmul.f32 %v7127, %v2298
    %v7430 = vmul.f32 %v7129, %v2298
    %v7431 = vmul.f32 %v7131, %v2298
    %v7432 = vmul.f32 %v7133, %v2298
    %v7433 = vmul.f32 %v7135, %v2298
    %v7434 = vmul.f32 %v7137, %v2298
    %v7435 = vmul.f32 %v7139, %v2298
    %v7436 = vmul.f32 %v7141, %v2298
    %v7437 = vmul.f32 %v7143, %v2298
    %v7438 = vmul.f32 %v7145, %v2298
    %v7439 = vmul.f32 %v7164, %v2298
    %v7457 = vrot.slane %v7423, 5
    %v7458 = vrot.slane %v7424, 5
    %v7459 = vsel %vm717, %v7457, %v7458
    %v7460 = vrot.slane %v7425, 5
    %v7461 = vsel %vm717, %v7458, %v7460
    %v7462 = vrot.slane %v7426, 5
    %v7463 = vsel %vm717, %v7460, %v7462
    %v7464 = vrot.slane %v7427, 5
    %v7465 = vsel %vm717, %v7462, %v7464
    %v7466 = vrot.slane %v7428, 5
    %v7467 = vsel %vm717, %v7464, %v7466
    %v7468 = vrot.slane %v7429, 5
    %v7469 = vsel %vm717, %v7466, %v7468
    %v7470 = vrot.slane %v7430, 5
    %v7471 = vsel %vm717, %v7468, %v7470
    %v7472 = vrot.slane %v7431, 5
    %v7473 = vsel %vm717, %v7470, %v7472
    %v7474 = vrot.slane %v7432, 5
    %v7475 = vsel %vm717, %v7472, %v7474
    %v7476 = vrot.slane %v7433, 5
    %v7477 = vsel %vm717, %v7474, %v7476
    %v7478 = vrot.slane %v7434, 5
    %v7479 = vsel %vm717, %v7476, %v7478
    %v7480 = vrot.slane %v7435, 5
    %v7481 = vsel %vm717, %v7478, %v7480
    %v7482 = vrot.slane %v7436, 5
    %v7483 = vsel %vm717, %v7480, %v7482
    %v7484 = vrot.slane %v7437, 5
    %v7485 = vsel %vm717, %v7482, %v7484
    %v7486 = vrot.slane %v7438, 5
    %v7487 = vsel %vm717, %v7484, %v7486
    %v7488 = vrot.slane %v7439, 5
    %v7489 = vsel %vm717, %v7486, %v7488
    %v7506 = vadd.f32 %v7407, %v7459
    %v7507 = vadd.f32 %v7408, %v7461
    %v7508 = vadd.f32 %v7409, %v7463
    %v7509 = vadd.f32 %v7410, %v7465
    %v7510 = vadd.f32 %v7411, %v7467
    %v7511 = vadd.f32 %v7412, %v7469
    %v7512 = vadd.f32 %v7413, %v7471
    %v7513 = vadd.f32 %v7414, %v7473
    %v7514 = vadd.f32 %v7415, %v7475
    %v7515 = vadd.f32 %v7416, %v7477
    %v7516 = vadd.f32 %v7417, %v7479
    %v7517 = vadd.f32 %v7418, %v7481
    %v7518 = vadd.f32 %v7419, %v7483
    %v7519 = vadd.f32 %v7420, %v7485
    %v7520 = vadd.f32 %v7421, %v7487
    %v7521 = vadd.f32 %v7422, %v7489
    %v7522 = vmul.f32 %v7117, %v2401
    %v7523 = vmul.f32 %v7119, %v2401
    %v7524 = vmul.f32 %v7121, %v2401
    %v7525 = vmul.f32 %v7123, %v2401
    %v7526 = vmul.f32 %v7125, %v2401
    %v7527 = vmul.f32 %v7127, %v2401
    %v7528 = vmul.f32 %v7129, %v2401
    %v7529 = vmul.f32 %v7131, %v2401
    %v7530 = vmul.f32 %v7133, %v2401
    %v7531 = vmul.f32 %v7135, %v2401
    %v7532 = vmul.f32 %v7137, %v2401
    %v7533 = vmul.f32 %v7139, %v2401
    %v7534 = vmul.f32 %v7141, %v2401
    %v7535 = vmul.f32 %v7143, %v2401
    %v7536 = vmul.f32 %v7145, %v2401
    %v7537 = vmul.f32 %v7164, %v2401
    %v7554 = vrot.slane %v7522, 2
    %v7555 = vrot.slane %v7523, 2
    %v7556 = vsel %vm667, %v7554, %v7555
    %v7557 = vrot.slane %v7524, 2
    %v7558 = vsel %vm667, %v7555, %v7557
    %v7559 = vrot.slane %v7525, 2
    %v7560 = vsel %vm667, %v7557, %v7559
    %v7561 = vrot.slane %v7526, 2
    %v7562 = vsel %vm667, %v7559, %v7561
    %v7563 = vrot.slane %v7527, 2
    %v7564 = vsel %vm667, %v7561, %v7563
    %v7565 = vrot.slane %v7528, 2
    %v7566 = vsel %vm667, %v7563, %v7565
    %v7567 = vrot.slane %v7529, 2
    %v7568 = vsel %vm667, %v7565, %v7567
    %v7569 = vrot.slane %v7530, 2
    %v7570 = vsel %vm667, %v7567, %v7569
    %v7571 = vrot.slane %v7531, 2
    %v7572 = vsel %vm667, %v7569, %v7571
    %v7573 = vrot.slane %v7532, 2
    %v7574 = vsel %vm667, %v7571, %v7573
    %v7575 = vrot.slane %v7533, 2
    %v7576 = vsel %vm667, %v7573, %v7575
    %v7577 = vrot.slane %v7534, 2
    %v7578 = vsel %vm667, %v7575, %v7577
    %v7579 = vrot.slane %v7535, 2
    %v7580 = vsel %vm667, %v7577, %v7579
    %v7581 = vrot.slane %v7536, 2
    %v7582 = vsel %vm667, %v7579, %v7581
    %v7583 = vrot.slane %v7537, 2
    %v7584 = vsel %vm667, %v7581, %v7583
    %v7601 = vadd.f32 %v7506, %v7556
    %v7602 = vadd.f32 %v7507, %v7558
    %v7603 = vadd.f32 %v7508, %v7560
    %v7604 = vadd.f32 %v7509, %v7562
    %v7605 = vadd.f32 %v7510, %v7564
    %v7606 = vadd.f32 %v7511, %v7566
    %v7607 = vadd.f32 %v7512, %v7568
    %v7608 = vadd.f32 %v7513, %v7570
    %v7609 = vadd.f32 %v7514, %v7572
    %v7610 = vadd.f32 %v7515, %v7574
    %v7611 = vadd.f32 %v7516, %v7576
    %v7612 = vadd.f32 %v7517, %v7578
    %v7613 = vadd.f32 %v7518, %v7580
    %v7614 = vadd.f32 %v7519, %v7582
    %v7615 = vadd.f32 %v7520, %v7584
    %v7616 = vadd.f32 %v7521, %v7583
    %v7617 = vmul.f32 %v7163, %v2500
    %v7618 = vmul.f32 %v7117, %v2500
    %v7619 = vmul.f32 %v7119, %v2500
    %v7620 = vmul.f32 %v7121, %v2500
    %v7621 = vmul.f32 %v7123, %v2500
    %v7622 = vmul.f32 %v7125, %v2500
    %v7623 = vmul.f32 %v7127, %v2500
    %v7624 = vmul.f32 %v7129, %v2500
    %v7625 = vmul.f32 %v7131, %v2500
    %v7626 = vmul.f32 %v7133, %v2500
    %v7627 = vmul.f32 %v7135, %v2500
    %v7628 = vmul.f32 %v7137, %v2500
    %v7629 = vmul.f32 %v7139, %v2500
    %v7630 = vmul.f32 %v7141, %v2500
    %v7631 = vmul.f32 %v7143, %v2500
    %v7632 = vmul.f32 %v7145, %v2500
    %v7633 = vadd.f32 %v7617, 0.0
    %v7634 = vadd.f32 %v7618, 0.0
    %v7635 = vadd.f32 %v7619, 0.0
    %v7636 = vadd.f32 %v7620, 0.0
    %v7637 = vadd.f32 %v7621, 0.0
    %v7638 = vadd.f32 %v7622, 0.0
    %v7639 = vadd.f32 %v7623, 0.0
    %v7640 = vadd.f32 %v7624, 0.0
    %v7641 = vadd.f32 %v7625, 0.0
    %v7642 = vadd.f32 %v7626, 0.0
    %v7643 = vadd.f32 %v7627, 0.0
    %v7644 = vadd.f32 %v7628, 0.0
    %v7645 = vadd.f32 %v7629, 0.0
    %v7646 = vadd.f32 %v7630, 0.0
    %v7647 = vadd.f32 %v7631, 0.0
    %v7648 = vadd.f32 %v7632, 0.0
    %v7649 = vmul.f32 %v7163, %v2536
    %v7650 = vmul.f32 %v7117, %v2536
    %v7651 = vmul.f32 %v7119, %v2536
    %v7652 = vmul.f32 %v7121, %v2536
    %v7653 = vmul.f32 %v7123, %v2536
    %v7654 = vmul.f32 %v7125, %v2536
    %v7655 = vmul.f32 %v7127, %v2536
    %v7656 = vmul.f32 %v7129, %v2536
    %v7657 = vmul.f32 %v7131, %v2536
    %v7658 = vmul.f32 %v7133, %v2536
    %v7659 = vmul.f32 %v7135, %v2536
    %v7660 = vmul.f32 %v7137, %v2536
    %v7661 = vmul.f32 %v7139, %v2536
    %v7662 = vmul.f32 %v7141, %v2536
    %v7663 = vmul.f32 %v7143, %v2536
    %v7664 = vmul.f32 %v7145, %v2536
    %v7665 = vmul.f32 %v7164, %v2536
    %v7683 = vrot.slane %v7649, 5
    %v7684 = vrot.slane %v7650, 5
    %v7685 = vsel %vm717, %v7683, %v7684
    %v7686 = vrot.slane %v7651, 5
    %v7687 = vsel %vm717, %v7684, %v7686
    %v7688 = vrot.slane %v7652, 5
    %v7689 = vsel %vm717, %v7686, %v7688
    %v7690 = vrot.slane %v7653, 5
    %v7691 = vsel %vm717, %v7688, %v7690
    %v7692 = vrot.slane %v7654, 5
    %v7693 = vsel %vm717, %v7690, %v7692
    %v7694 = vrot.slane %v7655, 5
    %v7695 = vsel %vm717, %v7692, %v7694
    %v7696 = vrot.slane %v7656, 5
    %v7697 = vsel %vm717, %v7694, %v7696
    %v7698 = vrot.slane %v7657, 5
    %v7699 = vsel %vm717, %v7696, %v7698
    %v7700 = vrot.slane %v7658, 5
    %v7701 = vsel %vm717, %v7698, %v7700
    %v7702 = vrot.slane %v7659, 5
    %v7703 = vsel %vm717, %v7700, %v7702
    %v7704 = vrot.slane %v7660, 5
    %v7705 = vsel %vm717, %v7702, %v7704
    %v7706 = vrot.slane %v7661, 5
    %v7707 = vsel %vm717, %v7704, %v7706
    %v7708 = vrot.slane %v7662, 5
    %v7709 = vsel %vm717, %v7706, %v7708
    %v7710 = vrot.slane %v7663, 5
    %v7711 = vsel %vm717, %v7708, %v7710
    %v7712 = vrot.slane %v7664, 5
    %v7713 = vsel %vm717, %v7710, %v7712
    %v7714 = vrot.slane %v7665, 5
    %v7715 = vsel %vm717, %v7712, %v7714
    %v7732 = vadd.f32 %v7633, %v7685
    %v7733 = vadd.f32 %v7634, %v7687
    %v7734 = vadd.f32 %v7635, %v7689
    %v7735 = vadd.f32 %v7636, %v7691
    %v7736 = vadd.f32 %v7637, %v7693
    %v7737 = vadd.f32 %v7638, %v7695
    %v7738 = vadd.f32 %v7639, %v7697
    %v7739 = vadd.f32 %v7640, %v7699
    %v7740 = vadd.f32 %v7641, %v7701
    %v7741 = vadd.f32 %v7642, %v7703
    %v7742 = vadd.f32 %v7643, %v7705
    %v7743 = vadd.f32 %v7644, %v7707
    %v7744 = vadd.f32 %v7645, %v7709
    %v7745 = vadd.f32 %v7646, %v7711
    %v7746 = vadd.f32 %v7647, %v7713
    %v7747 = vadd.f32 %v7648, %v7715
    %v7748 = vmul.f32 %v7117, %v2639
    %v7749 = vmul.f32 %v7119, %v2639
    %v7750 = vmul.f32 %v7121, %v2639
    %v7751 = vmul.f32 %v7123, %v2639
    %v7752 = vmul.f32 %v7125, %v2639
    %v7753 = vmul.f32 %v7127, %v2639
    %v7754 = vmul.f32 %v7129, %v2639
    %v7755 = vmul.f32 %v7131, %v2639
    %v7756 = vmul.f32 %v7133, %v2639
    %v7757 = vmul.f32 %v7135, %v2639
    %v7758 = vmul.f32 %v7137, %v2639
    %v7759 = vmul.f32 %v7139, %v2639
    %v7760 = vmul.f32 %v7141, %v2639
    %v7761 = vmul.f32 %v7143, %v2639
    %v7762 = vmul.f32 %v7145, %v2639
    %v7763 = vmul.f32 %v7164, %v2639
    %v7780 = vrot.slane %v7748, 2
    %v7781 = vrot.slane %v7749, 2
    %v7782 = vsel %vm667, %v7780, %v7781
    %v7783 = vrot.slane %v7750, 2
    %v7784 = vsel %vm667, %v7781, %v7783
    %v7785 = vrot.slane %v7751, 2
    %v7786 = vsel %vm667, %v7783, %v7785
    %v7787 = vrot.slane %v7752, 2
    %v7788 = vsel %vm667, %v7785, %v7787
    %v7789 = vrot.slane %v7753, 2
    %v7790 = vsel %vm667, %v7787, %v7789
    %v7791 = vrot.slane %v7754, 2
    %v7792 = vsel %vm667, %v7789, %v7791
    %v7793 = vrot.slane %v7755, 2
    %v7794 = vsel %vm667, %v7791, %v7793
    %v7795 = vrot.slane %v7756, 2
    %v7796 = vsel %vm667, %v7793, %v7795
    %v7797 = vrot.slane %v7757, 2
    %v7798 = vsel %vm667, %v7795, %v7797
    %v7799 = vrot.slane %v7758, 2
    %v7800 = vsel %vm667, %v7797, %v7799
    %v7801 = vrot.slane %v7759, 2
    %v7802 = vsel %vm667, %v7799, %v7801
    %v7803 = vrot.slane %v7760, 2
    %v7804 = vsel %vm667, %v7801, %v7803
    %v7805 = vrot.slane %v7761, 2
    %v7806 = vsel %vm667, %v7803, %v7805
    %v7807 = vrot.slane %v7762, 2
    %v7808 = vsel %vm667, %v7805, %v7807
    %v7809 = vrot.slane %v7763, 2
    %v7810 = vsel %vm667, %v7807, %v7809
    %v7811 = vsel %vm667, %v7809, %v2705
    %v7828 = vadd.f32 %v7732, %v7782
    %v7829 = vadd.f32 %v7733, %v7784
    %v7830 = vadd.f32 %v7734, %v7786
    %v7831 = vadd.f32 %v7735, %v7788
    %v7832 = vadd.f32 %v7736, %v7790
    %v7833 = vadd.f32 %v7737, %v7792
    %v7834 = vadd.f32 %v7738, %v7794
    %v7835 = vadd.f32 %v7739, %v7796
    %v7836 = vadd.f32 %v7740, %v7798
    %v7837 = vadd.f32 %v7741, %v7800
    %v7838 = vadd.f32 %v7742, %v7802
    %v7839 = vadd.f32 %v7743, %v7804
    %v7840 = vadd.f32 %v7744, %v7806
    %v7841 = vadd.f32 %v7745, %v7808
    %v7842 = vadd.f32 %v7746, %v7810
    %v7843 = vadd.f32 %v7747, %v7811
    %v7844 = vmul.f32 %v7375, %v353
    %v7845 = vmul.f32 %v7376, %v354
    %v7846 = vmul.f32 %v7377, %v355
    %v7847 = vmul.f32 %v7378, %v356
    %v7848 = vmul.f32 %v7379, %v357
    %v7849 = vmul.f32 %v7380, %v358
    %v7850 = vmul.f32 %v7381, %v359
    %v7851 = vmul.f32 %v7382, %v360
    %v7852 = vmul.f32 %v7383, %v361
    %v7853 = vmul.f32 %v7384, %v362
    %v7854 = vmul.f32 %v7385, %v363
    %v7855 = vmul.f32 %v7386, %v364
    %v7856 = vmul.f32 %v7387, %v365
    %v7857 = vmul.f32 %v7388, %v366
    %v7858 = vmul.f32 %v7389, %v367
    %v7859 = vmul.f32 %v7390, %v368
    %v7876 = vrot.slane %v7601, 1
    %v7877 = vrot.slane %v7602, 1
    %v7878 = vsel %vm1469, %v7876, %v7877
    %v7879 = vrot.slane %v7603, 1
    %v7880 = vsel %vm1469, %v7877, %v7879
    %v7881 = vrot.slane %v7604, 1
    %v7882 = vsel %vm1469, %v7879, %v7881
    %v7883 = vrot.slane %v7605, 1
    %v7884 = vsel %vm1469, %v7881, %v7883
    %v7885 = vrot.slane %v7606, 1
    %v7886 = vsel %vm1469, %v7883, %v7885
    %v7887 = vrot.slane %v7607, 1
    %v7888 = vsel %vm1469, %v7885, %v7887
    %v7889 = vrot.slane %v7608, 1
    %v7890 = vsel %vm1469, %v7887, %v7889
    %v7891 = vrot.slane %v7609, 1
    %v7892 = vsel %vm1469, %v7889, %v7891
    %v7893 = vrot.slane %v7610, 1
    %v7894 = vsel %vm1469, %v7891, %v7893
    %v7895 = vrot.slane %v7611, 1
    %v7896 = vsel %vm1469, %v7893, %v7895
    %v7897 = vrot.slane %v7612, 1
    %v7898 = vsel %vm1469, %v7895, %v7897
    %v7899 = vrot.slane %v7613, 1
    %v7900 = vsel %vm1469, %v7897, %v7899
    %v7901 = vrot.slane %v7614, 1
    %v7902 = vsel %vm1469, %v7899, %v7901
    %v7903 = vrot.slane %v7615, 1
    %v7904 = vsel %vm1469, %v7901, %v7903
    %v7905 = vrot.slane %v7616, 1
    %v7906 = vsel %vm1469, %v7903, %v7905
    %v7923 = vadd.f32 %v7844, %v7878
    %v7924 = vadd.f32 %v7845, %v7880
    %v7925 = vadd.f32 %v7846, %v7882
    %v7926 = vadd.f32 %v7847, %v7884
    %v7927 = vadd.f32 %v7848, %v7886
    %v7928 = vadd.f32 %v7849, %v7888
    %v7929 = vadd.f32 %v7850, %v7890
    %v7930 = vadd.f32 %v7851, %v7892
    %v7931 = vadd.f32 %v7852, %v7894
    %v7932 = vadd.f32 %v7853, %v7896
    %v7933 = vadd.f32 %v7854, %v7898
    %v7934 = vadd.f32 %v7855, %v7900
    %v7935 = vadd.f32 %v7856, %v7902
    %v7936 = vadd.f32 %v7857, %v7904
    %v7937 = vadd.f32 %v7858, %v7906
    %v7938 = vadd.f32 %v7859, %v7905
    %v7939 = vmul.f32 %v7828, %v1550
    %v7940 = vmul.f32 %v7829, %v1552
    %v7941 = vmul.f32 %v7830, %v1554
    %v7942 = vmul.f32 %v7831, %v1556
    %v7943 = vmul.f32 %v7832, %v1558
    %v7944 = vmul.f32 %v7833, %v1560
    %v7945 = vmul.f32 %v7834, %v1562
    %v7946 = vmul.f32 %v7835, %v1564
    %v7947 = vmul.f32 %v7836, %v1566
    %v7948 = vmul.f32 %v7837, %v1568
    %v7949 = vmul.f32 %v7838, %v1570
    %v7950 = vmul.f32 %v7839, %v1572
    %v7951 = vmul.f32 %v7840, %v1574
    %v7952 = vmul.f32 %v7841, %v1576
    %v7953 = vmul.f32 %v7842, %v1578
    %v7954 = vmul.f32 %v7843, %v1580
    %v7971 = vrot.slane %v7939, 2
    %v7972 = vrot.slane %v7940, 2
    %v7973 = vsel %vm667, %v7971, %v7972
    %v7974 = vrot.slane %v7941, 2
    %v7975 = vsel %vm667, %v7972, %v7974
    %v7976 = vrot.slane %v7942, 2
    %v7977 = vsel %vm667, %v7974, %v7976
    %v7978 = vrot.slane %v7943, 2
    %v7979 = vsel %vm667, %v7976, %v7978
    %v7980 = vrot.slane %v7944, 2
    %v7981 = vsel %vm667, %v7978, %v7980
    %v7982 = vrot.slane %v7945, 2
    %v7983 = vsel %vm667, %v7980, %v7982
    %v7984 = vrot.slane %v7946, 2
    %v7985 = vsel %vm667, %v7982, %v7984
    %v7986 = vrot.slane %v7947, 2
    %v7987 = vsel %vm667, %v7984, %v7986
    %v7988 = vrot.slane %v7948, 2
    %v7989 = vsel %vm667, %v7986, %v7988
    %v7990 = vrot.slane %v7949, 2
    %v7991 = vsel %vm667, %v7988, %v7990
    %v7992 = vrot.slane %v7950, 2
    %v7993 = vsel %vm667, %v7990, %v7992
    %v7994 = vrot.slane %v7951, 2
    %v7995 = vsel %vm667, %v7992, %v7994
    %v7996 = vrot.slane %v7952, 2
    %v7997 = vsel %vm667, %v7994, %v7996
    %v7998 = vrot.slane %v7953, 2
    %v7999 = vsel %vm667, %v7996, %v7998
    %v8000 = vrot.slane %v7954, 2
    %v8001 = vsel %vm667, %v7998, %v8000
    %v8018 = vadd.f32 %v7923, %v7973
    %v8019 = vadd.f32 %v7924, %v7975
    %v8020 = vadd.f32 %v7925, %v7977
    %v8021 = vadd.f32 %v7926, %v7979
    %v8022 = vadd.f32 %v7927, %v7981
    %v8023 = vadd.f32 %v7928, %v7983
    %v8024 = vadd.f32 %v7929, %v7985
    %v8025 = vadd.f32 %v7930, %v7987
    %v8026 = vadd.f32 %v7931, %v7989
    %v8027 = vadd.f32 %v7932, %v7991
    %v8028 = vadd.f32 %v7933, %v7993
    %v8029 = vadd.f32 %v7934, %v7995
    %v8030 = vadd.f32 %v7935, %v7997
    %v8031 = vadd.f32 %v7936, %v7999
    %v8032 = vadd.f32 %v7937, %v8001
    %v8033 = vadd.f32 %v7938, %v8000
    %v8034 = vadd.f32 %v8018, %v2933
    %v8035 = vadd.f32 %v8019, %v2933
    %v8036 = vadd.f32 %v8020, %v2933
    %v8037 = vadd.f32 %v8021, %v2933
    %v8038 = vadd.f32 %v8022, %v2933
    %v8039 = vadd.f32 %v8023, %v2933
    %v8040 = vadd.f32 %v8024, %v2933
    %v8041 = vadd.f32 %v8025, %v2933
    %v8042 = vadd.f32 %v8026, %v2933
    %v8043 = vadd.f32 %v8027, %v2933
    %v8044 = vadd.f32 %v8028, %v2933
    %v8045 = vadd.f32 %v8029, %v2933
    %v8046 = vadd.f32 %v8030, %v2933
    %v8047 = vadd.f32 %v8031, %v2933
    %v8048 = vadd.f32 %v8032, %v2933
    %v8049 = vadd.f32 %v8033, %v2933
    %v8050 = vmax.f32 %v8034, 0.0
    %v8051 = vmax.f32 %v8035, 0.0
    %v8052 = vmax.f32 %v8036, 0.0
    %v8053 = vmax.f32 %v8037, 0.0
    %v8054 = vmax.f32 %v8038, 0.0
    %v8055 = vmax.f32 %v8039, 0.0
    %v8056 = vmax.f32 %v8040, 0.0
    %v8057 = vmax.f32 %v8041, 0.0
    %v8058 = vmax.f32 %v8042, 0.0
    %v8059 = vmax.f32 %v8043, 0.0
    %v8060 = vmax.f32 %v8044, 0.0
    %v8061 = vmax.f32 %v8045, 0.0
    %v8062 = vmax.f32 %v8046, 0.0
    %v8063 = vmax.f32 %v8047, 0.0
    %v8064 = vmax.f32 %v8048, 0.0
    %v8065 = vmax.f32 %v8049, 0.0
    %v8067 = vsel %vm1742, %v8050, 0
    %v8070 = vsel %vm1742, %v8051, 0
    %v8073 = vsel %vm1742, %v8052, 0
    %v8076 = vsel %vm1742, %v8053, 0
    %v8079 = vsel %vm1742, %v8054, 0
    %v8082 = vsel %vm1742, %v8055, 0
    %v8085 = vsel %vm1742, %v8056, 0
    %v8088 = vsel %vm1742, %v8057, 0
    %v8091 = vsel %vm1742, %v8058, 0
    %v8094 = vsel %vm1742, %v8059, 0
    %v8097 = vsel %vm1742, %v8060, 0
    %v8100 = vsel %vm1742, %v8061, 0
    %v8103 = vsel %vm1742, %v8062, 0
    %v8106 = vsel %vm1742, %v8063, 0
    %v8109 = vsel %vm1742, %v8064, 0
    %v8112 = vsel %vm1742, %v8065, 0
    %8114 = vmatprep.subr.mxu0 0.0
    %8115 = vmatpush1.msra.mxu0 %v2967
    %8116 = vmatprep.subr.mxu0 0.0
    %8117 = vmatpush1.msra.mxu0 %v2968
    %8118 = vmatprep.subr.mxu0 0.0
    %8119 = vmatpush1.msra.mxu0 %v2969
    %8120 = vmatprep.subr.mxu0 0.0
    %8121 = vmatpush1.msra.mxu0 %v2970
    %8122 = vmatprep.subr.mxu0 0.0
    %8123 = vmatpush1.msra.mxu0 %v2971
    %8124 = vmatprep.subr.mxu0 0.0
    %8125 = vmatpush1.msra.mxu0 %v2972
    %8126 = vmatprep.subr.mxu0 0.0
    %8127 = vmatpush1.msra.mxu0 %v2973
    %8128 = vmatprep.subr.mxu0 0.0
    %8129 = vmatpush1.msra.mxu0 %v2974
    %8130 = vmatprep.subr.mxu0 0.0
    %8131 = vmatpush1.msra.mxu0 0.0
    %8132 = vmatprep.subr.mxu0 0.0
    %8133 = vmatpush1.msra.mxu0 0.0
    %8134 = vmatprep.subr.mxu0 0.0
    %8135 = vmatpush1.msra.mxu0 0.0
    %8136 = vmatprep.subr.mxu0 0.0
    %8137 = vmatpush1.msra.mxu0 0.0
    %8138 = vmatprep.subr.mxu0 0.0
    %8139 = vmatpush1.msra.mxu0 0.0
    %8140 = vmatprep.subr.mxu0 0.0
    %8141 = vmatpush1.msra.mxu0 0.0
    %8142 = vmatprep.subr.mxu0 0.0
    %8143 = vmatpush1.msra.mxu0 0.0
    %8144 = vmatprep.subr.mxu0 0.0
    %8145 = vmatpush1.msra.mxu0 0.0
    %8146 = vmatprep.subr.mxu0 0.0
    %8147 = vmatpush1.msra.mxu0 0.0
    %8148 = vmatprep.subr.mxu0 0.0
    %8149 = vmatpush1.msra.mxu0 0.0
    %8150 = vmatprep.subr.mxu0 0.0
    %8151 = vmatpush1.msra.mxu0 0.0
    %8152 = vmatprep.subr.mxu0 0.0
    %8153 = vmatpush1.msra.mxu0 0.0
    %8154 = vmatprep.subr.mxu0 0.0
    %8155 = vmatpush1.msra.mxu0 0.0
    %8156 = vmatprep.subr.mxu0 0.0
    %8157 = vmatpush1.msra.mxu0 0.0
    %8158 = vmatprep.subr.mxu0 0.0
    %8159 = vmatpush1.msra.mxu0 0.0
    %8160 = vmatprep.subr.mxu0 0.0
    %8161 = vmatpush1.msra.mxu0 0.0
    %8162 = vmatprep.subr.mxu0 0.0
    %8163 = vmatpush1.msra.mxu0 0.0
    %8164 = vmatprep.subr.mxu0 0.0
    %8165 = vmatpush1.msra.mxu0 0.0
    %8166 = vmatprep.subr.mxu0 0.0
    %8167 = vmatpush1.msra.mxu0 0.0
    %8168 = vmatprep.subr.mxu0 0.0
    %8169 = vmatpush1.msra.mxu0 0.0
    %8170 = vmatprep.subr.mxu0 0.0
    %8171 = vmatpush1.msra.mxu0 0.0
    %8172 = vmatprep.subr.mxu0 0.0
    %8173 = vmatpush1.msra.mxu0 0.0
    %8174 = vmatprep.subr.mxu0 0.0
    %8175 = vmatpush1.msra.mxu0 0.0
    %8176 = vmatprep.subr.mxu0 0.0
    %8177 = vmatpush1.msra.mxu0 0.0
    %8178 = vmatprep.mubr.f32.mxu0 0.0
    %8179 = vmatmul.mubr.f32.gmra.mrb[0].mxu0 %v8067
    %v8180 = vpop.f32.mrb[0].mxu0
    %v8181 = vadd.f32 %v2979, %v8180
    %v8182 = vpop.f32.mrb[0].mxu0
    %8183 = vmatprep.mubr.f32.mxu0 0.0
    %8184 = vmatmul.mubr.f32.gmra.mrb[0].mxu0 %v8070
    %v8185 = vpop.f32.mrb[0].mxu0
    %v8186 = vadd.f32 %v2979, %v8185
    %v8187 = vpop.f32.mrb[0].mxu0
    %8188 = vmatprep.mubr.f32.mxu0 0.0
    %8189 = vmatmul.mubr.f32.gmra.mrb[0].mxu0 %v8073
    %v8190 = vpop.f32.mrb[0].mxu0
    %v8191 = vadd.f32 %v2979, %v8190
    %v8192 = vpop.f32.mrb[0].mxu0
    %8193 = vmatprep.mubr.f32.mxu0 0.0
    %8194 = vmatmul.mubr.f32.gmra.mrb[0].mxu0 %v8076
    %v8195 = vpop.f32.mrb[0].mxu0
    %v8196 = vadd.f32 %v2979, %v8195
    %v8197 = vpop.f32.mrb[0].mxu0
    %8198 = vmatprep.mubr.f32.mxu0 0.0
    %8199 = vmatmul.mubr.f32.gmra.mrb[0].mxu0 %v8079
    %v8200 = vpop.f32.mrb[0].mxu0
    %v8201 = vadd.f32 %v2979, %v8200
    %v8202 = vpop.f32.mrb[0].mxu0
    %8203 = vmatprep.mubr.f32.mxu0 0.0
    %8204 = vmatmul.mubr.f32.gmra.mrb[0].mxu0 %v8082
    %v8205 = vpop.f32.mrb[0].mxu0
    %v8206 = vadd.f32 %v2979, %v8205
    %v8207 = vpop.f32.mrb[0].mxu0
    %8208 = vmatprep.mubr.f32.mxu0 0.0
    %8209 = vmatmul.mubr.f32.gmra.mrb[0].mxu0 %v8085
    %v8210 = vpop.f32.mrb[0].mxu0
    %v8211 = vadd.f32 %v2979, %v8210
    %v8212 = vpop.f32.mrb[0].mxu0
    %8213 = vmatprep.mubr.f32.mxu0 0.0
    %8214 = vmatmul.mubr.f32.gmra.mrb[0].mxu0 %v8088
    %v8215 = vpop.f32.mrb[0].mxu0
    %v8216 = vadd.f32 %v2979, %v8215
    %v8217 = vpop.f32.mrb[0].mxu0
    %8218 = vmatprep.mubr.f32.mxu0 0.0
    %8219 = vmatmul.mubr.f32.gmra.mrb[0].mxu0 %v8091
    %v8220 = vpop.f32.mrb[0].mxu0
    %v8221 = vadd.f32 %v2979, %v8220
    %v8222 = vpop.f32.mrb[0].mxu0
    %8223 = vmatprep.mubr.f32.mxu0 0.0
    %8224 = vmatmul.mubr.f32.gmra.mrb[0].mxu0 %v8094
    %v8225 = vpop.f32.mrb[0].mxu0
    %v8226 = vadd.f32 %v2979, %v8225
    %v8227 = vpop.f32.mrb[0].mxu0
    %8228 = vmatprep.mubr.f32.mxu0 0.0
    %8229 = vmatmul.mubr.f32.gmra.mrb[0].mxu0 %v8097
    %v8230 = vpop.f32.mrb[0].mxu0
    %v8231 = vadd.f32 %v2979, %v8230
    %v8232 = vpop.f32.mrb[0].mxu0
    %8233 = vmatprep.mubr.f32.mxu0 0.0
    %8234 = vmatmul.mubr.f32.gmra.mrb[0].mxu0 %v8100
    %v8235 = vpop.f32.mrb[0].mxu0
    %v8236 = vadd.f32 %v2979, %v8235
    %v8237 = vpop.f32.mrb[0].mxu0
    %8238 = vmatprep.mubr.f32.mxu0 0.0
    %8239 = vmatmul.mubr.f32.gmra.mrb[0].mxu0 %v8103
    %v8240 = vpop.f32.mrb[0].mxu0
    %v8241 = vadd.f32 %v2979, %v8240
    %v8242 = vpop.f32.mrb[0].mxu0
    %8243 = vmatprep.mubr.f32.mxu0 0.0
    %8244 = vmatmul.mubr.f32.gmra.mrb[0].mxu0 %v8106
    %v8245 = vpop.f32.mrb[0].mxu0
    %v8246 = vadd.f32 %v2979, %v8245
    %v8247 = vpop.f32.mrb[0].mxu0
    %8248 = vmatprep.mubr.f32.mxu0 0.0
    %8249 = vmatmul.mubr.f32.gmra.mrb[0].mxu0 %v8109
    %v8250 = vpop.f32.mrb[0].mxu0
    %v8251 = vadd.f32 %v2979, %v8250
    %v8252 = vpop.f32.mrb[0].mxu0
    %8253 = vmatprep.mubr.f32.mxu0 0.0
    %8254 = vmatmul.mubr.f32.gmra.mrb[0].mxu0 %v8112
    %v8255 = vpop.f32.mrb[0].mxu0
    %v8256 = vadd.f32 %v2979, %v8255
    %v8257 = vpop.f32.mrb[0].mxu0
    %8258 = vdwg.mxu0
    %v8259 = vmax.f32 %v8181, 0.0
    %v8260 = vmax.f32 %v8186, 0.0
    %v8261 = vmax.f32 %v8191, 0.0
    %v8262 = vmax.f32 %v8196, 0.0
    %v8263 = vmax.f32 %v8201, 0.0
    %v8264 = vmax.f32 %v8206, 0.0
    %v8265 = vmax.f32 %v8211, 0.0
    %v8266 = vmax.f32 %v8216, 0.0
    %v8267 = vmax.f32 %v8221, 0.0
    %v8268 = vmax.f32 %v8226, 0.0
    %v8269 = vmax.f32 %v8231, 0.0
    %v8270 = vmax.f32 %v8236, 0.0
    %v8271 = vmax.f32 %v8241, 0.0
    %v8272 = vmax.f32 %v8246, 0.0
    %v8273 = vmax.f32 %v8251, 0.0
    %v8274 = vmax.f32 %v8256, 0.0
    %v8291 = vrot.slane %v8259, 2
    %v8292 = vrot.slane %v8260, 2
    %v8293 = vsel %vm667, %v8291, %v8292
    %v8294 = vrot.slane %v8261, 2
    %v8295 = vsel %vm667, %v8292, %v8294
    %v8296 = vrot.slane %v8262, 2
    %v8297 = vsel %vm667, %v8294, %v8296
    %v8298 = vrot.slane %v8263, 2
    %v8299 = vsel %vm667, %v8296, %v8298
    %v8300 = vrot.slane %v8264, 2
    %v8301 = vsel %vm667, %v8298, %v8300
    %v8302 = vrot.slane %v8265, 2
    %v8303 = vsel %vm667, %v8300, %v8302
    %v8304 = vrot.slane %v8266, 2
    %v8305 = vsel %vm667, %v8302, %v8304
    %v8306 = vrot.slane %v8267, 2
    %v8307 = vsel %vm667, %v8304, %v8306
    %v8308 = vrot.slane %v8268, 2
    %v8309 = vsel %vm667, %v8306, %v8308
    %v8310 = vrot.slane %v8269, 2
    %v8311 = vsel %vm667, %v8308, %v8310
    %v8312 = vrot.slane %v8270, 2
    %v8313 = vsel %vm667, %v8310, %v8312
    %v8314 = vrot.slane %v8271, 2
    %v8315 = vsel %vm667, %v8312, %v8314
    %v8316 = vrot.slane %v8272, 2
    %v8317 = vsel %vm667, %v8314, %v8316
    %v8318 = vrot.slane %v8273, 2
    %v8319 = vsel %vm667, %v8316, %v8318
    %v8320 = vrot.slane %v8274, 2
    %v8321 = vsel %vm667, %v8318, %v8320
    %v8339 = vsel %vm667, 0.0, %v8291
    %v8340 = vsel %vm717, %v8320, 0.0
    %v8341 = vmul.f32 %v8339, %v3261
    %v8342 = vmul.f32 %v8293, %v3261
    %v8343 = vmul.f32 %v8295, %v3261
    %v8344 = vmul.f32 %v8297, %v3261
    %v8345 = vmul.f32 %v8299, %v3261
    %v8346 = vmul.f32 %v8301, %v3261
    %v8347 = vmul.f32 %v8303, %v3261
    %v8348 = vmul.f32 %v8305, %v3261
    %v8349 = vmul.f32 %v8307, %v3261
    %v8350 = vmul.f32 %v8309, %v3261
    %v8351 = vmul.f32 %v8311, %v3261
    %v8352 = vmul.f32 %v8313, %v3261
    %v8353 = vmul.f32 %v8315, %v3261
    %v8354 = vmul.f32 %v8317, %v3261
    %v8355 = vmul.f32 %v8319, %v3261
    %v8356 = vmul.f32 %v8321, %v3261
    %v8357 = vadd.f32 %v8341, 0.0
    %v8358 = vadd.f32 %v8342, 0.0
    %v8359 = vadd.f32 %v8343, 0.0
    %v8360 = vadd.f32 %v8344, 0.0
    %v8361 = vadd.f32 %v8345, 0.0
    %v8362 = vadd.f32 %v8346, 0.0
    %v8363 = vadd.f32 %v8347, 0.0
    %v8364 = vadd.f32 %v8348, 0.0
    %v8365 = vadd.f32 %v8349, 0.0
    %v8366 = vadd.f32 %v8350, 0.0
    %v8367 = vadd.f32 %v8351, 0.0
    %v8368 = vadd.f32 %v8352, 0.0
    %v8369 = vadd.f32 %v8353, 0.0
    %v8370 = vadd.f32 %v8354, 0.0
    %v8371 = vadd.f32 %v8355, 0.0
    %v8372 = vadd.f32 %v8356, 0.0
    %v8373 = vmul.f32 %v8339, %v3297
    %v8374 = vmul.f32 %v8293, %v3297
    %v8375 = vmul.f32 %v8295, %v3297
    %v8376 = vmul.f32 %v8297, %v3297
    %v8377 = vmul.f32 %v8299, %v3297
    %v8378 = vmul.f32 %v8301, %v3297
    %v8379 = vmul.f32 %v8303, %v3297
    %v8380 = vmul.f32 %v8305, %v3297
    %v8381 = vmul.f32 %v8307, %v3297
    %v8382 = vmul.f32 %v8309, %v3297
    %v8383 = vmul.f32 %v8311, %v3297
    %v8384 = vmul.f32 %v8313, %v3297
    %v8385 = vmul.f32 %v8315, %v3297
    %v8386 = vmul.f32 %v8317, %v3297
    %v8387 = vmul.f32 %v8319, %v3297
    %v8388 = vmul.f32 %v8321, %v3297
    %v8389 = vmul.f32 %v8340, %v3297
    %v8407 = vrot.slane %v8373, 5
    %v8408 = vrot.slane %v8374, 5
    %v8409 = vsel %vm717, %v8407, %v8408
    %v8410 = vrot.slane %v8375, 5
    %v8411 = vsel %vm717, %v8408, %v8410
    %v8412 = vrot.slane %v8376, 5
    %v8413 = vsel %vm717, %v8410, %v8412
    %v8414 = vrot.slane %v8377, 5
    %v8415 = vsel %vm717, %v8412, %v8414
    %v8416 = vrot.slane %v8378, 5
    %v8417 = vsel %vm717, %v8414, %v8416
    %v8418 = vrot.slane %v8379, 5
    %v8419 = vsel %vm717, %v8416, %v8418
    %v8420 = vrot.slane %v8380, 5
    %v8421 = vsel %vm717, %v8418, %v8420
    %v8422 = vrot.slane %v8381, 5
    %v8423 = vsel %vm717, %v8420, %v8422
    %v8424 = vrot.slane %v8382, 5
    %v8425 = vsel %vm717, %v8422, %v8424
    %v8426 = vrot.slane %v8383, 5
    %v8427 = vsel %vm717, %v8424, %v8426
    %v8428 = vrot.slane %v8384, 5
    %v8429 = vsel %vm717, %v8426, %v8428
    %v8430 = vrot.slane %v8385, 5
    %v8431 = vsel %vm717, %v8428, %v8430
    %v8432 = vrot.slane %v8386, 5
    %v8433 = vsel %vm717, %v8430, %v8432
    %v8434 = vrot.slane %v8387, 5
    %v8435 = vsel %vm717, %v8432, %v8434
    %v8436 = vrot.slane %v8388, 5
    %v8437 = vsel %vm717, %v8434, %v8436
    %v8438 = vrot.slane %v8389, 5
    %v8439 = vsel %vm717, %v8436, %v8438
    %v8456 = vadd.f32 %v8357, %v8409
    %v8457 = vadd.f32 %v8358, %v8411
    %v8458 = vadd.f32 %v8359, %v8413
    %v8459 = vadd.f32 %v8360, %v8415
    %v8460 = vadd.f32 %v8361, %v8417
    %v8461 = vadd.f32 %v8362, %v8419
    %v8462 = vadd.f32 %v8363, %v8421
    %v8463 = vadd.f32 %v8364, %v8423
    %v8464 = vadd.f32 %v8365, %v8425
    %v8465 = vadd.f32 %v8366, %v8427
    %v8466 = vadd.f32 %v8367, %v8429
    %v8467 = vadd.f32 %v8368, %v8431
    %v8468 = vadd.f32 %v8369, %v8433
    %v8469 = vadd.f32 %v8370, %v8435
    %v8470 = vadd.f32 %v8371, %v8437
    %v8471 = vadd.f32 %v8372, %v8439
    %v8472 = vmul.f32 %v8293, %v3400
    %v8473 = vmul.f32 %v8295, %v3400
    %v8474 = vmul.f32 %v8297, %v3400
    %v8475 = vmul.f32 %v8299, %v3400
    %v8476 = vmul.f32 %v8301, %v3400
    %v8477 = vmul.f32 %v8303, %v3400
    %v8478 = vmul.f32 %v8305, %v3400
    %v8479 = vmul.f32 %v8307, %v3400
    %v8480 = vmul.f32 %v8309, %v3400
    %v8481 = vmul.f32 %v8311, %v3400
    %v8482 = vmul.f32 %v8313, %v3400
    %v8483 = vmul.f32 %v8315, %v3400
    %v8484 = vmul.f32 %v8317, %v3400
    %v8485 = vmul.f32 %v8319, %v3400
    %v8486 = vmul.f32 %v8321, %v3400
    %v8487 = vmul.f32 %v8340, %v3400
    %v8504 = vrot.slane %v8472, 2
    %v8505 = vrot.slane %v8473, 2
    %v8506 = vsel %vm667, %v8504, %v8505
    %v8507 = vrot.slane %v8474, 2
    %v8508 = vsel %vm667, %v8505, %v8507
    %v8509 = vrot.slane %v8475, 2
    %v8510 = vsel %vm667, %v8507, %v8509
    %v8511 = vrot.slane %v8476, 2
    %v8512 = vsel %vm667, %v8509, %v8511
    %v8513 = vrot.slane %v8477, 2
    %v8514 = vsel %vm667, %v8511, %v8513
    %v8515 = vrot.slane %v8478, 2
    %v8516 = vsel %vm667, %v8513, %v8515
    %v8517 = vrot.slane %v8479, 2
    %v8518 = vsel %vm667, %v8515, %v8517
    %v8519 = vrot.slane %v8480, 2
    %v8520 = vsel %vm667, %v8517, %v8519
    %v8521 = vrot.slane %v8481, 2
    %v8522 = vsel %vm667, %v8519, %v8521
    %v8523 = vrot.slane %v8482, 2
    %v8524 = vsel %vm667, %v8521, %v8523
    %v8525 = vrot.slane %v8483, 2
    %v8526 = vsel %vm667, %v8523, %v8525
    %v8527 = vrot.slane %v8484, 2
    %v8528 = vsel %vm667, %v8525, %v8527
    %v8529 = vrot.slane %v8485, 2
    %v8530 = vsel %vm667, %v8527, %v8529
    %v8531 = vrot.slane %v8486, 2
    %v8532 = vsel %vm667, %v8529, %v8531
    %v8533 = vrot.slane %v8487, 2
    %v8534 = vsel %vm667, %v8531, %v8533
    %v8551 = vadd.f32 %v8456, %v8506
    %v8552 = vadd.f32 %v8457, %v8508
    %v8553 = vadd.f32 %v8458, %v8510
    %v8554 = vadd.f32 %v8459, %v8512
    %v8555 = vadd.f32 %v8460, %v8514
    %v8556 = vadd.f32 %v8461, %v8516
    %v8557 = vadd.f32 %v8462, %v8518
    %v8558 = vadd.f32 %v8463, %v8520
    %v8559 = vadd.f32 %v8464, %v8522
    %v8560 = vadd.f32 %v8465, %v8524
    %v8561 = vadd.f32 %v8466, %v8526
    %v8562 = vadd.f32 %v8467, %v8528
    %v8563 = vadd.f32 %v8468, %v8530
    %v8564 = vadd.f32 %v8469, %v8532
    %v8565 = vadd.f32 %v8470, %v8534
    %v8566 = vadd.f32 %v8471, %v8533
    %v8567 = vmul.f32 %v8339, %v3499
    %v8568 = vmul.f32 %v8293, %v3499
    %v8569 = vmul.f32 %v8295, %v3499
    %v8570 = vmul.f32 %v8297, %v3499
    %v8571 = vmul.f32 %v8299, %v3499
    %v8572 = vmul.f32 %v8301, %v3499
    %v8573 = vmul.f32 %v8303, %v3499
    %v8574 = vmul.f32 %v8305, %v3499
    %v8575 = vmul.f32 %v8307, %v3499
    %v8576 = vmul.f32 %v8309, %v3499
    %v8577 = vmul.f32 %v8311, %v3499
    %v8578 = vmul.f32 %v8313, %v3499
    %v8579 = vmul.f32 %v8315, %v3499
    %v8580 = vmul.f32 %v8317, %v3499
    %v8581 = vmul.f32 %v8319, %v3499
    %v8582 = vmul.f32 %v8321, %v3499
    %v8583 = vadd.f32 %v8567, 0.0
    %v8584 = vadd.f32 %v8568, 0.0
    %v8585 = vadd.f32 %v8569, 0.0
    %v8586 = vadd.f32 %v8570, 0.0
    %v8587 = vadd.f32 %v8571, 0.0
    %v8588 = vadd.f32 %v8572, 0.0
    %v8589 = vadd.f32 %v8573, 0.0
    %v8590 = vadd.f32 %v8574, 0.0
    %v8591 = vadd.f32 %v8575, 0.0
    %v8592 = vadd.f32 %v8576, 0.0
    %v8593 = vadd.f32 %v8577, 0.0
    %v8594 = vadd.f32 %v8578, 0.0
    %v8595 = vadd.f32 %v8579, 0.0
    %v8596 = vadd.f32 %v8580, 0.0
    %v8597 = vadd.f32 %v8581, 0.0
    %v8598 = vadd.f32 %v8582, 0.0
    %v8599 = vmul.f32 %v8339, %v3535
    %v8600 = vmul.f32 %v8293, %v3535
    %v8601 = vmul.f32 %v8295, %v3535
    %v8602 = vmul.f32 %v8297, %v3535
    %v8603 = vmul.f32 %v8299, %v3535
    %v8604 = vmul.f32 %v8301, %v3535
    %v8605 = vmul.f32 %v8303, %v3535
    %v8606 = vmul.f32 %v8305, %v3535
    %v8607 = vmul.f32 %v8307, %v3535
    %v8608 = vmul.f32 %v8309, %v3535
    %v8609 = vmul.f32 %v8311, %v3535
    %v8610 = vmul.f32 %v8313, %v3535
    %v8611 = vmul.f32 %v8315, %v3535
    %v8612 = vmul.f32 %v8317, %v3535
    %v8613 = vmul.f32 %v8319, %v3535
    %v8614 = vmul.f32 %v8321, %v3535
    %v8615 = vmul.f32 %v8340, %v3535
    %v8633 = vrot.slane %v8599, 5
    %v8634 = vrot.slane %v8600, 5
    %v8635 = vsel %vm717, %v8633, %v8634
    %v8636 = vrot.slane %v8601, 5
    %v8637 = vsel %vm717, %v8634, %v8636
    %v8638 = vrot.slane %v8602, 5
    %v8639 = vsel %vm717, %v8636, %v8638
    %v8640 = vrot.slane %v8603, 5
    %v8641 = vsel %vm717, %v8638, %v8640
    %v8642 = vrot.slane %v8604, 5
    %v8643 = vsel %vm717, %v8640, %v8642
    %v8644 = vrot.slane %v8605, 5
    %v8645 = vsel %vm717, %v8642, %v8644
    %v8646 = vrot.slane %v8606, 5
    %v8647 = vsel %vm717, %v8644, %v8646
    %v8648 = vrot.slane %v8607, 5
    %v8649 = vsel %vm717, %v8646, %v8648
    %v8650 = vrot.slane %v8608, 5
    %v8651 = vsel %vm717, %v8648, %v8650
    %v8652 = vrot.slane %v8609, 5
    %v8653 = vsel %vm717, %v8650, %v8652
    %v8654 = vrot.slane %v8610, 5
    %v8655 = vsel %vm717, %v8652, %v8654
    %v8656 = vrot.slane %v8611, 5
    %v8657 = vsel %vm717, %v8654, %v8656
    %v8658 = vrot.slane %v8612, 5
    %v8659 = vsel %vm717, %v8656, %v8658
    %v8660 = vrot.slane %v8613, 5
    %v8661 = vsel %vm717, %v8658, %v8660
    %v8662 = vrot.slane %v8614, 5
    %v8663 = vsel %vm717, %v8660, %v8662
    %v8664 = vrot.slane %v8615, 5
    %v8665 = vsel %vm717, %v8662, %v8664
    %v8682 = vadd.f32 %v8583, %v8635
    %v8683 = vadd.f32 %v8584, %v8637
    %v8684 = vadd.f32 %v8585, %v8639
    %v8685 = vadd.f32 %v8586, %v8641
    %v8686 = vadd.f32 %v8587, %v8643
    %v8687 = vadd.f32 %v8588, %v8645
    %v8688 = vadd.f32 %v8589, %v8647
    %v8689 = vadd.f32 %v8590, %v8649
    %v8690 = vadd.f32 %v8591, %v8651
    %v8691 = vadd.f32 %v8592, %v8653
    %v8692 = vadd.f32 %v8593, %v8655
    %v8693 = vadd.f32 %v8594, %v8657
    %v8694 = vadd.f32 %v8595, %v8659
    %v8695 = vadd.f32 %v8596, %v8661
    %v8696 = vadd.f32 %v8597, %v8663
    %v8697 = vadd.f32 %v8598, %v8665
    %v8698 = vmul.f32 %v8293, %v3638
    %v8699 = vmul.f32 %v8295, %v3638
    %v8700 = vmul.f32 %v8297, %v3638
    %v8701 = vmul.f32 %v8299, %v3638
    %v8702 = vmul.f32 %v8301, %v3638
    %v8703 = vmul.f32 %v8303, %v3638
    %v8704 = vmul.f32 %v8305, %v3638
    %v8705 = vmul.f32 %v8307, %v3638
    %v8706 = vmul.f32 %v8309, %v3638
    %v8707 = vmul.f32 %v8311, %v3638
    %v8708 = vmul.f32 %v8313, %v3638
    %v8709 = vmul.f32 %v8315, %v3638
    %v8710 = vmul.f32 %v8317, %v3638
    %v8711 = vmul.f32 %v8319, %v3638
    %v8712 = vmul.f32 %v8321, %v3638
    %v8713 = vmul.f32 %v8340, %v3638
    %v8730 = vrot.slane %v8698, 2
    %v8731 = vrot.slane %v8699, 2
    %v8732 = vsel %vm667, %v8730, %v8731
    %v8733 = vrot.slane %v8700, 2
    %v8734 = vsel %vm667, %v8731, %v8733
    %v8735 = vrot.slane %v8701, 2
    %v8736 = vsel %vm667, %v8733, %v8735
    %v8737 = vrot.slane %v8702, 2
    %v8738 = vsel %vm667, %v8735, %v8737
    %v8739 = vrot.slane %v8703, 2
    %v8740 = vsel %vm667, %v8737, %v8739
    %v8741 = vrot.slane %v8704, 2
    %v8742 = vsel %vm667, %v8739, %v8741
    %v8743 = vrot.slane %v8705, 2
    %v8744 = vsel %vm667, %v8741, %v8743
    %v8745 = vrot.slane %v8706, 2
    %v8746 = vsel %vm667, %v8743, %v8745
    %v8747 = vrot.slane %v8707, 2
    %v8748 = vsel %vm667, %v8745, %v8747
    %v8749 = vrot.slane %v8708, 2
    %v8750 = vsel %vm667, %v8747, %v8749
    %v8751 = vrot.slane %v8709, 2
    %v8752 = vsel %vm667, %v8749, %v8751
    %v8753 = vrot.slane %v8710, 2
    %v8754 = vsel %vm667, %v8751, %v8753
    %v8755 = vrot.slane %v8711, 2
    %v8756 = vsel %vm667, %v8753, %v8755
    %v8757 = vrot.slane %v8712, 2
    %v8758 = vsel %vm667, %v8755, %v8757
    %v8759 = vrot.slane %v8713, 2
    %v8760 = vsel %vm667, %v8757, %v8759
    %v8777 = vadd.f32 %v8682, %v8732
    %v8778 = vadd.f32 %v8683, %v8734
    %v8779 = vadd.f32 %v8684, %v8736
    %v8780 = vadd.f32 %v8685, %v8738
    %v8781 = vadd.f32 %v8686, %v8740
    %v8782 = vadd.f32 %v8687, %v8742
    %v8783 = vadd.f32 %v8688, %v8744
    %v8784 = vadd.f32 %v8689, %v8746
    %v8785 = vadd.f32 %v8690, %v8748
    %v8786 = vadd.f32 %v8691, %v8750
    %v8787 = vadd.f32 %v8692, %v8752
    %v8788 = vadd.f32 %v8693, %v8754
    %v8789 = vadd.f32 %v8694, %v8756
    %v8790 = vadd.f32 %v8695, %v8758
    %v8791 = vadd.f32 %v8696, %v8760
    %v8792 = vadd.f32 %v8697, %v8759
    %v8793 = vmul.f32 %v8339, %v3737
    %v8794 = vmul.f32 %v8293, %v3737
    %v8795 = vmul.f32 %v8295, %v3737
    %v8796 = vmul.f32 %v8297, %v3737
    %v8797 = vmul.f32 %v8299, %v3737
    %v8798 = vmul.f32 %v8301, %v3737
    %v8799 = vmul.f32 %v8303, %v3737
    %v8800 = vmul.f32 %v8305, %v3737
    %v8801 = vmul.f32 %v8307, %v3737
    %v8802 = vmul.f32 %v8309, %v3737
    %v8803 = vmul.f32 %v8311, %v3737
    %v8804 = vmul.f32 %v8313, %v3737
    %v8805 = vmul.f32 %v8315, %v3737
    %v8806 = vmul.f32 %v8317, %v3737
    %v8807 = vmul.f32 %v8319, %v3737
    %v8808 = vmul.f32 %v8321, %v3737
    %v8809 = vadd.f32 %v8793, 0.0
    %v8810 = vadd.f32 %v8794, 0.0
    %v8811 = vadd.f32 %v8795, 0.0
    %v8812 = vadd.f32 %v8796, 0.0
    %v8813 = vadd.f32 %v8797, 0.0
    %v8814 = vadd.f32 %v8798, 0.0
    %v8815 = vadd.f32 %v8799, 0.0
    %v8816 = vadd.f32 %v8800, 0.0
    %v8817 = vadd.f32 %v8801, 0.0
    %v8818 = vadd.f32 %v8802, 0.0
    %v8819 = vadd.f32 %v8803, 0.0
    %v8820 = vadd.f32 %v8804, 0.0
    %v8821 = vadd.f32 %v8805, 0.0
    %v8822 = vadd.f32 %v8806, 0.0
    %v8823 = vadd.f32 %v8807, 0.0
    %v8824 = vadd.f32 %v8808, 0.0
    %v8825 = vmul.f32 %v8339, %v3773
    %v8826 = vmul.f32 %v8293, %v3773
    %v8827 = vmul.f32 %v8295, %v3773
    %v8828 = vmul.f32 %v8297, %v3773
    %v8829 = vmul.f32 %v8299, %v3773
    %v8830 = vmul.f32 %v8301, %v3773
    %v8831 = vmul.f32 %v8303, %v3773
    %v8832 = vmul.f32 %v8305, %v3773
    %v8833 = vmul.f32 %v8307, %v3773
    %v8834 = vmul.f32 %v8309, %v3773
    %v8835 = vmul.f32 %v8311, %v3773
    %v8836 = vmul.f32 %v8313, %v3773
    %v8837 = vmul.f32 %v8315, %v3773
    %v8838 = vmul.f32 %v8317, %v3773
    %v8839 = vmul.f32 %v8319, %v3773
    %v8840 = vmul.f32 %v8321, %v3773
    %v8841 = vmul.f32 %v8340, %v3773
    %v8859 = vrot.slane %v8825, 5
    %v8860 = vrot.slane %v8826, 5
    %v8861 = vsel %vm717, %v8859, %v8860
    %v8862 = vrot.slane %v8827, 5
    %v8863 = vsel %vm717, %v8860, %v8862
    %v8864 = vrot.slane %v8828, 5
    %v8865 = vsel %vm717, %v8862, %v8864
    %v8866 = vrot.slane %v8829, 5
    %v8867 = vsel %vm717, %v8864, %v8866
    %v8868 = vrot.slane %v8830, 5
    %v8869 = vsel %vm717, %v8866, %v8868
    %v8870 = vrot.slane %v8831, 5
    %v8871 = vsel %vm717, %v8868, %v8870
    %v8872 = vrot.slane %v8832, 5
    %v8873 = vsel %vm717, %v8870, %v8872
    %v8874 = vrot.slane %v8833, 5
    %v8875 = vsel %vm717, %v8872, %v8874
    %v8876 = vrot.slane %v8834, 5
    %v8877 = vsel %vm717, %v8874, %v8876
    %v8878 = vrot.slane %v8835, 5
    %v8879 = vsel %vm717, %v8876, %v8878
    %v8880 = vrot.slane %v8836, 5
    %v8881 = vsel %vm717, %v8878, %v8880
    %v8882 = vrot.slane %v8837, 5
    %v8883 = vsel %vm717, %v8880, %v8882
    %v8884 = vrot.slane %v8838, 5
    %v8885 = vsel %vm717, %v8882, %v8884
    %v8886 = vrot.slane %v8839, 5
    %v8887 = vsel %vm717, %v8884, %v8886
    %v8888 = vrot.slane %v8840, 5
    %v8889 = vsel %vm717, %v8886, %v8888
    %v8890 = vrot.slane %v8841, 5
    %v8891 = vsel %vm717, %v8888, %v8890
    %v8908 = vadd.f32 %v8809, %v8861
    %v8909 = vadd.f32 %v8810, %v8863
    %v8910 = vadd.f32 %v8811, %v8865
    %v8911 = vadd.f32 %v8812, %v8867
    %v8912 = vadd.f32 %v8813, %v8869
    %v8913 = vadd.f32 %v8814, %v8871
    %v8914 = vadd.f32 %v8815, %v8873
    %v8915 = vadd.f32 %v8816, %v8875
    %v8916 = vadd.f32 %v8817, %v8877
    %v8917 = vadd.f32 %v8818, %v8879
    %v8918 = vadd.f32 %v8819, %v8881
    %v8919 = vadd.f32 %v8820, %v8883
    %v8920 = vadd.f32 %v8821, %v8885
    %v8921 = vadd.f32 %v8822, %v8887
    %v8922 = vadd.f32 %v8823, %v8889
    %v8923 = vadd.f32 %v8824, %v8891
    %v8924 = vmul.f32 %v8293, %v3876
    %v8925 = vmul.f32 %v8295, %v3876
    %v8926 = vmul.f32 %v8297, %v3876
    %v8927 = vmul.f32 %v8299, %v3876
    %v8928 = vmul.f32 %v8301, %v3876
    %v8929 = vmul.f32 %v8303, %v3876
    %v8930 = vmul.f32 %v8305, %v3876
    %v8931 = vmul.f32 %v8307, %v3876
    %v8932 = vmul.f32 %v8309, %v3876
    %v8933 = vmul.f32 %v8311, %v3876
    %v8934 = vmul.f32 %v8313, %v3876
    %v8935 = vmul.f32 %v8315, %v3876
    %v8936 = vmul.f32 %v8317, %v3876
    %v8937 = vmul.f32 %v8319, %v3876
    %v8938 = vmul.f32 %v8321, %v3876
    %v8939 = vmul.f32 %v8340, %v3876
    %v8956 = vrot.slane %v8924, 2
    %v8957 = vrot.slane %v8925, 2
    %v8958 = vsel %vm667, %v8956, %v8957
    %v8959 = vrot.slane %v8926, 2
    %v8960 = vsel %vm667, %v8957, %v8959
    %v8961 = vrot.slane %v8927, 2
    %v8962 = vsel %vm667, %v8959, %v8961
    %v8963 = vrot.slane %v8928, 2
    %v8964 = vsel %vm667, %v8961, %v8963
    %v8965 = vrot.slane %v8929, 2
    %v8966 = vsel %vm667, %v8963, %v8965
    %v8967 = vrot.slane %v8930, 2
    %v8968 = vsel %vm667, %v8965, %v8967
    %v8969 = vrot.slane %v8931, 2
    %v8970 = vsel %vm667, %v8967, %v8969
    %v8971 = vrot.slane %v8932, 2
    %v8972 = vsel %vm667, %v8969, %v8971
    %v8973 = vrot.slane %v8933, 2
    %v8974 = vsel %vm667, %v8971, %v8973
    %v8975 = vrot.slane %v8934, 2
    %v8976 = vsel %vm667, %v8973, %v8975
    %v8977 = vrot.slane %v8935, 2
    %v8978 = vsel %vm667, %v8975, %v8977
    %v8979 = vrot.slane %v8936, 2
    %v8980 = vsel %vm667, %v8977, %v8979
    %v8981 = vrot.slane %v8937, 2
    %v8982 = vsel %vm667, %v8979, %v8981
    %v8983 = vrot.slane %v8938, 2
    %v8984 = vsel %vm667, %v8981, %v8983
    %v8985 = vrot.slane %v8939, 2
    %v8986 = vsel %vm667, %v8983, %v8985
    %v8987 = vsel %vm667, %v8985, %v3942
    %v9004 = vadd.f32 %v8908, %v8958
    %v9005 = vadd.f32 %v8909, %v8960
    %v9006 = vadd.f32 %v8910, %v8962
    %v9007 = vadd.f32 %v8911, %v8964
    %v9008 = vadd.f32 %v8912, %v8966
    %v9009 = vadd.f32 %v8913, %v8968
    %v9010 = vadd.f32 %v8914, %v8970
    %v9011 = vadd.f32 %v8915, %v8972
    %v9012 = vadd.f32 %v8916, %v8974
    %v9013 = vadd.f32 %v8917, %v8976
    %v9014 = vadd.f32 %v8918, %v8978
    %v9015 = vadd.f32 %v8919, %v8980
    %v9016 = vadd.f32 %v8920, %v8982
    %v9017 = vadd.f32 %v8921, %v8984
    %v9018 = vadd.f32 %v8922, %v8986
    %v9019 = vadd.f32 %v8923, %v8987
    %v9020 = vmul.f32 %v8551, %v353
    %v9021 = vmul.f32 %v8552, %v354
    %v9022 = vmul.f32 %v8553, %v355
    %v9023 = vmul.f32 %v8554, %v356
    %v9024 = vmul.f32 %v8555, %v357
    %v9025 = vmul.f32 %v8556, %v358
    %v9026 = vmul.f32 %v8557, %v359
    %v9027 = vmul.f32 %v8558, %v360
    %v9028 = vmul.f32 %v8559, %v361
    %v9029 = vmul.f32 %v8560, %v362
    %v9030 = vmul.f32 %v8561, %v363
    %v9031 = vmul.f32 %v8562, %v364
    %v9032 = vmul.f32 %v8563, %v365
    %v9033 = vmul.f32 %v8564, %v366
    %v9034 = vmul.f32 %v8565, %v367
    %v9035 = vmul.f32 %v8566, %v368
    %v9052 = vrot.slane %v8777, 1
    %v9053 = vrot.slane %v8778, 1
    %v9054 = vsel %vm1469, %v9052, %v9053
    %v9055 = vrot.slane %v8779, 1
    %v9056 = vsel %vm1469, %v9053, %v9055
    %v9057 = vrot.slane %v8780, 1
    %v9058 = vsel %vm1469, %v9055, %v9057
    %v9059 = vrot.slane %v8781, 1
    %v9060 = vsel %vm1469, %v9057, %v9059
    %v9061 = vrot.slane %v8782, 1
    %v9062 = vsel %vm1469, %v9059, %v9061
    %v9063 = vrot.slane %v8783, 1
    %v9064 = vsel %vm1469, %v9061, %v9063
    %v9065 = vrot.slane %v8784, 1
    %v9066 = vsel %vm1469, %v9063, %v9065
    %v9067 = vrot.slane %v8785, 1
    %v9068 = vsel %vm1469, %v9065, %v9067
    %v9069 = vrot.slane %v8786, 1
    %v9070 = vsel %vm1469, %v9067, %v9069
    %v9071 = vrot.slane %v8787, 1
    %v9072 = vsel %vm1469, %v9069, %v9071
    %v9073 = vrot.slane %v8788, 1
    %v9074 = vsel %vm1469, %v9071, %v9073
    %v9075 = vrot.slane %v8789, 1
    %v9076 = vsel %vm1469, %v9073, %v9075
    %v9077 = vrot.slane %v8790, 1
    %v9078 = vsel %vm1469, %v9075, %v9077
    %v9079 = vrot.slane %v8791, 1
    %v9080 = vsel %vm1469, %v9077, %v9079
    %v9081 = vrot.slane %v8792, 1
    %v9082 = vsel %vm1469, %v9079, %v9081
    %v9099 = vadd.f32 %v9020, %v9054
    %v9100 = vadd.f32 %v9021, %v9056
    %v9101 = vadd.f32 %v9022, %v9058
    %v9102 = vadd.f32 %v9023, %v9060
    %v9103 = vadd.f32 %v9024, %v9062
    %v9104 = vadd.f32 %v9025, %v9064
    %v9105 = vadd.f32 %v9026, %v9066
    %v9106 = vadd.f32 %v9027, %v9068
    %v9107 = vadd.f32 %v9028, %v9070
    %v9108 = vadd.f32 %v9029, %v9072
    %v9109 = vadd.f32 %v9030, %v9074
    %v9110 = vadd.f32 %v9031, %v9076
    %v9111 = vadd.f32 %v9032, %v9078
    %v9112 = vadd.f32 %v9033, %v9080
    %v9113 = vadd.f32 %v9034, %v9082
    %v9114 = vadd.f32 %v9035, %v9081
    %v9115 = vmul.f32 %v9004, %v1550
    %v9116 = vmul.f32 %v9005, %v1552
    %v9117 = vmul.f32 %v9006, %v1554
    %v9118 = vmul.f32 %v9007, %v1556
    %v9119 = vmul.f32 %v9008, %v1558
    %v9120 = vmul.f32 %v9009, %v1560
    %v9121 = vmul.f32 %v9010, %v1562
    %v9122 = vmul.f32 %v9011, %v1564
    %v9123 = vmul.f32 %v9012, %v1566
    %v9124 = vmul.f32 %v9013, %v1568
    %v9125 = vmul.f32 %v9014, %v1570
    %v9126 = vmul.f32 %v9015, %v1572
    %v9127 = vmul.f32 %v9016, %v1574
    %v9128 = vmul.f32 %v9017, %v1576
    %v9129 = vmul.f32 %v9018, %v1578
    %v9130 = vmul.f32 %v9019, %v1580
    %v9147 = vrot.slane %v9115, 2
    %v9148 = vrot.slane %v9116, 2
    %v9149 = vsel %vm667, %v9147, %v9148
    %v9150 = vrot.slane %v9117, 2
    %v9151 = vsel %vm667, %v9148, %v9150
    %v9152 = vrot.slane %v9118, 2
    %v9153 = vsel %vm667, %v9150, %v9152
    %v9154 = vrot.slane %v9119, 2
    %v9155 = vsel %vm667, %v9152, %v9154
    %v9156 = vrot.slane %v9120, 2
    %v9157 = vsel %vm667, %v9154, %v9156
    %v9158 = vrot.slane %v9121, 2
    %v9159 = vsel %vm667, %v9156, %v9158
    %v9160 = vrot.slane %v9122, 2
    %v9161 = vsel %vm667, %v9158, %v9160
    %v9162 = vrot.slane %v9123, 2
    %v9163 = vsel %vm667, %v9160, %v9162
    %v9164 = vrot.slane %v9124, 2
    %v9165 = vsel %vm667, %v9162, %v9164
    %v9166 = vrot.slane %v9125, 2
    %v9167 = vsel %vm667, %v9164, %v9166
    %v9168 = vrot.slane %v9126, 2
    %v9169 = vsel %vm667, %v9166, %v9168
    %v9170 = vrot.slane %v9127, 2
    %v9171 = vsel %vm667, %v9168, %v9170
    %v9172 = vrot.slane %v9128, 2
    %v9173 = vsel %vm667, %v9170, %v9172
    %v9174 = vrot.slane %v9129, 2
    %v9175 = vsel %vm667, %v9172, %v9174
    %v9176 = vrot.slane %v9130, 2
    %v9177 = vsel %vm667, %v9174, %v9176
    %v9194 = vadd.f32 %v9099, %v9149
    %v9195 = vadd.f32 %v9100, %v9151
    %v9196 = vadd.f32 %v9101, %v9153
    %v9197 = vadd.f32 %v9102, %v9155
    %v9198 = vadd.f32 %v9103, %v9157
    %v9199 = vadd.f32 %v9104, %v9159
    %v9200 = vadd.f32 %v9105, %v9161
    %v9201 = vadd.f32 %v9106, %v9163
    %v9202 = vadd.f32 %v9107, %v9165
    %v9203 = vadd.f32 %v9108, %v9167
    %v9204 = vadd.f32 %v9109, %v9169
    %v9205 = vadd.f32 %v9110, %v9171
    %v9206 = vadd.f32 %v9111, %v9173
    %v9207 = vadd.f32 %v9112, %v9175
    %v9208 = vadd.f32 %v9113, %v9177
    %v9209 = vadd.f32 %v9114, %v9176
    %v9210 = vadd.f32 %v9194, %v4170
    %v9211 = vadd.f32 %v9195, %v4170
    %v9212 = vadd.f32 %v9196, %v4170
    %v9213 = vadd.f32 %v9197, %v4170
    %v9214 = vadd.f32 %v9198, %v4170
    %v9215 = vadd.f32 %v9199, %v4170
    %v9216 = vadd.f32 %v9200, %v4170
    %v9217 = vadd.f32 %v9201, %v4170
    %v9218 = vadd.f32 %v9202, %v4170
    %v9219 = vadd.f32 %v9203, %v4170
    %v9220 = vadd.f32 %v9204, %v4170
    %v9221 = vadd.f32 %v9205, %v4170
    %v9222 = vadd.f32 %v9206, %v4170
    %v9223 = vadd.f32 %v9207, %v4170
    %v9224 = vadd.f32 %v9208, %v4170
    %v9225 = vadd.f32 %v9209, %v4170
    %v9226 = vmax.f32 %v9210, 0.0
    %v9227 = vmax.f32 %v9211, 0.0
    %v9228 = vmax.f32 %v9212, 0.0
    %v9229 = vmax.f32 %v9213, 0.0
    %v9230 = vmax.f32 %v9214, 0.0
    %v9231 = vmax.f32 %v9215, 0.0
    %v9232 = vmax.f32 %v9216, 0.0
    %v9233 = vmax.f32 %v9217, 0.0
    %v9234 = vmax.f32 %v9218, 0.0
    %v9235 = vmax.f32 %v9219, 0.0
    %v9236 = vmax.f32 %v9220, 0.0
    %v9237 = vmax.f32 %v9221, 0.0
    %v9238 = vmax.f32 %v9222, 0.0
    %v9239 = vmax.f32 %v9223, 0.0
    %v9240 = vmax.f32 %v9224, 0.0
    %v9241 = vmax.f32 %v9225, 0.0
    %v9243 = vsel %vm1742, %v9226, 0
    %v9246 = vsel %vm1742, %v9227, 0
    %v9249 = vsel %vm1742, %v9228, 0
    %v9252 = vsel %vm1742, %v9229, 0
    %v9255 = vsel %vm1742, %v9230, 0
    %v9258 = vsel %vm1742, %v9231, 0
    %v9261 = vsel %vm1742, %v9232, 0
    %v9264 = vsel %vm1742, %v9233, 0
    %v9267 = vsel %vm1742, %v9234, 0
    %v9270 = vsel %vm1742, %v9235, 0
    %v9273 = vsel %vm1742, %v9236, 0
    %v9276 = vsel %vm1742, %v9237, 0
    %v9279 = vsel %vm1742, %v9238, 0
    %v9282 = vsel %vm1742, %v9239, 0
    %v9285 = vsel %vm1742, %v9240, 0
    %v9288 = vsel %vm1742, %v9241, 0
    %9290 = vmatprep.subr.mxu0 0.0
    %9291 = vmatpush1.msra.mxu0 %v4204
    %9292 = vmatprep.subr.mxu0 0.0
    %9293 = vmatpush1.msra.mxu0 %v4205
    %9294 = vmatprep.subr.mxu0 0.0
    %9295 = vmatpush1.msra.mxu0 %v4206
    %9296 = vmatprep.subr.mxu0 0.0
    %9297 = vmatpush1.msra.mxu0 %v4207
    %9298 = vmatprep.subr.mxu0 0.0
    %9299 = vmatpush1.msra.mxu0 %v4208
    %9300 = vmatprep.subr.mxu0 0.0
    %9301 = vmatpush1.msra.mxu0 %v4209
    %9302 = vmatprep.subr.mxu0 0.0
    %9303 = vmatpush1.msra.mxu0 %v4210
    %9304 = vmatprep.subr.mxu0 0.0
    %9305 = vmatpush1.msra.mxu0 %v4211
    %9306 = vmatprep.subr.mxu0 0.0
    %9307 = vmatpush1.msra.mxu0 0.0
    %9308 = vmatprep.subr.mxu0 0.0
    %9309 = vmatpush1.msra.mxu0 0.0
    %9310 = vmatprep.subr.mxu0 0.0
    %9311 = vmatpush1.msra.mxu0 0.0
    %9312 = vmatprep.subr.mxu0 0.0
    %9313 = vmatpush1.msra.mxu0 0.0
    %9314 = vmatprep.subr.mxu0 0.0
    %9315 = vmatpush1.msra.mxu0 0.0
    %9316 = vmatprep.subr.mxu0 0.0
    %9317 = vmatpush1.msra.mxu0 0.0
    %9318 = vmatprep.subr.mxu0 0.0
    %9319 = vmatpush1.msra.mxu0 0.0
    %9320 = vmatprep.subr.mxu0 0.0
    %9321 = vmatpush1.msra.mxu0 0.0
    %9322 = vmatprep.subr.mxu0 0.0
    %9323 = vmatpush1.msra.mxu0 0.0
    %9324 = vmatprep.subr.mxu0 0.0
    %9325 = vmatpush1.msra.mxu0 0.0
    %9326 = vmatprep.subr.mxu0 0.0
    %9327 = vmatpush1.msra.mxu0 0.0
    %9328 = vmatprep.subr.mxu0 0.0
    %9329 = vmatpush1.msra.mxu0 0.0
    %9330 = vmatprep.subr.mxu0 0.0
    %9331 = vmatpush1.msra.mxu0 0.0
    %9332 = vmatprep.subr.mxu0 0.0
    %9333 = vmatpush1.msra.mxu0 0.0
    %9334 = vmatprep.subr.mxu0 0.0
    %9335 = vmatpush1.msra.mxu0 0.0
    %9336 = vmatprep.subr.mxu0 0.0
    %9337 = vmatpush1.msra.mxu0 0.0
    %9338 = vmatprep.subr.mxu0 0.0
    %9339 = vmatpush1.msra.mxu0 0.0
    %9340 = vmatprep.subr.mxu0 0.0
    %9341 = vmatpush1.msra.mxu0 0.0
    %9342 = vmatprep.subr.mxu0 0.0
    %9343 = vmatpush1.msra.mxu0 0.0
    %9344 = vmatprep.subr.mxu0 0.0
    %9345 = vmatpush1.msra.mxu0 0.0
    %9346 = vmatprep.subr.mxu0 0.0
    %9347 = vmatpush1.msra.mxu0 0.0
    %9348 = vmatprep.subr.mxu0 0.0
    %9349 = vmatpush1.msra.mxu0 0.0
    %9350 = vmatprep.subr.mxu0 0.0
    %9351 = vmatpush1.msra.mxu0 0.0
    %9352 = vmatprep.subr.mxu0 0.0
    %9353 = vmatpush1.msra.mxu0 0.0
    %9354 = vmatprep.mubr.f32.mxu0 0.0
    %9355 = vmatmul.mubr.f32.gmra.mrb[0].mxu0 %v9243
    %v9356 = vpop.f32.mrb[0].mxu0
    %v9357 = vadd.f32 %v4216, %v9356
    %v9358 = vpop.f32.mrb[0].mxu0
    %9359 = vmatprep.mubr.f32.mxu0 0.0
    %9360 = vmatmul.mubr.f32.gmra.mrb[0].mxu0 %v9246
    %v9361 = vpop.f32.mrb[0].mxu0
    %v9362 = vadd.f32 %v4216, %v9361
    %v9363 = vpop.f32.mrb[0].mxu0
    %9364 = vmatprep.mubr.f32.mxu0 0.0
    %9365 = vmatmul.mubr.f32.gmra.mrb[0].mxu0 %v9249
    %v9366 = vpop.f32.mrb[0].mxu0
    %v9367 = vadd.f32 %v4216, %v9366
    %v9368 = vpop.f32.mrb[0].mxu0
    %9369 = vmatprep.mubr.f32.mxu0 0.0
    %9370 = vmatmul.mubr.f32.gmra.mrb[0].mxu0 %v9252
    %v9371 = vpop.f32.mrb[0].mxu0
    %v9372 = vadd.f32 %v4216, %v9371
    %v9373 = vpop.f32.mrb[0].mxu0
    %9374 = vmatprep.mubr.f32.mxu0 0.0
    %9375 = vmatmul.mubr.f32.gmra.mrb[0].mxu0 %v9255
    %v9376 = vpop.f32.mrb[0].mxu0
    %v9377 = vadd.f32 %v4216, %v9376
    %v9378 = vpop.f32.mrb[0].mxu0
    %9379 = vmatprep.mubr.f32.mxu0 0.0
    %9380 = vmatmul.mubr.f32.gmra.mrb[0].mxu0 %v9258
    %v9381 = vpop.f32.mrb[0].mxu0
    %v9382 = vadd.f32 %v4216, %v9381
    %v9383 = vpop.f32.mrb[0].mxu0
    %9384 = vmatprep.mubr.f32.mxu0 0.0
    %9385 = vmatmul.mubr.f32.gmra.mrb[0].mxu0 %v9261
    %v9386 = vpop.f32.mrb[0].mxu0
    %v9387 = vadd.f32 %v4216, %v9386
    %v9388 = vpop.f32.mrb[0].mxu0
    %9389 = vmatprep.mubr.f32.mxu0 0.0
    %9390 = vmatmul.mubr.f32.gmra.mrb[0].mxu0 %v9264
    %v9391 = vpop.f32.mrb[0].mxu0
    %v9392 = vadd.f32 %v4216, %v9391
    %v9393 = vpop.f32.mrb[0].mxu0
    %9394 = vmatprep.mubr.f32.mxu0 0.0
    %9395 = vmatmul.mubr.f32.gmra.mrb[0].mxu0 %v9267
    %v9396 = vpop.f32.mrb[0].mxu0
    %v9397 = vadd.f32 %v4216, %v9396
    %v9398 = vpop.f32.mrb[0].mxu0
    %9399 = vmatprep.mubr.f32.mxu0 0.0
    %9400 = vmatmul.mubr.f32.gmra.mrb[0].mxu0 %v9270
    %v9401 = vpop.f32.mrb[0].mxu0
    %v9402 = vadd.f32 %v4216, %v9401
    %v9403 = vpop.f32.mrb[0].mxu0
    %9404 = vmatprep.mubr.f32.mxu0 0.0
    %9405 = vmatmul.mubr.f32.gmra.mrb[0].mxu0 %v9273
    %v9406 = vpop.f32.mrb[0].mxu0
    %v9407 = vadd.f32 %v4216, %v9406
    %v9408 = vpop.f32.mrb[0].mxu0
    %9409 = vmatprep.mubr.f32.mxu0 0.0
    %9410 = vmatmul.mubr.f32.gmra.mrb[0].mxu0 %v9276
    %v9411 = vpop.f32.mrb[0].mxu0
    %v9412 = vadd.f32 %v4216, %v9411
    %v9413 = vpop.f32.mrb[0].mxu0
    %9414 = vmatprep.mubr.f32.mxu0 0.0
    %9415 = vmatmul.mubr.f32.gmra.mrb[0].mxu0 %v9279
    %v9416 = vpop.f32.mrb[0].mxu0
    %v9417 = vadd.f32 %v4216, %v9416
    %v9418 = vpop.f32.mrb[0].mxu0
    %9419 = vmatprep.mubr.f32.mxu0 0.0
    %9420 = vmatmul.mubr.f32.gmra.mrb[0].mxu0 %v9282
    %v9421 = vpop.f32.mrb[0].mxu0
    %v9422 = vadd.f32 %v4216, %v9421
    %v9423 = vpop.f32.mrb[0].mxu0
    %9424 = vmatprep.mubr.f32.mxu0 0.0
    %9425 = vmatmul.mubr.f32.gmra.mrb[0].mxu0 %v9285
    %v9426 = vpop.f32.mrb[0].mxu0
    %v9427 = vadd.f32 %v4216, %v9426
    %v9428 = vpop.f32.mrb[0].mxu0
    %9429 = vmatprep.mubr.f32.mxu0 0.0
    %9430 = vmatmul.mubr.f32.gmra.mrb[0].mxu0 %v9288
    %v9431 = vpop.f32.mrb[0].mxu0
    %v9432 = vadd.f32 %v4216, %v9431
    %v9433 = vpop.f32.mrb[0].mxu0
    %9434 = vdwg.mxu0
    %v9435 = vmax.f32 %v9357, 0.0
    %v9436 = vmax.f32 %v9362, 0.0
    %v9437 = vmax.f32 %v9367, 0.0
    %v9438 = vmax.f32 %v9372, 0.0
    %v9439 = vmax.f32 %v9377, 0.0
    %v9440 = vmax.f32 %v9382, 0.0
    %v9441 = vmax.f32 %v9387, 0.0
    %v9442 = vmax.f32 %v9392, 0.0
    %v9443 = vmax.f32 %v9397, 0.0
    %v9444 = vmax.f32 %v9402, 0.0
    %v9445 = vmax.f32 %v9407, 0.0
    %v9446 = vmax.f32 %v9412, 0.0
    %v9447 = vmax.f32 %v9417, 0.0
    %v9448 = vmax.f32 %v9422, 0.0
    %v9449 = vmax.f32 %v9427, 0.0
    %v9450 = vmax.f32 %v9432, 0.0
    %v9467 = vrot.slane %v9435, 2
    %v9468 = vrot.slane %v9436, 2
    %v9469 = vsel %vm667, %v9467, %v9468
    %v9470 = vrot.slane %v9437, 2
    %v9471 = vsel %vm667, %v9468, %v9470
    %v9472 = vrot.slane %v9438, 2
    %v9473 = vsel %vm667, %v9470, %v9472
    %v9474 = vrot.slane %v9439, 2
    %v9475 = vsel %vm667, %v9472, %v9474
    %v9476 = vrot.slane %v9440, 2
    %v9477 = vsel %vm667, %v9474, %v9476
    %v9478 = vrot.slane %v9441, 2
    %v9479 = vsel %vm667, %v9476, %v9478
    %v9480 = vrot.slane %v9442, 2
    %v9481 = vsel %vm667, %v9478, %v9480
    %v9482 = vrot.slane %v9443, 2
    %v9483 = vsel %vm667, %v9480, %v9482
    %v9484 = vrot.slane %v9444, 2
    %v9485 = vsel %vm667, %v9482, %v9484
    %v9486 = vrot.slane %v9445, 2
    %v9487 = vsel %vm667, %v9484, %v9486
    %v9488 = vrot.slane %v9446, 2
    %v9489 = vsel %vm667, %v9486, %v9488
    %v9490 = vrot.slane %v9447, 2
    %v9491 = vsel %vm667, %v9488, %v9490
    %v9492 = vrot.slane %v9448, 2
    %v9493 = vsel %vm667, %v9490, %v9492
    %v9494 = vrot.slane %v9449, 2
    %v9495 = vsel %vm667, %v9492, %v9494
    %v9496 = vrot.slane %v9450, 2
    %v9497 = vsel %vm667, %v9494, %v9496
    %v9515 = vsel %vm667, 0.0, %v9467
    %v9516 = vsel %vm717, %v9496, 0.0
    %v9517 = vmul.f32 %v9515, %v4498
    %v9518 = vmul.f32 %v9469, %v4498
    %v9519 = vmul.f32 %v9471, %v4498
    %v9520 = vmul.f32 %v9473, %v4498
    %v9521 = vmul.f32 %v9475, %v4498
    %v9522 = vmul.f32 %v9477, %v4498
    %v9523 = vmul.f32 %v9479, %v4498
    %v9524 = vmul.f32 %v9481, %v4498
    %v9525 = vmul.f32 %v9483, %v4498
    %v9526 = vmul.f32 %v9485, %v4498
    %v9527 = vmul.f32 %v9487, %v4498
    %v9528 = vmul.f32 %v9489, %v4498
    %v9529 = vmul.f32 %v9491, %v4498
    %v9530 = vmul.f32 %v9493, %v4498
    %v9531 = vmul.f32 %v9495, %v4498
    %v9532 = vmul.f32 %v9497, %v4498
    %v9533 = vadd.f32 %v9517, 0.0
    %v9534 = vadd.f32 %v9518, 0.0
    %v9535 = vadd.f32 %v9519, 0.0
    %v9536 = vadd.f32 %v9520, 0.0
    %v9537 = vadd.f32 %v9521, 0.0
    %v9538 = vadd.f32 %v9522, 0.0
    %v9539 = vadd.f32 %v9523, 0.0
    %v9540 = vadd.f32 %v9524, 0.0
    %v9541 = vadd.f32 %v9525, 0.0
    %v9542 = vadd.f32 %v9526, 0.0
    %v9543 = vadd.f32 %v9527, 0.0
    %v9544 = vadd.f32 %v9528, 0.0
    %v9545 = vadd.f32 %v9529, 0.0
    %v9546 = vadd.f32 %v9530, 0.0
    %v9547 = vadd.f32 %v9531, 0.0
    %v9548 = vadd.f32 %v9532, 0.0
    %v9549 = vmul.f32 %v9515, %v4534
    %v9550 = vmul.f32 %v9469, %v4534
    %v9551 = vmul.f32 %v9471, %v4534
    %v9552 = vmul.f32 %v9473, %v4534
    %v9553 = vmul.f32 %v9475, %v4534
    %v9554 = vmul.f32 %v9477, %v4534
    %v9555 = vmul.f32 %v9479, %v4534
    %v9556 = vmul.f32 %v9481, %v4534
    %v9557 = vmul.f32 %v9483, %v4534
    %v9558 = vmul.f32 %v9485, %v4534
    %v9559 = vmul.f32 %v9487, %v4534
    %v9560 = vmul.f32 %v9489, %v4534
    %v9561 = vmul.f32 %v9491, %v4534
    %v9562 = vmul.f32 %v9493, %v4534
    %v9563 = vmul.f32 %v9495, %v4534
    %v9564 = vmul.f32 %v9497, %v4534
    %v9565 = vmul.f32 %v9516, %v4534
    %v9583 = vrot.slane %v9549, 5
    %v9584 = vrot.slane %v9550, 5
    %v9585 = vsel %vm717, %v9583, %v9584
    %v9586 = vrot.slane %v9551, 5
    %v9587 = vsel %vm717, %v9584, %v9586
    %v9588 = vrot.slane %v9552, 5
    %v9589 = vsel %vm717, %v9586, %v9588
    %v9590 = vrot.slane %v9553, 5
    %v9591 = vsel %vm717, %v9588, %v9590
    %v9592 = vrot.slane %v9554, 5
    %v9593 = vsel %vm717, %v9590, %v9592
    %v9594 = vrot.slane %v9555, 5
    %v9595 = vsel %vm717, %v9592, %v9594
    %v9596 = vrot.slane %v9556, 5
    %v9597 = vsel %vm717, %v9594, %v9596
    %v9598 = vrot.slane %v9557, 5
    %v9599 = vsel %vm717, %v9596, %v9598
    %v9600 = vrot.slane %v9558, 5
    %v9601 = vsel %vm717, %v9598, %v9600
    %v9602 = vrot.slane %v9559, 5
    %v9603 = vsel %vm717, %v9600, %v9602
    %v9604 = vrot.slane %v9560, 5
    %v9605 = vsel %vm717, %v9602, %v9604
    %v9606 = vrot.slane %v9561, 5
    %v9607 = vsel %vm717, %v9604, %v9606
    %v9608 = vrot.slane %v9562, 5
    %v9609 = vsel %vm717, %v9606, %v9608
    %v9610 = vrot.slane %v9563, 5
    %v9611 = vsel %vm717, %v9608, %v9610
    %v9612 = vrot.slane %v9564, 5
    %v9613 = vsel %vm717, %v9610, %v9612
    %v9614 = vrot.slane %v9565, 5
    %v9615 = vsel %vm717, %v9612, %v9614
    %v9632 = vadd.f32 %v9533, %v9585
    %v9633 = vadd.f32 %v9534, %v9587
    %v9634 = vadd.f32 %v9535, %v9589
    %v9635 = vadd.f32 %v9536, %v9591
    %v9636 = vadd.f32 %v9537, %v9593
    %v9637 = vadd.f32 %v9538, %v9595
    %v9638 = vadd.f32 %v9539, %v9597
    %v9639 = vadd.f32 %v9540, %v9599
    %v9640 = vadd.f32 %v9541, %v9601
    %v9641 = vadd.f32 %v9542, %v9603
    %v9642 = vadd.f32 %v9543, %v9605
    %v9643 = vadd.f32 %v9544, %v9607
    %v9644 = vadd.f32 %v9545, %v9609
    %v9645 = vadd.f32 %v9546, %v9611
    %v9646 = vadd.f32 %v9547, %v9613
    %v9647 = vadd.f32 %v9548, %v9615
    %v9648 = vmul.f32 %v9469, %v4637
    %v9649 = vmul.f32 %v9471, %v4637
    %v9650 = vmul.f32 %v9473, %v4637
    %v9651 = vmul.f32 %v9475, %v4637
    %v9652 = vmul.f32 %v9477, %v4637
    %v9653 = vmul.f32 %v9479, %v4637
    %v9654 = vmul.f32 %v9481, %v4637
    %v9655 = vmul.f32 %v9483, %v4637
    %v9656 = vmul.f32 %v9485, %v4637
    %v9657 = vmul.f32 %v9487, %v4637
    %v9658 = vmul.f32 %v9489, %v4637
    %v9659 = vmul.f32 %v9491, %v4637
    %v9660 = vmul.f32 %v9493, %v4637
    %v9661 = vmul.f32 %v9495, %v4637
    %v9662 = vmul.f32 %v9497, %v4637
    %v9663 = vmul.f32 %v9516, %v4637
    %v9680 = vrot.slane %v9648, 2
    %v9681 = vrot.slane %v9649, 2
    %v9682 = vsel %vm667, %v9680, %v9681
    %v9683 = vrot.slane %v9650, 2
    %v9684 = vsel %vm667, %v9681, %v9683
    %v9685 = vrot.slane %v9651, 2
    %v9686 = vsel %vm667, %v9683, %v9685
    %v9687 = vrot.slane %v9652, 2
    %v9688 = vsel %vm667, %v9685, %v9687
    %v9689 = vrot.slane %v9653, 2
    %v9690 = vsel %vm667, %v9687, %v9689
    %v9691 = vrot.slane %v9654, 2
    %v9692 = vsel %vm667, %v9689, %v9691
    %v9693 = vrot.slane %v9655, 2
    %v9694 = vsel %vm667, %v9691, %v9693
    %v9695 = vrot.slane %v9656, 2
    %v9696 = vsel %vm667, %v9693, %v9695
    %v9697 = vrot.slane %v9657, 2
    %v9698 = vsel %vm667, %v9695, %v9697
    %v9699 = vrot.slane %v9658, 2
    %v9700 = vsel %vm667, %v9697, %v9699
    %v9701 = vrot.slane %v9659, 2
    %v9702 = vsel %vm667, %v9699, %v9701
    %v9703 = vrot.slane %v9660, 2
    %v9704 = vsel %vm667, %v9701, %v9703
    %v9705 = vrot.slane %v9661, 2
    %v9706 = vsel %vm667, %v9703, %v9705
    %v9707 = vrot.slane %v9662, 2
    %v9708 = vsel %vm667, %v9705, %v9707
    %v9709 = vrot.slane %v9663, 2
    %v9710 = vsel %vm667, %v9707, %v9709
    %v9727 = vadd.f32 %v9632, %v9682
    %v9728 = vadd.f32 %v9633, %v9684
    %v9729 = vadd.f32 %v9634, %v9686
    %v9730 = vadd.f32 %v9635, %v9688
    %v9731 = vadd.f32 %v9636, %v9690
    %v9732 = vadd.f32 %v9637, %v9692
    %v9733 = vadd.f32 %v9638, %v9694
    %v9734 = vadd.f32 %v9639, %v9696
    %v9735 = vadd.f32 %v9640, %v9698
    %v9736 = vadd.f32 %v9641, %v9700
    %v9737 = vadd.f32 %v9642, %v9702
    %v9738 = vadd.f32 %v9643, %v9704
    %v9739 = vadd.f32 %v9644, %v9706
    %v9740 = vadd.f32 %v9645, %v9708
    %v9741 = vadd.f32 %v9646, %v9710
    %v9742 = vadd.f32 %v9647, %v9709
    %v9743 = vmul.f32 %v9515, %v4736
    %v9744 = vmul.f32 %v9469, %v4736
    %v9745 = vmul.f32 %v9471, %v4736
    %v9746 = vmul.f32 %v9473, %v4736
    %v9747 = vmul.f32 %v9475, %v4736
    %v9748 = vmul.f32 %v9477, %v4736
    %v9749 = vmul.f32 %v9479, %v4736
    %v9750 = vmul.f32 %v9481, %v4736
    %v9751 = vmul.f32 %v9483, %v4736
    %v9752 = vmul.f32 %v9485, %v4736
    %v9753 = vmul.f32 %v9487, %v4736
    %v9754 = vmul.f32 %v9489, %v4736
    %v9755 = vmul.f32 %v9491, %v4736
    %v9756 = vmul.f32 %v9493, %v4736
    %v9757 = vmul.f32 %v9495, %v4736
    %v9758 = vmul.f32 %v9497, %v4736
    %v9759 = vadd.f32 %v9743, 0.0
    %v9760 = vadd.f32 %v9744, 0.0
    %v9761 = vadd.f32 %v9745, 0.0
    %v9762 = vadd.f32 %v9746, 0.0
    %v9763 = vadd.f32 %v9747, 0.0
    %v9764 = vadd.f32 %v9748, 0.0
    %v9765 = vadd.f32 %v9749, 0.0
    %v9766 = vadd.f32 %v9750, 0.0
    %v9767 = vadd.f32 %v9751, 0.0
    %v9768 = vadd.f32 %v9752, 0.0
    %v9769 = vadd.f32 %v9753, 0.0
    %v9770 = vadd.f32 %v9754, 0.0
    %v9771 = vadd.f32 %v9755, 0.0
    %v9772 = vadd.f32 %v9756, 0.0
    %v9773 = vadd.f32 %v9757, 0.0
    %v9774 = vadd.f32 %v9758, 0.0
    %v9775 = vmul.f32 %v9515, %v4772
    %v9776 = vmul.f32 %v9469, %v4772
    %v9777 = vmul.f32 %v9471, %v4772
    %v9778 = vmul.f32 %v9473, %v4772
    %v9779 = vmul.f32 %v9475, %v4772
    %v9780 = vmul.f32 %v9477, %v4772
    %v9781 = vmul.f32 %v9479, %v4772
    %v9782 = vmul.f32 %v9481, %v4772
    %v9783 = vmul.f32 %v9483, %v4772
    %v9784 = vmul.f32 %v9485, %v4772
    %v9785 = vmul.f32 %v9487, %v4772
    %v9786 = vmul.f32 %v9489, %v4772
    %v9787 = vmul.f32 %v9491, %v4772
    %v9788 = vmul.f32 %v9493, %v4772
    %v9789 = vmul.f32 %v9495, %v4772
    %v9790 = vmul.f32 %v9497, %v4772
    %v9791 = vmul.f32 %v9516, %v4772
    %v9809 = vrot.slane %v9775, 5
    %v9810 = vrot.slane %v9776, 5
    %v9811 = vsel %vm717, %v9809, %v9810
    %v9812 = vrot.slane %v9777, 5
    %v9813 = vsel %vm717, %v9810, %v9812
    %v9814 = vrot.slane %v9778, 5
    %v9815 = vsel %vm717, %v9812, %v9814
    %v9816 = vrot.slane %v9779, 5
    %v9817 = vsel %vm717, %v9814, %v9816
    %v9818 = vrot.slane %v9780, 5
    %v9819 = vsel %vm717, %v9816, %v9818
    %v9820 = vrot.slane %v9781, 5
    %v9821 = vsel %vm717, %v9818, %v9820
    %v9822 = vrot.slane %v9782, 5
    %v9823 = vsel %vm717, %v9820, %v9822
    %v9824 = vrot.slane %v9783, 5
    %v9825 = vsel %vm717, %v9822, %v9824
    %v9826 = vrot.slane %v9784, 5
    %v9827 = vsel %vm717, %v9824, %v9826
    %v9828 = vrot.slane %v9785, 5
    %v9829 = vsel %vm717, %v9826, %v9828
    %v9830 = vrot.slane %v9786, 5
    %v9831 = vsel %vm717, %v9828, %v9830
    %v9832 = vrot.slane %v9787, 5
    %v9833 = vsel %vm717, %v9830, %v9832
    %v9834 = vrot.slane %v9788, 5
    %v9835 = vsel %vm717, %v9832, %v9834
    %v9836 = vrot.slane %v9789, 5
    %v9837 = vsel %vm717, %v9834, %v9836
    %v9838 = vrot.slane %v9790, 5
    %v9839 = vsel %vm717, %v9836, %v9838
    %v9840 = vrot.slane %v9791, 5
    %v9841 = vsel %vm717, %v9838, %v9840
    %v9858 = vadd.f32 %v9759, %v9811
    %v9859 = vadd.f32 %v9760, %v9813
    %v9860 = vadd.f32 %v9761, %v9815
    %v9861 = vadd.f32 %v9762, %v9817
    %v9862 = vadd.f32 %v9763, %v9819
    %v9863 = vadd.f32 %v9764, %v9821
    %v9864 = vadd.f32 %v9765, %v9823
    %v9865 = vadd.f32 %v9766, %v9825
    %v9866 = vadd.f32 %v9767, %v9827
    %v9867 = vadd.f32 %v9768, %v9829
    %v9868 = vadd.f32 %v9769, %v9831
    %v9869 = vadd.f32 %v9770, %v9833
    %v9870 = vadd.f32 %v9771, %v9835
    %v9871 = vadd.f32 %v9772, %v9837
    %v9872 = vadd.f32 %v9773, %v9839
    %v9873 = vadd.f32 %v9774, %v9841
    %v9874 = vmul.f32 %v9469, %v4875
    %v9875 = vmul.f32 %v9471, %v4875
    %v9876 = vmul.f32 %v9473, %v4875
    %v9877 = vmul.f32 %v9475, %v4875
    %v9878 = vmul.f32 %v9477, %v4875
    %v9879 = vmul.f32 %v9479, %v4875
    %v9880 = vmul.f32 %v9481, %v4875
    %v9881 = vmul.f32 %v9483, %v4875
    %v9882 = vmul.f32 %v9485, %v4875
    %v9883 = vmul.f32 %v9487, %v4875
    %v9884 = vmul.f32 %v9489, %v4875
    %v9885 = vmul.f32 %v9491, %v4875
    %v9886 = vmul.f32 %v9493, %v4875
    %v9887 = vmul.f32 %v9495, %v4875
    %v9888 = vmul.f32 %v9497, %v4875
    %v9889 = vmul.f32 %v9516, %v4875
    %v9906 = vrot.slane %v9874, 2
    %v9907 = vrot.slane %v9875, 2
    %v9908 = vsel %vm667, %v9906, %v9907
    %v9909 = vrot.slane %v9876, 2
    %v9910 = vsel %vm667, %v9907, %v9909
    %v9911 = vrot.slane %v9877, 2
    %v9912 = vsel %vm667, %v9909, %v9911
    %v9913 = vrot.slane %v9878, 2
    %v9914 = vsel %vm667, %v9911, %v9913
    %v9915 = vrot.slane %v9879, 2
    %v9916 = vsel %vm667, %v9913, %v9915
    %v9917 = vrot.slane %v9880, 2
    %v9918 = vsel %vm667, %v9915, %v9917
    %v9919 = vrot.slane %v9881, 2
    %v9920 = vsel %vm667, %v9917, %v9919
    %v9921 = vrot.slane %v9882, 2
    %v9922 = vsel %vm667, %v9919, %v9921
    %v9923 = vrot.slane %v9883, 2
    %v9924 = vsel %vm667, %v9921, %v9923
    %v9925 = vrot.slane %v9884, 2
    %v9926 = vsel %vm667, %v9923, %v9925
    %v9927 = vrot.slane %v9885, 2
    %v9928 = vsel %vm667, %v9925, %v9927
    %v9929 = vrot.slane %v9886, 2
    %v9930 = vsel %vm667, %v9927, %v9929
    %v9931 = vrot.slane %v9887, 2
    %v9932 = vsel %vm667, %v9929, %v9931
    %v9933 = vrot.slane %v9888, 2
    %v9934 = vsel %vm667, %v9931, %v9933
    %v9935 = vrot.slane %v9889, 2
    %v9936 = vsel %vm667, %v9933, %v9935
    %v9953 = vadd.f32 %v9858, %v9908
    %v9954 = vadd.f32 %v9859, %v9910
    %v9955 = vadd.f32 %v9860, %v9912
    %v9956 = vadd.f32 %v9861, %v9914
    %v9957 = vadd.f32 %v9862, %v9916
    %v9958 = vadd.f32 %v9863, %v9918
    %v9959 = vadd.f32 %v9864, %v9920
    %v9960 = vadd.f32 %v9865, %v9922
    %v9961 = vadd.f32 %v9866, %v9924
    %v9962 = vadd.f32 %v9867, %v9926
    %v9963 = vadd.f32 %v9868, %v9928
    %v9964 = vadd.f32 %v9869, %v9930
    %v9965 = vadd.f32 %v9870, %v9932
    %v9966 = vadd.f32 %v9871, %v9934
    %v9967 = vadd.f32 %v9872, %v9936
    %v9968 = vadd.f32 %v9873, %v9935
    %v9969 = vmul.f32 %v9515, %v4974
    %v9970 = vmul.f32 %v9469, %v4974
    %v9971 = vmul.f32 %v9471, %v4974
    %v9972 = vmul.f32 %v9473, %v4974
    %v9973 = vmul.f32 %v9475, %v4974
    %v9974 = vmul.f32 %v9477, %v4974
    %v9975 = vmul.f32 %v9479, %v4974
    %v9976 = vmul.f32 %v9481, %v4974
    %v9977 = vmul.f32 %v9483, %v4974
    %v9978 = vmul.f32 %v9485, %v4974
    %v9979 = vmul.f32 %v9487, %v4974
    %v9980 = vmul.f32 %v9489, %v4974
    %v9981 = vmul.f32 %v9491, %v4974
    %v9982 = vmul.f32 %v9493, %v4974
    %v9983 = vmul.f32 %v9495, %v4974
    %v9984 = vmul.f32 %v9497, %v4974
    %v9985 = vadd.f32 %v9969, 0.0
    %v9986 = vadd.f32 %v9970, 0.0
    %v9987 = vadd.f32 %v9971, 0.0
    %v9988 = vadd.f32 %v9972, 0.0
    %v9989 = vadd.f32 %v9973, 0.0
    %v9990 = vadd.f32 %v9974, 0.0
    %v9991 = vadd.f32 %v9975, 0.0
    %v9992 = vadd.f32 %v9976, 0.0
    %v9993 = vadd.f32 %v9977, 0.0
    %v9994 = vadd.f32 %v9978, 0.0
    %v9995 = vadd.f32 %v9979, 0.0
    %v9996 = vadd.f32 %v9980, 0.0
    %v9997 = vadd.f32 %v9981, 0.0
    %v9998 = vadd.f32 %v9982, 0.0
    %v9999 = vadd.f32 %v9983, 0.0
    %v10000 = vadd.f32 %v9984, 0.0
    %v10001 = vmul.f32 %v9515, %v5010
    %v10002 = vmul.f32 %v9469, %v5010
    %v10003 = vmul.f32 %v9471, %v5010
    %v10004 = vmul.f32 %v9473, %v5010
    %v10005 = vmul.f32 %v9475, %v5010
    %v10006 = vmul.f32 %v9477, %v5010
    %v10007 = vmul.f32 %v9479, %v5010
    %v10008 = vmul.f32 %v9481, %v5010
    %v10009 = vmul.f32 %v9483, %v5010
    %v10010 = vmul.f32 %v9485, %v5010
    %v10011 = vmul.f32 %v9487, %v5010
    %v10012 = vmul.f32 %v9489, %v5010
    %v10013 = vmul.f32 %v9491, %v5010
    %v10014 = vmul.f32 %v9493, %v5010
    %v10015 = vmul.f32 %v9495, %v5010
    %v10016 = vmul.f32 %v9497, %v5010
    %v10017 = vmul.f32 %v9516, %v5010
    %v10035 = vrot.slane %v10001, 5
    %v10036 = vrot.slane %v10002, 5
    %v10037 = vsel %vm717, %v10035, %v10036
    %v10038 = vrot.slane %v10003, 5
    %v10039 = vsel %vm717, %v10036, %v10038
    %v10040 = vrot.slane %v10004, 5
    %v10041 = vsel %vm717, %v10038, %v10040
    %v10042 = vrot.slane %v10005, 5
    %v10043 = vsel %vm717, %v10040, %v10042
    %v10044 = vrot.slane %v10006, 5
    %v10045 = vsel %vm717, %v10042, %v10044
    %v10046 = vrot.slane %v10007, 5
    %v10047 = vsel %vm717, %v10044, %v10046
    %v10048 = vrot.slane %v10008, 5
    %v10049 = vsel %vm717, %v10046, %v10048
    %v10050 = vrot.slane %v10009, 5
    %v10051 = vsel %vm717, %v10048, %v10050
    %v10052 = vrot.slane %v10010, 5
    %v10053 = vsel %vm717, %v10050, %v10052
    %v10054 = vrot.slane %v10011, 5
    %v10055 = vsel %vm717, %v10052, %v10054
    %v10056 = vrot.slane %v10012, 5
    %v10057 = vsel %vm717, %v10054, %v10056
    %v10058 = vrot.slane %v10013, 5
    %v10059 = vsel %vm717, %v10056, %v10058
    %v10060 = vrot.slane %v10014, 5
    %v10061 = vsel %vm717, %v10058, %v10060
    %v10062 = vrot.slane %v10015, 5
    %v10063 = vsel %vm717, %v10060, %v10062
    %v10064 = vrot.slane %v10016, 5
    %v10065 = vsel %vm717, %v10062, %v10064
    %v10066 = vrot.slane %v10017, 5
    %v10067 = vsel %vm717, %v10064, %v10066
    %v10084 = vadd.f32 %v9985, %v10037
    %v10085 = vadd.f32 %v9986, %v10039
    %v10086 = vadd.f32 %v9987, %v10041
    %v10087 = vadd.f32 %v9988, %v10043
    %v10088 = vadd.f32 %v9989, %v10045
    %v10089 = vadd.f32 %v9990, %v10047
    %v10090 = vadd.f32 %v9991, %v10049
    %v10091 = vadd.f32 %v9992, %v10051
    %v10092 = vadd.f32 %v9993, %v10053
    %v10093 = vadd.f32 %v9994, %v10055
    %v10094 = vadd.f32 %v9995, %v10057
    %v10095 = vadd.f32 %v9996, %v10059
    %v10096 = vadd.f32 %v9997, %v10061
    %v10097 = vadd.f32 %v9998, %v10063
    %v10098 = vadd.f32 %v9999, %v10065
    %v10099 = vadd.f32 %v10000, %v10067
    %v10100 = vmul.f32 %v9469, %v5113
    %v10101 = vmul.f32 %v9471, %v5113
    %v10102 = vmul.f32 %v9473, %v5113
    %v10103 = vmul.f32 %v9475, %v5113
    %v10104 = vmul.f32 %v9477, %v5113
    %v10105 = vmul.f32 %v9479, %v5113
    %v10106 = vmul.f32 %v9481, %v5113
    %v10107 = vmul.f32 %v9483, %v5113
    %v10108 = vmul.f32 %v9485, %v5113
    %v10109 = vmul.f32 %v9487, %v5113
    %v10110 = vmul.f32 %v9489, %v5113
    %v10111 = vmul.f32 %v9491, %v5113
    %v10112 = vmul.f32 %v9493, %v5113
    %v10113 = vmul.f32 %v9495, %v5113
    %v10114 = vmul.f32 %v9497, %v5113
    %v10115 = vmul.f32 %v9516, %v5113
    %v10132 = vrot.slane %v10100, 2
    %v10133 = vrot.slane %v10101, 2
    %v10134 = vsel %vm667, %v10132, %v10133
    %v10135 = vrot.slane %v10102, 2
    %v10136 = vsel %vm667, %v10133, %v10135
    %v10137 = vrot.slane %v10103, 2
    %v10138 = vsel %vm667, %v10135, %v10137
    %v10139 = vrot.slane %v10104, 2
    %v10140 = vsel %vm667, %v10137, %v10139
    %v10141 = vrot.slane %v10105, 2
    %v10142 = vsel %vm667, %v10139, %v10141
    %v10143 = vrot.slane %v10106, 2
    %v10144 = vsel %vm667, %v10141, %v10143
    %v10145 = vrot.slane %v10107, 2
    %v10146 = vsel %vm667, %v10143, %v10145
    %v10147 = vrot.slane %v10108, 2
    %v10148 = vsel %vm667, %v10145, %v10147
    %v10149 = vrot.slane %v10109, 2
    %v10150 = vsel %vm667, %v10147, %v10149
    %v10151 = vrot.slane %v10110, 2
    %v10152 = vsel %vm667, %v10149, %v10151
    %v10153 = vrot.slane %v10111, 2
    %v10154 = vsel %vm667, %v10151, %v10153
    %v10155 = vrot.slane %v10112, 2
    %v10156 = vsel %vm667, %v10153, %v10155
    %v10157 = vrot.slane %v10113, 2
    %v10158 = vsel %vm667, %v10155, %v10157
    %v10159 = vrot.slane %v10114, 2
    %v10160 = vsel %vm667, %v10157, %v10159
    %v10161 = vrot.slane %v10115, 2
    %v10162 = vsel %vm667, %v10159, %v10161
    %v10163 = vsel %vm667, %v10161, %v5179
    %v10180 = vadd.f32 %v10084, %v10134
    %v10181 = vadd.f32 %v10085, %v10136
    %v10182 = vadd.f32 %v10086, %v10138
    %v10183 = vadd.f32 %v10087, %v10140
    %v10184 = vadd.f32 %v10088, %v10142
    %v10185 = vadd.f32 %v10089, %v10144
    %v10186 = vadd.f32 %v10090, %v10146
    %v10187 = vadd.f32 %v10091, %v10148
    %v10188 = vadd.f32 %v10092, %v10150
    %v10189 = vadd.f32 %v10093, %v10152
    %v10190 = vadd.f32 %v10094, %v10154
    %v10191 = vadd.f32 %v10095, %v10156
    %v10192 = vadd.f32 %v10096, %v10158
    %v10193 = vadd.f32 %v10097, %v10160
    %v10194 = vadd.f32 %v10098, %v10162
    %v10195 = vadd.f32 %v10099, %v10163
    %v10196 = vmul.f32 %v9727, %v353
    %v10197 = vmul.f32 %v9728, %v354
    %v10198 = vmul.f32 %v9729, %v355
    %v10199 = vmul.f32 %v9730, %v356
    %v10200 = vmul.f32 %v9731, %v357
    %v10201 = vmul.f32 %v9732, %v358
    %v10202 = vmul.f32 %v9733, %v359
    %v10203 = vmul.f32 %v9734, %v360
    %v10204 = vmul.f32 %v9735, %v361
    %v10205 = vmul.f32 %v9736, %v362
    %v10206 = vmul.f32 %v9737, %v363
    %v10207 = vmul.f32 %v9738, %v364
    %v10208 = vmul.f32 %v9739, %v365
    %v10209 = vmul.f32 %v9740, %v366
    %v10210 = vmul.f32 %v9741, %v367
    %v10211 = vmul.f32 %v9742, %v368
    %v10228 = vrot.slane %v9953, 1
    %v10229 = vrot.slane %v9954, 1
    %v10230 = vsel %vm1469, %v10228, %v10229
    %v10231 = vrot.slane %v9955, 1
    %v10232 = vsel %vm1469, %v10229, %v10231
    %v10233 = vrot.slane %v9956, 1
    %v10234 = vsel %vm1469, %v10231, %v10233
    %v10235 = vrot.slane %v9957, 1
    %v10236 = vsel %vm1469, %v10233, %v10235
    %v10237 = vrot.slane %v9958, 1
    %v10238 = vsel %vm1469, %v10235, %v10237
    %v10239 = vrot.slane %v9959, 1
    %v10240 = vsel %vm1469, %v10237, %v10239
    %v10241 = vrot.slane %v9960, 1
    %v10242 = vsel %vm1469, %v10239, %v10241
    %v10243 = vrot.slane %v9961, 1
    %v10244 = vsel %vm1469, %v10241, %v10243
    %v10245 = vrot.slane %v9962, 1
    %v10246 = vsel %vm1469, %v10243, %v10245
    %v10247 = vrot.slane %v9963, 1
    %v10248 = vsel %vm1469, %v10245, %v10247
    %v10249 = vrot.slane %v9964, 1
    %v10250 = vsel %vm1469, %v10247, %v10249
    %v10251 = vrot.slane %v9965, 1
    %v10252 = vsel %vm1469, %v10249, %v10251
    %v10253 = vrot.slane %v9966, 1
    %v10254 = vsel %vm1469, %v10251, %v10253
    %v10255 = vrot.slane %v9967, 1
    %v10256 = vsel %vm1469, %v10253, %v10255
    %v10257 = vrot.slane %v9968, 1
    %v10258 = vsel %vm1469, %v10255, %v10257
    %v10275 = vadd.f32 %v10196, %v10230
    %v10276 = vadd.f32 %v10197, %v10232
    %v10277 = vadd.f32 %v10198, %v10234
    %v10278 = vadd.f32 %v10199, %v10236
    %v10279 = vadd.f32 %v10200, %v10238
    %v10280 = vadd.f32 %v10201, %v10240
    %v10281 = vadd.f32 %v10202, %v10242
    %v10282 = vadd.f32 %v10203, %v10244
    %v10283 = vadd.f32 %v10204, %v10246
    %v10284 = vadd.f32 %v10205, %v10248
    %v10285 = vadd.f32 %v10206, %v10250
    %v10286 = vadd.f32 %v10207, %v10252
    %v10287 = vadd.f32 %v10208, %v10254
    %v10288 = vadd.f32 %v10209, %v10256
    %v10289 = vadd.f32 %v10210, %v10258
    %v10290 = vadd.f32 %v10211, %v10257
    %v10291 = vmul.f32 %v10180, %v1550
    %v10292 = vmul.f32 %v10181, %v1552
    %v10293 = vmul.f32 %v10182, %v1554
    %v10294 = vmul.f32 %v10183, %v1556
    %v10295 = vmul.f32 %v10184, %v1558
    %v10296 = vmul.f32 %v10185, %v1560
    %v10297 = vmul.f32 %v10186, %v1562
    %v10298 = vmul.f32 %v10187, %v1564
    %v10299 = vmul.f32 %v10188, %v1566
    %v10300 = vmul.f32 %v10189, %v1568
    %v10301 = vmul.f32 %v10190, %v1570
    %v10302 = vmul.f32 %v10191, %v1572
    %v10303 = vmul.f32 %v10192, %v1574
    %v10304 = vmul.f32 %v10193, %v1576
    %v10305 = vmul.f32 %v10194, %v1578
    %v10306 = vmul.f32 %v10195, %v1580
    %v10323 = vrot.slane %v10291, 2
    %v10324 = vrot.slane %v10292, 2
    %v10325 = vsel %vm667, %v10323, %v10324
    %v10326 = vrot.slane %v10293, 2
    %v10327 = vsel %vm667, %v10324, %v10326
    %v10328 = vrot.slane %v10294, 2
    %v10329 = vsel %vm667, %v10326, %v10328
    %v10330 = vrot.slane %v10295, 2
    %v10331 = vsel %vm667, %v10328, %v10330
    %v10332 = vrot.slane %v10296, 2
    %v10333 = vsel %vm667, %v10330, %v10332
    %v10334 = vrot.slane %v10297, 2
    %v10335 = vsel %vm667, %v10332, %v10334
    %v10336 = vrot.slane %v10298, 2
    %v10337 = vsel %vm667, %v10334, %v10336
    %v10338 = vrot.slane %v10299, 2
    %v10339 = vsel %vm667, %v10336, %v10338
    %v10340 = vrot.slane %v10300, 2
    %v10341 = vsel %vm667, %v10338, %v10340
    %v10342 = vrot.slane %v10301, 2
    %v10343 = vsel %vm667, %v10340, %v10342
    %v10344 = vrot.slane %v10302, 2
    %v10345 = vsel %vm667, %v10342, %v10344
    %v10346 = vrot.slane %v10303, 2
    %v10347 = vsel %vm667, %v10344, %v10346
    %v10348 = vrot.slane %v10304, 2
    %v10349 = vsel %vm667, %v10346, %v10348
    %v10350 = vrot.slane %v10305, 2
    %v10351 = vsel %vm667, %v10348, %v10350
    %v10352 = vrot.slane %v10306, 2
    %v10353 = vsel %vm667, %v10350, %v10352
    %v10370 = vadd.f32 %v10275, %v10325
    %v10371 = vadd.f32 %v10276, %v10327
    %v10372 = vadd.f32 %v10277, %v10329
    %v10373 = vadd.f32 %v10278, %v10331
    %v10374 = vadd.f32 %v10279, %v10333
    %v10375 = vadd.f32 %v10280, %v10335
    %v10376 = vadd.f32 %v10281, %v10337
    %v10377 = vadd.f32 %v10282, %v10339
    %v10378 = vadd.f32 %v10283, %v10341
    %v10379 = vadd.f32 %v10284, %v10343
    %v10380 = vadd.f32 %v10285, %v10345
    %v10381 = vadd.f32 %v10286, %v10347
    %v10382 = vadd.f32 %v10287, %v10349
    %v10383 = vadd.f32 %v10288, %v10351
    %v10384 = vadd.f32 %v10289, %v10353
    %v10385 = vadd.f32 %v10290, %v10352
    %v10386 = vadd.f32 %v10370, %v5407
    %v10387 = vadd.f32 %v10371, %v5407
    %v10388 = vadd.f32 %v10372, %v5407
    %v10389 = vadd.f32 %v10373, %v5407
    %v10390 = vadd.f32 %v10374, %v5407
    %v10391 = vadd.f32 %v10375, %v5407
    %v10392 = vadd.f32 %v10376, %v5407
    %v10393 = vadd.f32 %v10377, %v5407
    %v10394 = vadd.f32 %v10378, %v5407
    %v10395 = vadd.f32 %v10379, %v5407
    %v10396 = vadd.f32 %v10380, %v5407
    %v10397 = vadd.f32 %v10381, %v5407
    %v10398 = vadd.f32 %v10382, %v5407
    %v10399 = vadd.f32 %v10383, %v5407
    %v10400 = vadd.f32 %v10384, %v5407
    %v10401 = vadd.f32 %v10385, %v5407
    %v10402 = vmax.f32 %v10386, 0.0
    %v10403 = vmax.f32 %v10387, 0.0
    %v10404 = vmax.f32 %v10388, 0.0
    %v10405 = vmax.f32 %v10389, 0.0
    %v10406 = vmax.f32 %v10390, 0.0
    %v10407 = vmax.f32 %v10391, 0.0
    %v10408 = vmax.f32 %v10392, 0.0
    %v10409 = vmax.f32 %v10393, 0.0
    %v10410 = vmax.f32 %v10394, 0.0
    %v10411 = vmax.f32 %v10395, 0.0
    %v10412 = vmax.f32 %v10396, 0.0
    %v10413 = vmax.f32 %v10397, 0.0
    %v10414 = vmax.f32 %v10398, 0.0
    %v10415 = vmax.f32 %v10399, 0.0
    %v10416 = vmax.f32 %v10400, 0.0
    %v10417 = vmax.f32 %v10401, 0.0
    %v10419 = vsel %vm1742, %v10402, 0
    %v10422 = vsel %vm1742, %v10403, 0
    %v10425 = vsel %vm1742, %v10404, 0
    %v10428 = vsel %vm1742, %v10405, 0
    %v10431 = vsel %vm1742, %v10406, 0
    %v10434 = vsel %vm1742, %v10407, 0
    %v10437 = vsel %vm1742, %v10408, 0
    %v10440 = vsel %vm1742, %v10409, 0
    %v10443 = vsel %vm1742, %v10410, 0
    %v10446 = vsel %vm1742, %v10411, 0
    %v10449 = vsel %vm1742, %v10412, 0
    %v10452 = vsel %vm1742, %v10413, 0
    %v10455 = vsel %vm1742, %v10414, 0
    %v10458 = vsel %vm1742, %v10415, 0
    %v10461 = vsel %vm1742, %v10416, 0
    %v10464 = vsel %vm1742, %v10417, 0
    %10466 = vmatprep.subr.mxu0 0.0
    %10467 = vmatpush1.msra.mxu0 %v5441
    %10468 = vmatprep.subr.mxu0 0.0
    %10469 = vmatpush1.msra.mxu0 %v5442
    %10470 = vmatprep.subr.mxu0 0.0
    %10471 = vmatpush1.msra.mxu0 %v5443
    %10472 = vmatprep.subr.mxu0 0.0
    %10473 = vmatpush1.msra.mxu0 %v5444
    %10474 = vmatprep.subr.mxu0 0.0
    %10475 = vmatpush1.msra.mxu0 %v5445
    %10476 = vmatprep.subr.mxu0 0.0
    %10477 = vmatpush1.msra.mxu0 %v5446
    %10478 = vmatprep.subr.mxu0 0.0
    %10479 = vmatpush1.msra.mxu0 %v5447
    %10480 = vmatprep.subr.mxu0 0.0
    %10481 = vmatpush1.msra.mxu0 %v5448
    %10482 = vmatprep.subr.mxu0 0.0
    %10483 = vmatpush1.msra.mxu0 0.0
    %10484 = vmatprep.subr.mxu0 0.0
    %10485 = vmatpush1.msra.mxu0 0.0
    %10486 = vmatprep.subr.mxu0 0.0
    %10487 = vmatpush1.msra.mxu0 0.0
    %10488 = vmatprep.subr.mxu0 0.0
    %10489 = vmatpush1.msra.mxu0 0.0
    %10490 = vmatprep.subr.mxu0 0.0
    %10491 = vmatpush1.msra.mxu0 0.0
    %10492 = vmatprep.subr.mxu0 0.0
    %10493 = vmatpush1.msra.mxu0 0.0
    %10494 = vmatprep.subr.mxu0 0.0
    %10495 = vmatpush1.msra.mxu0 0.0
    %10496 = vmatprep.subr.mxu0 0.0
    %10497 = vmatpush1.msra.mxu0 0.0
    %10498 = vmatprep.subr.mxu0 0.0
    %10499 = vmatpush1.msra.mxu0 0.0
    %10500 = vmatprep.subr.mxu0 0.0
    %10501 = vmatpush1.msra.mxu0 0.0
    %10502 = vmatprep.subr.mxu0 0.0
    %10503 = vmatpush1.msra.mxu0 0.0
    %10504 = vmatprep.subr.mxu0 0.0
    %10505 = vmatpush1.msra.mxu0 0.0
    %10506 = vmatprep.subr.mxu0 0.0
    %10507 = vmatpush1.msra.mxu0 0.0
    %10508 = vmatprep.subr.mxu0 0.0
    %10509 = vmatpush1.msra.mxu0 0.0
    %10510 = vmatprep.subr.mxu0 0.0
    %10511 = vmatpush1.msra.mxu0 0.0
    %10512 = vmatprep.subr.mxu0 0.0
    %10513 = vmatpush1.msra.mxu0 0.0
    %10514 = vmatprep.subr.mxu0 0.0
    %10515 = vmatpush1.msra.mxu0 0.0
    %10516 = vmatprep.subr.mxu0 0.0
    %10517 = vmatpush1.msra.mxu0 0.0
    %10518 = vmatprep.subr.mxu0 0.0
    %10519 = vmatpush1.msra.mxu0 0.0
    %10520 = vmatprep.subr.mxu0 0.0
    %10521 = vmatpush1.msra.mxu0 0.0
    %10522 = vmatprep.subr.mxu0 0.0
    %10523 = vmatpush1.msra.mxu0 0.0
    %10524 = vmatprep.subr.mxu0 0.0
    %10525 = vmatpush1.msra.mxu0 0.0
    %10526 = vmatprep.subr.mxu0 0.0
    %10527 = vmatpush1.msra.mxu0 0.0
    %10528 = vmatprep.subr.mxu0 0.0
    %10529 = vmatpush1.msra.mxu0 0.0
    %10530 = vmatprep.mubr.f32.mxu0 0.0
    %10531 = vmatmul.mubr.f32.gmra.mrb[0].mxu0 %v10419
    %v10532 = vpop.f32.mrb[0].mxu0
    %v10533 = vadd.f32 %v5453, %v10532
    %v10534 = vpop.f32.mrb[0].mxu0
    %10535 = vmatprep.mubr.f32.mxu0 0.0
    %10536 = vmatmul.mubr.f32.gmra.mrb[0].mxu0 %v10422
    %v10537 = vpop.f32.mrb[0].mxu0
    %v10538 = vadd.f32 %v5453, %v10537
    %v10539 = vpop.f32.mrb[0].mxu0
    %10540 = vmatprep.mubr.f32.mxu0 0.0
    %10541 = vmatmul.mubr.f32.gmra.mrb[0].mxu0 %v10425
    %v10542 = vpop.f32.mrb[0].mxu0
    %v10543 = vadd.f32 %v5453, %v10542
    %v10544 = vpop.f32.mrb[0].mxu0
    %10545 = vmatprep.mubr.f32.mxu0 0.0
    %10546 = vmatmul.mubr.f32.gmra.mrb[0].mxu0 %v10428
    %v10547 = vpop.f32.mrb[0].mxu0
    %v10548 = vadd.f32 %v5453, %v10547
    %v10549 = vpop.f32.mrb[0].mxu0
    %10550 = vmatprep.mubr.f32.mxu0 0.0
    %10551 = vmatmul.mubr.f32.gmra.mrb[0].mxu0 %v10431
    %v10552 = vpop.f32.mrb[0].mxu0
    %v10553 = vadd.f32 %v5453, %v10552
    %v10554 = vpop.f32.mrb[0].mxu0
    %10555 = vmatprep.mubr.f32.mxu0 0.0
    %10556 = vmatmul.mubr.f32.gmra.mrb[0].mxu0 %v10434
    %v10557 = vpop.f32.mrb[0].mxu0
    %v10558 = vadd.f32 %v5453, %v10557
    %v10559 = vpop.f32.mrb[0].mxu0
    %10560 = vmatprep.mubr.f32.mxu0 0.0
    %10561 = vmatmul.mubr.f32.gmra.mrb[0].mxu0 %v10437
    %v10562 = vpop.f32.mrb[0].mxu0
    %v10563 = vadd.f32 %v5453, %v10562
    %v10564 = vpop.f32.mrb[0].mxu0
    %10565 = vmatprep.mubr.f32.mxu0 0.0
    %10566 = vmatmul.mubr.f32.gmra.mrb[0].mxu0 %v10440
    %v10567 = vpop.f32.mrb[0].mxu0
    %v10568 = vadd.f32 %v5453, %v10567
    %v10569 = vpop.f32.mrb[0].mxu0
    %10570 = vmatprep.mubr.f32.mxu0 0.0
    %10571 = vmatmul.mubr.f32.gmra.mrb[0].mxu0 %v10443
    %v10572 = vpop.f32.mrb[0].mxu0
    %v10573 = vadd.f32 %v5453, %v10572
    %v10574 = vpop.f32.mrb[0].mxu0
    %10575 = vmatprep.mubr.f32.mxu0 0.0
    %10576 = vmatmul.mubr.f32.gmra.mrb[0].mxu0 %v10446
    %v10577 = vpop.f32.mrb[0].mxu0
    %v10578 = vadd.f32 %v5453, %v10577
    %v10579 = vpop.f32.mrb[0].mxu0
    %10580 = vmatprep.mubr.f32.mxu0 0.0
    %10581 = vmatmul.mubr.f32.gmra.mrb[0].mxu0 %v10449
    %v10582 = vpop.f32.mrb[0].mxu0
    %v10583 = vadd.f32 %v5453, %v10582
    %v10584 = vpop.f32.mrb[0].mxu0
    %10585 = vmatprep.mubr.f32.mxu0 0.0
    %10586 = vmatmul.mubr.f32.gmra.mrb[0].mxu0 %v10452
    %v10587 = vpop.f32.mrb[0].mxu0
    %v10588 = vadd.f32 %v5453, %v10587
    %v10589 = vpop.f32.mrb[0].mxu0
    %10590 = vmatprep.mubr.f32.mxu0 0.0
    %10591 = vmatmul.mubr.f32.gmra.mrb[0].mxu0 %v10455
    %v10592 = vpop.f32.mrb[0].mxu0
    %v10593 = vadd.f32 %v5453, %v10592
    %v10594 = vpop.f32.mrb[0].mxu0
    %10595 = vmatprep.mubr.f32.mxu0 0.0
    %10596 = vmatmul.mubr.f32.gmra.mrb[0].mxu0 %v10458
    %v10597 = vpop.f32.mrb[0].mxu0
    %v10598 = vadd.f32 %v5453, %v10597
    %v10599 = vpop.f32.mrb[0].mxu0
    %10600 = vmatprep.mubr.f32.mxu0 0.0
    %10601 = vmatmul.mubr.f32.gmra.mrb[0].mxu0 %v10461
    %v10602 = vpop.f32.mrb[0].mxu0
    %v10603 = vadd.f32 %v5453, %v10602
    %v10604 = vpop.f32.mrb[0].mxu0
    %10605 = vmatprep.mubr.f32.mxu0 0.0
    %10606 = vmatmul.mubr.f32.gmra.mrb[0].mxu0 %v10464
    %v10607 = vpop.f32.mrb[0].mxu0
    %v10608 = vpop.f32.mrb[0].mxu0
    %10609 = vdwg.mxu0
    %v10610 = vmax.f32 %v10533, 0.0
    %v10611 = vmax.f32 %v10538, 0.0
    %v10612 = vmax.f32 %v10543, 0.0
    %v10613 = vmax.f32 %v10548, 0.0
    %v10614 = vmax.f32 %v10553, 0.0
    %v10615 = vmax.f32 %v10558, 0.0
    %v10616 = vmax.f32 %v10563, 0.0
    %v10617 = vmax.f32 %v10568, 0.0
    %v10618 = vmax.f32 %v10573, 0.0
    %v10619 = vmax.f32 %v10578, 0.0
    %v10620 = vmax.f32 %v10583, 0.0
    %v10621 = vmax.f32 %v10588, 0.0
    %v10622 = vmax.f32 %v10593, 0.0
    %v10623 = vmax.f32 %v10598, 0.0
    %v10624 = vmax.f32 %v10603, 0.0
    %v10625 = vsel %vm1742, %v10610, 0.0
    %v10626 = vsel %vm1742, %v10611, 0.0
    %v10627 = vadd.f32 %v10625, %v10626
    %v10628 = vsel %vm1742, %v10612, 0.0
    %v10629 = vadd.f32 %v10627, %v10628
    %v10630 = vsel %vm1742, %v10613, 0.0
    %v10631 = vadd.f32 %v10629, %v10630
    %v10632 = vsel %vm1742, %v10614, 0.0
    %v10633 = vadd.f32 %v10631, %v10632
    %v10634 = vsel %vm1742, %v10615, 0.0
    %v10635 = vadd.f32 %v10633, %v10634
    %v10636 = vsel %vm1742, %v10616, 0.0
    %v10637 = vadd.f32 %v10635, %v10636
    %v10638 = vsel %vm1742, %v10617, 0.0
    %v10639 = vadd.f32 %v10637, %v10638
    %v10640 = vsel %vm1742, %v10618, 0.0
    %v10641 = vadd.f32 %v10639, %v10640
    %v10642 = vsel %vm1742, %v10619, 0.0
    %v10643 = vadd.f32 %v10641, %v10642
    %v10644 = vsel %vm1742, %v10620, 0.0
    %v10645 = vadd.f32 %v10643, %v10644
    %v10646 = vsel %vm1742, %v10621, 0.0
    %v10647 = vadd.f32 %v10645, %v10646
    %v10648 = vsel %vm1742, %v10622, 0.0
    %v10649 = vadd.f32 %v10647, %v10648
    %v10650 = vsel %vm1742, %v10623, 0.0
    %v10651 = vadd.f32 %v10649, %v10650
    %v10652 = vsel %vm1742, %v10624, 0.0
    %v10653 = vadd.f32 %v10651, %v10652
    %v10654 = vrot.slane %v10653, 4
    %v10655 = vadd.f32 %v10653, %v10654
    %v10656 = vrot.slane %v10655, 2
    %v10657 = vadd.f32 %v10655, %v10656
    %v10658 = vrot.slane %v10657, 1
    %v10659 = vadd.f32 %v10657, %v10658
    %v10660 = vmul.f32 %v10659, 0.008333334
    %vm10661 = vcmask 1040384
    %v10662 = vsel %vm10661, %v5696, %v10660
    %v10664 = vlaneseq
    %v10665 = vshrl.u32 %v10664, 7
    %v10666 = vsub.s32 0, %v10665
    %v10667 = vrot.slane %v47, %v10666
    %v10670 = vsel %vm1742, %v10662, 0
    %10672 = vmatprep.subr.mxu0 0.0
    %10673 = vmatpush1.msra.mxu0 %v39
    %10674 = vmatprep.subr.mxu0 0.0
    %10675 = vmatpush1.msra.mxu0 %v40
    %10676 = vmatprep.subr.mxu0 0.0
    %10677 = vmatpush1.msra.mxu0 %v41
    %10678 = vmatprep.subr.mxu0 0.0
    %10679 = vmatpush1.msra.mxu0 %v42
    %10680 = vmatprep.subr.mxu0 0.0
    %10681 = vmatpush1.msra.mxu0 %v43
    %10682 = vmatprep.subr.mxu0 0.0
    %10683 = vmatpush1.msra.mxu0 %v44
    %10684 = vmatprep.subr.mxu0 0.0
    %10685 = vmatpush1.msra.mxu0 %v45
    %10686 = vmatprep.subr.mxu0 0.0
    %10687 = vmatpush1.msra.mxu0 %v46
    %10688 = vmatprep.subr.mxu0 0.0
    %10689 = vmatpush1.msra.mxu0 0.0
    %10690 = vmatprep.subr.mxu0 0.0
    %10691 = vmatpush1.msra.mxu0 0.0
    %10692 = vmatprep.subr.mxu0 0.0
    %10693 = vmatpush1.msra.mxu0 0.0
    %10694 = vmatprep.subr.mxu0 0.0
    %10695 = vmatpush1.msra.mxu0 0.0
    %10696 = vmatprep.subr.mxu0 0.0
    %10697 = vmatpush1.msra.mxu0 0.0
    %10698 = vmatprep.subr.mxu0 0.0
    %10699 = vmatpush1.msra.mxu0 0.0
    %10700 = vmatprep.subr.mxu0 0.0
    %10701 = vmatpush1.msra.mxu0 0.0
    %10702 = vmatprep.subr.mxu0 0.0
    %10703 = vmatpush1.msra.mxu0 0.0
    %10704 = vmatprep.subr.mxu0 0.0
    %10705 = vmatpush1.msra.mxu0 0.0
    %10706 = vmatprep.subr.mxu0 0.0
    %10707 = vmatpush1.msra.mxu0 0.0
    %10708 = vmatprep.subr.mxu0 0.0
    %10709 = vmatpush1.msra.mxu0 0.0
    %10710 = vmatprep.subr.mxu0 0.0
    %10711 = vmatpush1.msra.mxu0 0.0
    %10712 = vmatprep.subr.mxu0 0.0
    %10713 = vmatpush1.msra.mxu0 0.0
    %10714 = vmatprep.subr.mxu0 0.0
    %10715 = vmatpush1.msra.mxu0 0.0
    %10716 = vmatprep.subr.mxu0 0.0
    %10717 = vmatpush1.msra.mxu0 0.0
    %10718 = vmatprep.subr.mxu0 0.0
    %10719 = vmatpush1.msra.mxu0 0.0
    %10720 = vmatprep.subr.mxu0 0.0
    %10721 = vmatpush1.msra.mxu0 0.0
    %10722 = vmatprep.subr.mxu0 0.0
    %10723 = vmatpush1.msra.mxu0 0.0
    %10724 = vmatprep.subr.mxu0 0.0
    %10725 = vmatpush1.msra.mxu0 0.0
    %10726 = vmatprep.subr.mxu0 0.0
    %10727 = vmatpush1.msra.mxu0 0.0
    %10728 = vmatprep.subr.mxu0 0.0
    %10729 = vmatpush1.msra.mxu0 0.0
    %10730 = vmatprep.subr.mxu0 0.0
    %10731 = vmatpush1.msra.mxu0 0.0
    %10732 = vmatprep.subr.mxu0 0.0
    %10733 = vmatpush1.msra.mxu0 0.0
    %10734 = vmatprep.subr.mxu0 0.0
    %10735 = vmatpush1.msra.mxu0 0.0
    %10736 = vmatprep.mubr.f32.mxu0 0.0
    %10737 = vmatmul.mubr.f32.gmra.mrb[0].mxu0 %v10670
    %v10738 = vpop.f32.mrb[0].mxu0
    %v10739 = vadd.f32 %v10667, %v10738
    %v10740 = vpop.f32.mrb[0].mxu0
    %10741 = vdwg.mxu0
    %vm10742 = vcmask 91136
    %10743 = vst.msk [vmem:[#allocation2] sm:$0x3] %vm10742, %v10739
    // Predicated region
    $region38: #{ds_cnn_forward.1} parent=1 // pred_check
      _
    $region39: #{ds_cnn_forward.1} parent=1 // pred_check_branch
      %10745 = sbr.rel (0) target = $region41
    $region40: #{ds_cnn_forward.1} parent=1 // pred_region
      %s10747 = ssub.s32 32, 32
      %10748 = vsyncadd [#allocation3], %s10747
      %s10750 = sshll.u32 [#allocation2], 4
      %s10751 = int_to_ptr.vmem [resolvable:$true] %s10750
      %10753 = dma.vmem_to_hbm [thread:$0]  %s10751, 32, %s9, [#allocation3]
    $region41: #{ds_cnn_forward.1} parent=1 // pred_fallthru
      _
    // Predicated region
    $region42: #{ds_cnn_forward.1} parent=1 // pred_check
      _
    $region43: #{ds_cnn_forward.1} parent=1 // pred_check_branch
      %10755 = sbr.rel (0) target = $region45
    $region44: #{ds_cnn_forward.1} parent=1 // pred_region
      %10756 = dma.done [#allocation3], 32
    $region45: #{ds_cnn_forward.1} parent=1 // pred_fallthru
      _
    %10757 = vsyncpa [#allocation3], 1

</llo_original>
